<compile_context>
chip_gen: v7x
topology: tpu7x:2x2x1
jax: 0.10.0
libtpu: 0.0.40
codegen_flags: <defaults>
</compile_context>

<pallas_src>
import jax
import jax.numpy as jnp
from jax.experimental import pallas as pl
from jax.experimental.pallas import tpu as pltpu

LATENT_PAD = 128  # latent dim (32) padded to a full 128-lane tile


def vae_kernel(
    # inputs (bf16 activations / noise)
    x_ref, err_ref,
    # encoder: 2 hidden blocks (no Linear bias -> cancels in training-mode BN)
    ew1_ref, eg1_ref, ebt1_ref,
    ew2_ref, eg2_ref, ebt2_ref,
    # fused encoder head: [mu_pad128 | logvar_pad128]
    ewh_ref, ebh_ref,
    # decoder: 2 hidden blocks + output linear
    dw1_ref, dg1_ref, dbt1_ref,
    dw2_ref, dg2_ref, dbt2_ref,
    dw3_ref, db3_ref,
    # outputs
    xhat_ref, mu_ref, logvar_ref,
):
    def mm(a, w_ref):
        # bf16 operands on the MXU, f32 accumulation.
        return jnp.dot(a.astype(jnp.bfloat16), w_ref[...],
                       preferred_element_type=jnp.float32)

    def batchnorm(v, g_ref, b_ref):
        # Training-mode BatchNorm1d (batch mean, biased variance, eps=1e-5).
        # One-pass stats: var = E[x^2] - mean^2 (f32), folded into a single
        # per-feature scale/shift -> only two (B,H) elementwise passes.
        inv_n = 1.0 / v.shape[0]
        mean = jnp.sum(v, axis=0, keepdims=True) * inv_n
        ex2 = jnp.sum(v * v, axis=0, keepdims=True) * inv_n
        var = ex2 - mean * mean
        scale = jax.lax.rsqrt(var + 1e-5) * g_ref[...]
        shift = b_ref[...] - mean * scale
        return v * scale + shift

    def mish(v):
        # mish(x) = x * tanh(softplus(x)) = x * (t-1)/(t+1), t = (1+e^x)^2.
        # 1 EUP exp + 1 approx EUP reciprocal; kept in f32 (v5e-friendly).
        e = jnp.exp(jnp.minimum(v, 20.0))
        t = (1.0 + e) * (1.0 + e)
        r = (t - 1.0) * pl.reciprocal(t + 1.0, approx=True)
        return jnp.where(v > 20.0, v, v * r)

    def block(a, w_ref, g_ref, bt_ref):
        # Linear (bias dropped: cancels under BN) -> BN -> Mish; returned in
        # bf16 so the next MXU dot needs no separate cast pass.
        h = mm(a, w_ref)
        return mish(batchnorm(h, g_ref, bt_ref)).astype(jnp.bfloat16)

    x = x_ref[...]

    # ---- encoder ----
    h = block(x, ew1_ref, eg1_ref, ebt1_ref)
    h = block(h, ew2_ref, eg2_ref, ebt2_ref)
    head = mm(h, ewh_ref) + ebh_ref[...]          # (B, 2*LATENT_PAD) f32
    mu = head[:, :LATENT_PAD]                     # lane-dense split at lane 128
    logvar = head[:, LATENT_PAD:]

    # ---- reparameterization ----
    std = jnp.exp(0.5 * logvar)                   # padded lanes -> 1
    z = mu + std * err_ref[...]                   # err pad lanes = 0 -> z pad = 0

    # ---- decoder ----
    h = block(z, dw1_ref, dg1_ref, dbt1_ref)      # dw1 rows >= L are zero
    h = block(h, dw2_ref, dg2_ref, dbt2_ref)
    xhat = mm(h, dw3_ref) + db3_ref[...]

    xhat_ref[...] = xhat
    mu_ref[...] = mu.astype(mu_ref.dtype)
    logvar_ref[...] = logvar.astype(logvar_ref.dtype)


def init_mlp_params(key, in_dim, hidden, out_dim):
    """PyTorch-layout MLP params: two (Linear+BN+Mish) blocks + output Linear."""
    ks = jax.random.split(key, 3)

    def linear(k, fan_in, fan_out):
        w = jax.random.normal(k, (fan_in, fan_out), jnp.float32) / jnp.sqrt(
            jnp.float32(fan_in)
        )
        b = jnp.zeros((1, fan_out), jnp.float32)
        return w, b

    w1, b1 = linear(ks[0], in_dim, hidden)
    w2, b2 = linear(ks[1], hidden, hidden)
    w3, b3 = linear(ks[2], hidden, out_dim)
    g1 = jnp.ones((1, hidden), jnp.float32)
    bt1 = jnp.zeros((1, hidden), jnp.float32)
    g2 = jnp.ones((1, hidden), jnp.float32)
    bt2 = jnp.zeros((1, hidden), jnp.float32)
    return (w1, b1, g1, bt1, w2, b2, g2, bt2, w3, b3)


def prepare_params(enc_params, dec_params, latent_dim):
    """Drop BN-cancelled biases, fuse/pad the encoder head, pad decoder K,
    cast matmul weights to bf16."""
    (ew1, eb1, eg1, ebt1, ew2, eb2, eg2, ebt2, ew3, eb3) = enc_params
    (dw1, db1, dg1, dbt1, dw2, db2, dg2, dbt2, dw3, db3) = dec_params
    # Linear biases feeding training-mode BatchNorm cancel exactly -> dropped.
    del eb1, eb2, db1, db2
    L = latent_dim
    H = ew2.shape[0]

    # fused encoder head: columns = [mu (pad to 128) | logvar (pad to 128)]
    ewh = jnp.zeros((H, 2 * LATENT_PAD), jnp.float32)
    ewh = ewh.at[:, :L].set(ew3[:, :L])
    ewh = ewh.at[:, LATENT_PAD:LATENT_PAD + L].set(ew3[:, L:])
    ebh = jnp.zeros((1, 2 * LATENT_PAD), jnp.float32)
    ebh = ebh.at[:, :L].set(eb3[:, :L])
    ebh = ebh.at[:, LATENT_PAD:LATENT_PAD + L].set(eb3[:, L:])

    # decoder first layer: pad contraction dim (K) from L up to LATENT_PAD
    dw1p = jnp.zeros((LATENT_PAD, dw1.shape[1]), dw1.dtype).at[:L, :].set(dw1)

    bf = lambda w: w.astype(jnp.bfloat16)
    return (
        bf(ew1), eg1, ebt1,
        bf(ew2), eg2, ebt2,
        bf(ewh), ebh,
        bf(dw1p), dg1, dbt1,
        bf(dw2), dg2, dbt2,
        bf(dw3), db3,
    )


def vae_forward(x, err, kernel_params, latent_dim):
    """x: (B, input_dim) f32, err: (B, latent_dim) f32."""
    B, D = x.shape
    L = latent_dim
    H = kernel_params[3].shape[0]  # ew2 is (H, H)

    # bf16 activations / noise on the wire (the kernel casts to bf16 for the
    # MXU anyway); noise padded with zeros so padded z lanes stay exactly 0.
    x_bf = x.astype(jnp.bfloat16)
    err_p = jnp.zeros((B, LATENT_PAD), jnp.bfloat16).at[:, :L].set(
        err.astype(jnp.bfloat16))
    inputs = (x_bf, err_p) + tuple(kernel_params)

    vmem = pl.BlockSpec(memory_space=pltpu.MemorySpace.VMEM)

    flops = 2 * B * (D * H + H * H + H * 2 * LATENT_PAD
                     + LATENT_PAD * H + H * H + H * D)
    transcendentals = B * (4 * 2 * H + LATENT_PAD)  # 4 Mish layers + std exp
    bytes_out = B * D * 4 + 2 * B * LATENT_PAD * 2
    bytes_accessed = (sum(int(a.size) * int(a.dtype.itemsize) for a in inputs)
                      + bytes_out)

    xhat, mu_p, logvar_p = pl.pallas_call(
        vae_kernel,
        out_shape=(
            jax.ShapeDtypeStruct((B, D), jnp.float32),            # x_hat
            jax.ShapeDtypeStruct((B, LATENT_PAD), jnp.bfloat16),  # mu (padded)
            jax.ShapeDtypeStruct((B, LATENT_PAD), jnp.bfloat16),  # logvar (padded)
        ),
        in_specs=[vmem] * len(inputs),
        out_specs=(vmem, vmem, vmem),
        compiler_params=pltpu.CompilerParams(vmem_limit_bytes=32 * 1024 * 1024),
        cost_estimate=pl.CostEstimate(
            flops=int(flops),
            transcendentals=int(transcendentals),
            bytes_accessed=int(bytes_accessed),
        ),
    )(*inputs)

    return (xhat,
            mu_p[:, :L].astype(jnp.float32),
            logvar_p[:, :L].astype(jnp.float32))


if __name__ == "__main__":
    # Module defaults: latent_dim=32, hidden_channels=256, num_layers=2.
    # Batch 256 so the MXU M dimension is actually utilized.
    B, D, H, L = 256, 128, 256, 32

    key = jax.random.PRNGKey(0)
    k_x, k_err, k_enc, k_dec = jax.random.split(key, 4)

    x = jax.random.normal(k_x, (B, D), jnp.float32)
    # torch.randn(std.size()) equivalent (deterministic here)
    err = jax.random.normal(k_err, (B, L), jnp.float32)

    enc_params = init_mlp_params(k_enc, D, H, 2 * L)  # encoder -> [mu | logvar]
    dec_params = init_mlp_params(k_dec, L, H, D)      # decoder -> x_hat
    kparams = prepare_params(enc_params, dec_params, L)

    x_hat, mu, logvar = vae_forward(x, err, kparams, L)
    jax.block_until_ready((x_hat, mu, logvar))

    assert x_hat.shape == (B, D) and mu.shape == (B, L) and logvar.shape == (B, L)
    assert bool(jnp.all(jnp.isfinite(x_hat)))
    assert bool(jnp.all(jnp.isfinite(mu))) and bool(jnp.all(jnp.isfinite(logvar)))
    print("KERNEL_OK")
</pallas_src>

<mosaic_0001>
module attributes {stable_mosaic.version = 11 : i64} {
  func.func @vae_kernel(%arg0: memref<256x128xbf16, #tpu.memory_space<vmem>>, %arg1: memref<256x128xbf16, #tpu.memory_space<vmem>>, %arg2: memref<128x256xbf16, #tpu.memory_space<vmem>>, %arg3: memref<1x256xf32, #tpu.memory_space<vmem>>, %arg4: memref<1x256xf32, #tpu.memory_space<vmem>>, %arg5: memref<256x256xbf16, #tpu.memory_space<vmem>>, %arg6: memref<1x256xf32, #tpu.memory_space<vmem>>, %arg7: memref<1x256xf32, #tpu.memory_space<vmem>>, %arg8: memref<256x256xbf16, #tpu.memory_space<vmem>>, %arg9: memref<1x256xf32, #tpu.memory_space<vmem>>, %arg10: memref<128x256xbf16, #tpu.memory_space<vmem>>, %arg11: memref<1x256xf32, #tpu.memory_space<vmem>>, %arg12: memref<1x256xf32, #tpu.memory_space<vmem>>, %arg13: memref<256x256xbf16, #tpu.memory_space<vmem>>, %arg14: memref<1x256xf32, #tpu.memory_space<vmem>>, %arg15: memref<1x256xf32, #tpu.memory_space<vmem>>, %arg16: memref<256x128xbf16, #tpu.memory_space<vmem>>, %arg17: memref<1x128xf32, #tpu.memory_space<vmem>>, %arg18: memref<256x128xf32, #tpu.memory_space<vmem>>, %arg19: memref<256x128xbf16, #tpu.memory_space<vmem>>, %arg20: memref<256x128xbf16, #tpu.memory_space<vmem>>) attributes {dimension_semantics = [], scalar_prefetch = 0 : i64, scratch_operands = 0 : i64, tpu.core_type = #tpu.core_type<tc>} {
    %c0 = arith.constant 0 : index
    %c0_0 = arith.constant 0 : index
    %0 = vector.load %arg0[%c0, %c0_0] : memref<256x128xbf16, #tpu.memory_space<vmem>>, vector<256x128xbf16>
    %c0_1 = arith.constant 0 : index
    %c0_2 = arith.constant 0 : index
    %1 = vector.load %arg2[%c0_1, %c0_2] : memref<128x256xbf16, #tpu.memory_space<vmem>>, vector<128x256xbf16>
    %cst = arith.constant dense<0.000000e+00> : vector<256x256xf32>
    %2 = tpu.matmul %0, %1, %cst {dimension_numbers = #tpu.dot_dimension_numbers<[1], [0], [0], [1], [0, 0, 1, 1], [], []>} : vector<256x128xbf16>, vector<128x256xbf16>, vector<256x256xf32> -> vector<256x256xf32>
    %cst_3 = arith.constant dense<0.000000e+00> : vector<256xf32>
    %3 = vector.multi_reduction <add>, %2, %cst_3 [0] : vector<256x256xf32> to vector<256xf32>
    %4 = vector.shape_cast %3 : vector<256xf32> to vector<1x256xf32>
    %cst_4 = arith.constant 3.906250e-03 : f32
    %5 = vector.broadcast %cst_4 : f32 to vector<1x256xf32>
    %6 = arith.mulf %4, %5 : vector<1x256xf32>
    %7 = arith.mulf %2, %2 : vector<256x256xf32>
    %cst_5 = arith.constant dense<0.000000e+00> : vector<256xf32>
    %8 = vector.multi_reduction <add>, %7, %cst_5 [0] : vector<256x256xf32> to vector<256xf32>
    %9 = vector.shape_cast %8 : vector<256xf32> to vector<1x256xf32>
    %cst_6 = arith.constant 3.906250e-03 : f32
    %10 = vector.broadcast %cst_6 : f32 to vector<1x256xf32>
    %11 = arith.mulf %9, %10 : vector<1x256xf32>
    %12 = arith.mulf %6, %6 : vector<1x256xf32>
    %13 = arith.subf %11, %12 : vector<1x256xf32>
    %cst_7 = arith.constant 9.99999974E-6 : f32
    %14 = vector.broadcast %cst_7 : f32 to vector<1x256xf32>
    %15 = arith.addf %13, %14 : vector<1x256xf32>
    %16 = math.rsqrt %15 : vector<1x256xf32>
    %c0_8 = arith.constant 0 : index
    %c0_9 = arith.constant 0 : index
    %17 = vector.load %arg3[%c0_8, %c0_9] : memref<1x256xf32, #tpu.memory_space<vmem>>, vector<1x256xf32>
    %18 = arith.mulf %16, %17 : vector<1x256xf32>
    %c0_10 = arith.constant 0 : index
    %c0_11 = arith.constant 0 : index
    %19 = vector.load %arg4[%c0_10, %c0_11] : memref<1x256xf32, #tpu.memory_space<vmem>>, vector<1x256xf32>
    %20 = arith.mulf %6, %18 : vector<1x256xf32>
    %21 = arith.subf %19, %20 : vector<1x256xf32>
    %22 = vector.broadcast %18 : vector<1x256xf32> to vector<256x256xf32>
    %23 = arith.mulf %2, %22 : vector<256x256xf32>
    %24 = vector.broadcast %21 : vector<1x256xf32> to vector<256x256xf32>
    %25 = arith.addf %23, %24 : vector<256x256xf32>
    %cst_12 = arith.constant 2.000000e+01 : f32
    %26 = vector.broadcast %cst_12 : f32 to vector<256x256xf32>
    %27 = arith.minimumf %25, %26 : vector<256x256xf32>
    %28 = math.exp %27 : vector<256x256xf32>
    %cst_13 = arith.constant 1.000000e+00 : f32
    %29 = vector.broadcast %cst_13 : f32 to vector<256x256xf32>
    %30 = arith.addf %29, %28 : vector<256x256xf32>
    %cst_14 = arith.constant 1.000000e+00 : f32
    %31 = vector.broadcast %cst_14 : f32 to vector<256x256xf32>
    %32 = arith.addf %31, %28 : vector<256x256xf32>
    %33 = arith.mulf %30, %32 : vector<256x256xf32>
    %cst_15 = arith.constant 1.000000e+00 : f32
    %34 = vector.broadcast %cst_15 : f32 to vector<256x256xf32>
    %35 = arith.subf %33, %34 : vector<256x256xf32>
    %cst_16 = arith.constant 1.000000e+00 : f32
    %36 = vector.broadcast %cst_16 : f32 to vector<256x256xf32>
    %37 = arith.addf %33, %36 : vector<256x256xf32>
    %38 = tpu.reciprocal %37 {approx = true} : vector<256x256xf32> -> vector<256x256xf32>
    %39 = arith.mulf %35, %38 : vector<256x256xf32>
    %cst_17 = arith.constant 2.000000e+01 : f32
    %40 = vector.broadcast %cst_17 : f32 to vector<256x256xf32>
    %41 = arith.cmpf ogt, %25, %40 : vector<256x256xf32>
    %42 = arith.mulf %25, %39 : vector<256x256xf32>
    %43 = arith.select %41, %25, %42 : vector<256x256xi1>, vector<256x256xf32>
    %44 = arith.truncf %43 : vector<256x256xf32> to vector<256x256xbf16>
    %c0_18 = arith.constant 0 : index
    %c0_19 = arith.constant 0 : index
    %45 = vector.load %arg5[%c0_18, %c0_19] : memref<256x256xbf16, #tpu.memory_space<vmem>>, vector<256x256xbf16>
    %cst_20 = arith.constant dense<0.000000e+00> : vector<256x256xf32>
    %46 = tpu.matmul %44, %45, %cst_20 {dimension_numbers = #tpu.dot_dimension_numbers<[1], [0], [0], [1], [0, 0, 1, 1], [], []>} : vector<256x256xbf16>, vector<256x256xbf16>, vector<256x256xf32> -> vector<256x256xf32>
    %cst_21 = arith.constant dense<0.000000e+00> : vector<256xf32>
    %47 = vector.multi_reduction <add>, %46, %cst_21 [0] : vector<256x256xf32> to vector<256xf32>
    %48 = vector.shape_cast %47 : vector<256xf32> to vector<1x256xf32>
    %cst_22 = arith.constant 3.906250e-03 : f32
    %49 = vector.broadcast %cst_22 : f32 to vector<1x256xf32>
    %50 = arith.mulf %48, %49 : vector<1x256xf32>
    %51 = arith.mulf %46, %46 : vector<256x256xf32>
    %cst_23 = arith.constant dense<0.000000e+00> : vector<256xf32>
    %52 = vector.multi_reduction <add>, %51, %cst_23 [0] : vector<256x256xf32> to vector<256xf32>
    %53 = vector.shape_cast %52 : vector<256xf32> to vector<1x256xf32>
    %cst_24 = arith.constant 3.906250e-03 : f32
    %54 = vector.broadcast %cst_24 : f32 to vector<1x256xf32>
    %55 = arith.mulf %53, %54 : vector<1x256xf32>
    %56 = arith.mulf %50, %50 : vector<1x256xf32>
    %57 = arith.subf %55, %56 : vector<1x256xf32>
    %cst_25 = arith.constant 9.99999974E-6 : f32
    %58 = vector.broadcast %cst_25 : f32 to vector<1x256xf32>
    %59 = arith.addf %57, %58 : vector<1x256xf32>
    %60 = math.rsqrt %59 : vector<1x256xf32>
    %c0_26 = arith.constant 0 : index
    %c0_27 = arith.constant 0 : index
    %61 = vector.load %arg6[%c0_26, %c0_27] : memref<1x256xf32, #tpu.memory_space<vmem>>, vector<1x256xf32>
    %62 = arith.mulf %60, %61 : vector<1x256xf32>
    %c0_28 = arith.constant 0 : index
    %c0_29 = arith.constant 0 : index
    %63 = vector.load %arg7[%c0_28, %c0_29] : memref<1x256xf32, #tpu.memory_space<vmem>>, vector<1x256xf32>
    %64 = arith.mulf %50, %62 : vector<1x256xf32>
    %65 = arith.subf %63, %64 : vector<1x256xf32>
    %66 = vector.broadcast %62 : vector<1x256xf32> to vector<256x256xf32>
    %67 = arith.mulf %46, %66 : vector<256x256xf32>
    %68 = vector.broadcast %65 : vector<1x256xf32> to vector<256x256xf32>
    %69 = arith.addf %67, %68 : vector<256x256xf32>
    %cst_30 = arith.constant 2.000000e+01 : f32
    %70 = vector.broadcast %cst_30 : f32 to vector<256x256xf32>
    %71 = arith.minimumf %69, %70 : vector<256x256xf32>
    %72 = math.exp %71 : vector<256x256xf32>
    %cst_31 = arith.constant 1.000000e+00 : f32
    %73 = vector.broadcast %cst_31 : f32 to vector<256x256xf32>
    %74 = arith.addf %73, %72 : vector<256x256xf32>
    %cst_32 = arith.constant 1.000000e+00 : f32
    %75 = vector.broadcast %cst_32 : f32 to vector<256x256xf32>
    %76 = arith.addf %75, %72 : vector<256x256xf32>
    %77 = arith.mulf %74, %76 : vector<256x256xf32>
    %cst_33 = arith.constant 1.000000e+00 : f32
    %78 = vector.broadcast %cst_33 : f32 to vector<256x256xf32>
    %79 = arith.subf %77, %78 : vector<256x256xf32>
    %cst_34 = arith.constant 1.000000e+00 : f32
    %80 = vector.broadcast %cst_34 : f32 to vector<256x256xf32>
    %81 = arith.addf %77, %80 : vector<256x256xf32>
    %82 = tpu.reciprocal %81 {approx = true} : vector<256x256xf32> -> vector<256x256xf32>
    %83 = arith.mulf %79, %82 : vector<256x256xf32>
    %cst_35 = arith.constant 2.000000e+01 : f32
    %84 = vector.broadcast %cst_35 : f32 to vector<256x256xf32>
    %85 = arith.cmpf ogt, %69, %84 : vector<256x256xf32>
    %86 = arith.mulf %69, %83 : vector<256x256xf32>
    %87 = arith.select %85, %69, %86 : vector<256x256xi1>, vector<256x256xf32>
    %88 = arith.truncf %87 : vector<256x256xf32> to vector<256x256xbf16>
    %c0_36 = arith.constant 0 : index
    %c0_37 = arith.constant 0 : index
    %89 = vector.load %arg8[%c0_36, %c0_37] : memref<256x256xbf16, #tpu.memory_space<vmem>>, vector<256x256xbf16>
    %cst_38 = arith.constant dense<0.000000e+00> : vector<256x256xf32>
    %90 = tpu.matmul %88, %89, %cst_38 {dimension_numbers = #tpu.dot_dimension_numbers<[1], [0], [0], [1], [0, 0, 1, 1], [], []>} : vector<256x256xbf16>, vector<256x256xbf16>, vector<256x256xf32> -> vector<256x256xf32>
    %c0_39 = arith.constant 0 : index
    %c0_40 = arith.constant 0 : index
    %91 = vector.load %arg9[%c0_39, %c0_40] : memref<1x256xf32, #tpu.memory_space<vmem>>, vector<1x256xf32>
    %92 = vector.broadcast %91 : vector<1x256xf32> to vector<256x256xf32>
    %93 = arith.addf %90, %92 : vector<256x256xf32>
    %94 = vector.extract_strided_slice %93 {offsets = [0, 0], sizes = [256, 128], strides = [1, 1]} : vector<256x256xf32> to vector<256x128xf32>
    %95 = vector.extract_strided_slice %93 {offsets = [0, 128], sizes = [256, 128], strides = [1, 1]} : vector<256x256xf32> to vector<256x128xf32>
    %cst_41 = arith.constant 5.000000e-01 : f32
    %96 = vector.broadcast %cst_41 : f32 to vector<256x128xf32>
    %97 = arith.mulf %96, %95 : vector<256x128xf32>
    %98 = math.exp %97 : vector<256x128xf32>
    %c0_42 = arith.constant 0 : index
    %c0_43 = arith.constant 0 : index
    %99 = vector.load %arg1[%c0_42, %c0_43] : memref<256x128xbf16, #tpu.memory_space<vmem>>, vector<256x128xbf16>
    %100 = arith.extf %99 : vector<256x128xbf16> to vector<256x128xf32>
    %101 = arith.mulf %98, %100 : vector<256x128xf32>
    %102 = arith.addf %94, %101 : vector<256x128xf32>
    %103 = arith.truncf %102 : vector<256x128xf32> to vector<256x128xbf16>
    %c0_44 = arith.constant 0 : index
    %c0_45 = arith.constant 0 : index
    %104 = vector.load %arg10[%c0_44, %c0_45] : memref<128x256xbf16, #tpu.memory_space<vmem>>, vector<128x256xbf16>
    %cst_46 = arith.constant dense<0.000000e+00> : vector<256x256xf32>
    %105 = tpu.matmul %103, %104, %cst_46 {dimension_numbers = #tpu.dot_dimension_numbers<[1], [0], [0], [1], [0, 0, 1, 1], [], []>} : vector<256x128xbf16>, vector<128x256xbf16>, vector<256x256xf32> -> vector<256x256xf32>
    %cst_47 = arith.constant dense<0.000000e+00> : vector<256xf32>
    %106 = vector.multi_reduction <add>, %105, %cst_47 [0] : vector<256x256xf32> to vector<256xf32>
    %107 = vector.shape_cast %106 : vector<256xf32> to vector<1x256xf32>
    %cst_48 = arith.constant 3.906250e-03 : f32
    %108 = vector.broadcast %cst_48 : f32 to vector<1x256xf32>
    %109 = arith.mulf %107, %108 : vector<1x256xf32>
    %110 = arith.mulf %105, %105 : vector<256x256xf32>
    %cst_49 = arith.constant dense<0.000000e+00> : vector<256xf32>
    %111 = vector.multi_reduction <add>, %110, %cst_49 [0] : vector<256x256xf32> to vector<256xf32>
    %112 = vector.shape_cast %111 : vector<256xf32> to vector<1x256xf32>
    %cst_50 = arith.constant 3.906250e-03 : f32
    %113 = vector.broadcast %cst_50 : f32 to vector<1x256xf32>
    %114 = arith.mulf %112, %113 : vector<1x256xf32>
    %115 = arith.mulf %109, %109 : vector<1x256xf32>
    %116 = arith.subf %114, %115 : vector<1x256xf32>
    %cst_51 = arith.constant 9.99999974E-6 : f32
    %117 = vector.broadcast %cst_51 : f32 to vector<1x256xf32>
    %118 = arith.addf %116, %117 : vector<1x256xf32>
    %119 = math.rsqrt %118 : vector<1x256xf32>
    %c0_52 = arith.constant 0 : index
    %c0_53 = arith.constant 0 : index
    %120 = vector.load %arg11[%c0_52, %c0_53] : memref<1x256xf32, #tpu.memory_space<vmem>>, vector<1x256xf32>
    %121 = arith.mulf %119, %120 : vector<1x256xf32>
    %c0_54 = arith.constant 0 : index
    %c0_55 = arith.constant 0 : index
    %122 = vector.load %arg12[%c0_54, %c0_55] : memref<1x256xf32, #tpu.memory_space<vmem>>, vector<1x256xf32>
    %123 = arith.mulf %109, %121 : vector<1x256xf32>
    %124 = arith.subf %122, %123 : vector<1x256xf32>
    %125 = vector.broadcast %121 : vector<1x256xf32> to vector<256x256xf32>
    %126 = arith.mulf %105, %125 : vector<256x256xf32>
    %127 = vector.broadcast %124 : vector<1x256xf32> to vector<256x256xf32>
    %128 = arith.addf %126, %127 : vector<256x256xf32>
    %cst_56 = arith.constant 2.000000e+01 : f32
    %129 = vector.broadcast %cst_56 : f32 to vector<256x256xf32>
    %130 = arith.minimumf %128, %129 : vector<256x256xf32>
    %131 = math.exp %130 : vector<256x256xf32>
    %cst_57 = arith.constant 1.000000e+00 : f32
    %132 = vector.broadcast %cst_57 : f32 to vector<256x256xf32>
    %133 = arith.addf %132, %131 : vector<256x256xf32>
    %cst_58 = arith.constant 1.000000e+00 : f32
    %134 = vector.broadcast %cst_58 : f32 to vector<256x256xf32>
    %135 = arith.addf %134, %131 : vector<256x256xf32>
    %136 = arith.mulf %133, %135 : vector<256x256xf32>
    %cst_59 = arith.constant 1.000000e+00 : f32
    %137 = vector.broadcast %cst_59 : f32 to vector<256x256xf32>
    %138 = arith.subf %136, %137 : vector<256x256xf32>
    %cst_60 = arith.constant 1.000000e+00 : f32
    %139 = vector.broadcast %cst_60 : f32 to vector<256x256xf32>
    %140 = arith.addf %136, %139 : vector<256x256xf32>
    %141 = tpu.reciprocal %140 {approx = true} : vector<256x256xf32> -> vector<256x256xf32>
    %142 = arith.mulf %138, %141 : vector<256x256xf32>
    %cst_61 = arith.constant 2.000000e+01 : f32
    %143 = vector.broadcast %cst_61 : f32 to vector<256x256xf32>
    %144 = arith.cmpf ogt, %128, %143 : vector<256x256xf32>
    %145 = arith.mulf %128, %142 : vector<256x256xf32>
    %146 = arith.select %144, %128, %145 : vector<256x256xi1>, vector<256x256xf32>
    %147 = arith.truncf %146 : vector<256x256xf32> to vector<256x256xbf16>
    %c0_62 = arith.constant 0 : index
    %c0_63 = arith.constant 0 : index
    %148 = vector.load %arg13[%c0_62, %c0_63] : memref<256x256xbf16, #tpu.memory_space<vmem>>, vector<256x256xbf16>
    %cst_64 = arith.constant dense<0.000000e+00> : vector<256x256xf32>
    %149 = tpu.matmul %147, %148, %cst_64 {dimension_numbers = #tpu.dot_dimension_numbers<[1], [0], [0], [1], [0, 0, 1, 1], [], []>} : vector<256x256xbf16>, vector<256x256xbf16>, vector<256x256xf32> -> vector<256x256xf32>
    %cst_65 = arith.constant dense<0.000000e+00> : vector<256xf32>
    %150 = vector.multi_reduction <add>, %149, %cst_65 [0] : vector<256x256xf32> to vector<256xf32>
    %151 = vector.shape_cast %150 : vector<256xf32> to vector<1x256xf32>
    %cst_66 = arith.constant 3.906250e-03 : f32
    %152 = vector.broadcast %cst_66 : f32 to vector<1x256xf32>
    %153 = arith.mulf %151, %152 : vector<1x256xf32>
    %154 = arith.mulf %149, %149 : vector<256x256xf32>
    %cst_67 = arith.constant dense<0.000000e+00> : vector<256xf32>
    %155 = vector.multi_reduction <add>, %154, %cst_67 [0] : vector<256x256xf32> to vector<256xf32>
    %156 = vector.shape_cast %155 : vector<256xf32> to vector<1x256xf32>
    %cst_68 = arith.constant 3.906250e-03 : f32
    %157 = vector.broadcast %cst_68 : f32 to vector<1x256xf32>
    %158 = arith.mulf %156, %157 : vector<1x256xf32>
    %159 = arith.mulf %153, %153 : vector<1x256xf32>
    %160 = arith.subf %158, %159 : vector<1x256xf32>
    %cst_69 = arith.constant 9.99999974E-6 : f32
    %161 = vector.broadcast %cst_69 : f32 to vector<1x256xf32>
    %162 = arith.addf %160, %161 : vector<1x256xf32>
    %163 = math.rsqrt %162 : vector<1x256xf32>
    %c0_70 = arith.constant 0 : index
    %c0_71 = arith.constant 0 : index
    %164 = vector.load %arg14[%c0_70, %c0_71] : memref<1x256xf32, #tpu.memory_space<vmem>>, vector<1x256xf32>
    %165 = arith.mulf %163, %164 : vector<1x256xf32>
    %c0_72 = arith.constant 0 : index
    %c0_73 = arith.constant 0 : index
    %166 = vector.load %arg15[%c0_72, %c0_73] : memref<1x256xf32, #tpu.memory_space<vmem>>, vector<1x256xf32>
    %167 = arith.mulf %153, %165 : vector<1x256xf32>
    %168 = arith.subf %166, %167 : vector<1x256xf32>
    %169 = vector.broadcast %165 : vector<1x256xf32> to vector<256x256xf32>
    %170 = arith.mulf %149, %169 : vector<256x256xf32>
    %171 = vector.broadcast %168 : vector<1x256xf32> to vector<256x256xf32>
    %172 = arith.addf %170, %171 : vector<256x256xf32>
    %cst_74 = arith.constant 2.000000e+01 : f32
    %173 = vector.broadcast %cst_74 : f32 to vector<256x256xf32>
    %174 = arith.minimumf %172, %173 : vector<256x256xf32>
    %175 = math.exp %174 : vector<256x256xf32>
    %cst_75 = arith.constant 1.000000e+00 : f32
    %176 = vector.broadcast %cst_75 : f32 to vector<256x256xf32>
    %177 = arith.addf %176, %175 : vector<256x256xf32>
    %cst_76 = arith.constant 1.000000e+00 : f32
    %178 = vector.broadcast %cst_76 : f32 to vector<256x256xf32>
    %179 = arith.addf %178, %175 : vector<256x256xf32>
    %180 = arith.mulf %177, %179 : vector<256x256xf32>
    %cst_77 = arith.constant 1.000000e+00 : f32
    %181 = vector.broadcast %cst_77 : f32 to vector<256x256xf32>
    %182 = arith.subf %180, %181 : vector<256x256xf32>
    %cst_78 = arith.constant 1.000000e+00 : f32
    %183 = vector.broadcast %cst_78 : f32 to vector<256x256xf32>
    %184 = arith.addf %180, %183 : vector<256x256xf32>
    %185 = tpu.reciprocal %184 {approx = true} : vector<256x256xf32> -> vector<256x256xf32>
    %186 = arith.mulf %182, %185 : vector<256x256xf32>
    %cst_79 = arith.constant 2.000000e+01 : f32
    %187 = vector.broadcast %cst_79 : f32 to vector<256x256xf32>
    %188 = arith.cmpf ogt, %172, %187 : vector<256x256xf32>
    %189 = arith.mulf %172, %186 : vector<256x256xf32>
    %190 = arith.select %188, %172, %189 : vector<256x256xi1>, vector<256x256xf32>
    %191 = arith.truncf %190 : vector<256x256xf32> to vector<256x256xbf16>
    %c0_80 = arith.constant 0 : index
    %c0_81 = arith.constant 0 : index
    %192 = vector.load %arg16[%c0_80, %c0_81] : memref<256x128xbf16, #tpu.memory_space<vmem>>, vector<256x128xbf16>
    %cst_82 = arith.constant dense<0.000000e+00> : vector<256x128xf32>
    %193 = tpu.matmul %191, %192, %cst_82 {dimension_numbers = #tpu.dot_dimension_numbers<[1], [0], [0], [1], [0, 0, 1, 1], [], []>} : vector<256x256xbf16>, vector<256x128xbf16>, vector<256x128xf32> -> vector<256x128xf32>
    %c0_83 = arith.constant 0 : index
    %c0_84 = arith.constant 0 : index
    %194 = vector.load %arg17[%c0_83, %c0_84] : memref<1x128xf32, #tpu.memory_space<vmem>>, vector<1x128xf32>
    %195 = vector.broadcast %194 : vector<1x128xf32> to vector<256x128xf32>
    %196 = arith.addf %193, %195 : vector<256x128xf32>
    %c0_85 = arith.constant 0 : index
    %c0_86 = arith.constant 0 : index
    %197 = vector.load %arg18[%c0_85, %c0_86] : memref<256x128xf32, #tpu.memory_space<vmem>>, vector<256x128xf32>
    tpu.vector_store %arg18[%c0_85, %c0_86], %196 {strides = array<i32>} : memref<256x128xf32, #tpu.memory_space<vmem>>, vector<256x128xf32>,
    %198 = arith.truncf %94 : vector<256x128xf32> to vector<256x128xbf16>
    %c0_87 = arith.constant 0 : index
    %c0_88 = arith.constant 0 : index
    %199 = vector.load %arg19[%c0_87, %c0_88] : memref<256x128xbf16, #tpu.memory_space<vmem>>, vector<256x128xbf16>
    tpu.vector_store %arg19[%c0_87, %c0_88], %198 {strides = array<i32>} : memref<256x128xbf16, #tpu.memory_space<vmem>>, vector<256x128xbf16>,
    %200 = arith.truncf %95 : vector<256x128xf32> to vector<256x128xbf16>
    %c0_89 = arith.constant 0 : index
    %c0_90 = arith.constant 0 : index
    %201 = vector.load %arg20[%c0_89, %c0_90] : memref<256x128xbf16, #tpu.memory_space<vmem>>, vector<256x128xbf16>
    tpu.vector_store %arg20[%c0_89, %c0_90], %200 {strides = array<i32>} : memref<256x128xbf16, #tpu.memory_space<vmem>>, vector<256x128xbf16>,
    return
  }
}

</mosaic_0001>

<llo_original>
// kernel: tpu_custom_call.1
$region0: #{tpu_custom_call.1}
  #allocation0 [shape = 'u32[]', space=smem, size = 0x4, offset = 0x4, fixed_abs, tag = 'smem constant byte address 0x4 - core index']
  #allocation1 [shape = 'u32[144,128]{1,0:T(1,128)}', space=vmem, size = 0x12000, scoped, tag = 'internal scratch']
  %s0 = inlined_call_operand.hbm [shape: bf16[256,128], index: 0, kind: input, shape index: {}]
  %s1 = inlined_call_operand.hbm [shape: bf16[256,128], index: 1, kind: input, shape index: {}]
  %s2 = inlined_call_operand.hbm [shape: bf16[128,256], index: 2, kind: input, shape index: {}]
  %s3 = inlined_call_operand.vmem [shape: f32[1,256], index: 3, kind: input, shape index: {}]
  %s4 = inlined_call_operand.vmem [shape: f32[1,256], index: 4, kind: input, shape index: {}]
  %s5 = inlined_call_operand.hbm [shape: bf16[256,256], index: 5, kind: input, shape index: {}]
  %s6 = inlined_call_operand.vmem [shape: f32[1,256], index: 6, kind: input, shape index: {}]
  %s7 = inlined_call_operand.vmem [shape: f32[1,256], index: 7, kind: input, shape index: {}]
  %s8 = inlined_call_operand.hbm [shape: bf16[256,256], index: 8, kind: input, shape index: {}]
  %s9 = inlined_call_operand.vmem [shape: f32[1,256], index: 9, kind: input, shape index: {}]
  %s10 = inlined_call_operand.hbm [shape: bf16[128,256], index: 10, kind: input, shape index: {}]
  %s11 = inlined_call_operand.vmem [shape: f32[1,256], index: 11, kind: input, shape index: {}]
  %s12 = inlined_call_operand.vmem [shape: f32[1,256], index: 12, kind: input, shape index: {}]
  %s13 = inlined_call_operand.hbm [shape: bf16[256,256], index: 13, kind: input, shape index: {}]
  %s14 = inlined_call_operand.vmem [shape: f32[1,256], index: 14, kind: input, shape index: {}]
  %s15 = inlined_call_operand.vmem [shape: f32[1,256], index: 15, kind: input, shape index: {}]
  %s16 = inlined_call_operand.hbm [shape: bf16[256,128], index: 16, kind: input, shape index: {}]
  %s17 = inlined_call_operand.vmem [shape: f32[1,128], index: 17, kind: input, shape index: {}]
  %s18 = inlined_call_operand.hbm [shape: f32[256,128], index: 18, kind: output, shape index: {0}]
  %s19 = inlined_call_operand.hbm [shape: bf16[256,128], index: 19, kind: output, shape index: {1}]
  %s20 = inlined_call_operand.hbm [shape: bf16[256,128], index: 20, kind: output, shape index: {2}]
  %21 = xla_tuple %s18, %s19, %s20
  %s22 = sld [smem:[#allocation0]]
  $region130: #{tpu_custom_call.1} parent=0
    _
  %s24 = ssub.s32 1, %s22
  %s25 = scalar_select 0, %s24, %s22
  $region1: #{tpu_custom_call.1} parent=0
    #allocation2 [shape = 'u8[65536]{0}', space=vmem, size = 0x10000, scoped, tag = 'input window, operand 0, single buffered']
    #allocation3 [shape = 's32[1]{0}', space=sflag, size = 0x4, scoped, tag = 'scoped memory for tpu_custom_call.1']
    #allocation4 [shape = 's32[1]{0}', space=sflag, size = 0x4, scoped, tag = 'scoped memory for tpu_custom_call.1']
    #allocation5 [shape = 'u8[65536]{0}', space=vmem, size = 0x10000, scoped, tag = 'input window, operand 1, single buffered']
    #allocation6 [shape = 's32[1]{0}', space=sflag, size = 0x4, scoped, tag = 'scoped memory for tpu_custom_call.1']
    #allocation7 [shape = 'u8[65536]{0}', space=vmem, size = 0x10000, scoped, tag = 'input window, operand 2, single buffered']
    #allocation8 [shape = 'u8[131072]{0}', space=vmem, size = 0x20000, scoped, tag = 'input window, operand 5, single buffered']
    #allocation9 [shape = 's32[1]{0}', space=sflag, size = 0x4, scoped, tag = 'scoped memory for tpu_custom_call.1']
    #allocation10 [shape = 'u8[131072]{0}', space=vmem, size = 0x20000, scoped, tag = 'input window, operand 8, single buffered']
    #allocation11 [shape = 'u8[65536]{0}', space=vmem, size = 0x10000, scoped, tag = 'input window, operand 10, single buffered']
    #allocation12 [shape = 's32[1]{0}', space=sflag, size = 0x4, scoped, tag = 'scoped memory for tpu_custom_call.1']
    #allocation13 [shape = 'u8[131072]{0}', space=vmem, size = 0x20000, scoped, tag = 'input window, operand 13, single buffered']
    #allocation14 [shape = 'u8[65536]{0}', space=vmem, size = 0x10000, scoped, tag = 'input window, operand 16, single buffered']
    #allocation15 [shape = 's32[1]{0}', space=sflag, size = 0x4, scoped, tag = 'scoped memory for tpu_custom_call.1']
    #allocation16 [shape = 'u8[131072]{0}', space=vmem, size = 0x20000, scoped, tag = 'output window, operand 0, single buffered']
    #allocation17 [shape = 'u8[65536]{0}', space=vmem, size = 0x10000, scoped, tag = 'output window, operand 1, single buffered']
    #allocation18 [shape = 's32[1]{0}', space=sflag, size = 0x4, scoped, tag = 'scoped memory for tpu_custom_call.1']
    #allocation19 [shape = 'u8[65536]{0}', space=vmem, size = 0x10000, scoped, tag = 'output window, operand 2, single buffered']
    %26 = vsyncpa [#allocation3], 0
    %27 = vsyncpa [#allocation6], 0
    %28 = vsyncpa [#allocation9], 0
    %29 = vsyncpa [#allocation12], 0
    %30 = vsyncpa [#allocation15], 0
    %31 = vsyncpa [#allocation4], 0
    %32 = vsyncpa [#allocation18], 0
    // Predicated region
    $region2: #{tpu_custom_call.1} parent=1 // pred_check
      _
    $region3: #{tpu_custom_call.1} parent=1 // pred_check_branch
      %34 = sbr.rel (0) target = $region5
    $region4: #{tpu_custom_call.1} parent=1 // pred_region
      %s36 = ssub.s32 2048, 2048
      %37 = vsyncadd [#allocation3], %s36
      %s38 = sshll.u32 [#allocation2], 4
      %s39 = int_to_ptr.vmem [resolvable:$true] %s38
      %44 = dma.hbm_to_vmem [thread:$0]  %s0, 2048, %s39, [#allocation3], 64, 64, 4
    $region5: #{tpu_custom_call.1} parent=1 // pred_fallthru
      _
    // Predicated region
    $region6: #{tpu_custom_call.1} parent=1 // pred_check
      _
    $region7: #{tpu_custom_call.1} parent=1 // pred_check_branch
      %46 = sbr.rel (0) target = $region9
    $region8: #{tpu_custom_call.1} parent=1 // pred_region
      %s48 = ssub.s32 2048, 2048
      %49 = vsyncadd [#allocation6], %s48
      %s50 = sshll.u32 [#allocation5], 4
      %s51 = int_to_ptr.vmem [resolvable:$true] %s50
      %56 = dma.hbm_to_vmem [thread:$0]  %s1, 2048, %s51, [#allocation6], 64, 64, 4
    $region9: #{tpu_custom_call.1} parent=1 // pred_fallthru
      _
    // Predicated region
    $region10: #{tpu_custom_call.1} parent=1 // pred_check
      _
    $region11: #{tpu_custom_call.1} parent=1 // pred_check_branch
      %58 = sbr.rel (0) target = $region13
    $region12: #{tpu_custom_call.1} parent=1 // pred_region
      %s60 = ssub.s32 2048, 2048
      %61 = vsyncadd [#allocation6], %s60
      %s62 = sshll.u32 [#allocation7], 4
      %s63 = int_to_ptr.vmem [resolvable:$true] %s62
      %68 = dma.hbm_to_vmem [thread:$0]  %s2, 2048, %s63, [#allocation6], 128, 128, 8
    $region13: #{tpu_custom_call.1} parent=1 // pred_fallthru
      _
    // Predicated region
    $region14: #{tpu_custom_call.1} parent=1 // pred_check
      _
    $region15: #{tpu_custom_call.1} parent=1 // pred_check_branch
      %70 = sbr.rel (0) target = $region17
    $region16: #{tpu_custom_call.1} parent=1 // pred_region
      _
    $region17: #{tpu_custom_call.1} parent=1 // pred_fallthru
      _
    // Predicated region
    $region18: #{tpu_custom_call.1} parent=1 // pred_check
      _
    $region19: #{tpu_custom_call.1} parent=1 // pred_check_branch
      %72 = sbr.rel (0) target = $region21
    $region20: #{tpu_custom_call.1} parent=1 // pred_region
      _
    $region21: #{tpu_custom_call.1} parent=1 // pred_fallthru
      _
    // Predicated region
    $region22: #{tpu_custom_call.1} parent=1 // pred_check
      _
    $region23: #{tpu_custom_call.1} parent=1 // pred_check_branch
      %74 = sbr.rel (0) target = $region25
    $region24: #{tpu_custom_call.1} parent=1 // pred_region
      %s76 = ssub.s32 4096, 4096
      %77 = vsyncadd [#allocation9], %s76
      %s78 = sshll.u32 [#allocation8], 4
      %s79 = int_to_ptr.vmem [resolvable:$true] %s78
      %84 = dma.hbm_to_vmem [thread:$0]  %s5, 4096, %s79, [#allocation9], 128, 128, 8
    $region25: #{tpu_custom_call.1} parent=1 // pred_fallthru
      _
    // Predicated region
    $region26: #{tpu_custom_call.1} parent=1 // pred_check
      _
    $region27: #{tpu_custom_call.1} parent=1 // pred_check_branch
      %86 = sbr.rel (0) target = $region29
    $region28: #{tpu_custom_call.1} parent=1 // pred_region
      _
    $region29: #{tpu_custom_call.1} parent=1 // pred_fallthru
      _
    // Predicated region
    $region30: #{tpu_custom_call.1} parent=1 // pred_check
      _
    $region31: #{tpu_custom_call.1} parent=1 // pred_check_branch
      %88 = sbr.rel (0) target = $region33
    $region32: #{tpu_custom_call.1} parent=1 // pred_region
      _
    $region33: #{tpu_custom_call.1} parent=1 // pred_fallthru
      _
    // Predicated region
    $region34: #{tpu_custom_call.1} parent=1 // pred_check
      _
    $region35: #{tpu_custom_call.1} parent=1 // pred_check_branch
      %90 = sbr.rel (0) target = $region37
    $region36: #{tpu_custom_call.1} parent=1 // pred_region
      %s92 = ssub.s32 4096, 4096
      %93 = vsyncadd [#allocation9], %s92
      %s94 = sshll.u32 [#allocation10], 4
      %s95 = int_to_ptr.vmem [resolvable:$true] %s94
      %100 = dma.hbm_to_vmem [thread:$0]  %s8, 4096, %s95, [#allocation9], 128, 128, 8
    $region37: #{tpu_custom_call.1} parent=1 // pred_fallthru
      _
    // Predicated region
    $region38: #{tpu_custom_call.1} parent=1 // pred_check
      _
    $region39: #{tpu_custom_call.1} parent=1 // pred_check_branch
      %102 = sbr.rel (0) target = $region41
    $region40: #{tpu_custom_call.1} parent=1 // pred_region
      _
    $region41: #{tpu_custom_call.1} parent=1 // pred_fallthru
      _
    // Predicated region
    $region42: #{tpu_custom_call.1} parent=1 // pred_check
      _
    $region43: #{tpu_custom_call.1} parent=1 // pred_check_branch
      %104 = sbr.rel (0) target = $region45
    $region44: #{tpu_custom_call.1} parent=1 // pred_region
      %s106 = ssub.s32 2048, 2048
      %107 = vsyncadd [#allocation12], %s106
      %s108 = sshll.u32 [#allocation11], 4
      %s109 = int_to_ptr.vmem [resolvable:$true] %s108
      %114 = dma.hbm_to_vmem [thread:$0]  %s10, 2048, %s109, [#allocation12], 128, 128, 8
    $region45: #{tpu_custom_call.1} parent=1 // pred_fallthru
      _
    // Predicated region
    $region46: #{tpu_custom_call.1} parent=1 // pred_check
      _
    $region47: #{tpu_custom_call.1} parent=1 // pred_check_branch
      %116 = sbr.rel (0) target = $region49
    $region48: #{tpu_custom_call.1} parent=1 // pred_region
      _
    $region49: #{tpu_custom_call.1} parent=1 // pred_fallthru
      _
    // Predicated region
    $region50: #{tpu_custom_call.1} parent=1 // pred_check
      _
    $region51: #{tpu_custom_call.1} parent=1 // pred_check_branch
      %118 = sbr.rel (0) target = $region53
    $region52: #{tpu_custom_call.1} parent=1 // pred_region
      _
    $region53: #{tpu_custom_call.1} parent=1 // pred_fallthru
      _
    // Predicated region
    $region54: #{tpu_custom_call.1} parent=1 // pred_check
      _
    $region55: #{tpu_custom_call.1} parent=1 // pred_check_branch
      %120 = sbr.rel (0) target = $region57
    $region56: #{tpu_custom_call.1} parent=1 // pred_region
      %s122 = ssub.s32 4096, 4096
      %123 = vsyncadd [#allocation12], %s122
      %s124 = sshll.u32 [#allocation13], 4
      %s125 = int_to_ptr.vmem [resolvable:$true] %s124
      %130 = dma.hbm_to_vmem [thread:$0]  %s13, 4096, %s125, [#allocation12], 128, 128, 8
    $region57: #{tpu_custom_call.1} parent=1 // pred_fallthru
      _
    // Predicated region
    $region58: #{tpu_custom_call.1} parent=1 // pred_check
      _
    $region59: #{tpu_custom_call.1} parent=1 // pred_check_branch
      %132 = sbr.rel (0) target = $region61
    $region60: #{tpu_custom_call.1} parent=1 // pred_region
      _
    $region61: #{tpu_custom_call.1} parent=1 // pred_fallthru
      _
    // Predicated region
    $region62: #{tpu_custom_call.1} parent=1 // pred_check
      _
    $region63: #{tpu_custom_call.1} parent=1 // pred_check_branch
      %134 = sbr.rel (0) target = $region65
    $region64: #{tpu_custom_call.1} parent=1 // pred_region
      _
    $region65: #{tpu_custom_call.1} parent=1 // pred_fallthru
      _
    // Predicated region
    $region66: #{tpu_custom_call.1} parent=1 // pred_check
      _
    $region67: #{tpu_custom_call.1} parent=1 // pred_check_branch
      %136 = sbr.rel (0) target = $region69
    $region68: #{tpu_custom_call.1} parent=1 // pred_region
      %s138 = ssub.s32 2048, 2048
      %139 = vsyncadd [#allocation15], %s138
      %s140 = sshll.u32 [#allocation14], 4
      %s141 = int_to_ptr.vmem [resolvable:$true] %s140
      %146 = dma.hbm_to_vmem [thread:$0]  %s16, 2048, %s141, [#allocation15], 64, 64, 4
    $region69: #{tpu_custom_call.1} parent=1 // pred_fallthru
      _
    // Predicated region
    $region70: #{tpu_custom_call.1} parent=1 // pred_check
      _
    $region71: #{tpu_custom_call.1} parent=1 // pred_check_branch
      %148 = sbr.rel (0) target = $region73
    $region72: #{tpu_custom_call.1} parent=1 // pred_region
      _
    $region73: #{tpu_custom_call.1} parent=1 // pred_fallthru
      _
    // Predicated region
    $region74: #{tpu_custom_call.1} parent=1 // pred_check
      _
    $region75: #{tpu_custom_call.1} parent=1 // pred_check_branch
      %150 = sbr.rel (0) target = $region77
    $region76: #{tpu_custom_call.1} parent=1 // pred_region
      %151 = dma.done [#allocation3], 2048
    $region77: #{tpu_custom_call.1} parent=1 // pred_fallthru
      _
    // Predicated region
    $region78: #{tpu_custom_call.1} parent=1 // pred_check
      _
    $region79: #{tpu_custom_call.1} parent=1 // pred_check_branch
      %153 = sbr.rel (0) target = $region81
    $region80: #{tpu_custom_call.1} parent=1 // pred_region
      %154 = dma.done [#allocation6], 2048
    $region81: #{tpu_custom_call.1} parent=1 // pred_fallthru
      _
    // Predicated region
    $region82: #{tpu_custom_call.1} parent=1 // pred_check
      _
    $region83: #{tpu_custom_call.1} parent=1 // pred_check_branch
      %156 = sbr.rel (0) target = $region85
    $region84: #{tpu_custom_call.1} parent=1 // pred_region
      %157 = dma.done [#allocation6], 2048
    $region85: #{tpu_custom_call.1} parent=1 // pred_fallthru
      _
    // Predicated region
    $region86: #{tpu_custom_call.1} parent=1 // pred_check
      _
    $region87: #{tpu_custom_call.1} parent=1 // pred_check_branch
      %159 = sbr.rel (0) target = $region89
    $region88: #{tpu_custom_call.1} parent=1 // pred_region
      %160 = dma.done [#allocation9], 4096
    $region89: #{tpu_custom_call.1} parent=1 // pred_fallthru
      _
    // Predicated region
    $region90: #{tpu_custom_call.1} parent=1 // pred_check
      _
    $region91: #{tpu_custom_call.1} parent=1 // pred_check_branch
      %162 = sbr.rel (0) target = $region93
    $region92: #{tpu_custom_call.1} parent=1 // pred_region
      %163 = dma.done [#allocation9], 4096
    $region93: #{tpu_custom_call.1} parent=1 // pred_fallthru
      _
    // Predicated region
    $region94: #{tpu_custom_call.1} parent=1 // pred_check
      _
    $region95: #{tpu_custom_call.1} parent=1 // pred_check_branch
      %165 = sbr.rel (0) target = $region97
    $region96: #{tpu_custom_call.1} parent=1 // pred_region
      %166 = dma.done [#allocation12], 2048
    $region97: #{tpu_custom_call.1} parent=1 // pred_fallthru
      _
    // Predicated region
    $region98: #{tpu_custom_call.1} parent=1 // pred_check
      _
    $region99: #{tpu_custom_call.1} parent=1 // pred_check_branch
      %168 = sbr.rel (0) target = $region101
    $region100: #{tpu_custom_call.1} parent=1 // pred_region
      %169 = dma.done [#allocation12], 4096
    $region101: #{tpu_custom_call.1} parent=1 // pred_fallthru
      _
    // Predicated region
    $region102: #{tpu_custom_call.1} parent=1 // pred_check
      _
    $region103: #{tpu_custom_call.1} parent=1 // pred_check_branch
      %171 = sbr.rel (0) target = $region105
    $region104: #{tpu_custom_call.1} parent=1 // pred_region
      %172 = dma.done [#allocation15], 2048
    $region105: #{tpu_custom_call.1} parent=1 // pred_fallthru
      _
    %v174 = vld [vmem:[#allocation2] sm:$0xf]
    %v175 = vld [vmem:[#allocation2 + $0x4] sm:$0xf]
    %v176 = vld [vmem:[#allocation2 + $0x8] sm:$0xf]
    %v177 = vld [vmem:[#allocation2 + $0xc] sm:$0xf]
    %v178 = vld [vmem:[#allocation2 + $0x10] sm:$0xf]
    %v179 = vld [vmem:[#allocation2 + $0x14] sm:$0xf]
    %v180 = vld [vmem:[#allocation2 + $0x18] sm:$0xf]
    %v181 = vld [vmem:[#allocation2 + $0x1c] sm:$0xf]
    %v182 = vld [vmem:[#allocation2 + $0x20] sm:$0xf]
    %v183 = vld [vmem:[#allocation2 + $0x24] sm:$0xf]
    %v184 = vld [vmem:[#allocation2 + $0x28] sm:$0xf]
    %v185 = vld [vmem:[#allocation2 + $0x2c] sm:$0xf]
    %v186 = vld [vmem:[#allocation2 + $0x30] sm:$0xf]
    %v187 = vld [vmem:[#allocation2 + $0x34] sm:$0xf]
    %v188 = vld [vmem:[#allocation2 + $0x38] sm:$0xf]
    %v189 = vld [vmem:[#allocation2 + $0x3c] sm:$0xf]
    %v190 = vld [vmem:[#allocation2 + $0x40] sm:$0xf]
    %v191 = vld [vmem:[#allocation2 + $0x44] sm:$0xf]
    %v192 = vld [vmem:[#allocation2 + $0x48] sm:$0xf]
    %v193 = vld [vmem:[#allocation2 + $0x4c] sm:$0xf]
    %v194 = vld [vmem:[#allocation2 + $0x50] sm:$0xf]
    %v195 = vld [vmem:[#allocation2 + $0x54] sm:$0xf]
    %v196 = vld [vmem:[#allocation2 + $0x58] sm:$0xf]
    %v197 = vld [vmem:[#allocation2 + $0x5c] sm:$0xf]
    %v198 = vld [vmem:[#allocation2 + $0x60] sm:$0xf]
    %v199 = vld [vmem:[#allocation2 + $0x64] sm:$0xf]
    %v200 = vld [vmem:[#allocation2 + $0x68] sm:$0xf]
    %v201 = vld [vmem:[#allocation2 + $0x6c] sm:$0xf]
    %v202 = vld [vmem:[#allocation2 + $0x70] sm:$0xf]
    %v203 = vld [vmem:[#allocation2 + $0x74] sm:$0xf]
    %v204 = vld [vmem:[#allocation2 + $0x78] sm:$0xf]
    %v205 = vld [vmem:[#allocation2 + $0x7c] sm:$0xf]
    %v206 = vld [vmem:[#allocation7] sm:$0xff]
    %v207 = vld [vmem:[#allocation7 + $0x8] sm:$0xff]
    %v208 = vld [vmem:[#allocation7 + $0x10] sm:$0xff]
    %v209 = vld [vmem:[#allocation7 + $0x18] sm:$0xff]
    %v210 = vld [vmem:[#allocation7 + $0x20] sm:$0xff]
    %v211 = vld [vmem:[#allocation7 + $0x28] sm:$0xff]
    %v212 = vld [vmem:[#allocation7 + $0x30] sm:$0xff]
    %v213 = vld [vmem:[#allocation7 + $0x38] sm:$0xff]
    %v214 = vld [vmem:[#allocation7 + $0x40] sm:$0xff]
    %v215 = vld [vmem:[#allocation7 + $0x48] sm:$0xff]
    %v216 = vld [vmem:[#allocation7 + $0x50] sm:$0xff]
    %v217 = vld [vmem:[#allocation7 + $0x58] sm:$0xff]
    %v218 = vld [vmem:[#allocation7 + $0x60] sm:$0xff]
    %v219 = vld [vmem:[#allocation7 + $0x68] sm:$0xff]
    %v220 = vld [vmem:[#allocation7 + $0x70] sm:$0xff]
    %v221 = vld [vmem:[#allocation7 + $0x78] sm:$0xff]
    %v254 = vunpack.c.l.b16 %v174
    %v255 = vunpack.c.l.b16 %v175
    %v256 = vunpack.c.l.b16 %v176
    %v257 = vunpack.c.l.b16 %v177
    %v258 = vunpack.c.l.b16 %v178
    %v259 = vunpack.c.l.b16 %v179
    %v260 = vunpack.c.l.b16 %v180
    %v261 = vunpack.c.l.b16 %v181
    %v262 = vunpack.c.l.b16 %v182
    %v263 = vunpack.c.l.b16 %v183
    %v264 = vunpack.c.l.b16 %v184
    %v265 = vunpack.c.l.b16 %v185
    %v266 = vunpack.c.l.b16 %v186
    %v267 = vunpack.c.l.b16 %v187
    %v268 = vunpack.c.l.b16 %v188
    %v269 = vunpack.c.l.b16 %v189
    %v270 = vunpack.c.l.b16 %v190
    %v271 = vunpack.c.l.b16 %v191
    %v272 = vunpack.c.l.b16 %v192
    %v273 = vunpack.c.l.b16 %v193
    %v274 = vunpack.c.l.b16 %v194
    %v275 = vunpack.c.l.b16 %v195
    %v276 = vunpack.c.l.b16 %v196
    %v277 = vunpack.c.l.b16 %v197
    %v278 = vunpack.c.l.b16 %v198
    %v279 = vunpack.c.l.b16 %v199
    %v280 = vunpack.c.l.b16 %v200
    %v281 = vunpack.c.l.b16 %v201
    %v282 = vunpack.c.l.b16 %v202
    %v283 = vunpack.c.l.b16 %v203
    %v284 = vunpack.c.l.b16 %v204
    %v285 = vunpack.c.l.b16 %v205
    %v286 = vpack.c.b16 %v255, %v254
    %v287 = vpack.c.b16 %v257, %v256
    %v288 = vpack.c.b16 %v259, %v258
    %v289 = vpack.c.b16 %v261, %v260
    %v290 = vpack.c.b16 %v263, %v262
    %v291 = vpack.c.b16 %v265, %v264
    %v292 = vpack.c.b16 %v267, %v266
    %v293 = vpack.c.b16 %v269, %v268
    %v294 = vpack.c.b16 %v271, %v270
    %v295 = vpack.c.b16 %v273, %v272
    %v296 = vpack.c.b16 %v275, %v274
    %v297 = vpack.c.b16 %v277, %v276
    %v298 = vpack.c.b16 %v279, %v278
    %v299 = vpack.c.b16 %v281, %v280
    %v300 = vpack.c.b16 %v283, %v282
    %v301 = vpack.c.b16 %v285, %v284
    %v334 = vunpack.c.l.b16 %v206
    %v335 = vunpack.c.h.b16 %v206
    %v336 = vunpack.c.l.b16 %v207
    %v337 = vunpack.c.h.b16 %v207
    %v338 = vunpack.c.l.b16 %v208
    %v339 = vunpack.c.h.b16 %v208
    %v340 = vunpack.c.l.b16 %v209
    %v341 = vunpack.c.h.b16 %v209
    %v342 = vunpack.c.l.b16 %v210
    %v343 = vunpack.c.h.b16 %v210
    %v344 = vunpack.c.l.b16 %v211
    %v345 = vunpack.c.h.b16 %v211
    %v346 = vunpack.c.l.b16 %v212
    %v347 = vunpack.c.h.b16 %v212
    %v348 = vunpack.c.l.b16 %v213
    %v349 = vunpack.c.h.b16 %v213
    %v350 = vunpack.c.l.b16 %v214
    %v351 = vunpack.c.h.b16 %v214
    %v352 = vunpack.c.l.b16 %v215
    %v353 = vunpack.c.h.b16 %v215
    %v354 = vunpack.c.l.b16 %v216
    %v355 = vunpack.c.h.b16 %v216
    %v356 = vunpack.c.l.b16 %v217
    %v357 = vunpack.c.h.b16 %v217
    %v358 = vunpack.c.l.b16 %v218
    %v359 = vunpack.c.h.b16 %v218
    %v360 = vunpack.c.l.b16 %v219
    %v361 = vunpack.c.h.b16 %v219
    %v362 = vunpack.c.l.b16 %v220
    %v363 = vunpack.c.h.b16 %v220
    %v364 = vunpack.c.l.b16 %v221
    %v365 = vunpack.c.h.b16 %v221
    %v366 = vpack.c.b16 %v336, %v334
    %v367 = vpack.c.b16 %v337, %v335
    %v368 = vpack.c.b16 %v340, %v338
    %v369 = vpack.c.b16 %v341, %v339
    %v370 = vpack.c.b16 %v344, %v342
    %v371 = vpack.c.b16 %v345, %v343
    %v372 = vpack.c.b16 %v348, %v346
    %v373 = vpack.c.b16 %v349, %v347
    %v374 = vpack.c.b16 %v352, %v350
    %v375 = vpack.c.b16 %v353, %v351
    %v376 = vpack.c.b16 %v356, %v354
    %v377 = vpack.c.b16 %v357, %v355
    %v378 = vpack.c.b16 %v360, %v358
    %v379 = vpack.c.b16 %v361, %v359
    %v380 = vpack.c.b16 %v364, %v362
    %v381 = vpack.c.b16 %v365, %v363
    %398 = vmatprep.subr.bf16.mxu0 %v367
    %399 = vmatpush1.bf16.msra.mxu0 %v366
    %400 = vmatprep.subr.bf16.mxu0 %v369
    %401 = vmatpush1.bf16.msra.mxu0 %v368
    %402 = vmatprep.subr.bf16.mxu0 %v371
    %403 = vmatpush1.bf16.msra.mxu0 %v370
    %404 = vmatprep.subr.bf16.mxu0 %v373
    %405 = vmatpush1.bf16.msra.mxu0 %v372
    %406 = vmatprep.subr.bf16.mxu0 %v375
    %407 = vmatpush1.bf16.msra.mxu0 %v374
    %408 = vmatprep.subr.bf16.mxu0 %v377
    %409 = vmatpush1.bf16.msra.mxu0 %v376
    %410 = vmatprep.subr.bf16.mxu0 %v379
    %411 = vmatpush1.bf16.msra.mxu0 %v378
    %412 = vmatprep.subr.bf16.mxu0 %v381
    %413 = vmatpush1.bf16.msra.mxu0 %v380
    %414 = vmatprep.subr.bf16.mxu0 0
    %415 = vmatpush1.bf16.msra.mxu0 0
    %416 = vmatprep.subr.bf16.mxu0 0
    %417 = vmatpush1.bf16.msra.mxu0 0
    %418 = vmatprep.subr.bf16.mxu0 0
    %419 = vmatpush1.bf16.msra.mxu0 0
    %420 = vmatprep.subr.bf16.mxu0 0
    %421 = vmatpush1.bf16.msra.mxu0 0
    %422 = vmatprep.subr.bf16.mxu0 0
    %423 = vmatpush1.bf16.msra.mxu0 0
    %424 = vmatprep.subr.bf16.mxu0 0
    %425 = vmatpush1.bf16.msra.mxu0 0
    %426 = vmatprep.subr.bf16.mxu0 0
    %427 = vmatpush1.bf16.msra.mxu0 0
    %428 = vmatprep.subr.bf16.mxu0 0
    %429 = vmatpush1.bf16.msra.mxu0 0
    %430 = vmatprep.mubr.bf16.mxu0 0
    %431 = vmatmul.mubr.bf16.gmra.mrb[0].mxu0 %v286
    %v432 = vpop.f32.mrb[0].mxu0
    %v433 = vadd.f32 0.0, %v432
    %v434 = vpop.f32.mrb[0].mxu0
    %v435 = vadd.f32 0.0, %v434
    %v436 = vpop.f32.mrb[0].mxu0
    %v437 = vadd.f32 0.0, %v436
    %v438 = vpop.f32.mrb[0].mxu0
    %v439 = vadd.f32 0.0, %v438
    %440 = vmatprep.mubr.bf16.mxu0 0
    %441 = vmatmul.mubr.bf16.gmra.mrb[0].mxu0 %v287
    %v442 = vpop.f32.mrb[0].mxu0
    %v443 = vadd.f32 0.0, %v442
    %v444 = vpop.f32.mrb[0].mxu0
    %v445 = vadd.f32 0.0, %v444
    %v446 = vpop.f32.mrb[0].mxu0
    %v447 = vadd.f32 0.0, %v446
    %v448 = vpop.f32.mrb[0].mxu0
    %v449 = vadd.f32 0.0, %v448
    %450 = vmatprep.mubr.bf16.mxu0 0
    %451 = vmatmul.mubr.bf16.gmra.mrb[0].mxu0 %v288
    %v452 = vpop.f32.mrb[0].mxu0
    %v453 = vadd.f32 0.0, %v452
    %v454 = vpop.f32.mrb[0].mxu0
    %v455 = vadd.f32 0.0, %v454
    %v456 = vpop.f32.mrb[0].mxu0
    %v457 = vadd.f32 0.0, %v456
    %v458 = vpop.f32.mrb[0].mxu0
    %v459 = vadd.f32 0.0, %v458
    %460 = vmatprep.mubr.bf16.mxu0 0
    %461 = vmatmul.mubr.bf16.gmra.mrb[0].mxu0 %v289
    %v462 = vpop.f32.mrb[0].mxu0
    %v463 = vadd.f32 0.0, %v462
    %v464 = vpop.f32.mrb[0].mxu0
    %v465 = vadd.f32 0.0, %v464
    %v466 = vpop.f32.mrb[0].mxu0
    %v467 = vadd.f32 0.0, %v466
    %v468 = vpop.f32.mrb[0].mxu0
    %v469 = vadd.f32 0.0, %v468
    %470 = vmatprep.mubr.bf16.mxu0 0
    %471 = vmatmul.mubr.bf16.gmra.mrb[0].mxu0 %v290
    %v472 = vpop.f32.mrb[0].mxu0
    %v473 = vadd.f32 0.0, %v472
    %v474 = vpop.f32.mrb[0].mxu0
    %v475 = vadd.f32 0.0, %v474
    %v476 = vpop.f32.mrb[0].mxu0
    %v477 = vadd.f32 0.0, %v476
    %v478 = vpop.f32.mrb[0].mxu0
    %v479 = vadd.f32 0.0, %v478
    %480 = vmatprep.mubr.bf16.mxu0 0
    %481 = vmatmul.mubr.bf16.gmra.mrb[0].mxu0 %v291
    %v482 = vpop.f32.mrb[0].mxu0
    %v483 = vadd.f32 0.0, %v482
    %v484 = vpop.f32.mrb[0].mxu0
    %v485 = vadd.f32 0.0, %v484
    %v486 = vpop.f32.mrb[0].mxu0
    %v487 = vadd.f32 0.0, %v486
    %v488 = vpop.f32.mrb[0].mxu0
    %v489 = vadd.f32 0.0, %v488
    %490 = vmatprep.mubr.bf16.mxu0 0
    %491 = vmatmul.mubr.bf16.gmra.mrb[0].mxu0 %v292
    %v492 = vpop.f32.mrb[0].mxu0
    %v493 = vadd.f32 0.0, %v492
    %v494 = vpop.f32.mrb[0].mxu0
    %v495 = vadd.f32 0.0, %v494
    %v496 = vpop.f32.mrb[0].mxu0
    %v497 = vadd.f32 0.0, %v496
    %v498 = vpop.f32.mrb[0].mxu0
    %v499 = vadd.f32 0.0, %v498
    %500 = vmatprep.mubr.bf16.mxu0 0
    %501 = vmatmul.mubr.bf16.gmra.mrb[0].mxu0 %v293
    %v502 = vpop.f32.mrb[0].mxu0
    %v503 = vadd.f32 0.0, %v502
    %v504 = vpop.f32.mrb[0].mxu0
    %v505 = vadd.f32 0.0, %v504
    %v506 = vpop.f32.mrb[0].mxu0
    %v507 = vadd.f32 0.0, %v506
    %v508 = vpop.f32.mrb[0].mxu0
    %v509 = vadd.f32 0.0, %v508
    %510 = vmatprep.mubr.bf16.mxu0 0
    %511 = vmatmul.mubr.bf16.gmra.mrb[0].mxu0 %v294
    %v512 = vpop.f32.mrb[0].mxu0
    %v513 = vadd.f32 0.0, %v512
    %v514 = vpop.f32.mrb[0].mxu0
    %v515 = vadd.f32 0.0, %v514
    %v516 = vpop.f32.mrb[0].mxu0
    %v517 = vadd.f32 0.0, %v516
    %v518 = vpop.f32.mrb[0].mxu0
    %v519 = vadd.f32 0.0, %v518
    %520 = vmatprep.mubr.bf16.mxu0 0
    %521 = vmatmul.mubr.bf16.gmra.mrb[0].mxu0 %v295
    %v522 = vpop.f32.mrb[0].mxu0
    %v523 = vadd.f32 0.0, %v522
    %v524 = vpop.f32.mrb[0].mxu0
    %v525 = vadd.f32 0.0, %v524
    %v526 = vpop.f32.mrb[0].mxu0
    %v527 = vadd.f32 0.0, %v526
    %v528 = vpop.f32.mrb[0].mxu0
    %v529 = vadd.f32 0.0, %v528
    %530 = vmatprep.mubr.bf16.mxu0 0
    %531 = vmatmul.mubr.bf16.gmra.mrb[0].mxu0 %v296
    %v532 = vpop.f32.mrb[0].mxu0
    %v533 = vadd.f32 0.0, %v532
    %v534 = vpop.f32.mrb[0].mxu0
    %v535 = vadd.f32 0.0, %v534
    %v536 = vpop.f32.mrb[0].mxu0
    %v537 = vadd.f32 0.0, %v536
    %v538 = vpop.f32.mrb[0].mxu0
    %v539 = vadd.f32 0.0, %v538
    %540 = vmatprep.mubr.bf16.mxu0 0
    %541 = vmatmul.mubr.bf16.gmra.mrb[0].mxu0 %v297
    %v542 = vpop.f32.mrb[0].mxu0
    %v543 = vadd.f32 0.0, %v542
    %v544 = vpop.f32.mrb[0].mxu0
    %v545 = vadd.f32 0.0, %v544
    %v546 = vpop.f32.mrb[0].mxu0
    %v547 = vadd.f32 0.0, %v546
    %v548 = vpop.f32.mrb[0].mxu0
    %v549 = vadd.f32 0.0, %v548
    %550 = vmatprep.mubr.bf16.mxu0 0
    %551 = vmatmul.mubr.bf16.gmra.mrb[0].mxu0 %v298
    %v552 = vpop.f32.mrb[0].mxu0
    %v553 = vadd.f32 0.0, %v552
    %v554 = vpop.f32.mrb[0].mxu0
    %v555 = vadd.f32 0.0, %v554
    %v556 = vpop.f32.mrb[0].mxu0
    %v557 = vadd.f32 0.0, %v556
    %v558 = vpop.f32.mrb[0].mxu0
    %v559 = vadd.f32 0.0, %v558
    %560 = vmatprep.mubr.bf16.mxu0 0
    %561 = vmatmul.mubr.bf16.gmra.mrb[0].mxu0 %v299
    %v562 = vpop.f32.mrb[0].mxu0
    %v563 = vadd.f32 0.0, %v562
    %v564 = vpop.f32.mrb[0].mxu0
    %v565 = vadd.f32 0.0, %v564
    %v566 = vpop.f32.mrb[0].mxu0
    %v567 = vadd.f32 0.0, %v566
    %v568 = vpop.f32.mrb[0].mxu0
    %v569 = vadd.f32 0.0, %v568
    %570 = vmatprep.mubr.bf16.mxu0 0
    %571 = vmatmul.mubr.bf16.gmra.mrb[0].mxu0 %v300
    %v572 = vpop.f32.mrb[0].mxu0
    %v573 = vadd.f32 0.0, %v572
    %v574 = vpop.f32.mrb[0].mxu0
    %v575 = vadd.f32 0.0, %v574
    %v576 = vpop.f32.mrb[0].mxu0
    %v577 = vadd.f32 0.0, %v576
    %v578 = vpop.f32.mrb[0].mxu0
    %v579 = vadd.f32 0.0, %v578
    %580 = vmatprep.mubr.bf16.mxu0 0
    %581 = vmatmul.mubr.bf16.gmra.mrb[0].mxu0 %v301
    %v582 = vpop.f32.mrb[0].mxu0
    %v583 = vadd.f32 0.0, %v582
    %v584 = vpop.f32.mrb[0].mxu0
    %v585 = vadd.f32 0.0, %v584
    %v586 = vpop.f32.mrb[0].mxu0
    %v587 = vadd.f32 0.0, %v586
    %v588 = vpop.f32.mrb[0].mxu0
    %v589 = vadd.f32 0.0, %v588
    %590 = vdwg.mxu0
    %v591 = vadd.f32 %v433, %v437
    %v592 = vadd.f32 %v591, %v443
    %v593 = vadd.f32 %v592, %v447
    %v594 = vadd.f32 %v593, %v453
    %v595 = vadd.f32 %v594, %v457
    %v596 = vadd.f32 %v595, %v463
    %v597 = vadd.f32 %v596, %v467
    %v598 = vadd.f32 %v597, %v473
    %v599 = vadd.f32 %v598, %v477
    %v600 = vadd.f32 %v599, %v483
    %v601 = vadd.f32 %v600, %v487
    %v602 = vadd.f32 %v601, %v493
    %v603 = vadd.f32 %v602, %v497
    %v604 = vadd.f32 %v603, %v503
    %v605 = vadd.f32 %v604, %v507
    %v606 = vadd.f32 %v605, %v513
    %v607 = vadd.f32 %v606, %v517
    %v608 = vadd.f32 %v607, %v523
    %v609 = vadd.f32 %v608, %v527
    %v610 = vadd.f32 %v609, %v533
    %v611 = vadd.f32 %v610, %v537
    %v612 = vadd.f32 %v611, %v543
    %v613 = vadd.f32 %v612, %v547
    %v614 = vadd.f32 %v613, %v553
    %v615 = vadd.f32 %v614, %v557
    %v616 = vadd.f32 %v615, %v563
    %v617 = vadd.f32 %v616, %v567
    %v618 = vadd.f32 %v617, %v573
    %v619 = vadd.f32 %v618, %v577
    %v620 = vadd.f32 %v619, %v583
    %v621 = vadd.f32 %v620, %v587
    %v622 = vrot.slane %v621, 4
    %v623 = vadd.f32 %v621, %v622
    %v624 = vrot.slane %v623, 2
    %v625 = vadd.f32 %v623, %v624
    %v626 = vrot.slane %v625, 1
    %v627 = vadd.f32 %v625, %v626
    %v628 = vadd.f32 %v435, %v439
    %v629 = vadd.f32 %v628, %v445
    %v630 = vadd.f32 %v629, %v449
    %v631 = vadd.f32 %v630, %v455
    %v632 = vadd.f32 %v631, %v459
    %v633 = vadd.f32 %v632, %v465
    %v634 = vadd.f32 %v633, %v469
    %v635 = vadd.f32 %v634, %v475
    %v636 = vadd.f32 %v635, %v479
    %v637 = vadd.f32 %v636, %v485
    %v638 = vadd.f32 %v637, %v489
    %v639 = vadd.f32 %v638, %v495
    %v640 = vadd.f32 %v639, %v499
    %v641 = vadd.f32 %v640, %v505
    %v642 = vadd.f32 %v641, %v509
    %v643 = vadd.f32 %v642, %v515
    %v644 = vadd.f32 %v643, %v519
    %v645 = vadd.f32 %v644, %v525
    %v646 = vadd.f32 %v645, %v529
    %v647 = vadd.f32 %v646, %v535
    %v648 = vadd.f32 %v647, %v539
    %v649 = vadd.f32 %v648, %v545
    %v650 = vadd.f32 %v649, %v549
    %v651 = vadd.f32 %v650, %v555
    %v652 = vadd.f32 %v651, %v559
    %v653 = vadd.f32 %v652, %v565
    %v654 = vadd.f32 %v653, %v569
    %v655 = vadd.f32 %v654, %v575
    %v656 = vadd.f32 %v655, %v579
    %v657 = vadd.f32 %v656, %v585
    %v658 = vadd.f32 %v657, %v589
    %v659 = vrot.slane %v658, 4
    %v660 = vadd.f32 %v658, %v659
    %v661 = vrot.slane %v660, 2
    %v662 = vadd.f32 %v660, %v661
    %v663 = vrot.slane %v662, 1
    %v664 = vadd.f32 %v662, %v663
    %v665 = vmul.f32 %v627, 0.00390625
    %v666 = vmul.f32 %v664, 0.00390625
    %v667 = vmul.f32 %v433, %v433
    %v668 = vmul.f32 %v435, %v435
    %v669 = vmul.f32 %v437, %v437
    %v670 = vmul.f32 %v439, %v439
    %v671 = vmul.f32 %v443, %v443
    %v672 = vmul.f32 %v445, %v445
    %v673 = vmul.f32 %v447, %v447
    %v674 = vmul.f32 %v449, %v449
    %v675 = vmul.f32 %v453, %v453
    %v676 = vmul.f32 %v455, %v455
    %v677 = vmul.f32 %v457, %v457
    %v678 = vmul.f32 %v459, %v459
    %v679 = vmul.f32 %v463, %v463
    %v680 = vmul.f32 %v465, %v465
    %v681 = vmul.f32 %v467, %v467
    %v682 = vmul.f32 %v469, %v469
    %v683 = vmul.f32 %v473, %v473
    %v684 = vmul.f32 %v475, %v475
    %v685 = vmul.f32 %v477, %v477
    %v686 = vmul.f32 %v479, %v479
    %v687 = vmul.f32 %v483, %v483
    %v688 = vmul.f32 %v485, %v485
    %v689 = vmul.f32 %v487, %v487
    %v690 = vmul.f32 %v489, %v489
    %v691 = vmul.f32 %v493, %v493
    %v692 = vmul.f32 %v495, %v495
    %v693 = vmul.f32 %v497, %v497
    %v694 = vmul.f32 %v499, %v499
    %v695 = vmul.f32 %v503, %v503
    %v696 = vmul.f32 %v505, %v505
    %v697 = vmul.f32 %v507, %v507
    %v698 = vmul.f32 %v509, %v509
    %v699 = vmul.f32 %v513, %v513
    %v700 = vmul.f32 %v515, %v515
    %v701 = vmul.f32 %v517, %v517
    %v702 = vmul.f32 %v519, %v519
    %v703 = vmul.f32 %v523, %v523
    %v704 = vmul.f32 %v525, %v525
    %v705 = vmul.f32 %v527, %v527
    %v706 = vmul.f32 %v529, %v529
    %v707 = vmul.f32 %v533, %v533
    %v708 = vmul.f32 %v535, %v535
    %v709 = vmul.f32 %v537, %v537
    %v710 = vmul.f32 %v539, %v539
    %v711 = vmul.f32 %v543, %v543
    %v712 = vmul.f32 %v545, %v545
    %v713 = vmul.f32 %v547, %v547
    %v714 = vmul.f32 %v549, %v549
    %v715 = vmul.f32 %v553, %v553
    %v716 = vmul.f32 %v555, %v555
    %v717 = vmul.f32 %v557, %v557
    %v718 = vmul.f32 %v559, %v559
    %v719 = vmul.f32 %v563, %v563
    %v720 = vmul.f32 %v565, %v565
    %v721 = vmul.f32 %v567, %v567
    %v722 = vmul.f32 %v569, %v569
    %v723 = vmul.f32 %v573, %v573
    %v724 = vmul.f32 %v575, %v575
    %v725 = vmul.f32 %v577, %v577
    %v726 = vmul.f32 %v579, %v579
    %v727 = vmul.f32 %v583, %v583
    %v728 = vmul.f32 %v585, %v585
    %v729 = vmul.f32 %v587, %v587
    %v730 = vmul.f32 %v589, %v589
    %v731 = vadd.f32 %v667, %v669
    %v732 = vadd.f32 %v731, %v671
    %v733 = vadd.f32 %v732, %v673
    %v734 = vadd.f32 %v733, %v675
    %v735 = vadd.f32 %v734, %v677
    %v736 = vadd.f32 %v735, %v679
    %v737 = vadd.f32 %v736, %v681
    %v738 = vadd.f32 %v737, %v683
    %v739 = vadd.f32 %v738, %v685
    %v740 = vadd.f32 %v739, %v687
    %v741 = vadd.f32 %v740, %v689
    %v742 = vadd.f32 %v741, %v691
    %v743 = vadd.f32 %v742, %v693
    %v744 = vadd.f32 %v743, %v695
    %v745 = vadd.f32 %v744, %v697
    %v746 = vadd.f32 %v745, %v699
    %v747 = vadd.f32 %v746, %v701
    %v748 = vadd.f32 %v747, %v703
    %v749 = vadd.f32 %v748, %v705
    %v750 = vadd.f32 %v749, %v707
    %v751 = vadd.f32 %v750, %v709
    %v752 = vadd.f32 %v751, %v711
    %v753 = vadd.f32 %v752, %v713
    %v754 = vadd.f32 %v753, %v715
    %v755 = vadd.f32 %v754, %v717
    %v756 = vadd.f32 %v755, %v719
    %v757 = vadd.f32 %v756, %v721
    %v758 = vadd.f32 %v757, %v723
    %v759 = vadd.f32 %v758, %v725
    %v760 = vadd.f32 %v759, %v727
    %v761 = vadd.f32 %v760, %v729
    %v762 = vrot.slane %v761, 4
    %v763 = vadd.f32 %v761, %v762
    %v764 = vrot.slane %v763, 2
    %v765 = vadd.f32 %v763, %v764
    %v766 = vrot.slane %v765, 1
    %v767 = vadd.f32 %v765, %v766
    %v768 = vadd.f32 %v668, %v670
    %v769 = vadd.f32 %v768, %v672
    %v770 = vadd.f32 %v769, %v674
    %v771 = vadd.f32 %v770, %v676
    %v772 = vadd.f32 %v771, %v678
    %v773 = vadd.f32 %v772, %v680
    %v774 = vadd.f32 %v773, %v682
    %v775 = vadd.f32 %v774, %v684
    %v776 = vadd.f32 %v775, %v686
    %v777 = vadd.f32 %v776, %v688
    %v778 = vadd.f32 %v777, %v690
    %v779 = vadd.f32 %v778, %v692
    %v780 = vadd.f32 %v779, %v694
    %v781 = vadd.f32 %v780, %v696
    %v782 = vadd.f32 %v781, %v698
    %v783 = vadd.f32 %v782, %v700
    %v784 = vadd.f32 %v783, %v702
    %v785 = vadd.f32 %v784, %v704
    %v786 = vadd.f32 %v785, %v706
    %v787 = vadd.f32 %v786, %v708
    %v788 = vadd.f32 %v787, %v710
    %v789 = vadd.f32 %v788, %v712
    %v790 = vadd.f32 %v789, %v714
    %v791 = vadd.f32 %v790, %v716
    %v792 = vadd.f32 %v791, %v718
    %v793 = vadd.f32 %v792, %v720
    %v794 = vadd.f32 %v793, %v722
    %v795 = vadd.f32 %v794, %v724
    %v796 = vadd.f32 %v795, %v726
    %v797 = vadd.f32 %v796, %v728
    %v798 = vadd.f32 %v797, %v730
    %v799 = vrot.slane %v798, 4
    %v800 = vadd.f32 %v798, %v799
    %v801 = vrot.slane %v800, 2
    %v802 = vadd.f32 %v800, %v801
    %v803 = vrot.slane %v802, 1
    %v804 = vadd.f32 %v802, %v803
    %v805 = vmul.f32 %v767, 0.00390625
    %v806 = vmul.f32 %v804, 0.00390625
    %v807 = vmul.f32 %v665, %v665
    %v808 = vmul.f32 %v666, %v666
    %v809 = vsub.f32 %v805, %v807
    %v810 = vsub.f32 %v806, %v808
    %v811 = vadd.f32 %v809, 1e-05
    %v812 = vadd.f32 %v810, 1e-05
    %v813 = vrsqrt.pop %v811
    %v814 = vrsqrt.pop %v812
    %v815 = vld [vmem:[%s3] sm:$0x3]
    %v817 = vlaneseq
    %v818 = vshrl.u32 %v817, 7
    %v819 = vsub.s32 0, %v818
    %v820 = vrot.slane %v815, %v819
    %v821 = vlaneseq
    %v822 = vshrl.u32 %v821, 7
    %v823 = vsub.s32 1, %v822
    %v824 = vrot.slane %v815, %v823
    %v827 = vmul.f32 %v813, %v820
    %v828 = vmul.f32 %v814, %v824
    %v829 = vld [vmem:[%s4] sm:$0x3]
    %v830 = vmul.f32 %v665, %v827
    %v831 = vmul.f32 %v666, %v828
    %v834 = vcombine.low %v830, %v831
    %v836 = vunpack.c.l.s4 1966171168
    %v837 = vunpack.c.0.s8 %v836
    %v838 = vlaneseq
    %v839 = vshrl.u32 %v838, 7
    %v840 = vsub.s32 %v837, %v839
    %v841 = vrot.slane %v834, %v840
    %v843 = vunpack.c.l.s4 1966171168
    %v844 = vunpack.c.0.s8 %v843
    %v845 = vlaneseq
    %v846 = vshrl.u32 %v845, 7
    %v847 = vsub.s32 %v844, %v846
    %v848 = vrot.slane %v841, %v847
    %v850 = vsub.f32 %v829, %v848
    %v851 = vlaneseq
    %v852 = vshrl.u32 %v851, 7
    %v853 = vsub.s32 0, %v852
    %v854 = vrot.slane %v827, %v853
    %v855 = vlaneseq
    %v856 = vshrl.u32 %v855, 7
    %v857 = vsub.s32 0, %v856
    %v858 = vrot.slane %v828, %v857
    %v859 = vmul.f32 %v433, %v854
    %v860 = vmul.f32 %v435, %v858
    %v861 = vmul.f32 %v437, %v854
    %v862 = vmul.f32 %v439, %v858
    %v863 = vmul.f32 %v443, %v854
    %v864 = vmul.f32 %v445, %v858
    %v865 = vmul.f32 %v447, %v854
    %v866 = vmul.f32 %v449, %v858
    %v867 = vmul.f32 %v453, %v854
    %v868 = vmul.f32 %v455, %v858
    %v869 = vmul.f32 %v457, %v854
    %v870 = vmul.f32 %v459, %v858
    %v871 = vmul.f32 %v463, %v854
    %v872 = vmul.f32 %v465, %v858
    %v873 = vmul.f32 %v467, %v854
    %v874 = vmul.f32 %v469, %v858
    %v875 = vmul.f32 %v473, %v854
    %v876 = vmul.f32 %v475, %v858
    %v877 = vmul.f32 %v477, %v854
    %v878 = vmul.f32 %v479, %v858
    %v879 = vmul.f32 %v483, %v854
    %v880 = vmul.f32 %v485, %v858
    %v881 = vmul.f32 %v487, %v854
    %v882 = vmul.f32 %v489, %v858
    %v883 = vmul.f32 %v493, %v854
    %v884 = vmul.f32 %v495, %v858
    %v885 = vmul.f32 %v497, %v854
    %v886 = vmul.f32 %v499, %v858
    %v887 = vmul.f32 %v503, %v854
    %v888 = vmul.f32 %v505, %v858
    %v889 = vmul.f32 %v507, %v854
    %v890 = vmul.f32 %v509, %v858
    %v891 = vmul.f32 %v513, %v854
    %v892 = vmul.f32 %v515, %v858
    %v893 = vmul.f32 %v517, %v854
    %v894 = vmul.f32 %v519, %v858
    %v895 = vmul.f32 %v523, %v854
    %v896 = vmul.f32 %v525, %v858
    %v897 = vmul.f32 %v527, %v854
    %v898 = vmul.f32 %v529, %v858
    %v899 = vmul.f32 %v533, %v854
    %v900 = vmul.f32 %v535, %v858
    %v901 = vmul.f32 %v537, %v854
    %v902 = vmul.f32 %v539, %v858
    %v903 = vmul.f32 %v543, %v854
    %v904 = vmul.f32 %v545, %v858
    %v905 = vmul.f32 %v547, %v854
    %v906 = vmul.f32 %v549, %v858
    %v907 = vmul.f32 %v553, %v854
    %v908 = vmul.f32 %v555, %v858
    %v909 = vmul.f32 %v557, %v854
    %v910 = vmul.f32 %v559, %v858
    %v911 = vmul.f32 %v563, %v854
    %v912 = vmul.f32 %v565, %v858
    %v913 = vmul.f32 %v567, %v854
    %v914 = vmul.f32 %v569, %v858
    %v915 = vmul.f32 %v573, %v854
    %v916 = vmul.f32 %v575, %v858
    %v917 = vmul.f32 %v577, %v854
    %v918 = vmul.f32 %v579, %v858
    %v919 = vmul.f32 %v583, %v854
    %v920 = vmul.f32 %v585, %v858
    %v921 = vmul.f32 %v587, %v854
    %v922 = vmul.f32 %v589, %v858
    %v924 = vlaneseq
    %v925 = vshrl.u32 %v924, 7
    %v926 = vsub.s32 0, %v925
    %v927 = vrot.slane %v850, %v926
    %v928 = vlaneseq
    %v929 = vshrl.u32 %v928, 7
    %v930 = vsub.s32 1, %v929
    %v931 = vrot.slane %v850, %v930
    %v934 = vadd.f32 %v859, %v927
    %v935 = vadd.f32 %v860, %v931
    %v936 = vadd.f32 %v861, %v927
    %v937 = vadd.f32 %v862, %v931
    %v938 = vadd.f32 %v863, %v927
    %v939 = vadd.f32 %v864, %v931
    %v940 = vadd.f32 %v865, %v927
    %v941 = vadd.f32 %v866, %v931
    %v942 = vadd.f32 %v867, %v927
    %v943 = vadd.f32 %v868, %v931
    %v944 = vadd.f32 %v869, %v927
    %v945 = vadd.f32 %v870, %v931
    %v946 = vadd.f32 %v871, %v927
    %v947 = vadd.f32 %v872, %v931
    %v948 = vadd.f32 %v873, %v927
    %v949 = vadd.f32 %v874, %v931
    %v950 = vadd.f32 %v875, %v927
    %v951 = vadd.f32 %v876, %v931
    %v952 = vadd.f32 %v877, %v927
    %v953 = vadd.f32 %v878, %v931
    %v954 = vadd.f32 %v879, %v927
    %v955 = vadd.f32 %v880, %v931
    %v956 = vadd.f32 %v881, %v927
    %v957 = vadd.f32 %v882, %v931
    %v958 = vadd.f32 %v883, %v927
    %v959 = vadd.f32 %v884, %v931
    %v960 = vadd.f32 %v885, %v927
    %v961 = vadd.f32 %v886, %v931
    %v962 = vadd.f32 %v887, %v927
    %v963 = vadd.f32 %v888, %v931
    %v964 = vadd.f32 %v889, %v927
    %v965 = vadd.f32 %v890, %v931
    %v966 = vadd.f32 %v891, %v927
    %v967 = vadd.f32 %v892, %v931
    %v968 = vadd.f32 %v893, %v927
    %v969 = vadd.f32 %v894, %v931
    %v970 = vadd.f32 %v895, %v927
    %v971 = vadd.f32 %v896, %v931
    %v972 = vadd.f32 %v897, %v927
    %v973 = vadd.f32 %v898, %v931
    %v974 = vadd.f32 %v899, %v927
    %v975 = vadd.f32 %v900, %v931
    %v976 = vadd.f32 %v901, %v927
    %v977 = vadd.f32 %v902, %v931
    %v978 = vadd.f32 %v903, %v927
    %v979 = vadd.f32 %v904, %v931
    %v980 = vadd.f32 %v905, %v927
    %v981 = vadd.f32 %v906, %v931
    %v982 = vadd.f32 %v907, %v927
    %v983 = vadd.f32 %v908, %v931
    %v984 = vadd.f32 %v909, %v927
    %v985 = vadd.f32 %v910, %v931
    %v986 = vadd.f32 %v911, %v927
    %v987 = vadd.f32 %v912, %v931
    %v988 = vadd.f32 %v913, %v927
    %v989 = vadd.f32 %v914, %v931
    %v990 = vadd.f32 %v915, %v927
    %v991 = vadd.f32 %v916, %v931
    %v992 = vadd.f32 %v917, %v927
    %v993 = vadd.f32 %v918, %v931
    %v994 = vadd.f32 %v919, %v927
    %v995 = vadd.f32 %v920, %v931
    %v996 = vadd.f32 %v921, %v927
    %v997 = vadd.f32 %v922, %v931
    %v998 = vmin.f32 %v934, 20.0
    %v999 = vmin.f32 %v935, 20.0
    %v1000 = vmin.f32 %v936, 20.0
    %v1001 = vmin.f32 %v937, 20.0
    %v1002 = vmin.f32 %v938, 20.0
    %v1003 = vmin.f32 %v939, 20.0
    %v1004 = vmin.f32 %v940, 20.0
    %v1005 = vmin.f32 %v941, 20.0
    %v1006 = vmin.f32 %v942, 20.0
    %v1007 = vmin.f32 %v943, 20.0
    %v1008 = vmin.f32 %v944, 20.0
    %v1009 = vmin.f32 %v945, 20.0
    %v1010 = vmin.f32 %v946, 20.0
    %v1011 = vmin.f32 %v947, 20.0
    %v1012 = vmin.f32 %v948, 20.0
    %v1013 = vmin.f32 %v949, 20.0
    %v1014 = vmin.f32 %v950, 20.0
    %v1015 = vmin.f32 %v951, 20.0
    %v1016 = vmin.f32 %v952, 20.0
    %v1017 = vmin.f32 %v953, 20.0
    %v1018 = vmin.f32 %v954, 20.0
    %v1019 = vmin.f32 %v955, 20.0
    %v1020 = vmin.f32 %v956, 20.0
    %v1021 = vmin.f32 %v957, 20.0
    %v1022 = vmin.f32 %v958, 20.0
    %v1023 = vmin.f32 %v959, 20.0
    %v1024 = vmin.f32 %v960, 20.0
    %v1025 = vmin.f32 %v961, 20.0
    %v1026 = vmin.f32 %v962, 20.0
    %v1027 = vmin.f32 %v963, 20.0
    %v1028 = vmin.f32 %v964, 20.0
    %v1029 = vmin.f32 %v965, 20.0
    %v1030 = vmin.f32 %v966, 20.0
    %v1031 = vmin.f32 %v967, 20.0
    %v1032 = vmin.f32 %v968, 20.0
    %v1033 = vmin.f32 %v969, 20.0
    %v1034 = vmin.f32 %v970, 20.0
    %v1035 = vmin.f32 %v971, 20.0
    %v1036 = vmin.f32 %v972, 20.0
    %v1037 = vmin.f32 %v973, 20.0
    %v1038 = vmin.f32 %v974, 20.0
    %v1039 = vmin.f32 %v975, 20.0
    %v1040 = vmin.f32 %v976, 20.0
    %v1041 = vmin.f32 %v977, 20.0
    %v1042 = vmin.f32 %v978, 20.0
    %v1043 = vmin.f32 %v979, 20.0
    %v1044 = vmin.f32 %v980, 20.0
    %v1045 = vmin.f32 %v981, 20.0
    %v1046 = vmin.f32 %v982, 20.0
    %v1047 = vmin.f32 %v983, 20.0
    %v1048 = vmin.f32 %v984, 20.0
    %v1049 = vmin.f32 %v985, 20.0
    %v1050 = vmin.f32 %v986, 20.0
    %v1051 = vmin.f32 %v987, 20.0
    %v1052 = vmin.f32 %v988, 20.0
    %v1053 = vmin.f32 %v989, 20.0
    %v1054 = vmin.f32 %v990, 20.0
    %v1055 = vmin.f32 %v991, 20.0
    %v1056 = vmin.f32 %v992, 20.0
    %v1057 = vmin.f32 %v993, 20.0
    %v1058 = vmin.f32 %v994, 20.0
    %v1059 = vmin.f32 %v995, 20.0
    %v1060 = vmin.f32 %v996, 20.0
    %v1061 = vmin.f32 %v997, 20.0
    %v1062 = vmul.f32 %v998, 1.442695
    %v1063 = vpow.pop %v1062
    %v1064 = vmul.f32 %v999, 1.442695
    %v1065 = vpow.pop %v1064
    %v1066 = vmul.f32 %v1000, 1.442695
    %v1067 = vpow.pop %v1066
    %v1068 = vmul.f32 %v1001, 1.442695
    %v1069 = vpow.pop %v1068
    %v1070 = vmul.f32 %v1002, 1.442695
    %v1071 = vpow.pop %v1070
    %v1072 = vmul.f32 %v1003, 1.442695
    %v1073 = vpow.pop %v1072
    %v1074 = vmul.f32 %v1004, 1.442695
    %v1075 = vpow.pop %v1074
    %v1076 = vmul.f32 %v1005, 1.442695
    %v1077 = vpow.pop %v1076
    %v1078 = vmul.f32 %v1006, 1.442695
    %v1079 = vpow.pop %v1078
    %v1080 = vmul.f32 %v1007, 1.442695
    %v1081 = vpow.pop %v1080
    %v1082 = vmul.f32 %v1008, 1.442695
    %v1083 = vpow.pop %v1082
    %v1084 = vmul.f32 %v1009, 1.442695
    %v1085 = vpow.pop %v1084
    %v1086 = vmul.f32 %v1010, 1.442695
    %v1087 = vpow.pop %v1086
    %v1088 = vmul.f32 %v1011, 1.442695
    %v1089 = vpow.pop %v1088
    %v1090 = vmul.f32 %v1012, 1.442695
    %v1091 = vpow.pop %v1090
    %v1092 = vmul.f32 %v1013, 1.442695
    %v1093 = vpow.pop %v1092
    %v1094 = vmul.f32 %v1014, 1.442695
    %v1095 = vpow.pop %v1094
    %v1096 = vmul.f32 %v1015, 1.442695
    %v1097 = vpow.pop %v1096
    %v1098 = vmul.f32 %v1016, 1.442695
    %v1099 = vpow.pop %v1098
    %v1100 = vmul.f32 %v1017, 1.442695
    %v1101 = vpow.pop %v1100
    %v1102 = vmul.f32 %v1018, 1.442695
    %v1103 = vpow.pop %v1102
    %v1104 = vmul.f32 %v1019, 1.442695
    %v1105 = vpow.pop %v1104
    %v1106 = vmul.f32 %v1020, 1.442695
    %v1107 = vpow.pop %v1106
    %v1108 = vmul.f32 %v1021, 1.442695
    %v1109 = vpow.pop %v1108
    %v1110 = vmul.f32 %v1022, 1.442695
    %v1111 = vpow.pop %v1110
    %v1112 = vmul.f32 %v1023, 1.442695
    %v1113 = vpow.pop %v1112
    %v1114 = vmul.f32 %v1024, 1.442695
    %v1115 = vpow.pop %v1114
    %v1116 = vmul.f32 %v1025, 1.442695
    %v1117 = vpow.pop %v1116
    %v1118 = vmul.f32 %v1026, 1.442695
    %v1119 = vpow.pop %v1118
    %v1120 = vmul.f32 %v1027, 1.442695
    %v1121 = vpow.pop %v1120
    %v1122 = vmul.f32 %v1028, 1.442695
    %v1123 = vpow.pop %v1122
    %v1124 = vmul.f32 %v1029, 1.442695
    %v1125 = vpow.pop %v1124
    %v1126 = vmul.f32 %v1030, 1.442695
    %v1127 = vpow.pop %v1126
    %v1128 = vmul.f32 %v1031, 1.442695
    %v1129 = vpow.pop %v1128
    %v1130 = vmul.f32 %v1032, 1.442695
    %v1131 = vpow.pop %v1130
    %v1132 = vmul.f32 %v1033, 1.442695
    %v1133 = vpow.pop %v1132
    %v1134 = vmul.f32 %v1034, 1.442695
    %v1135 = vpow.pop %v1134
    %v1136 = vmul.f32 %v1035, 1.442695
    %v1137 = vpow.pop %v1136
    %v1138 = vmul.f32 %v1036, 1.442695
    %v1139 = vpow.pop %v1138
    %v1140 = vmul.f32 %v1037, 1.442695
    %v1141 = vpow.pop %v1140
    %v1142 = vmul.f32 %v1038, 1.442695
    %v1143 = vpow.pop %v1142
    %v1144 = vmul.f32 %v1039, 1.442695
    %v1145 = vpow.pop %v1144
    %v1146 = vmul.f32 %v1040, 1.442695
    %v1147 = vpow.pop %v1146
    %v1148 = vmul.f32 %v1041, 1.442695
    %v1149 = vpow.pop %v1148
    %v1150 = vmul.f32 %v1042, 1.442695
    %v1151 = vpow.pop %v1150
    %v1152 = vmul.f32 %v1043, 1.442695
    %v1153 = vpow.pop %v1152
    %v1154 = vmul.f32 %v1044, 1.442695
    %v1155 = vpow.pop %v1154
    %v1156 = vmul.f32 %v1045, 1.442695
    %v1157 = vpow.pop %v1156
    %v1158 = vmul.f32 %v1046, 1.442695
    %v1159 = vpow.pop %v1158
    %v1160 = vmul.f32 %v1047, 1.442695
    %v1161 = vpow.pop %v1160
    %v1162 = vmul.f32 %v1048, 1.442695
    %v1163 = vpow.pop %v1162
    %v1164 = vmul.f32 %v1049, 1.442695
    %v1165 = vpow.pop %v1164
    %v1166 = vmul.f32 %v1050, 1.442695
    %v1167 = vpow.pop %v1166
    %v1168 = vmul.f32 %v1051, 1.442695
    %v1169 = vpow.pop %v1168
    %v1170 = vmul.f32 %v1052, 1.442695
    %v1171 = vpow.pop %v1170
    %v1172 = vmul.f32 %v1053, 1.442695
    %v1173 = vpow.pop %v1172
    %v1174 = vmul.f32 %v1054, 1.442695
    %v1175 = vpow.pop %v1174
    %v1176 = vmul.f32 %v1055, 1.442695
    %v1177 = vpow.pop %v1176
    %v1178 = vmul.f32 %v1056, 1.442695
    %v1179 = vpow.pop %v1178
    %v1180 = vmul.f32 %v1057, 1.442695
    %v1181 = vpow.pop %v1180
    %v1182 = vmul.f32 %v1058, 1.442695
    %v1183 = vpow.pop %v1182
    %v1184 = vmul.f32 %v1059, 1.442695
    %v1185 = vpow.pop %v1184
    %v1186 = vmul.f32 %v1060, 1.442695
    %v1187 = vpow.pop %v1186
    %v1188 = vmul.f32 %v1061, 1.442695
    %v1189 = vpow.pop %v1188
    %v1190 = vadd.f32 %v1063, 1.0
    %v1191 = vadd.f32 %v1065, 1.0
    %v1192 = vadd.f32 %v1067, 1.0
    %v1193 = vadd.f32 %v1069, 1.0
    %v1194 = vadd.f32 %v1071, 1.0
    %v1195 = vadd.f32 %v1073, 1.0
    %v1196 = vadd.f32 %v1075, 1.0
    %v1197 = vadd.f32 %v1077, 1.0
    %v1198 = vadd.f32 %v1079, 1.0
    %v1199 = vadd.f32 %v1081, 1.0
    %v1200 = vadd.f32 %v1083, 1.0
    %v1201 = vadd.f32 %v1085, 1.0
    %v1202 = vadd.f32 %v1087, 1.0
    %v1203 = vadd.f32 %v1089, 1.0
    %v1204 = vadd.f32 %v1091, 1.0
    %v1205 = vadd.f32 %v1093, 1.0
    %v1206 = vadd.f32 %v1095, 1.0
    %v1207 = vadd.f32 %v1097, 1.0
    %v1208 = vadd.f32 %v1099, 1.0
    %v1209 = vadd.f32 %v1101, 1.0
    %v1210 = vadd.f32 %v1103, 1.0
    %v1211 = vadd.f32 %v1105, 1.0
    %v1212 = vadd.f32 %v1107, 1.0
    %v1213 = vadd.f32 %v1109, 1.0
    %v1214 = vadd.f32 %v1111, 1.0
    %v1215 = vadd.f32 %v1113, 1.0
    %v1216 = vadd.f32 %v1115, 1.0
    %v1217 = vadd.f32 %v1117, 1.0
    %v1218 = vadd.f32 %v1119, 1.0
    %v1219 = vadd.f32 %v1121, 1.0
    %v1220 = vadd.f32 %v1123, 1.0
    %v1221 = vadd.f32 %v1125, 1.0
    %v1222 = vadd.f32 %v1127, 1.0
    %v1223 = vadd.f32 %v1129, 1.0
    %v1224 = vadd.f32 %v1131, 1.0
    %v1225 = vadd.f32 %v1133, 1.0
    %v1226 = vadd.f32 %v1135, 1.0
    %v1227 = vadd.f32 %v1137, 1.0
    %v1228 = vadd.f32 %v1139, 1.0
    %v1229 = vadd.f32 %v1141, 1.0
    %v1230 = vadd.f32 %v1143, 1.0
    %v1231 = vadd.f32 %v1145, 1.0
    %v1232 = vadd.f32 %v1147, 1.0
    %v1233 = vadd.f32 %v1149, 1.0
    %v1234 = vadd.f32 %v1151, 1.0
    %v1235 = vadd.f32 %v1153, 1.0
    %v1236 = vadd.f32 %v1155, 1.0
    %v1237 = vadd.f32 %v1157, 1.0
    %v1238 = vadd.f32 %v1159, 1.0
    %v1239 = vadd.f32 %v1161, 1.0
    %v1240 = vadd.f32 %v1163, 1.0
    %v1241 = vadd.f32 %v1165, 1.0
    %v1242 = vadd.f32 %v1167, 1.0
    %v1243 = vadd.f32 %v1169, 1.0
    %v1244 = vadd.f32 %v1171, 1.0
    %v1245 = vadd.f32 %v1173, 1.0
    %v1246 = vadd.f32 %v1175, 1.0
    %v1247 = vadd.f32 %v1177, 1.0
    %v1248 = vadd.f32 %v1179, 1.0
    %v1249 = vadd.f32 %v1181, 1.0
    %v1250 = vadd.f32 %v1183, 1.0
    %v1251 = vadd.f32 %v1185, 1.0
    %v1252 = vadd.f32 %v1187, 1.0
    %v1253 = vadd.f32 %v1189, 1.0
    %v1254 = vmul.f32 %v1190, %v1190
    %v1255 = vmul.f32 %v1191, %v1191
    %v1256 = vmul.f32 %v1192, %v1192
    %v1257 = vmul.f32 %v1193, %v1193
    %v1258 = vmul.f32 %v1194, %v1194
    %v1259 = vmul.f32 %v1195, %v1195
    %v1260 = vmul.f32 %v1196, %v1196
    %v1261 = vmul.f32 %v1197, %v1197
    %v1262 = vmul.f32 %v1198, %v1198
    %v1263 = vmul.f32 %v1199, %v1199
    %v1264 = vmul.f32 %v1200, %v1200
    %v1265 = vmul.f32 %v1201, %v1201
    %v1266 = vmul.f32 %v1202, %v1202
    %v1267 = vmul.f32 %v1203, %v1203
    %v1268 = vmul.f32 %v1204, %v1204
    %v1269 = vmul.f32 %v1205, %v1205
    %v1270 = vmul.f32 %v1206, %v1206
    %v1271 = vmul.f32 %v1207, %v1207
    %v1272 = vmul.f32 %v1208, %v1208
    %v1273 = vmul.f32 %v1209, %v1209
    %v1274 = vmul.f32 %v1210, %v1210
    %v1275 = vmul.f32 %v1211, %v1211
    %v1276 = vmul.f32 %v1212, %v1212
    %v1277 = vmul.f32 %v1213, %v1213
    %v1278 = vmul.f32 %v1214, %v1214
    %v1279 = vmul.f32 %v1215, %v1215
    %v1280 = vmul.f32 %v1216, %v1216
    %v1281 = vmul.f32 %v1217, %v1217
    %v1282 = vmul.f32 %v1218, %v1218
    %v1283 = vmul.f32 %v1219, %v1219
    %v1284 = vmul.f32 %v1220, %v1220
    %v1285 = vmul.f32 %v1221, %v1221
    %v1286 = vmul.f32 %v1222, %v1222
    %v1287 = vmul.f32 %v1223, %v1223
    %v1288 = vmul.f32 %v1224, %v1224
    %v1289 = vmul.f32 %v1225, %v1225
    %v1290 = vmul.f32 %v1226, %v1226
    %v1291 = vmul.f32 %v1227, %v1227
    %v1292 = vmul.f32 %v1228, %v1228
    %v1293 = vmul.f32 %v1229, %v1229
    %v1294 = vmul.f32 %v1230, %v1230
    %v1295 = vmul.f32 %v1231, %v1231
    %v1296 = vmul.f32 %v1232, %v1232
    %v1297 = vmul.f32 %v1233, %v1233
    %v1298 = vmul.f32 %v1234, %v1234
    %v1299 = vmul.f32 %v1235, %v1235
    %v1300 = vmul.f32 %v1236, %v1236
    %v1301 = vmul.f32 %v1237, %v1237
    %v1302 = vmul.f32 %v1238, %v1238
    %v1303 = vmul.f32 %v1239, %v1239
    %v1304 = vmul.f32 %v1240, %v1240
    %v1305 = vmul.f32 %v1241, %v1241
    %v1306 = vmul.f32 %v1242, %v1242
    %v1307 = vmul.f32 %v1243, %v1243
    %v1308 = vmul.f32 %v1244, %v1244
    %v1309 = vmul.f32 %v1245, %v1245
    %v1310 = vmul.f32 %v1246, %v1246
    %v1311 = vmul.f32 %v1247, %v1247
    %v1312 = vmul.f32 %v1248, %v1248
    %v1313 = vmul.f32 %v1249, %v1249
    %v1314 = vmul.f32 %v1250, %v1250
    %v1315 = vmul.f32 %v1251, %v1251
    %v1316 = vmul.f32 %v1252, %v1252
    %v1317 = vmul.f32 %v1253, %v1253
    %v1318 = vsub.f32 %v1254, 1.0
    %v1319 = vsub.f32 %v1255, 1.0
    %v1320 = vsub.f32 %v1256, 1.0
    %v1321 = vsub.f32 %v1257, 1.0
    %v1322 = vsub.f32 %v1258, 1.0
    %v1323 = vsub.f32 %v1259, 1.0
    %v1324 = vsub.f32 %v1260, 1.0
    %v1325 = vsub.f32 %v1261, 1.0
    %v1326 = vsub.f32 %v1262, 1.0
    %v1327 = vsub.f32 %v1263, 1.0
    %v1328 = vsub.f32 %v1264, 1.0
    %v1329 = vsub.f32 %v1265, 1.0
    %v1330 = vsub.f32 %v1266, 1.0
    %v1331 = vsub.f32 %v1267, 1.0
    %v1332 = vsub.f32 %v1268, 1.0
    %v1333 = vsub.f32 %v1269, 1.0
    %v1334 = vsub.f32 %v1270, 1.0
    %v1335 = vsub.f32 %v1271, 1.0
    %v1336 = vsub.f32 %v1272, 1.0
    %v1337 = vsub.f32 %v1273, 1.0
    %v1338 = vsub.f32 %v1274, 1.0
    %v1339 = vsub.f32 %v1275, 1.0
    %v1340 = vsub.f32 %v1276, 1.0
    %v1341 = vsub.f32 %v1277, 1.0
    %v1342 = vsub.f32 %v1278, 1.0
    %v1343 = vsub.f32 %v1279, 1.0
    %v1344 = vsub.f32 %v1280, 1.0
    %v1345 = vsub.f32 %v1281, 1.0
    %v1346 = vsub.f32 %v1282, 1.0
    %v1347 = vsub.f32 %v1283, 1.0
    %v1348 = vsub.f32 %v1284, 1.0
    %v1349 = vsub.f32 %v1285, 1.0
    %v1350 = vsub.f32 %v1286, 1.0
    %v1351 = vsub.f32 %v1287, 1.0
    %v1352 = vsub.f32 %v1288, 1.0
    %v1353 = vsub.f32 %v1289, 1.0
    %v1354 = vsub.f32 %v1290, 1.0
    %v1355 = vsub.f32 %v1291, 1.0
    %v1356 = vsub.f32 %v1292, 1.0
    %v1357 = vsub.f32 %v1293, 1.0
    %v1358 = vsub.f32 %v1294, 1.0
    %v1359 = vsub.f32 %v1295, 1.0
    %v1360 = vsub.f32 %v1296, 1.0
    %v1361 = vsub.f32 %v1297, 1.0
    %v1362 = vsub.f32 %v1298, 1.0
    %v1363 = vsub.f32 %v1299, 1.0
    %v1364 = vsub.f32 %v1300, 1.0
    %v1365 = vsub.f32 %v1301, 1.0
    %v1366 = vsub.f32 %v1302, 1.0
    %v1367 = vsub.f32 %v1303, 1.0
    %v1368 = vsub.f32 %v1304, 1.0
    %v1369 = vsub.f32 %v1305, 1.0
    %v1370 = vsub.f32 %v1306, 1.0
    %v1371 = vsub.f32 %v1307, 1.0
    %v1372 = vsub.f32 %v1308, 1.0
    %v1373 = vsub.f32 %v1309, 1.0
    %v1374 = vsub.f32 %v1310, 1.0
    %v1375 = vsub.f32 %v1311, 1.0
    %v1376 = vsub.f32 %v1312, 1.0
    %v1377 = vsub.f32 %v1313, 1.0
    %v1378 = vsub.f32 %v1314, 1.0
    %v1379 = vsub.f32 %v1315, 1.0
    %v1380 = vsub.f32 %v1316, 1.0
    %v1381 = vsub.f32 %v1317, 1.0
    %v1382 = vadd.f32 %v1254, 1.0
    %v1383 = vadd.f32 %v1255, 1.0
    %v1384 = vadd.f32 %v1256, 1.0
    %v1385 = vadd.f32 %v1257, 1.0
    %v1386 = vadd.f32 %v1258, 1.0
    %v1387 = vadd.f32 %v1259, 1.0
    %v1388 = vadd.f32 %v1260, 1.0
    %v1389 = vadd.f32 %v1261, 1.0
    %v1390 = vadd.f32 %v1262, 1.0
    %v1391 = vadd.f32 %v1263, 1.0
    %v1392 = vadd.f32 %v1264, 1.0
    %v1393 = vadd.f32 %v1265, 1.0
    %v1394 = vadd.f32 %v1266, 1.0
    %v1395 = vadd.f32 %v1267, 1.0
    %v1396 = vadd.f32 %v1268, 1.0
    %v1397 = vadd.f32 %v1269, 1.0
    %v1398 = vadd.f32 %v1270, 1.0
    %v1399 = vadd.f32 %v1271, 1.0
    %v1400 = vadd.f32 %v1272, 1.0
    %v1401 = vadd.f32 %v1273, 1.0
    %v1402 = vadd.f32 %v1274, 1.0
    %v1403 = vadd.f32 %v1275, 1.0
    %v1404 = vadd.f32 %v1276, 1.0
    %v1405 = vadd.f32 %v1277, 1.0
    %v1406 = vadd.f32 %v1278, 1.0
    %v1407 = vadd.f32 %v1279, 1.0
    %v1408 = vadd.f32 %v1280, 1.0
    %v1409 = vadd.f32 %v1281, 1.0
    %v1410 = vadd.f32 %v1282, 1.0
    %v1411 = vadd.f32 %v1283, 1.0
    %v1412 = vadd.f32 %v1284, 1.0
    %v1413 = vadd.f32 %v1285, 1.0
    %v1414 = vadd.f32 %v1286, 1.0
    %v1415 = vadd.f32 %v1287, 1.0
    %v1416 = vadd.f32 %v1288, 1.0
    %v1417 = vadd.f32 %v1289, 1.0
    %v1418 = vadd.f32 %v1290, 1.0
    %v1419 = vadd.f32 %v1291, 1.0
    %v1420 = vadd.f32 %v1292, 1.0
    %v1421 = vadd.f32 %v1293, 1.0
    %v1422 = vadd.f32 %v1294, 1.0
    %v1423 = vadd.f32 %v1295, 1.0
    %v1424 = vadd.f32 %v1296, 1.0
    %v1425 = vadd.f32 %v1297, 1.0
    %v1426 = vadd.f32 %v1298, 1.0
    %v1427 = vadd.f32 %v1299, 1.0
    %v1428 = vadd.f32 %v1300, 1.0
    %v1429 = vadd.f32 %v1301, 1.0
    %v1430 = vadd.f32 %v1302, 1.0
    %v1431 = vadd.f32 %v1303, 1.0
    %v1432 = vadd.f32 %v1304, 1.0
    %v1433 = vadd.f32 %v1305, 1.0
    %v1434 = vadd.f32 %v1306, 1.0
    %v1435 = vadd.f32 %v1307, 1.0
    %v1436 = vadd.f32 %v1308, 1.0
    %v1437 = vadd.f32 %v1309, 1.0
    %v1438 = vadd.f32 %v1310, 1.0
    %v1439 = vadd.f32 %v1311, 1.0
    %v1440 = vadd.f32 %v1312, 1.0
    %v1441 = vadd.f32 %v1313, 1.0
    %v1442 = vadd.f32 %v1314, 1.0
    %v1443 = vadd.f32 %v1315, 1.0
    %v1444 = vadd.f32 %v1316, 1.0
    %v1445 = vadd.f32 %v1317, 1.0
    %v1446 = vrcp.pop %v1382
    %v1447 = vrcp.pop %v1383
    %v1448 = vrcp.pop %v1384
    %v1449 = vrcp.pop %v1385
    %v1450 = vrcp.pop %v1386
    %v1451 = vrcp.pop %v1387
    %v1452 = vrcp.pop %v1388
    %v1453 = vrcp.pop %v1389
    %v1454 = vrcp.pop %v1390
    %v1455 = vrcp.pop %v1391
    %v1456 = vrcp.pop %v1392
    %v1457 = vrcp.pop %v1393
    %v1458 = vrcp.pop %v1394
    %v1459 = vrcp.pop %v1395
    %v1460 = vrcp.pop %v1396
    %v1461 = vrcp.pop %v1397
    %v1462 = vrcp.pop %v1398
    %v1463 = vrcp.pop %v1399
    %v1464 = vrcp.pop %v1400
    %v1465 = vrcp.pop %v1401
    %v1466 = vrcp.pop %v1402
    %v1467 = vrcp.pop %v1403
    %v1468 = vrcp.pop %v1404
    %v1469 = vrcp.pop %v1405
    %v1470 = vrcp.pop %v1406
    %v1471 = vrcp.pop %v1407
    %v1472 = vrcp.pop %v1408
    %v1473 = vrcp.pop %v1409
    %v1474 = vrcp.pop %v1410
    %v1475 = vrcp.pop %v1411
    %v1476 = vrcp.pop %v1412
    %v1477 = vrcp.pop %v1413
    %v1478 = vrcp.pop %v1414
    %v1479 = vrcp.pop %v1415
    %v1480 = vrcp.pop %v1416
    %v1481 = vrcp.pop %v1417
    %v1482 = vrcp.pop %v1418
    %v1483 = vrcp.pop %v1419
    %v1484 = vrcp.pop %v1420
    %v1485 = vrcp.pop %v1421
    %v1486 = vrcp.pop %v1422
    %v1487 = vrcp.pop %v1423
    %v1488 = vrcp.pop %v1424
    %v1489 = vrcp.pop %v1425
    %v1490 = vrcp.pop %v1426
    %v1491 = vrcp.pop %v1427
    %v1492 = vrcp.pop %v1428
    %v1493 = vrcp.pop %v1429
    %v1494 = vrcp.pop %v1430
    %v1495 = vrcp.pop %v1431
    %v1496 = vrcp.pop %v1432
    %v1497 = vrcp.pop %v1433
    %v1498 = vrcp.pop %v1434
    %v1499 = vrcp.pop %v1435
    %v1500 = vrcp.pop %v1436
    %v1501 = vrcp.pop %v1437
    %v1502 = vrcp.pop %v1438
    %v1503 = vrcp.pop %v1439
    %v1504 = vrcp.pop %v1440
    %v1505 = vrcp.pop %v1441
    %v1506 = vrcp.pop %v1442
    %v1507 = vrcp.pop %v1443
    %v1508 = vrcp.pop %v1444
    %v1509 = vrcp.pop %v1445
    %v1510 = vmul.f32 %v1318, %v1446
    %v1511 = vmul.f32 %v1319, %v1447
    %v1512 = vmul.f32 %v1320, %v1448
    %v1513 = vmul.f32 %v1321, %v1449
    %v1514 = vmul.f32 %v1322, %v1450
    %v1515 = vmul.f32 %v1323, %v1451
    %v1516 = vmul.f32 %v1324, %v1452
    %v1517 = vmul.f32 %v1325, %v1453
    %v1518 = vmul.f32 %v1326, %v1454
    %v1519 = vmul.f32 %v1327, %v1455
    %v1520 = vmul.f32 %v1328, %v1456
    %v1521 = vmul.f32 %v1329, %v1457
    %v1522 = vmul.f32 %v1330, %v1458
    %v1523 = vmul.f32 %v1331, %v1459
    %v1524 = vmul.f32 %v1332, %v1460
    %v1525 = vmul.f32 %v1333, %v1461
    %v1526 = vmul.f32 %v1334, %v1462
    %v1527 = vmul.f32 %v1335, %v1463
    %v1528 = vmul.f32 %v1336, %v1464
    %v1529 = vmul.f32 %v1337, %v1465
    %v1530 = vmul.f32 %v1338, %v1466
    %v1531 = vmul.f32 %v1339, %v1467
    %v1532 = vmul.f32 %v1340, %v1468
    %v1533 = vmul.f32 %v1341, %v1469
    %v1534 = vmul.f32 %v1342, %v1470
    %v1535 = vmul.f32 %v1343, %v1471
    %v1536 = vmul.f32 %v1344, %v1472
    %v1537 = vmul.f32 %v1345, %v1473
    %v1538 = vmul.f32 %v1346, %v1474
    %v1539 = vmul.f32 %v1347, %v1475
    %v1540 = vmul.f32 %v1348, %v1476
    %v1541 = vmul.f32 %v1349, %v1477
    %v1542 = vmul.f32 %v1350, %v1478
    %v1543 = vmul.f32 %v1351, %v1479
    %v1544 = vmul.f32 %v1352, %v1480
    %v1545 = vmul.f32 %v1353, %v1481
    %v1546 = vmul.f32 %v1354, %v1482
    %v1547 = vmul.f32 %v1355, %v1483
    %v1548 = vmul.f32 %v1356, %v1484
    %v1549 = vmul.f32 %v1357, %v1485
    %v1550 = vmul.f32 %v1358, %v1486
    %v1551 = vmul.f32 %v1359, %v1487
    %v1552 = vmul.f32 %v1360, %v1488
    %v1553 = vmul.f32 %v1361, %v1489
    %v1554 = vmul.f32 %v1362, %v1490
    %v1555 = vmul.f32 %v1363, %v1491
    %v1556 = vmul.f32 %v1364, %v1492
    %v1557 = vmul.f32 %v1365, %v1493
    %v1558 = vmul.f32 %v1366, %v1494
    %v1559 = vmul.f32 %v1367, %v1495
    %v1560 = vmul.f32 %v1368, %v1496
    %v1561 = vmul.f32 %v1369, %v1497
    %v1562 = vmul.f32 %v1370, %v1498
    %v1563 = vmul.f32 %v1371, %v1499
    %v1564 = vmul.f32 %v1372, %v1500
    %v1565 = vmul.f32 %v1373, %v1501
    %v1566 = vmul.f32 %v1374, %v1502
    %v1567 = vmul.f32 %v1375, %v1503
    %v1568 = vmul.f32 %v1376, %v1504
    %v1569 = vmul.f32 %v1377, %v1505
    %v1570 = vmul.f32 %v1378, %v1506
    %v1571 = vmul.f32 %v1379, %v1507
    %v1572 = vmul.f32 %v1380, %v1508
    %v1573 = vmul.f32 %v1381, %v1509
    %vm1574 = vcmp.gt.f32.partialorder %v934, 20.0
    %vm1575 = vcmp.gt.f32.partialorder %v935, 20.0
    %vm1576 = vcmp.gt.f32.partialorder %v936, 20.0
    %vm1577 = vcmp.gt.f32.partialorder %v937, 20.0
    %vm1578 = vcmp.gt.f32.partialorder %v938, 20.0
    %vm1579 = vcmp.gt.f32.partialorder %v939, 20.0
    %vm1580 = vcmp.gt.f32.partialorder %v940, 20.0
    %vm1581 = vcmp.gt.f32.partialorder %v941, 20.0
    %vm1582 = vcmp.gt.f32.partialorder %v942, 20.0
    %vm1583 = vcmp.gt.f32.partialorder %v943, 20.0
    %vm1584 = vcmp.gt.f32.partialorder %v944, 20.0
    %vm1585 = vcmp.gt.f32.partialorder %v945, 20.0
    %vm1586 = vcmp.gt.f32.partialorder %v946, 20.0
    %vm1587 = vcmp.gt.f32.partialorder %v947, 20.0
    %vm1588 = vcmp.gt.f32.partialorder %v948, 20.0
    %vm1589 = vcmp.gt.f32.partialorder %v949, 20.0
    %vm1590 = vcmp.gt.f32.partialorder %v950, 20.0
    %vm1591 = vcmp.gt.f32.partialorder %v951, 20.0
    %vm1592 = vcmp.gt.f32.partialorder %v952, 20.0
    %vm1593 = vcmp.gt.f32.partialorder %v953, 20.0
    %vm1594 = vcmp.gt.f32.partialorder %v954, 20.0
    %vm1595 = vcmp.gt.f32.partialorder %v955, 20.0
    %vm1596 = vcmp.gt.f32.partialorder %v956, 20.0
    %vm1597 = vcmp.gt.f32.partialorder %v957, 20.0
    %vm1598 = vcmp.gt.f32.partialorder %v958, 20.0
    %vm1599 = vcmp.gt.f32.partialorder %v959, 20.0
    %vm1600 = vcmp.gt.f32.partialorder %v960, 20.0
    %vm1601 = vcmp.gt.f32.partialorder %v961, 20.0
    %vm1602 = vcmp.gt.f32.partialorder %v962, 20.0
    %vm1603 = vcmp.gt.f32.partialorder %v963, 20.0
    %vm1604 = vcmp.gt.f32.partialorder %v964, 20.0
    %vm1605 = vcmp.gt.f32.partialorder %v965, 20.0
    %vm1606 = vcmp.gt.f32.partialorder %v966, 20.0
    %vm1607 = vcmp.gt.f32.partialorder %v967, 20.0
    %vm1608 = vcmp.gt.f32.partialorder %v968, 20.0
    %vm1609 = vcmp.gt.f32.partialorder %v969, 20.0
    %vm1610 = vcmp.gt.f32.partialorder %v970, 20.0
    %vm1611 = vcmp.gt.f32.partialorder %v971, 20.0
    %vm1612 = vcmp.gt.f32.partialorder %v972, 20.0
    %vm1613 = vcmp.gt.f32.partialorder %v973, 20.0
    %vm1614 = vcmp.gt.f32.partialorder %v974, 20.0
    %vm1615 = vcmp.gt.f32.partialorder %v975, 20.0
    %vm1616 = vcmp.gt.f32.partialorder %v976, 20.0
    %vm1617 = vcmp.gt.f32.partialorder %v977, 20.0
    %vm1618 = vcmp.gt.f32.partialorder %v978, 20.0
    %vm1619 = vcmp.gt.f32.partialorder %v979, 20.0
    %vm1620 = vcmp.gt.f32.partialorder %v980, 20.0
    %vm1621 = vcmp.gt.f32.partialorder %v981, 20.0
    %vm1622 = vcmp.gt.f32.partialorder %v982, 20.0
    %vm1623 = vcmp.gt.f32.partialorder %v983, 20.0
    %vm1624 = vcmp.gt.f32.partialorder %v984, 20.0
    %vm1625 = vcmp.gt.f32.partialorder %v985, 20.0
    %vm1626 = vcmp.gt.f32.partialorder %v986, 20.0
    %vm1627 = vcmp.gt.f32.partialorder %v987, 20.0
    %vm1628 = vcmp.gt.f32.partialorder %v988, 20.0
    %vm1629 = vcmp.gt.f32.partialorder %v989, 20.0
    %vm1630 = vcmp.gt.f32.partialorder %v990, 20.0
    %vm1631 = vcmp.gt.f32.partialorder %v991, 20.0
    %vm1632 = vcmp.gt.f32.partialorder %v992, 20.0
    %vm1633 = vcmp.gt.f32.partialorder %v993, 20.0
    %vm1634 = vcmp.gt.f32.partialorder %v994, 20.0
    %vm1635 = vcmp.gt.f32.partialorder %v995, 20.0
    %vm1636 = vcmp.gt.f32.partialorder %v996, 20.0
    %vm1637 = vcmp.gt.f32.partialorder %v997, 20.0
    %v1638 = vmul.f32 %v934, %v1510
    %v1639 = vmul.f32 %v935, %v1511
    %v1640 = vmul.f32 %v936, %v1512
    %v1641 = vmul.f32 %v937, %v1513
    %v1642 = vmul.f32 %v938, %v1514
    %v1643 = vmul.f32 %v939, %v1515
    %v1644 = vmul.f32 %v940, %v1516
    %v1645 = vmul.f32 %v941, %v1517
    %v1646 = vmul.f32 %v942, %v1518
    %v1647 = vmul.f32 %v943, %v1519
    %v1648 = vmul.f32 %v944, %v1520
    %v1649 = vmul.f32 %v945, %v1521
    %v1650 = vmul.f32 %v946, %v1522
    %v1651 = vmul.f32 %v947, %v1523
    %v1652 = vmul.f32 %v948, %v1524
    %v1653 = vmul.f32 %v949, %v1525
    %v1654 = vmul.f32 %v950, %v1526
    %v1655 = vmul.f32 %v951, %v1527
    %v1656 = vmul.f32 %v952, %v1528
    %v1657 = vmul.f32 %v953, %v1529
    %v1658 = vmul.f32 %v954, %v1530
    %v1659 = vmul.f32 %v955, %v1531
    %v1660 = vmul.f32 %v956, %v1532
    %v1661 = vmul.f32 %v957, %v1533
    %v1662 = vmul.f32 %v958, %v1534
    %v1663 = vmul.f32 %v959, %v1535
    %v1664 = vmul.f32 %v960, %v1536
    %v1665 = vmul.f32 %v961, %v1537
    %v1666 = vmul.f32 %v962, %v1538
    %v1667 = vmul.f32 %v963, %v1539
    %v1668 = vmul.f32 %v964, %v1540
    %v1669 = vmul.f32 %v965, %v1541
    %v1670 = vmul.f32 %v966, %v1542
    %v1671 = vmul.f32 %v967, %v1543
    %v1672 = vmul.f32 %v968, %v1544
    %v1673 = vmul.f32 %v969, %v1545
    %v1674 = vmul.f32 %v970, %v1546
    %v1675 = vmul.f32 %v971, %v1547
    %v1676 = vmul.f32 %v972, %v1548
    %v1677 = vmul.f32 %v973, %v1549
    %v1678 = vmul.f32 %v974, %v1550
    %v1679 = vmul.f32 %v975, %v1551
    %v1680 = vmul.f32 %v976, %v1552
    %v1681 = vmul.f32 %v977, %v1553
    %v1682 = vmul.f32 %v978, %v1554
    %v1683 = vmul.f32 %v979, %v1555
    %v1684 = vmul.f32 %v980, %v1556
    %v1685 = vmul.f32 %v981, %v1557
    %v1686 = vmul.f32 %v982, %v1558
    %v1687 = vmul.f32 %v983, %v1559
    %v1688 = vmul.f32 %v984, %v1560
    %v1689 = vmul.f32 %v985, %v1561
    %v1690 = vmul.f32 %v986, %v1562
    %v1691 = vmul.f32 %v987, %v1563
    %v1692 = vmul.f32 %v988, %v1564
    %v1693 = vmul.f32 %v989, %v1565
    %v1694 = vmul.f32 %v990, %v1566
    %v1695 = vmul.f32 %v991, %v1567
    %v1696 = vmul.f32 %v992, %v1568
    %v1697 = vmul.f32 %v993, %v1569
    %v1698 = vmul.f32 %v994, %v1570
    %v1699 = vmul.f32 %v995, %v1571
    %v1700 = vmul.f32 %v996, %v1572
    %v1701 = vmul.f32 %v997, %v1573
    %v1702 = vsel %vm1574, %v934, %v1638
    %v1703 = vsel %vm1575, %v935, %v1639
    %v1704 = vsel %vm1576, %v936, %v1640
    %v1705 = vsel %vm1577, %v937, %v1641
    %v1706 = vsel %vm1578, %v938, %v1642
    %v1707 = vsel %vm1579, %v939, %v1643
    %v1708 = vsel %vm1580, %v940, %v1644
    %v1709 = vsel %vm1581, %v941, %v1645
    %v1710 = vsel %vm1582, %v942, %v1646
    %v1711 = vsel %vm1583, %v943, %v1647
    %v1712 = vsel %vm1584, %v944, %v1648
    %v1713 = vsel %vm1585, %v945, %v1649
    %v1714 = vsel %vm1586, %v946, %v1650
    %v1715 = vsel %vm1587, %v947, %v1651
    %v1716 = vsel %vm1588, %v948, %v1652
    %v1717 = vsel %vm1589, %v949, %v1653
    %v1718 = vsel %vm1590, %v950, %v1654
    %v1719 = vsel %vm1591, %v951, %v1655
    %v1720 = vsel %vm1592, %v952, %v1656
    %v1721 = vsel %vm1593, %v953, %v1657
    %v1722 = vsel %vm1594, %v954, %v1658
    %v1723 = vsel %vm1595, %v955, %v1659
    %v1724 = vsel %vm1596, %v956, %v1660
    %v1725 = vsel %vm1597, %v957, %v1661
    %v1726 = vsel %vm1598, %v958, %v1662
    %v1727 = vsel %vm1599, %v959, %v1663
    %v1728 = vsel %vm1600, %v960, %v1664
    %v1729 = vsel %vm1601, %v961, %v1665
    %v1730 = vsel %vm1602, %v962, %v1666
    %v1731 = vsel %vm1603, %v963, %v1667
    %v1732 = vsel %vm1604, %v964, %v1668
    %v1733 = vsel %vm1605, %v965, %v1669
    %v1734 = vsel %vm1606, %v966, %v1670
    %v1735 = vsel %vm1607, %v967, %v1671
    %v1736 = vsel %vm1608, %v968, %v1672
    %v1737 = vsel %vm1609, %v969, %v1673
    %v1738 = vsel %vm1610, %v970, %v1674
    %v1739 = vsel %vm1611, %v971, %v1675
    %v1740 = vsel %vm1612, %v972, %v1676
    %v1741 = vsel %vm1613, %v973, %v1677
    %v1742 = vsel %vm1614, %v974, %v1678
    %v1743 = vsel %vm1615, %v975, %v1679
    %v1744 = vsel %vm1616, %v976, %v1680
    %v1745 = vsel %vm1617, %v977, %v1681
    %v1746 = vsel %vm1618, %v978, %v1682
    %v1747 = vsel %vm1619, %v979, %v1683
    %v1748 = vsel %vm1620, %v980, %v1684
    %v1749 = vsel %vm1621, %v981, %v1685
    %v1750 = vsel %vm1622, %v982, %v1686
    %v1751 = vsel %vm1623, %v983, %v1687
    %v1752 = vsel %vm1624, %v984, %v1688
    %v1753 = vsel %vm1625, %v985, %v1689
    %v1754 = vsel %vm1626, %v986, %v1690
    %v1755 = vsel %vm1627, %v987, %v1691
    %v1756 = vsel %vm1628, %v988, %v1692
    %v1757 = vsel %vm1629, %v989, %v1693
    %v1758 = vsel %vm1630, %v990, %v1694
    %v1759 = vsel %vm1631, %v991, %v1695
    %v1760 = vsel %vm1632, %v992, %v1696
    %v1761 = vsel %vm1633, %v993, %v1697
    %v1762 = vsel %vm1634, %v994, %v1698
    %v1763 = vsel %vm1635, %v995, %v1699
    %v1764 = vsel %vm1636, %v996, %v1700
    %v1765 = vsel %vm1637, %v997, %v1701
    %v1766 = vpack.c.bf16 %v1704, %v1702
    %v1767 = vpack.c.bf16 %v1705, %v1703
    %v1768 = vpack.c.bf16 %v1708, %v1706
    %v1769 = vpack.c.bf16 %v1709, %v1707
    %v1770 = vpack.c.bf16 %v1712, %v1710
    %v1771 = vpack.c.bf16 %v1713, %v1711
    %v1772 = vpack.c.bf16 %v1716, %v1714
    %v1773 = vpack.c.bf16 %v1717, %v1715
    %v1774 = vpack.c.bf16 %v1720, %v1718
    %v1775 = vpack.c.bf16 %v1721, %v1719
    %v1776 = vpack.c.bf16 %v1724, %v1722
    %v1777 = vpack.c.bf16 %v1725, %v1723
    %v1778 = vpack.c.bf16 %v1728, %v1726
    %v1779 = vpack.c.bf16 %v1729, %v1727
    %v1780 = vpack.c.bf16 %v1732, %v1730
    %v1781 = vpack.c.bf16 %v1733, %v1731
    %v1782 = vpack.c.bf16 %v1736, %v1734
    %v1783 = vpack.c.bf16 %v1737, %v1735
    %v1784 = vpack.c.bf16 %v1740, %v1738
    %v1785 = vpack.c.bf16 %v1741, %v1739
    %v1786 = vpack.c.bf16 %v1744, %v1742
    %v1787 = vpack.c.bf16 %v1745, %v1743
    %v1788 = vpack.c.bf16 %v1748, %v1746
    %v1789 = vpack.c.bf16 %v1749, %v1747
    %v1790 = vpack.c.bf16 %v1752, %v1750
    %v1791 = vpack.c.bf16 %v1753, %v1751
    %v1792 = vpack.c.bf16 %v1756, %v1754
    %v1793 = vpack.c.bf16 %v1757, %v1755
    %v1794 = vpack.c.bf16 %v1760, %v1758
    %v1795 = vpack.c.bf16 %v1761, %v1759
    %v1796 = vpack.c.bf16 %v1764, %v1762
    %v1797 = vpack.c.bf16 %v1765, %v1763
    %v1798 = vld [vmem:[#allocation8] sm:$0xff]
    %v1799 = vld [vmem:[#allocation8 + $0x8] sm:$0xff]
    %v1800 = vld [vmem:[#allocation8 + $0x10] sm:$0xff]
    %v1801 = vld [vmem:[#allocation8 + $0x18] sm:$0xff]
    %v1802 = vld [vmem:[#allocation8 + $0x20] sm:$0xff]
    %v1803 = vld [vmem:[#allocation8 + $0x28] sm:$0xff]
    %v1804 = vld [vmem:[#allocation8 + $0x30] sm:$0xff]
    %v1805 = vld [vmem:[#allocation8 + $0x38] sm:$0xff]
    %v1806 = vld [vmem:[#allocation8 + $0x40] sm:$0xff]
    %v1807 = vld [vmem:[#allocation8 + $0x48] sm:$0xff]
    %v1808 = vld [vmem:[#allocation8 + $0x50] sm:$0xff]
    %v1809 = vld [vmem:[#allocation8 + $0x58] sm:$0xff]
    %v1810 = vld [vmem:[#allocation8 + $0x60] sm:$0xff]
    %v1811 = vld [vmem:[#allocation8 + $0x68] sm:$0xff]
    %v1812 = vld [vmem:[#allocation8 + $0x70] sm:$0xff]
    %v1813 = vld [vmem:[#allocation8 + $0x78] sm:$0xff]
    %v1814 = vld [vmem:[#allocation8 + $0x80] sm:$0xff]
    %v1815 = vld [vmem:[#allocation8 + $0x88] sm:$0xff]
    %v1816 = vld [vmem:[#allocation8 + $0x90] sm:$0xff]
    %v1817 = vld [vmem:[#allocation8 + $0x98] sm:$0xff]
    %v1818 = vld [vmem:[#allocation8 + $0xa0] sm:$0xff]
    %v1819 = vld [vmem:[#allocation8 + $0xa8] sm:$0xff]
    %v1820 = vld [vmem:[#allocation8 + $0xb0] sm:$0xff]
    %v1821 = vld [vmem:[#allocation8 + $0xb8] sm:$0xff]
    %v1822 = vld [vmem:[#allocation8 + $0xc0] sm:$0xff]
    %v1823 = vld [vmem:[#allocation8 + $0xc8] sm:$0xff]
    %v1824 = vld [vmem:[#allocation8 + $0xd0] sm:$0xff]
    %v1825 = vld [vmem:[#allocation8 + $0xd8] sm:$0xff]
    %v1826 = vld [vmem:[#allocation8 + $0xe0] sm:$0xff]
    %v1827 = vld [vmem:[#allocation8 + $0xe8] sm:$0xff]
    %v1828 = vld [vmem:[#allocation8 + $0xf0] sm:$0xff]
    %v1829 = vld [vmem:[#allocation8 + $0xf8] sm:$0xff]
    %v1862 = vunpack.c.l.b16 %v1798
    %v1863 = vunpack.c.h.b16 %v1798
    %v1864 = vunpack.c.l.b16 %v1799
    %v1865 = vunpack.c.h.b16 %v1799
    %v1866 = vunpack.c.l.b16 %v1800
    %v1867 = vunpack.c.h.b16 %v1800
    %v1868 = vunpack.c.l.b16 %v1801
    %v1869 = vunpack.c.h.b16 %v1801
    %v1870 = vunpack.c.l.b16 %v1802
    %v1871 = vunpack.c.h.b16 %v1802
    %v1872 = vunpack.c.l.b16 %v1803
    %v1873 = vunpack.c.h.b16 %v1803
    %v1874 = vunpack.c.l.b16 %v1804
    %v1875 = vunpack.c.h.b16 %v1804
    %v1876 = vunpack.c.l.b16 %v1805
    %v1877 = vunpack.c.h.b16 %v1805
    %v1878 = vunpack.c.l.b16 %v1806
    %v1879 = vunpack.c.h.b16 %v1806
    %v1880 = vunpack.c.l.b16 %v1807
    %v1881 = vunpack.c.h.b16 %v1807
    %v1882 = vunpack.c.l.b16 %v1808
    %v1883 = vunpack.c.h.b16 %v1808
    %v1884 = vunpack.c.l.b16 %v1809
    %v1885 = vunpack.c.h.b16 %v1809
    %v1886 = vunpack.c.l.b16 %v1810
    %v1887 = vunpack.c.h.b16 %v1810
    %v1888 = vunpack.c.l.b16 %v1811
    %v1889 = vunpack.c.h.b16 %v1811
    %v1890 = vunpack.c.l.b16 %v1812
    %v1891 = vunpack.c.h.b16 %v1812
    %v1892 = vunpack.c.l.b16 %v1813
    %v1893 = vunpack.c.h.b16 %v1813
    %v1894 = vunpack.c.l.b16 %v1814
    %v1895 = vunpack.c.h.b16 %v1814
    %v1896 = vunpack.c.l.b16 %v1815
    %v1897 = vunpack.c.h.b16 %v1815
    %v1898 = vunpack.c.l.b16 %v1816
    %v1899 = vunpack.c.h.b16 %v1816
    %v1900 = vunpack.c.l.b16 %v1817
    %v1901 = vunpack.c.h.b16 %v1817
    %v1902 = vunpack.c.l.b16 %v1818
    %v1903 = vunpack.c.h.b16 %v1818
    %v1904 = vunpack.c.l.b16 %v1819
    %v1905 = vunpack.c.h.b16 %v1819
    %v1906 = vunpack.c.l.b16 %v1820
    %v1907 = vunpack.c.h.b16 %v1820
    %v1908 = vunpack.c.l.b16 %v1821
    %v1909 = vunpack.c.h.b16 %v1821
    %v1910 = vunpack.c.l.b16 %v1822
    %v1911 = vunpack.c.h.b16 %v1822
    %v1912 = vunpack.c.l.b16 %v1823
    %v1913 = vunpack.c.h.b16 %v1823
    %v1914 = vunpack.c.l.b16 %v1824
    %v1915 = vunpack.c.h.b16 %v1824
    %v1916 = vunpack.c.l.b16 %v1825
    %v1917 = vunpack.c.h.b16 %v1825
    %v1918 = vunpack.c.l.b16 %v1826
    %v1919 = vunpack.c.h.b16 %v1826
    %v1920 = vunpack.c.l.b16 %v1827
    %v1921 = vunpack.c.h.b16 %v1827
    %v1922 = vunpack.c.l.b16 %v1828
    %v1923 = vunpack.c.h.b16 %v1828
    %v1924 = vunpack.c.l.b16 %v1829
    %v1925 = vunpack.c.h.b16 %v1829
    %v1926 = vpack.c.b16 %v1864, %v1862
    %v1927 = vpack.c.b16 %v1865, %v1863
    %v1928 = vpack.c.b16 %v1868, %v1866
    %v1929 = vpack.c.b16 %v1869, %v1867
    %v1930 = vpack.c.b16 %v1872, %v1870
    %v1931 = vpack.c.b16 %v1873, %v1871
    %v1932 = vpack.c.b16 %v1876, %v1874
    %v1933 = vpack.c.b16 %v1877, %v1875
    %v1934 = vpack.c.b16 %v1880, %v1878
    %v1935 = vpack.c.b16 %v1881, %v1879
    %v1936 = vpack.c.b16 %v1884, %v1882
    %v1937 = vpack.c.b16 %v1885, %v1883
    %v1938 = vpack.c.b16 %v1888, %v1886
    %v1939 = vpack.c.b16 %v1889, %v1887
    %v1940 = vpack.c.b16 %v1892, %v1890
    %v1941 = vpack.c.b16 %v1893, %v1891
    %v1942 = vpack.c.b16 %v1896, %v1894
    %v1943 = vpack.c.b16 %v1897, %v1895
    %v1944 = vpack.c.b16 %v1900, %v1898
    %v1945 = vpack.c.b16 %v1901, %v1899
    %v1946 = vpack.c.b16 %v1904, %v1902
    %v1947 = vpack.c.b16 %v1905, %v1903
    %v1948 = vpack.c.b16 %v1908, %v1906
    %v1949 = vpack.c.b16 %v1909, %v1907
    %v1950 = vpack.c.b16 %v1912, %v1910
    %v1951 = vpack.c.b16 %v1913, %v1911
    %v1952 = vpack.c.b16 %v1916, %v1914
    %v1953 = vpack.c.b16 %v1917, %v1915
    %v1954 = vpack.c.b16 %v1920, %v1918
    %v1955 = vpack.c.b16 %v1921, %v1919
    %v1956 = vpack.c.b16 %v1924, %v1922
    %v1957 = vpack.c.b16 %v1925, %v1923
    %1990 = vmatprep.subr.bf16.mxu0 %v1927
    %1991 = vmatpush1.bf16.msra.mxu0 %v1926
    %1992 = vmatprep.subr.bf16.mxu0 %v1929
    %1993 = vmatpush1.bf16.msra.mxu0 %v1928
    %1994 = vmatprep.subr.bf16.mxu0 %v1931
    %1995 = vmatpush1.bf16.msra.mxu0 %v1930
    %1996 = vmatprep.subr.bf16.mxu0 %v1933
    %1997 = vmatpush1.bf16.msra.mxu0 %v1932
    %1998 = vmatprep.subr.bf16.mxu0 %v1935
    %1999 = vmatpush1.bf16.msra.mxu0 %v1934
    %2000 = vmatprep.subr.bf16.mxu0 %v1937
    %2001 = vmatpush1.bf16.msra.mxu0 %v1936
    %2002 = vmatprep.subr.bf16.mxu0 %v1939
    %2003 = vmatpush1.bf16.msra.mxu0 %v1938
    %2004 = vmatprep.subr.bf16.mxu0 %v1941
    %2005 = vmatpush1.bf16.msra.mxu0 %v1940
    %2006 = vmatprep.subr.bf16.mxu0 %v1943
    %2007 = vmatpush1.bf16.msra.mxu0 %v1942
    %2008 = vmatprep.subr.bf16.mxu0 %v1945
    %2009 = vmatpush1.bf16.msra.mxu0 %v1944
    %2010 = vmatprep.subr.bf16.mxu0 %v1947
    %2011 = vmatpush1.bf16.msra.mxu0 %v1946
    %2012 = vmatprep.subr.bf16.mxu0 %v1949
    %2013 = vmatpush1.bf16.msra.mxu0 %v1948
    %2014 = vmatprep.subr.bf16.mxu0 %v1951
    %2015 = vmatpush1.bf16.msra.mxu0 %v1950
    %2016 = vmatprep.subr.bf16.mxu0 %v1953
    %2017 = vmatpush1.bf16.msra.mxu0 %v1952
    %2018 = vmatprep.subr.bf16.mxu0 %v1955
    %2019 = vmatpush1.bf16.msra.mxu0 %v1954
    %2020 = vmatprep.subr.bf16.mxu0 %v1957
    %2021 = vmatpush1.bf16.msra.mxu0 %v1956
    %2022 = vmatprep.mubr.bf16.mxu0 %v1767
    %2023 = vmatmul.mubr.bf16.gmra.mrb[0].mxu0 %v1766
    %v2024 = vpop.f32.mrb[0].mxu0
    %v2025 = vadd.f32 0.0, %v2024
    %v2026 = vpop.f32.mrb[0].mxu0
    %v2027 = vadd.f32 0.0, %v2026
    %v2028 = vpop.f32.mrb[0].mxu0
    %v2029 = vadd.f32 0.0, %v2028
    %v2030 = vpop.f32.mrb[0].mxu0
    %v2031 = vadd.f32 0.0, %v2030
    %2032 = vmatprep.mubr.bf16.mxu0 %v1769
    %2033 = vmatmul.mubr.bf16.gmra.mrb[0].mxu0 %v1768
    %v2034 = vpop.f32.mrb[0].mxu0
    %v2035 = vadd.f32 0.0, %v2034
    %v2036 = vpop.f32.mrb[0].mxu0
    %v2037 = vadd.f32 0.0, %v2036
    %v2038 = vpop.f32.mrb[0].mxu0
    %v2039 = vadd.f32 0.0, %v2038
    %v2040 = vpop.f32.mrb[0].mxu0
    %v2041 = vadd.f32 0.0, %v2040
    %2042 = vmatprep.mubr.bf16.mxu0 %v1771
    %2043 = vmatmul.mubr.bf16.gmra.mrb[0].mxu0 %v1770
    %v2044 = vpop.f32.mrb[0].mxu0
    %v2045 = vadd.f32 0.0, %v2044
    %v2046 = vpop.f32.mrb[0].mxu0
    %v2047 = vadd.f32 0.0, %v2046
    %v2048 = vpop.f32.mrb[0].mxu0
    %v2049 = vadd.f32 0.0, %v2048
    %v2050 = vpop.f32.mrb[0].mxu0
    %v2051 = vadd.f32 0.0, %v2050
    %2052 = vmatprep.mubr.bf16.mxu0 %v1773
    %2053 = vmatmul.mubr.bf16.gmra.mrb[0].mxu0 %v1772
    %v2054 = vpop.f32.mrb[0].mxu0
    %v2055 = vadd.f32 0.0, %v2054
    %v2056 = vpop.f32.mrb[0].mxu0
    %v2057 = vadd.f32 0.0, %v2056
    %v2058 = vpop.f32.mrb[0].mxu0
    %v2059 = vadd.f32 0.0, %v2058
    %v2060 = vpop.f32.mrb[0].mxu0
    %v2061 = vadd.f32 0.0, %v2060
    %2062 = vmatprep.mubr.bf16.mxu0 %v1775
    %2063 = vmatmul.mubr.bf16.gmra.mrb[0].mxu0 %v1774
    %v2064 = vpop.f32.mrb[0].mxu0
    %v2065 = vadd.f32 0.0, %v2064
    %v2066 = vpop.f32.mrb[0].mxu0
    %v2067 = vadd.f32 0.0, %v2066
    %v2068 = vpop.f32.mrb[0].mxu0
    %v2069 = vadd.f32 0.0, %v2068
    %v2070 = vpop.f32.mrb[0].mxu0
    %v2071 = vadd.f32 0.0, %v2070
    %2072 = vmatprep.mubr.bf16.mxu0 %v1777
    %2073 = vmatmul.mubr.bf16.gmra.mrb[0].mxu0 %v1776
    %v2074 = vpop.f32.mrb[0].mxu0
    %v2075 = vadd.f32 0.0, %v2074
    %v2076 = vpop.f32.mrb[0].mxu0
    %v2077 = vadd.f32 0.0, %v2076
    %v2078 = vpop.f32.mrb[0].mxu0
    %v2079 = vadd.f32 0.0, %v2078
    %v2080 = vpop.f32.mrb[0].mxu0
    %v2081 = vadd.f32 0.0, %v2080
    %2082 = vmatprep.mubr.bf16.mxu0 %v1779
    %2083 = vmatmul.mubr.bf16.gmra.mrb[0].mxu0 %v1778
    %v2084 = vpop.f32.mrb[0].mxu0
    %v2085 = vadd.f32 0.0, %v2084
    %v2086 = vpop.f32.mrb[0].mxu0
    %v2087 = vadd.f32 0.0, %v2086
    %v2088 = vpop.f32.mrb[0].mxu0
    %v2089 = vadd.f32 0.0, %v2088
    %v2090 = vpop.f32.mrb[0].mxu0
    %v2091 = vadd.f32 0.0, %v2090
    %2092 = vmatprep.mubr.bf16.mxu0 %v1781
    %2093 = vmatmul.mubr.bf16.gmra.mrb[0].mxu0 %v1780
    %v2094 = vpop.f32.mrb[0].mxu0
    %v2095 = vadd.f32 0.0, %v2094
    %v2096 = vpop.f32.mrb[0].mxu0
    %v2097 = vadd.f32 0.0, %v2096
    %v2098 = vpop.f32.mrb[0].mxu0
    %v2099 = vadd.f32 0.0, %v2098
    %v2100 = vpop.f32.mrb[0].mxu0
    %v2101 = vadd.f32 0.0, %v2100
    %2102 = vmatprep.mubr.bf16.mxu0 %v1783
    %2103 = vmatmul.mubr.bf16.gmra.mrb[0].mxu0 %v1782
    %v2104 = vpop.f32.mrb[0].mxu0
    %v2105 = vadd.f32 0.0, %v2104
    %v2106 = vpop.f32.mrb[0].mxu0
    %v2107 = vadd.f32 0.0, %v2106
    %v2108 = vpop.f32.mrb[0].mxu0
    %v2109 = vadd.f32 0.0, %v2108
    %v2110 = vpop.f32.mrb[0].mxu0
    %v2111 = vadd.f32 0.0, %v2110
    %2112 = vmatprep.mubr.bf16.mxu0 %v1785
    %2113 = vmatmul.mubr.bf16.gmra.mrb[0].mxu0 %v1784
    %v2114 = vpop.f32.mrb[0].mxu0
    %v2115 = vadd.f32 0.0, %v2114
    %v2116 = vpop.f32.mrb[0].mxu0
    %v2117 = vadd.f32 0.0, %v2116
    %v2118 = vpop.f32.mrb[0].mxu0
    %v2119 = vadd.f32 0.0, %v2118
    %v2120 = vpop.f32.mrb[0].mxu0
    %v2121 = vadd.f32 0.0, %v2120
    %2122 = vmatprep.mubr.bf16.mxu0 %v1787
    %2123 = vmatmul.mubr.bf16.gmra.mrb[0].mxu0 %v1786
    %v2124 = vpop.f32.mrb[0].mxu0
    %v2125 = vadd.f32 0.0, %v2124
    %v2126 = vpop.f32.mrb[0].mxu0
    %v2127 = vadd.f32 0.0, %v2126
    %v2128 = vpop.f32.mrb[0].mxu0
    %v2129 = vadd.f32 0.0, %v2128
    %v2130 = vpop.f32.mrb[0].mxu0
    %v2131 = vadd.f32 0.0, %v2130
    %2132 = vmatprep.mubr.bf16.mxu0 %v1789
    %2133 = vmatmul.mubr.bf16.gmra.mrb[0].mxu0 %v1788
    %v2134 = vpop.f32.mrb[0].mxu0
    %v2135 = vadd.f32 0.0, %v2134
    %v2136 = vpop.f32.mrb[0].mxu0
    %v2137 = vadd.f32 0.0, %v2136
    %v2138 = vpop.f32.mrb[0].mxu0
    %v2139 = vadd.f32 0.0, %v2138
    %v2140 = vpop.f32.mrb[0].mxu0
    %v2141 = vadd.f32 0.0, %v2140
    %2142 = vmatprep.mubr.bf16.mxu0 %v1791
    %2143 = vmatmul.mubr.bf16.gmra.mrb[0].mxu0 %v1790
    %v2144 = vpop.f32.mrb[0].mxu0
    %v2145 = vadd.f32 0.0, %v2144
    %v2146 = vpop.f32.mrb[0].mxu0
    %v2147 = vadd.f32 0.0, %v2146
    %v2148 = vpop.f32.mrb[0].mxu0
    %v2149 = vadd.f32 0.0, %v2148
    %v2150 = vpop.f32.mrb[0].mxu0
    %v2151 = vadd.f32 0.0, %v2150
    %2152 = vmatprep.mubr.bf16.mxu0 %v1793
    %2153 = vmatmul.mubr.bf16.gmra.mrb[0].mxu0 %v1792
    %v2154 = vpop.f32.mrb[0].mxu0
    %v2155 = vadd.f32 0.0, %v2154
    %v2156 = vpop.f32.mrb[0].mxu0
    %v2157 = vadd.f32 0.0, %v2156
    %v2158 = vpop.f32.mrb[0].mxu0
    %v2159 = vadd.f32 0.0, %v2158
    %v2160 = vpop.f32.mrb[0].mxu0
    %v2161 = vadd.f32 0.0, %v2160
    %2162 = vmatprep.mubr.bf16.mxu0 %v1795
    %2163 = vmatmul.mubr.bf16.gmra.mrb[0].mxu0 %v1794
    %v2164 = vpop.f32.mrb[0].mxu0
    %v2165 = vadd.f32 0.0, %v2164
    %v2166 = vpop.f32.mrb[0].mxu0
    %v2167 = vadd.f32 0.0, %v2166
    %v2168 = vpop.f32.mrb[0].mxu0
    %v2169 = vadd.f32 0.0, %v2168
    %v2170 = vpop.f32.mrb[0].mxu0
    %v2171 = vadd.f32 0.0, %v2170
    %2172 = vmatprep.mubr.bf16.mxu0 %v1797
    %2173 = vmatmul.mubr.bf16.gmra.mrb[0].mxu0 %v1796
    %v2174 = vpop.f32.mrb[0].mxu0
    %v2175 = vadd.f32 0.0, %v2174
    %v2176 = vpop.f32.mrb[0].mxu0
    %v2177 = vadd.f32 0.0, %v2176
    %v2178 = vpop.f32.mrb[0].mxu0
    %v2179 = vadd.f32 0.0, %v2178
    %v2180 = vpop.f32.mrb[0].mxu0
    %v2181 = vadd.f32 0.0, %v2180
    %2182 = vdwg.mxu0
    %v2183 = vadd.f32 %v2025, %v2029
    %v2184 = vadd.f32 %v2183, %v2035
    %v2185 = vadd.f32 %v2184, %v2039
    %v2186 = vadd.f32 %v2185, %v2045
    %v2187 = vadd.f32 %v2186, %v2049
    %v2188 = vadd.f32 %v2187, %v2055
    %v2189 = vadd.f32 %v2188, %v2059
    %v2190 = vadd.f32 %v2189, %v2065
    %v2191 = vadd.f32 %v2190, %v2069
    %v2192 = vadd.f32 %v2191, %v2075
    %v2193 = vadd.f32 %v2192, %v2079
    %v2194 = vadd.f32 %v2193, %v2085
    %v2195 = vadd.f32 %v2194, %v2089
    %v2196 = vadd.f32 %v2195, %v2095
    %v2197 = vadd.f32 %v2196, %v2099
    %v2198 = vadd.f32 %v2197, %v2105
    %v2199 = vadd.f32 %v2198, %v2109
    %v2200 = vadd.f32 %v2199, %v2115
    %v2201 = vadd.f32 %v2200, %v2119
    %v2202 = vadd.f32 %v2201, %v2125
    %v2203 = vadd.f32 %v2202, %v2129
    %v2204 = vadd.f32 %v2203, %v2135
    %v2205 = vadd.f32 %v2204, %v2139
    %v2206 = vadd.f32 %v2205, %v2145
    %v2207 = vadd.f32 %v2206, %v2149
    %v2208 = vadd.f32 %v2207, %v2155
    %v2209 = vadd.f32 %v2208, %v2159
    %v2210 = vadd.f32 %v2209, %v2165
    %v2211 = vadd.f32 %v2210, %v2169
    %v2212 = vadd.f32 %v2211, %v2175
    %v2213 = vadd.f32 %v2212, %v2179
    %v2214 = vrot.slane %v2213, 4
    %v2215 = vadd.f32 %v2213, %v2214
    %v2216 = vrot.slane %v2215, 2
    %v2217 = vadd.f32 %v2215, %v2216
    %v2218 = vrot.slane %v2217, 1
    %v2219 = vadd.f32 %v2217, %v2218
    %v2220 = vadd.f32 %v2027, %v2031
    %v2221 = vadd.f32 %v2220, %v2037
    %v2222 = vadd.f32 %v2221, %v2041
    %v2223 = vadd.f32 %v2222, %v2047
    %v2224 = vadd.f32 %v2223, %v2051
    %v2225 = vadd.f32 %v2224, %v2057
    %v2226 = vadd.f32 %v2225, %v2061
    %v2227 = vadd.f32 %v2226, %v2067
    %v2228 = vadd.f32 %v2227, %v2071
    %v2229 = vadd.f32 %v2228, %v2077
    %v2230 = vadd.f32 %v2229, %v2081
    %v2231 = vadd.f32 %v2230, %v2087
    %v2232 = vadd.f32 %v2231, %v2091
    %v2233 = vadd.f32 %v2232, %v2097
    %v2234 = vadd.f32 %v2233, %v2101
    %v2235 = vadd.f32 %v2234, %v2107
    %v2236 = vadd.f32 %v2235, %v2111
    %v2237 = vadd.f32 %v2236, %v2117
    %v2238 = vadd.f32 %v2237, %v2121
    %v2239 = vadd.f32 %v2238, %v2127
    %v2240 = vadd.f32 %v2239, %v2131
    %v2241 = vadd.f32 %v2240, %v2137
    %v2242 = vadd.f32 %v2241, %v2141
    %v2243 = vadd.f32 %v2242, %v2147
    %v2244 = vadd.f32 %v2243, %v2151
    %v2245 = vadd.f32 %v2244, %v2157
    %v2246 = vadd.f32 %v2245, %v2161
    %v2247 = vadd.f32 %v2246, %v2167
    %v2248 = vadd.f32 %v2247, %v2171
    %v2249 = vadd.f32 %v2248, %v2177
    %v2250 = vadd.f32 %v2249, %v2181
    %v2251 = vrot.slane %v2250, 4
    %v2252 = vadd.f32 %v2250, %v2251
    %v2253 = vrot.slane %v2252, 2
    %v2254 = vadd.f32 %v2252, %v2253
    %v2255 = vrot.slane %v2254, 1
    %v2256 = vadd.f32 %v2254, %v2255
    %v2257 = vmul.f32 %v2219, 0.00390625
    %v2258 = vmul.f32 %v2256, 0.00390625
    %v2259 = vmul.f32 %v2025, %v2025
    %v2260 = vmul.f32 %v2027, %v2027
    %v2261 = vmul.f32 %v2029, %v2029
    %v2262 = vmul.f32 %v2031, %v2031
    %v2263 = vmul.f32 %v2035, %v2035
    %v2264 = vmul.f32 %v2037, %v2037
    %v2265 = vmul.f32 %v2039, %v2039
    %v2266 = vmul.f32 %v2041, %v2041
    %v2267 = vmul.f32 %v2045, %v2045
    %v2268 = vmul.f32 %v2047, %v2047
    %v2269 = vmul.f32 %v2049, %v2049
    %v2270 = vmul.f32 %v2051, %v2051
    %v2271 = vmul.f32 %v2055, %v2055
    %v2272 = vmul.f32 %v2057, %v2057
    %v2273 = vmul.f32 %v2059, %v2059
    %v2274 = vmul.f32 %v2061, %v2061
    %v2275 = vmul.f32 %v2065, %v2065
    %v2276 = vmul.f32 %v2067, %v2067
    %v2277 = vmul.f32 %v2069, %v2069
    %v2278 = vmul.f32 %v2071, %v2071
    %v2279 = vmul.f32 %v2075, %v2075
    %v2280 = vmul.f32 %v2077, %v2077
    %v2281 = vmul.f32 %v2079, %v2079
    %v2282 = vmul.f32 %v2081, %v2081
    %v2283 = vmul.f32 %v2085, %v2085
    %v2284 = vmul.f32 %v2087, %v2087
    %v2285 = vmul.f32 %v2089, %v2089
    %v2286 = vmul.f32 %v2091, %v2091
    %v2287 = vmul.f32 %v2095, %v2095
    %v2288 = vmul.f32 %v2097, %v2097
    %v2289 = vmul.f32 %v2099, %v2099
    %v2290 = vmul.f32 %v2101, %v2101
    %v2291 = vmul.f32 %v2105, %v2105
    %v2292 = vmul.f32 %v2107, %v2107
    %v2293 = vmul.f32 %v2109, %v2109
    %v2294 = vmul.f32 %v2111, %v2111
    %v2295 = vmul.f32 %v2115, %v2115
    %v2296 = vmul.f32 %v2117, %v2117
    %v2297 = vmul.f32 %v2119, %v2119
    %v2298 = vmul.f32 %v2121, %v2121
    %v2299 = vmul.f32 %v2125, %v2125
    %v2300 = vmul.f32 %v2127, %v2127
    %v2301 = vmul.f32 %v2129, %v2129
    %v2302 = vmul.f32 %v2131, %v2131
    %v2303 = vmul.f32 %v2135, %v2135
    %v2304 = vmul.f32 %v2137, %v2137
    %v2305 = vmul.f32 %v2139, %v2139
    %v2306 = vmul.f32 %v2141, %v2141
    %v2307 = vmul.f32 %v2145, %v2145
    %v2308 = vmul.f32 %v2147, %v2147
    %v2309 = vmul.f32 %v2149, %v2149
    %v2310 = vmul.f32 %v2151, %v2151
    %v2311 = vmul.f32 %v2155, %v2155
    %v2312 = vmul.f32 %v2157, %v2157
    %v2313 = vmul.f32 %v2159, %v2159
    %v2314 = vmul.f32 %v2161, %v2161
    %v2315 = vmul.f32 %v2165, %v2165
    %v2316 = vmul.f32 %v2167, %v2167
    %v2317 = vmul.f32 %v2169, %v2169
    %v2318 = vmul.f32 %v2171, %v2171
    %v2319 = vmul.f32 %v2175, %v2175
    %v2320 = vmul.f32 %v2177, %v2177
    %v2321 = vmul.f32 %v2179, %v2179
    %v2322 = vmul.f32 %v2181, %v2181
    %v2323 = vadd.f32 %v2259, %v2261
    %v2324 = vadd.f32 %v2323, %v2263
    %v2325 = vadd.f32 %v2324, %v2265
    %v2326 = vadd.f32 %v2325, %v2267
    %v2327 = vadd.f32 %v2326, %v2269
    %v2328 = vadd.f32 %v2327, %v2271
    %v2329 = vadd.f32 %v2328, %v2273
    %v2330 = vadd.f32 %v2329, %v2275
    %v2331 = vadd.f32 %v2330, %v2277
    %v2332 = vadd.f32 %v2331, %v2279
    %v2333 = vadd.f32 %v2332, %v2281
    %v2334 = vadd.f32 %v2333, %v2283
    %v2335 = vadd.f32 %v2334, %v2285
    %v2336 = vadd.f32 %v2335, %v2287
    %v2337 = vadd.f32 %v2336, %v2289
    %v2338 = vadd.f32 %v2337, %v2291
    %v2339 = vadd.f32 %v2338, %v2293
    %v2340 = vadd.f32 %v2339, %v2295
    %v2341 = vadd.f32 %v2340, %v2297
    %v2342 = vadd.f32 %v2341, %v2299
    %v2343 = vadd.f32 %v2342, %v2301
    %v2344 = vadd.f32 %v2343, %v2303
    %v2345 = vadd.f32 %v2344, %v2305
    %v2346 = vadd.f32 %v2345, %v2307
    %v2347 = vadd.f32 %v2346, %v2309
    %v2348 = vadd.f32 %v2347, %v2311
    %v2349 = vadd.f32 %v2348, %v2313
    %v2350 = vadd.f32 %v2349, %v2315
    %v2351 = vadd.f32 %v2350, %v2317
    %v2352 = vadd.f32 %v2351, %v2319
    %v2353 = vadd.f32 %v2352, %v2321
    %v2354 = vrot.slane %v2353, 4
    %v2355 = vadd.f32 %v2353, %v2354
    %v2356 = vrot.slane %v2355, 2
    %v2357 = vadd.f32 %v2355, %v2356
    %v2358 = vrot.slane %v2357, 1
    %v2359 = vadd.f32 %v2357, %v2358
    %v2360 = vadd.f32 %v2260, %v2262
    %v2361 = vadd.f32 %v2360, %v2264
    %v2362 = vadd.f32 %v2361, %v2266
    %v2363 = vadd.f32 %v2362, %v2268
    %v2364 = vadd.f32 %v2363, %v2270
    %v2365 = vadd.f32 %v2364, %v2272
    %v2366 = vadd.f32 %v2365, %v2274
    %v2367 = vadd.f32 %v2366, %v2276
    %v2368 = vadd.f32 %v2367, %v2278
    %v2369 = vadd.f32 %v2368, %v2280
    %v2370 = vadd.f32 %v2369, %v2282
    %v2371 = vadd.f32 %v2370, %v2284
    %v2372 = vadd.f32 %v2371, %v2286
    %v2373 = vadd.f32 %v2372, %v2288
    %v2374 = vadd.f32 %v2373, %v2290
    %v2375 = vadd.f32 %v2374, %v2292
    %v2376 = vadd.f32 %v2375, %v2294
    %v2377 = vadd.f32 %v2376, %v2296
    %v2378 = vadd.f32 %v2377, %v2298
    %v2379 = vadd.f32 %v2378, %v2300
    %v2380 = vadd.f32 %v2379, %v2302
    %v2381 = vadd.f32 %v2380, %v2304
    %v2382 = vadd.f32 %v2381, %v2306
    %v2383 = vadd.f32 %v2382, %v2308
    %v2384 = vadd.f32 %v2383, %v2310
    %v2385 = vadd.f32 %v2384, %v2312
    %v2386 = vadd.f32 %v2385, %v2314
    %v2387 = vadd.f32 %v2386, %v2316
    %v2388 = vadd.f32 %v2387, %v2318
    %v2389 = vadd.f32 %v2388, %v2320
    %v2390 = vadd.f32 %v2389, %v2322
    %v2391 = vrot.slane %v2390, 4
    %v2392 = vadd.f32 %v2390, %v2391
    %v2393 = vrot.slane %v2392, 2
    %v2394 = vadd.f32 %v2392, %v2393
    %v2395 = vrot.slane %v2394, 1
    %v2396 = vadd.f32 %v2394, %v2395
    %v2397 = vmul.f32 %v2359, 0.00390625
    %v2398 = vmul.f32 %v2396, 0.00390625
    %v2399 = vmul.f32 %v2257, %v2257
    %v2400 = vmul.f32 %v2258, %v2258
    %v2401 = vsub.f32 %v2397, %v2399
    %v2402 = vsub.f32 %v2398, %v2400
    %v2403 = vadd.f32 %v2401, 1e-05
    %v2404 = vadd.f32 %v2402, 1e-05
    %v2405 = vrsqrt.pop %v2403
    %v2406 = vrsqrt.pop %v2404
    %v2407 = vld [vmem:[%s6] sm:$0x3]
    %v2409 = vlaneseq
    %v2410 = vshrl.u32 %v2409, 7
    %v2411 = vsub.s32 0, %v2410
    %v2412 = vrot.slane %v2407, %v2411
    %v2413 = vlaneseq
    %v2414 = vshrl.u32 %v2413, 7
    %v2415 = vsub.s32 1, %v2414
    %v2416 = vrot.slane %v2407, %v2415
    %v2419 = vmul.f32 %v2405, %v2412
    %v2420 = vmul.f32 %v2406, %v2416
    %v2421 = vld [vmem:[%s7] sm:$0x3]
    %v2422 = vmul.f32 %v2257, %v2419
    %v2423 = vmul.f32 %v2258, %v2420
    %v2426 = vcombine.low %v2422, %v2423
    %v2428 = vunpack.c.l.s4 1966171168
    %v2429 = vunpack.c.0.s8 %v2428
    %v2430 = vlaneseq
    %v2431 = vshrl.u32 %v2430, 7
    %v2432 = vsub.s32 %v2429, %v2431
    %v2433 = vrot.slane %v2426, %v2432
    %v2435 = vunpack.c.l.s4 1966171168
    %v2436 = vunpack.c.0.s8 %v2435
    %v2437 = vlaneseq
    %v2438 = vshrl.u32 %v2437, 7
    %v2439 = vsub.s32 %v2436, %v2438
    %v2440 = vrot.slane %v2433, %v2439
    %v2442 = vsub.f32 %v2421, %v2440
    %v2443 = vlaneseq
    %v2444 = vshrl.u32 %v2443, 7
    %v2445 = vsub.s32 0, %v2444
    %v2446 = vrot.slane %v2419, %v2445
    %v2447 = vlaneseq
    %v2448 = vshrl.u32 %v2447, 7
    %v2449 = vsub.s32 0, %v2448
    %v2450 = vrot.slane %v2420, %v2449
    %v2451 = vmul.f32 %v2025, %v2446
    %v2452 = vmul.f32 %v2027, %v2450
    %v2453 = vmul.f32 %v2029, %v2446
    %v2454 = vmul.f32 %v2031, %v2450
    %v2455 = vmul.f32 %v2035, %v2446
    %v2456 = vmul.f32 %v2037, %v2450
    %v2457 = vmul.f32 %v2039, %v2446
    %v2458 = vmul.f32 %v2041, %v2450
    %v2459 = vmul.f32 %v2045, %v2446
    %v2460 = vmul.f32 %v2047, %v2450
    %v2461 = vmul.f32 %v2049, %v2446
    %v2462 = vmul.f32 %v2051, %v2450
    %v2463 = vmul.f32 %v2055, %v2446
    %v2464 = vmul.f32 %v2057, %v2450
    %v2465 = vmul.f32 %v2059, %v2446
    %v2466 = vmul.f32 %v2061, %v2450
    %v2467 = vmul.f32 %v2065, %v2446
    %v2468 = vmul.f32 %v2067, %v2450
    %v2469 = vmul.f32 %v2069, %v2446
    %v2470 = vmul.f32 %v2071, %v2450
    %v2471 = vmul.f32 %v2075, %v2446
    %v2472 = vmul.f32 %v2077, %v2450
    %v2473 = vmul.f32 %v2079, %v2446
    %v2474 = vmul.f32 %v2081, %v2450
    %v2475 = vmul.f32 %v2085, %v2446
    %v2476 = vmul.f32 %v2087, %v2450
    %v2477 = vmul.f32 %v2089, %v2446
    %v2478 = vmul.f32 %v2091, %v2450
    %v2479 = vmul.f32 %v2095, %v2446
    %v2480 = vmul.f32 %v2097, %v2450
    %v2481 = vmul.f32 %v2099, %v2446
    %v2482 = vmul.f32 %v2101, %v2450
    %v2483 = vmul.f32 %v2105, %v2446
    %v2484 = vmul.f32 %v2107, %v2450
    %v2485 = vmul.f32 %v2109, %v2446
    %v2486 = vmul.f32 %v2111, %v2450
    %v2487 = vmul.f32 %v2115, %v2446
    %v2488 = vmul.f32 %v2117, %v2450
    %v2489 = vmul.f32 %v2119, %v2446
    %v2490 = vmul.f32 %v2121, %v2450
    %v2491 = vmul.f32 %v2125, %v2446
    %v2492 = vmul.f32 %v2127, %v2450
    %v2493 = vmul.f32 %v2129, %v2446
    %v2494 = vmul.f32 %v2131, %v2450
    %v2495 = vmul.f32 %v2135, %v2446
    %v2496 = vmul.f32 %v2137, %v2450
    %v2497 = vmul.f32 %v2139, %v2446
    %v2498 = vmul.f32 %v2141, %v2450
    %v2499 = vmul.f32 %v2145, %v2446
    %v2500 = vmul.f32 %v2147, %v2450
    %v2501 = vmul.f32 %v2149, %v2446
    %v2502 = vmul.f32 %v2151, %v2450
    %v2503 = vmul.f32 %v2155, %v2446
    %v2504 = vmul.f32 %v2157, %v2450
    %v2505 = vmul.f32 %v2159, %v2446
    %v2506 = vmul.f32 %v2161, %v2450
    %v2507 = vmul.f32 %v2165, %v2446
    %v2508 = vmul.f32 %v2167, %v2450
    %v2509 = vmul.f32 %v2169, %v2446
    %v2510 = vmul.f32 %v2171, %v2450
    %v2511 = vmul.f32 %v2175, %v2446
    %v2512 = vmul.f32 %v2177, %v2450
    %v2513 = vmul.f32 %v2179, %v2446
    %v2514 = vmul.f32 %v2181, %v2450
    %v2516 = vlaneseq
    %v2517 = vshrl.u32 %v2516, 7
    %v2518 = vsub.s32 0, %v2517
    %v2519 = vrot.slane %v2442, %v2518
    %v2520 = vlaneseq
    %v2521 = vshrl.u32 %v2520, 7
    %v2522 = vsub.s32 1, %v2521
    %v2523 = vrot.slane %v2442, %v2522
    %v2526 = vadd.f32 %v2451, %v2519
    %v2527 = vadd.f32 %v2452, %v2523
    %v2528 = vadd.f32 %v2453, %v2519
    %v2529 = vadd.f32 %v2454, %v2523
    %v2530 = vadd.f32 %v2455, %v2519
    %v2531 = vadd.f32 %v2456, %v2523
    %v2532 = vadd.f32 %v2457, %v2519
    %v2533 = vadd.f32 %v2458, %v2523
    %v2534 = vadd.f32 %v2459, %v2519
    %v2535 = vadd.f32 %v2460, %v2523
    %v2536 = vadd.f32 %v2461, %v2519
    %v2537 = vadd.f32 %v2462, %v2523
    %v2538 = vadd.f32 %v2463, %v2519
    %v2539 = vadd.f32 %v2464, %v2523
    %v2540 = vadd.f32 %v2465, %v2519
    %v2541 = vadd.f32 %v2466, %v2523
    %v2542 = vadd.f32 %v2467, %v2519
    %v2543 = vadd.f32 %v2468, %v2523
    %v2544 = vadd.f32 %v2469, %v2519
    %v2545 = vadd.f32 %v2470, %v2523
    %v2546 = vadd.f32 %v2471, %v2519
    %v2547 = vadd.f32 %v2472, %v2523
    %v2548 = vadd.f32 %v2473, %v2519
    %v2549 = vadd.f32 %v2474, %v2523
    %v2550 = vadd.f32 %v2475, %v2519
    %v2551 = vadd.f32 %v2476, %v2523
    %v2552 = vadd.f32 %v2477, %v2519
    %v2553 = vadd.f32 %v2478, %v2523
    %v2554 = vadd.f32 %v2479, %v2519
    %v2555 = vadd.f32 %v2480, %v2523
    %v2556 = vadd.f32 %v2481, %v2519
    %v2557 = vadd.f32 %v2482, %v2523
    %v2558 = vadd.f32 %v2483, %v2519
    %v2559 = vadd.f32 %v2484, %v2523
    %v2560 = vadd.f32 %v2485, %v2519
    %v2561 = vadd.f32 %v2486, %v2523
    %v2562 = vadd.f32 %v2487, %v2519
    %v2563 = vadd.f32 %v2488, %v2523
    %v2564 = vadd.f32 %v2489, %v2519
    %v2565 = vadd.f32 %v2490, %v2523
    %v2566 = vadd.f32 %v2491, %v2519
    %v2567 = vadd.f32 %v2492, %v2523
    %v2568 = vadd.f32 %v2493, %v2519
    %v2569 = vadd.f32 %v2494, %v2523
    %v2570 = vadd.f32 %v2495, %v2519
    %v2571 = vadd.f32 %v2496, %v2523
    %v2572 = vadd.f32 %v2497, %v2519
    %v2573 = vadd.f32 %v2498, %v2523
    %v2574 = vadd.f32 %v2499, %v2519
    %v2575 = vadd.f32 %v2500, %v2523
    %v2576 = vadd.f32 %v2501, %v2519
    %v2577 = vadd.f32 %v2502, %v2523
    %v2578 = vadd.f32 %v2503, %v2519
    %v2579 = vadd.f32 %v2504, %v2523
    %v2580 = vadd.f32 %v2505, %v2519
    %v2581 = vadd.f32 %v2506, %v2523
    %v2582 = vadd.f32 %v2507, %v2519
    %v2583 = vadd.f32 %v2508, %v2523
    %v2584 = vadd.f32 %v2509, %v2519
    %v2585 = vadd.f32 %v2510, %v2523
    %v2586 = vadd.f32 %v2511, %v2519
    %v2587 = vadd.f32 %v2512, %v2523
    %v2588 = vadd.f32 %v2513, %v2519
    %v2589 = vadd.f32 %v2514, %v2523
    %v2590 = vmin.f32 %v2526, 20.0
    %v2591 = vmin.f32 %v2527, 20.0
    %v2592 = vmin.f32 %v2528, 20.0
    %v2593 = vmin.f32 %v2529, 20.0
    %v2594 = vmin.f32 %v2530, 20.0
    %v2595 = vmin.f32 %v2531, 20.0
    %v2596 = vmin.f32 %v2532, 20.0
    %v2597 = vmin.f32 %v2533, 20.0
    %v2598 = vmin.f32 %v2534, 20.0
    %v2599 = vmin.f32 %v2535, 20.0
    %v2600 = vmin.f32 %v2536, 20.0
    %v2601 = vmin.f32 %v2537, 20.0
    %v2602 = vmin.f32 %v2538, 20.0
    %v2603 = vmin.f32 %v2539, 20.0
    %v2604 = vmin.f32 %v2540, 20.0
    %v2605 = vmin.f32 %v2541, 20.0
    %v2606 = vmin.f32 %v2542, 20.0
    %v2607 = vmin.f32 %v2543, 20.0
    %v2608 = vmin.f32 %v2544, 20.0
    %v2609 = vmin.f32 %v2545, 20.0
    %v2610 = vmin.f32 %v2546, 20.0
    %v2611 = vmin.f32 %v2547, 20.0
    %v2612 = vmin.f32 %v2548, 20.0
    %v2613 = vmin.f32 %v2549, 20.0
    %v2614 = vmin.f32 %v2550, 20.0
    %v2615 = vmin.f32 %v2551, 20.0
    %v2616 = vmin.f32 %v2552, 20.0
    %v2617 = vmin.f32 %v2553, 20.0
    %v2618 = vmin.f32 %v2554, 20.0
    %v2619 = vmin.f32 %v2555, 20.0
    %v2620 = vmin.f32 %v2556, 20.0
    %v2621 = vmin.f32 %v2557, 20.0
    %v2622 = vmin.f32 %v2558, 20.0
    %v2623 = vmin.f32 %v2559, 20.0
    %v2624 = vmin.f32 %v2560, 20.0
    %v2625 = vmin.f32 %v2561, 20.0
    %v2626 = vmin.f32 %v2562, 20.0
    %v2627 = vmin.f32 %v2563, 20.0
    %v2628 = vmin.f32 %v2564, 20.0
    %v2629 = vmin.f32 %v2565, 20.0
    %v2630 = vmin.f32 %v2566, 20.0
    %v2631 = vmin.f32 %v2567, 20.0
    %v2632 = vmin.f32 %v2568, 20.0
    %v2633 = vmin.f32 %v2569, 20.0
    %v2634 = vmin.f32 %v2570, 20.0
    %v2635 = vmin.f32 %v2571, 20.0
    %v2636 = vmin.f32 %v2572, 20.0
    %v2637 = vmin.f32 %v2573, 20.0
    %v2638 = vmin.f32 %v2574, 20.0
    %v2639 = vmin.f32 %v2575, 20.0
    %v2640 = vmin.f32 %v2576, 20.0
    %v2641 = vmin.f32 %v2577, 20.0
    %v2642 = vmin.f32 %v2578, 20.0
    %v2643 = vmin.f32 %v2579, 20.0
    %v2644 = vmin.f32 %v2580, 20.0
    %v2645 = vmin.f32 %v2581, 20.0
    %v2646 = vmin.f32 %v2582, 20.0
    %v2647 = vmin.f32 %v2583, 20.0
    %v2648 = vmin.f32 %v2584, 20.0
    %v2649 = vmin.f32 %v2585, 20.0
    %v2650 = vmin.f32 %v2586, 20.0
    %v2651 = vmin.f32 %v2587, 20.0
    %v2652 = vmin.f32 %v2588, 20.0
    %v2653 = vmin.f32 %v2589, 20.0
    %v2654 = vmul.f32 %v2590, 1.442695
    %v2655 = vpow.pop %v2654
    %v2656 = vmul.f32 %v2591, 1.442695
    %v2657 = vpow.pop %v2656
    %v2658 = vmul.f32 %v2592, 1.442695
    %v2659 = vpow.pop %v2658
    %v2660 = vmul.f32 %v2593, 1.442695
    %v2661 = vpow.pop %v2660
    %v2662 = vmul.f32 %v2594, 1.442695
    %v2663 = vpow.pop %v2662
    %v2664 = vmul.f32 %v2595, 1.442695
    %v2665 = vpow.pop %v2664
    %v2666 = vmul.f32 %v2596, 1.442695
    %v2667 = vpow.pop %v2666
    %v2668 = vmul.f32 %v2597, 1.442695
    %v2669 = vpow.pop %v2668
    %v2670 = vmul.f32 %v2598, 1.442695
    %v2671 = vpow.pop %v2670
    %v2672 = vmul.f32 %v2599, 1.442695
    %v2673 = vpow.pop %v2672
    %v2674 = vmul.f32 %v2600, 1.442695
    %v2675 = vpow.pop %v2674
    %v2676 = vmul.f32 %v2601, 1.442695
    %v2677 = vpow.pop %v2676
    %v2678 = vmul.f32 %v2602, 1.442695
    %v2679 = vpow.pop %v2678
    %v2680 = vmul.f32 %v2603, 1.442695
    %v2681 = vpow.pop %v2680
    %v2682 = vmul.f32 %v2604, 1.442695
    %v2683 = vpow.pop %v2682
    %v2684 = vmul.f32 %v2605, 1.442695
    %v2685 = vpow.pop %v2684
    %v2686 = vmul.f32 %v2606, 1.442695
    %v2687 = vpow.pop %v2686
    %v2688 = vmul.f32 %v2607, 1.442695
    %v2689 = vpow.pop %v2688
    %v2690 = vmul.f32 %v2608, 1.442695
    %v2691 = vpow.pop %v2690
    %v2692 = vmul.f32 %v2609, 1.442695
    %v2693 = vpow.pop %v2692
    %v2694 = vmul.f32 %v2610, 1.442695
    %v2695 = vpow.pop %v2694
    %v2696 = vmul.f32 %v2611, 1.442695
    %v2697 = vpow.pop %v2696
    %v2698 = vmul.f32 %v2612, 1.442695
    %v2699 = vpow.pop %v2698
    %v2700 = vmul.f32 %v2613, 1.442695
    %v2701 = vpow.pop %v2700
    %v2702 = vmul.f32 %v2614, 1.442695
    %v2703 = vpow.pop %v2702
    %v2704 = vmul.f32 %v2615, 1.442695
    %v2705 = vpow.pop %v2704
    %v2706 = vmul.f32 %v2616, 1.442695
    %v2707 = vpow.pop %v2706
    %v2708 = vmul.f32 %v2617, 1.442695
    %v2709 = vpow.pop %v2708
    %v2710 = vmul.f32 %v2618, 1.442695
    %v2711 = vpow.pop %v2710
    %v2712 = vmul.f32 %v2619, 1.442695
    %v2713 = vpow.pop %v2712
    %v2714 = vmul.f32 %v2620, 1.442695
    %v2715 = vpow.pop %v2714
    %v2716 = vmul.f32 %v2621, 1.442695
    %v2717 = vpow.pop %v2716
    %v2718 = vmul.f32 %v2622, 1.442695
    %v2719 = vpow.pop %v2718
    %v2720 = vmul.f32 %v2623, 1.442695
    %v2721 = vpow.pop %v2720
    %v2722 = vmul.f32 %v2624, 1.442695
    %v2723 = vpow.pop %v2722
    %v2724 = vmul.f32 %v2625, 1.442695
    %v2725 = vpow.pop %v2724
    %v2726 = vmul.f32 %v2626, 1.442695
    %v2727 = vpow.pop %v2726
    %v2728 = vmul.f32 %v2627, 1.442695
    %v2729 = vpow.pop %v2728
    %v2730 = vmul.f32 %v2628, 1.442695
    %v2731 = vpow.pop %v2730
    %v2732 = vmul.f32 %v2629, 1.442695
    %v2733 = vpow.pop %v2732
    %v2734 = vmul.f32 %v2630, 1.442695
    %v2735 = vpow.pop %v2734
    %v2736 = vmul.f32 %v2631, 1.442695
    %v2737 = vpow.pop %v2736
    %v2738 = vmul.f32 %v2632, 1.442695
    %v2739 = vpow.pop %v2738
    %v2740 = vmul.f32 %v2633, 1.442695
    %v2741 = vpow.pop %v2740
    %v2742 = vmul.f32 %v2634, 1.442695
    %v2743 = vpow.pop %v2742
    %v2744 = vmul.f32 %v2635, 1.442695
    %v2745 = vpow.pop %v2744
    %v2746 = vmul.f32 %v2636, 1.442695
    %v2747 = vpow.pop %v2746
    %v2748 = vmul.f32 %v2637, 1.442695
    %v2749 = vpow.pop %v2748
    %v2750 = vmul.f32 %v2638, 1.442695
    %v2751 = vpow.pop %v2750
    %v2752 = vmul.f32 %v2639, 1.442695
    %v2753 = vpow.pop %v2752
    %v2754 = vmul.f32 %v2640, 1.442695
    %v2755 = vpow.pop %v2754
    %v2756 = vmul.f32 %v2641, 1.442695
    %v2757 = vpow.pop %v2756
    %v2758 = vmul.f32 %v2642, 1.442695
    %v2759 = vpow.pop %v2758
    %v2760 = vmul.f32 %v2643, 1.442695
    %v2761 = vpow.pop %v2760
    %v2762 = vmul.f32 %v2644, 1.442695
    %v2763 = vpow.pop %v2762
    %v2764 = vmul.f32 %v2645, 1.442695
    %v2765 = vpow.pop %v2764
    %v2766 = vmul.f32 %v2646, 1.442695
    %v2767 = vpow.pop %v2766
    %v2768 = vmul.f32 %v2647, 1.442695
    %v2769 = vpow.pop %v2768
    %v2770 = vmul.f32 %v2648, 1.442695
    %v2771 = vpow.pop %v2770
    %v2772 = vmul.f32 %v2649, 1.442695
    %v2773 = vpow.pop %v2772
    %v2774 = vmul.f32 %v2650, 1.442695
    %v2775 = vpow.pop %v2774
    %v2776 = vmul.f32 %v2651, 1.442695
    %v2777 = vpow.pop %v2776
    %v2778 = vmul.f32 %v2652, 1.442695
    %v2779 = vpow.pop %v2778
    %v2780 = vmul.f32 %v2653, 1.442695
    %v2781 = vpow.pop %v2780
    %v2782 = vadd.f32 %v2655, 1.0
    %v2783 = vadd.f32 %v2657, 1.0
    %v2784 = vadd.f32 %v2659, 1.0
    %v2785 = vadd.f32 %v2661, 1.0
    %v2786 = vadd.f32 %v2663, 1.0
    %v2787 = vadd.f32 %v2665, 1.0
    %v2788 = vadd.f32 %v2667, 1.0
    %v2789 = vadd.f32 %v2669, 1.0
    %v2790 = vadd.f32 %v2671, 1.0
    %v2791 = vadd.f32 %v2673, 1.0
    %v2792 = vadd.f32 %v2675, 1.0
    %v2793 = vadd.f32 %v2677, 1.0
    %v2794 = vadd.f32 %v2679, 1.0
    %v2795 = vadd.f32 %v2681, 1.0
    %v2796 = vadd.f32 %v2683, 1.0
    %v2797 = vadd.f32 %v2685, 1.0
    %v2798 = vadd.f32 %v2687, 1.0
    %v2799 = vadd.f32 %v2689, 1.0
    %v2800 = vadd.f32 %v2691, 1.0
    %v2801 = vadd.f32 %v2693, 1.0
    %v2802 = vadd.f32 %v2695, 1.0
    %v2803 = vadd.f32 %v2697, 1.0
    %v2804 = vadd.f32 %v2699, 1.0
    %v2805 = vadd.f32 %v2701, 1.0
    %v2806 = vadd.f32 %v2703, 1.0
    %v2807 = vadd.f32 %v2705, 1.0
    %v2808 = vadd.f32 %v2707, 1.0
    %v2809 = vadd.f32 %v2709, 1.0
    %v2810 = vadd.f32 %v2711, 1.0
    %v2811 = vadd.f32 %v2713, 1.0
    %v2812 = vadd.f32 %v2715, 1.0
    %v2813 = vadd.f32 %v2717, 1.0
    %v2814 = vadd.f32 %v2719, 1.0
    %v2815 = vadd.f32 %v2721, 1.0
    %v2816 = vadd.f32 %v2723, 1.0
    %v2817 = vadd.f32 %v2725, 1.0
    %v2818 = vadd.f32 %v2727, 1.0
    %v2819 = vadd.f32 %v2729, 1.0
    %v2820 = vadd.f32 %v2731, 1.0
    %v2821 = vadd.f32 %v2733, 1.0
    %v2822 = vadd.f32 %v2735, 1.0
    %v2823 = vadd.f32 %v2737, 1.0
    %v2824 = vadd.f32 %v2739, 1.0
    %v2825 = vadd.f32 %v2741, 1.0
    %v2826 = vadd.f32 %v2743, 1.0
    %v2827 = vadd.f32 %v2745, 1.0
    %v2828 = vadd.f32 %v2747, 1.0
    %v2829 = vadd.f32 %v2749, 1.0
    %v2830 = vadd.f32 %v2751, 1.0
    %v2831 = vadd.f32 %v2753, 1.0
    %v2832 = vadd.f32 %v2755, 1.0
    %v2833 = vadd.f32 %v2757, 1.0
    %v2834 = vadd.f32 %v2759, 1.0
    %v2835 = vadd.f32 %v2761, 1.0
    %v2836 = vadd.f32 %v2763, 1.0
    %v2837 = vadd.f32 %v2765, 1.0
    %v2838 = vadd.f32 %v2767, 1.0
    %v2839 = vadd.f32 %v2769, 1.0
    %v2840 = vadd.f32 %v2771, 1.0
    %v2841 = vadd.f32 %v2773, 1.0
    %v2842 = vadd.f32 %v2775, 1.0
    %v2843 = vadd.f32 %v2777, 1.0
    %v2844 = vadd.f32 %v2779, 1.0
    %v2845 = vadd.f32 %v2781, 1.0
    %v2846 = vmul.f32 %v2782, %v2782
    %v2847 = vmul.f32 %v2783, %v2783
    %v2848 = vmul.f32 %v2784, %v2784
    %v2849 = vmul.f32 %v2785, %v2785
    %v2850 = vmul.f32 %v2786, %v2786
    %v2851 = vmul.f32 %v2787, %v2787
    %v2852 = vmul.f32 %v2788, %v2788
    %v2853 = vmul.f32 %v2789, %v2789
    %v2854 = vmul.f32 %v2790, %v2790
    %v2855 = vmul.f32 %v2791, %v2791
    %v2856 = vmul.f32 %v2792, %v2792
    %v2857 = vmul.f32 %v2793, %v2793
    %v2858 = vmul.f32 %v2794, %v2794
    %v2859 = vmul.f32 %v2795, %v2795
    %v2860 = vmul.f32 %v2796, %v2796
    %v2861 = vmul.f32 %v2797, %v2797
    %v2862 = vmul.f32 %v2798, %v2798
    %v2863 = vmul.f32 %v2799, %v2799
    %v2864 = vmul.f32 %v2800, %v2800
    %v2865 = vmul.f32 %v2801, %v2801
    %v2866 = vmul.f32 %v2802, %v2802
    %v2867 = vmul.f32 %v2803, %v2803
    %v2868 = vmul.f32 %v2804, %v2804
    %v2869 = vmul.f32 %v2805, %v2805
    %v2870 = vmul.f32 %v2806, %v2806
    %v2871 = vmul.f32 %v2807, %v2807
    %v2872 = vmul.f32 %v2808, %v2808
    %v2873 = vmul.f32 %v2809, %v2809
    %v2874 = vmul.f32 %v2810, %v2810
    %v2875 = vmul.f32 %v2811, %v2811
    %v2876 = vmul.f32 %v2812, %v2812
    %v2877 = vmul.f32 %v2813, %v2813
    %v2878 = vmul.f32 %v2814, %v2814
    %v2879 = vmul.f32 %v2815, %v2815
    %v2880 = vmul.f32 %v2816, %v2816
    %v2881 = vmul.f32 %v2817, %v2817
    %v2882 = vmul.f32 %v2818, %v2818
    %v2883 = vmul.f32 %v2819, %v2819
    %v2884 = vmul.f32 %v2820, %v2820
    %v2885 = vmul.f32 %v2821, %v2821
    %v2886 = vmul.f32 %v2822, %v2822
    %v2887 = vmul.f32 %v2823, %v2823
    %v2888 = vmul.f32 %v2824, %v2824
    %v2889 = vmul.f32 %v2825, %v2825
    %v2890 = vmul.f32 %v2826, %v2826
    %v2891 = vmul.f32 %v2827, %v2827
    %v2892 = vmul.f32 %v2828, %v2828
    %v2893 = vmul.f32 %v2829, %v2829
    %v2894 = vmul.f32 %v2830, %v2830
    %v2895 = vmul.f32 %v2831, %v2831
    %v2896 = vmul.f32 %v2832, %v2832
    %v2897 = vmul.f32 %v2833, %v2833
    %v2898 = vmul.f32 %v2834, %v2834
    %v2899 = vmul.f32 %v2835, %v2835
    %v2900 = vmul.f32 %v2836, %v2836
    %v2901 = vmul.f32 %v2837, %v2837
    %v2902 = vmul.f32 %v2838, %v2838
    %v2903 = vmul.f32 %v2839, %v2839
    %v2904 = vmul.f32 %v2840, %v2840
    %v2905 = vmul.f32 %v2841, %v2841
    %v2906 = vmul.f32 %v2842, %v2842
    %v2907 = vmul.f32 %v2843, %v2843
    %v2908 = vmul.f32 %v2844, %v2844
    %v2909 = vmul.f32 %v2845, %v2845
    %v2910 = vsub.f32 %v2846, 1.0
    %v2911 = vsub.f32 %v2847, 1.0
    %v2912 = vsub.f32 %v2848, 1.0
    %v2913 = vsub.f32 %v2849, 1.0
    %v2914 = vsub.f32 %v2850, 1.0
    %v2915 = vsub.f32 %v2851, 1.0
    %v2916 = vsub.f32 %v2852, 1.0
    %v2917 = vsub.f32 %v2853, 1.0
    %v2918 = vsub.f32 %v2854, 1.0
    %v2919 = vsub.f32 %v2855, 1.0
    %v2920 = vsub.f32 %v2856, 1.0
    %v2921 = vsub.f32 %v2857, 1.0
    %v2922 = vsub.f32 %v2858, 1.0
    %v2923 = vsub.f32 %v2859, 1.0
    %v2924 = vsub.f32 %v2860, 1.0
    %v2925 = vsub.f32 %v2861, 1.0
    %v2926 = vsub.f32 %v2862, 1.0
    %v2927 = vsub.f32 %v2863, 1.0
    %v2928 = vsub.f32 %v2864, 1.0
    %v2929 = vsub.f32 %v2865, 1.0
    %v2930 = vsub.f32 %v2866, 1.0
    %v2931 = vsub.f32 %v2867, 1.0
    %v2932 = vsub.f32 %v2868, 1.0
    %v2933 = vsub.f32 %v2869, 1.0
    %v2934 = vsub.f32 %v2870, 1.0
    %v2935 = vsub.f32 %v2871, 1.0
    %v2936 = vsub.f32 %v2872, 1.0
    %v2937 = vsub.f32 %v2873, 1.0
    %v2938 = vsub.f32 %v2874, 1.0
    %v2939 = vsub.f32 %v2875, 1.0
    %v2940 = vsub.f32 %v2876, 1.0
    %v2941 = vsub.f32 %v2877, 1.0
    %v2942 = vsub.f32 %v2878, 1.0
    %v2943 = vsub.f32 %v2879, 1.0
    %v2944 = vsub.f32 %v2880, 1.0
    %v2945 = vsub.f32 %v2881, 1.0
    %v2946 = vsub.f32 %v2882, 1.0
    %v2947 = vsub.f32 %v2883, 1.0
    %v2948 = vsub.f32 %v2884, 1.0
    %v2949 = vsub.f32 %v2885, 1.0
    %v2950 = vsub.f32 %v2886, 1.0
    %v2951 = vsub.f32 %v2887, 1.0
    %v2952 = vsub.f32 %v2888, 1.0
    %v2953 = vsub.f32 %v2889, 1.0
    %v2954 = vsub.f32 %v2890, 1.0
    %v2955 = vsub.f32 %v2891, 1.0
    %v2956 = vsub.f32 %v2892, 1.0
    %v2957 = vsub.f32 %v2893, 1.0
    %v2958 = vsub.f32 %v2894, 1.0
    %v2959 = vsub.f32 %v2895, 1.0
    %v2960 = vsub.f32 %v2896, 1.0
    %v2961 = vsub.f32 %v2897, 1.0
    %v2962 = vsub.f32 %v2898, 1.0
    %v2963 = vsub.f32 %v2899, 1.0
    %v2964 = vsub.f32 %v2900, 1.0
    %v2965 = vsub.f32 %v2901, 1.0
    %v2966 = vsub.f32 %v2902, 1.0
    %v2967 = vsub.f32 %v2903, 1.0
    %v2968 = vsub.f32 %v2904, 1.0
    %v2969 = vsub.f32 %v2905, 1.0
    %v2970 = vsub.f32 %v2906, 1.0
    %v2971 = vsub.f32 %v2907, 1.0
    %v2972 = vsub.f32 %v2908, 1.0
    %v2973 = vsub.f32 %v2909, 1.0
    %v2974 = vadd.f32 %v2846, 1.0
    %v2975 = vadd.f32 %v2847, 1.0
    %v2976 = vadd.f32 %v2848, 1.0
    %v2977 = vadd.f32 %v2849, 1.0
    %v2978 = vadd.f32 %v2850, 1.0
    %v2979 = vadd.f32 %v2851, 1.0
    %v2980 = vadd.f32 %v2852, 1.0
    %v2981 = vadd.f32 %v2853, 1.0
    %v2982 = vadd.f32 %v2854, 1.0
    %v2983 = vadd.f32 %v2855, 1.0
    %v2984 = vadd.f32 %v2856, 1.0
    %v2985 = vadd.f32 %v2857, 1.0
    %v2986 = vadd.f32 %v2858, 1.0
    %v2987 = vadd.f32 %v2859, 1.0
    %v2988 = vadd.f32 %v2860, 1.0
    %v2989 = vadd.f32 %v2861, 1.0
    %v2990 = vadd.f32 %v2862, 1.0
    %v2991 = vadd.f32 %v2863, 1.0
    %v2992 = vadd.f32 %v2864, 1.0
    %v2993 = vadd.f32 %v2865, 1.0
    %v2994 = vadd.f32 %v2866, 1.0
    %v2995 = vadd.f32 %v2867, 1.0
    %v2996 = vadd.f32 %v2868, 1.0
    %v2997 = vadd.f32 %v2869, 1.0
    %v2998 = vadd.f32 %v2870, 1.0
    %v2999 = vadd.f32 %v2871, 1.0
    %v3000 = vadd.f32 %v2872, 1.0
    %v3001 = vadd.f32 %v2873, 1.0
    %v3002 = vadd.f32 %v2874, 1.0
    %v3003 = vadd.f32 %v2875, 1.0
    %v3004 = vadd.f32 %v2876, 1.0
    %v3005 = vadd.f32 %v2877, 1.0
    %v3006 = vadd.f32 %v2878, 1.0
    %v3007 = vadd.f32 %v2879, 1.0
    %v3008 = vadd.f32 %v2880, 1.0
    %v3009 = vadd.f32 %v2881, 1.0
    %v3010 = vadd.f32 %v2882, 1.0
    %v3011 = vadd.f32 %v2883, 1.0
    %v3012 = vadd.f32 %v2884, 1.0
    %v3013 = vadd.f32 %v2885, 1.0
    %v3014 = vadd.f32 %v2886, 1.0
    %v3015 = vadd.f32 %v2887, 1.0
    %v3016 = vadd.f32 %v2888, 1.0
    %v3017 = vadd.f32 %v2889, 1.0
    %v3018 = vadd.f32 %v2890, 1.0
    %v3019 = vadd.f32 %v2891, 1.0
    %v3020 = vadd.f32 %v2892, 1.0
    %v3021 = vadd.f32 %v2893, 1.0
    %v3022 = vadd.f32 %v2894, 1.0
    %v3023 = vadd.f32 %v2895, 1.0
    %v3024 = vadd.f32 %v2896, 1.0
    %v3025 = vadd.f32 %v2897, 1.0
    %v3026 = vadd.f32 %v2898, 1.0
    %v3027 = vadd.f32 %v2899, 1.0
    %v3028 = vadd.f32 %v2900, 1.0
    %v3029 = vadd.f32 %v2901, 1.0
    %v3030 = vadd.f32 %v2902, 1.0
    %v3031 = vadd.f32 %v2903, 1.0
    %v3032 = vadd.f32 %v2904, 1.0
    %v3033 = vadd.f32 %v2905, 1.0
    %v3034 = vadd.f32 %v2906, 1.0
    %v3035 = vadd.f32 %v2907, 1.0
    %v3036 = vadd.f32 %v2908, 1.0
    %v3037 = vadd.f32 %v2909, 1.0
    %v3038 = vrcp.pop %v2974
    %v3039 = vrcp.pop %v2975
    %v3040 = vrcp.pop %v2976
    %v3041 = vrcp.pop %v2977
    %v3042 = vrcp.pop %v2978
    %v3043 = vrcp.pop %v2979
    %v3044 = vrcp.pop %v2980
    %v3045 = vrcp.pop %v2981
    %v3046 = vrcp.pop %v2982
    %v3047 = vrcp.pop %v2983
    %v3048 = vrcp.pop %v2984
    %v3049 = vrcp.pop %v2985
    %v3050 = vrcp.pop %v2986
    %v3051 = vrcp.pop %v2987
    %v3052 = vrcp.pop %v2988
    %v3053 = vrcp.pop %v2989
    %v3054 = vrcp.pop %v2990
    %v3055 = vrcp.pop %v2991
    %v3056 = vrcp.pop %v2992
    %v3057 = vrcp.pop %v2993
    %v3058 = vrcp.pop %v2994
    %v3059 = vrcp.pop %v2995
    %v3060 = vrcp.pop %v2996
    %v3061 = vrcp.pop %v2997
    %v3062 = vrcp.pop %v2998
    %v3063 = vrcp.pop %v2999
    %v3064 = vrcp.pop %v3000
    %v3065 = vrcp.pop %v3001
    %v3066 = vrcp.pop %v3002
    %v3067 = vrcp.pop %v3003
    %v3068 = vrcp.pop %v3004
    %v3069 = vrcp.pop %v3005
    %v3070 = vrcp.pop %v3006
    %v3071 = vrcp.pop %v3007
    %v3072 = vrcp.pop %v3008
    %v3073 = vrcp.pop %v3009
    %v3074 = vrcp.pop %v3010
    %v3075 = vrcp.pop %v3011
    %v3076 = vrcp.pop %v3012
    %v3077 = vrcp.pop %v3013
    %v3078 = vrcp.pop %v3014
    %v3079 = vrcp.pop %v3015
    %v3080 = vrcp.pop %v3016
    %v3081 = vrcp.pop %v3017
    %v3082 = vrcp.pop %v3018
    %v3083 = vrcp.pop %v3019
    %v3084 = vrcp.pop %v3020
    %v3085 = vrcp.pop %v3021
    %v3086 = vrcp.pop %v3022
    %v3087 = vrcp.pop %v3023
    %v3088 = vrcp.pop %v3024
    %v3089 = vrcp.pop %v3025
    %v3090 = vrcp.pop %v3026
    %v3091 = vrcp.pop %v3027
    %v3092 = vrcp.pop %v3028
    %v3093 = vrcp.pop %v3029
    %v3094 = vrcp.pop %v3030
    %v3095 = vrcp.pop %v3031
    %v3096 = vrcp.pop %v3032
    %v3097 = vrcp.pop %v3033
    %v3098 = vrcp.pop %v3034
    %v3099 = vrcp.pop %v3035
    %v3100 = vrcp.pop %v3036
    %v3101 = vrcp.pop %v3037
    %v3102 = vmul.f32 %v2910, %v3038
    %v3103 = vmul.f32 %v2911, %v3039
    %v3104 = vmul.f32 %v2912, %v3040
    %v3105 = vmul.f32 %v2913, %v3041
    %v3106 = vmul.f32 %v2914, %v3042
    %v3107 = vmul.f32 %v2915, %v3043
    %v3108 = vmul.f32 %v2916, %v3044
    %v3109 = vmul.f32 %v2917, %v3045
    %v3110 = vmul.f32 %v2918, %v3046
    %v3111 = vmul.f32 %v2919, %v3047
    %v3112 = vmul.f32 %v2920, %v3048
    %v3113 = vmul.f32 %v2921, %v3049
    %v3114 = vmul.f32 %v2922, %v3050
    %v3115 = vmul.f32 %v2923, %v3051
    %v3116 = vmul.f32 %v2924, %v3052
    %v3117 = vmul.f32 %v2925, %v3053
    %v3118 = vmul.f32 %v2926, %v3054
    %v3119 = vmul.f32 %v2927, %v3055
    %v3120 = vmul.f32 %v2928, %v3056
    %v3121 = vmul.f32 %v2929, %v3057
    %v3122 = vmul.f32 %v2930, %v3058
    %v3123 = vmul.f32 %v2931, %v3059
    %v3124 = vmul.f32 %v2932, %v3060
    %v3125 = vmul.f32 %v2933, %v3061
    %v3126 = vmul.f32 %v2934, %v3062
    %v3127 = vmul.f32 %v2935, %v3063
    %v3128 = vmul.f32 %v2936, %v3064
    %v3129 = vmul.f32 %v2937, %v3065
    %v3130 = vmul.f32 %v2938, %v3066
    %v3131 = vmul.f32 %v2939, %v3067
    %v3132 = vmul.f32 %v2940, %v3068
    %v3133 = vmul.f32 %v2941, %v3069
    %v3134 = vmul.f32 %v2942, %v3070
    %v3135 = vmul.f32 %v2943, %v3071
    %v3136 = vmul.f32 %v2944, %v3072
    %v3137 = vmul.f32 %v2945, %v3073
    %v3138 = vmul.f32 %v2946, %v3074
    %v3139 = vmul.f32 %v2947, %v3075
    %v3140 = vmul.f32 %v2948, %v3076
    %v3141 = vmul.f32 %v2949, %v3077
    %v3142 = vmul.f32 %v2950, %v3078
    %v3143 = vmul.f32 %v2951, %v3079
    %v3144 = vmul.f32 %v2952, %v3080
    %v3145 = vmul.f32 %v2953, %v3081
    %v3146 = vmul.f32 %v2954, %v3082
    %v3147 = vmul.f32 %v2955, %v3083
    %v3148 = vmul.f32 %v2956, %v3084
    %v3149 = vmul.f32 %v2957, %v3085
    %v3150 = vmul.f32 %v2958, %v3086
    %v3151 = vmul.f32 %v2959, %v3087
    %v3152 = vmul.f32 %v2960, %v3088
    %v3153 = vmul.f32 %v2961, %v3089
    %v3154 = vmul.f32 %v2962, %v3090
    %v3155 = vmul.f32 %v2963, %v3091
    %v3156 = vmul.f32 %v2964, %v3092
    %v3157 = vmul.f32 %v2965, %v3093
    %v3158 = vmul.f32 %v2966, %v3094
    %v3159 = vmul.f32 %v2967, %v3095
    %v3160 = vmul.f32 %v2968, %v3096
    %v3161 = vmul.f32 %v2969, %v3097
    %v3162 = vmul.f32 %v2970, %v3098
    %v3163 = vmul.f32 %v2971, %v3099
    %v3164 = vmul.f32 %v2972, %v3100
    %v3165 = vmul.f32 %v2973, %v3101
    %vm3166 = vcmp.gt.f32.partialorder %v2526, 20.0
    %vm3167 = vcmp.gt.f32.partialorder %v2527, 20.0
    %vm3168 = vcmp.gt.f32.partialorder %v2528, 20.0
    %vm3169 = vcmp.gt.f32.partialorder %v2529, 20.0
    %vm3170 = vcmp.gt.f32.partialorder %v2530, 20.0
    %vm3171 = vcmp.gt.f32.partialorder %v2531, 20.0
    %vm3172 = vcmp.gt.f32.partialorder %v2532, 20.0
    %vm3173 = vcmp.gt.f32.partialorder %v2533, 20.0
    %vm3174 = vcmp.gt.f32.partialorder %v2534, 20.0
    %vm3175 = vcmp.gt.f32.partialorder %v2535, 20.0
    %vm3176 = vcmp.gt.f32.partialorder %v2536, 20.0
    %vm3177 = vcmp.gt.f32.partialorder %v2537, 20.0
    %vm3178 = vcmp.gt.f32.partialorder %v2538, 20.0
    %vm3179 = vcmp.gt.f32.partialorder %v2539, 20.0
    %vm3180 = vcmp.gt.f32.partialorder %v2540, 20.0
    %vm3181 = vcmp.gt.f32.partialorder %v2541, 20.0
    %vm3182 = vcmp.gt.f32.partialorder %v2542, 20.0
    %vm3183 = vcmp.gt.f32.partialorder %v2543, 20.0
    %vm3184 = vcmp.gt.f32.partialorder %v2544, 20.0
    %vm3185 = vcmp.gt.f32.partialorder %v2545, 20.0
    %vm3186 = vcmp.gt.f32.partialorder %v2546, 20.0
    %vm3187 = vcmp.gt.f32.partialorder %v2547, 20.0
    %vm3188 = vcmp.gt.f32.partialorder %v2548, 20.0
    %vm3189 = vcmp.gt.f32.partialorder %v2549, 20.0
    %vm3190 = vcmp.gt.f32.partialorder %v2550, 20.0
    %vm3191 = vcmp.gt.f32.partialorder %v2551, 20.0
    %vm3192 = vcmp.gt.f32.partialorder %v2552, 20.0
    %vm3193 = vcmp.gt.f32.partialorder %v2553, 20.0
    %vm3194 = vcmp.gt.f32.partialorder %v2554, 20.0
    %vm3195 = vcmp.gt.f32.partialorder %v2555, 20.0
    %vm3196 = vcmp.gt.f32.partialorder %v2556, 20.0
    %vm3197 = vcmp.gt.f32.partialorder %v2557, 20.0
    %vm3198 = vcmp.gt.f32.partialorder %v2558, 20.0
    %vm3199 = vcmp.gt.f32.partialorder %v2559, 20.0
    %vm3200 = vcmp.gt.f32.partialorder %v2560, 20.0
    %vm3201 = vcmp.gt.f32.partialorder %v2561, 20.0
    %vm3202 = vcmp.gt.f32.partialorder %v2562, 20.0
    %vm3203 = vcmp.gt.f32.partialorder %v2563, 20.0
    %vm3204 = vcmp.gt.f32.partialorder %v2564, 20.0
    %vm3205 = vcmp.gt.f32.partialorder %v2565, 20.0
    %vm3206 = vcmp.gt.f32.partialorder %v2566, 20.0
    %vm3207 = vcmp.gt.f32.partialorder %v2567, 20.0
    %vm3208 = vcmp.gt.f32.partialorder %v2568, 20.0
    %vm3209 = vcmp.gt.f32.partialorder %v2569, 20.0
    %vm3210 = vcmp.gt.f32.partialorder %v2570, 20.0
    %vm3211 = vcmp.gt.f32.partialorder %v2571, 20.0
    %vm3212 = vcmp.gt.f32.partialorder %v2572, 20.0
    %vm3213 = vcmp.gt.f32.partialorder %v2573, 20.0
    %vm3214 = vcmp.gt.f32.partialorder %v2574, 20.0
    %vm3215 = vcmp.gt.f32.partialorder %v2575, 20.0
    %vm3216 = vcmp.gt.f32.partialorder %v2576, 20.0
    %vm3217 = vcmp.gt.f32.partialorder %v2577, 20.0
    %vm3218 = vcmp.gt.f32.partialorder %v2578, 20.0
    %vm3219 = vcmp.gt.f32.partialorder %v2579, 20.0
    %vm3220 = vcmp.gt.f32.partialorder %v2580, 20.0
    %vm3221 = vcmp.gt.f32.partialorder %v2581, 20.0
    %vm3222 = vcmp.gt.f32.partialorder %v2582, 20.0
    %vm3223 = vcmp.gt.f32.partialorder %v2583, 20.0
    %vm3224 = vcmp.gt.f32.partialorder %v2584, 20.0
    %vm3225 = vcmp.gt.f32.partialorder %v2585, 20.0
    %vm3226 = vcmp.gt.f32.partialorder %v2586, 20.0
    %vm3227 = vcmp.gt.f32.partialorder %v2587, 20.0
    %vm3228 = vcmp.gt.f32.partialorder %v2588, 20.0
    %vm3229 = vcmp.gt.f32.partialorder %v2589, 20.0
    %v3230 = vmul.f32 %v2526, %v3102
    %v3231 = vmul.f32 %v2527, %v3103
    %v3232 = vmul.f32 %v2528, %v3104
    %v3233 = vmul.f32 %v2529, %v3105
    %v3234 = vmul.f32 %v2530, %v3106
    %v3235 = vmul.f32 %v2531, %v3107
    %v3236 = vmul.f32 %v2532, %v3108
    %v3237 = vmul.f32 %v2533, %v3109
    %v3238 = vmul.f32 %v2534, %v3110
    %v3239 = vmul.f32 %v2535, %v3111
    %v3240 = vmul.f32 %v2536, %v3112
    %v3241 = vmul.f32 %v2537, %v3113
    %v3242 = vmul.f32 %v2538, %v3114
    %v3243 = vmul.f32 %v2539, %v3115
    %v3244 = vmul.f32 %v2540, %v3116
    %v3245 = vmul.f32 %v2541, %v3117
    %v3246 = vmul.f32 %v2542, %v3118
    %v3247 = vmul.f32 %v2543, %v3119
    %v3248 = vmul.f32 %v2544, %v3120
    %v3249 = vmul.f32 %v2545, %v3121
    %v3250 = vmul.f32 %v2546, %v3122
    %v3251 = vmul.f32 %v2547, %v3123
    %v3252 = vmul.f32 %v2548, %v3124
    %v3253 = vmul.f32 %v2549, %v3125
    %v3254 = vmul.f32 %v2550, %v3126
    %v3255 = vmul.f32 %v2551, %v3127
    %v3256 = vmul.f32 %v2552, %v3128
    %v3257 = vmul.f32 %v2553, %v3129
    %v3258 = vmul.f32 %v2554, %v3130
    %v3259 = vmul.f32 %v2555, %v3131
    %v3260 = vmul.f32 %v2556, %v3132
    %v3261 = vmul.f32 %v2557, %v3133
    %v3262 = vmul.f32 %v2558, %v3134
    %v3263 = vmul.f32 %v2559, %v3135
    %v3264 = vmul.f32 %v2560, %v3136
    %v3265 = vmul.f32 %v2561, %v3137
    %v3266 = vmul.f32 %v2562, %v3138
    %v3267 = vmul.f32 %v2563, %v3139
    %v3268 = vmul.f32 %v2564, %v3140
    %v3269 = vmul.f32 %v2565, %v3141
    %v3270 = vmul.f32 %v2566, %v3142
    %v3271 = vmul.f32 %v2567, %v3143
    %v3272 = vmul.f32 %v2568, %v3144
    %v3273 = vmul.f32 %v2569, %v3145
    %v3274 = vmul.f32 %v2570, %v3146
    %v3275 = vmul.f32 %v2571, %v3147
    %v3276 = vmul.f32 %v2572, %v3148
    %v3277 = vmul.f32 %v2573, %v3149
    %v3278 = vmul.f32 %v2574, %v3150
    %v3279 = vmul.f32 %v2575, %v3151
    %v3280 = vmul.f32 %v2576, %v3152
    %v3281 = vmul.f32 %v2577, %v3153
    %v3282 = vmul.f32 %v2578, %v3154
    %v3283 = vmul.f32 %v2579, %v3155
    %v3284 = vmul.f32 %v2580, %v3156
    %v3285 = vmul.f32 %v2581, %v3157
    %v3286 = vmul.f32 %v2582, %v3158
    %v3287 = vmul.f32 %v2583, %v3159
    %v3288 = vmul.f32 %v2584, %v3160
    %v3289 = vmul.f32 %v2585, %v3161
    %v3290 = vmul.f32 %v2586, %v3162
    %v3291 = vmul.f32 %v2587, %v3163
    %v3292 = vmul.f32 %v2588, %v3164
    %v3293 = vmul.f32 %v2589, %v3165
    %v3294 = vsel %vm3166, %v2526, %v3230
    %v3295 = vsel %vm3167, %v2527, %v3231
    %v3296 = vsel %vm3168, %v2528, %v3232
    %v3297 = vsel %vm3169, %v2529, %v3233
    %v3298 = vsel %vm3170, %v2530, %v3234
    %v3299 = vsel %vm3171, %v2531, %v3235
    %v3300 = vsel %vm3172, %v2532, %v3236
    %v3301 = vsel %vm3173, %v2533, %v3237
    %v3302 = vsel %vm3174, %v2534, %v3238
    %v3303 = vsel %vm3175, %v2535, %v3239
    %v3304 = vsel %vm3176, %v2536, %v3240
    %v3305 = vsel %vm3177, %v2537, %v3241
    %v3306 = vsel %vm3178, %v2538, %v3242
    %v3307 = vsel %vm3179, %v2539, %v3243
    %v3308 = vsel %vm3180, %v2540, %v3244
    %v3309 = vsel %vm3181, %v2541, %v3245
    %v3310 = vsel %vm3182, %v2542, %v3246
    %v3311 = vsel %vm3183, %v2543, %v3247
    %v3312 = vsel %vm3184, %v2544, %v3248
    %v3313 = vsel %vm3185, %v2545, %v3249
    %v3314 = vsel %vm3186, %v2546, %v3250
    %v3315 = vsel %vm3187, %v2547, %v3251
    %v3316 = vsel %vm3188, %v2548, %v3252
    %v3317 = vsel %vm3189, %v2549, %v3253
    %v3318 = vsel %vm3190, %v2550, %v3254
    %v3319 = vsel %vm3191, %v2551, %v3255
    %v3320 = vsel %vm3192, %v2552, %v3256
    %v3321 = vsel %vm3193, %v2553, %v3257
    %v3322 = vsel %vm3194, %v2554, %v3258
    %v3323 = vsel %vm3195, %v2555, %v3259
    %v3324 = vsel %vm3196, %v2556, %v3260
    %v3325 = vsel %vm3197, %v2557, %v3261
    %v3326 = vsel %vm3198, %v2558, %v3262
    %v3327 = vsel %vm3199, %v2559, %v3263
    %v3328 = vsel %vm3200, %v2560, %v3264
    %v3329 = vsel %vm3201, %v2561, %v3265
    %v3330 = vsel %vm3202, %v2562, %v3266
    %v3331 = vsel %vm3203, %v2563, %v3267
    %v3332 = vsel %vm3204, %v2564, %v3268
    %v3333 = vsel %vm3205, %v2565, %v3269
    %v3334 = vsel %vm3206, %v2566, %v3270
    %v3335 = vsel %vm3207, %v2567, %v3271
    %v3336 = vsel %vm3208, %v2568, %v3272
    %v3337 = vsel %vm3209, %v2569, %v3273
    %v3338 = vsel %vm3210, %v2570, %v3274
    %v3339 = vsel %vm3211, %v2571, %v3275
    %v3340 = vsel %vm3212, %v2572, %v3276
    %v3341 = vsel %vm3213, %v2573, %v3277
    %v3342 = vsel %vm3214, %v2574, %v3278
    %v3343 = vsel %vm3215, %v2575, %v3279
    %v3344 = vsel %vm3216, %v2576, %v3280
    %v3345 = vsel %vm3217, %v2577, %v3281
    %v3346 = vsel %vm3218, %v2578, %v3282
    %v3347 = vsel %vm3219, %v2579, %v3283
    %v3348 = vsel %vm3220, %v2580, %v3284
    %v3349 = vsel %vm3221, %v2581, %v3285
    %v3350 = vsel %vm3222, %v2582, %v3286
    %v3351 = vsel %vm3223, %v2583, %v3287
    %v3352 = vsel %vm3224, %v2584, %v3288
    %v3353 = vsel %vm3225, %v2585, %v3289
    %v3354 = vsel %vm3226, %v2586, %v3290
    %v3355 = vsel %vm3227, %v2587, %v3291
    %v3356 = vsel %vm3228, %v2588, %v3292
    %v3357 = vsel %vm3229, %v2589, %v3293
    %v3358 = vpack.c.bf16 %v3296, %v3294
    %v3359 = vpack.c.bf16 %v3297, %v3295
    %v3360 = vpack.c.bf16 %v3300, %v3298
    %v3361 = vpack.c.bf16 %v3301, %v3299
    %v3362 = vpack.c.bf16 %v3304, %v3302
    %v3363 = vpack.c.bf16 %v3305, %v3303
    %v3364 = vpack.c.bf16 %v3308, %v3306
    %v3365 = vpack.c.bf16 %v3309, %v3307
    %v3366 = vpack.c.bf16 %v3312, %v3310
    %v3367 = vpack.c.bf16 %v3313, %v3311
    %v3368 = vpack.c.bf16 %v3316, %v3314
    %v3369 = vpack.c.bf16 %v3317, %v3315
    %v3370 = vpack.c.bf16 %v3320, %v3318
    %v3371 = vpack.c.bf16 %v3321, %v3319
    %v3372 = vpack.c.bf16 %v3324, %v3322
    %v3373 = vpack.c.bf16 %v3325, %v3323
    %v3374 = vpack.c.bf16 %v3328, %v3326
    %v3375 = vpack.c.bf16 %v3329, %v3327
    %v3376 = vpack.c.bf16 %v3332, %v3330
    %v3377 = vpack.c.bf16 %v3333, %v3331
    %v3378 = vpack.c.bf16 %v3336, %v3334
    %v3379 = vpack.c.bf16 %v3337, %v3335
    %v3380 = vpack.c.bf16 %v3340, %v3338
    %v3381 = vpack.c.bf16 %v3341, %v3339
    %v3382 = vpack.c.bf16 %v3344, %v3342
    %v3383 = vpack.c.bf16 %v3345, %v3343
    %v3384 = vpack.c.bf16 %v3348, %v3346
    %v3385 = vpack.c.bf16 %v3349, %v3347
    %v3386 = vpack.c.bf16 %v3352, %v3350
    %v3387 = vpack.c.bf16 %v3353, %v3351
    %v3388 = vpack.c.bf16 %v3356, %v3354
    %v3389 = vpack.c.bf16 %v3357, %v3355
    %v3390 = vld [vmem:[#allocation10] sm:$0xff]
    %v3391 = vld [vmem:[#allocation10 + $0x8] sm:$0xff]
    %v3392 = vld [vmem:[#allocation10 + $0x10] sm:$0xff]
    %v3393 = vld [vmem:[#allocation10 + $0x18] sm:$0xff]
    %v3394 = vld [vmem:[#allocation10 + $0x20] sm:$0xff]
    %v3395 = vld [vmem:[#allocation10 + $0x28] sm:$0xff]
    %v3396 = vld [vmem:[#allocation10 + $0x30] sm:$0xff]
    %v3397 = vld [vmem:[#allocation10 + $0x38] sm:$0xff]
    %v3398 = vld [vmem:[#allocation10 + $0x40] sm:$0xff]
    %v3399 = vld [vmem:[#allocation10 + $0x48] sm:$0xff]
    %v3400 = vld [vmem:[#allocation10 + $0x50] sm:$0xff]
    %v3401 = vld [vmem:[#allocation10 + $0x58] sm:$0xff]
    %v3402 = vld [vmem:[#allocation10 + $0x60] sm:$0xff]
    %v3403 = vld [vmem:[#allocation10 + $0x68] sm:$0xff]
    %v3404 = vld [vmem:[#allocation10 + $0x70] sm:$0xff]
    %v3405 = vld [vmem:[#allocation10 + $0x78] sm:$0xff]
    %v3406 = vld [vmem:[#allocation10 + $0x80] sm:$0xff]
    %v3407 = vld [vmem:[#allocation10 + $0x88] sm:$0xff]
    %v3408 = vld [vmem:[#allocation10 + $0x90] sm:$0xff]
    %v3409 = vld [vmem:[#allocation10 + $0x98] sm:$0xff]
    %v3410 = vld [vmem:[#allocation10 + $0xa0] sm:$0xff]
    %v3411 = vld [vmem:[#allocation10 + $0xa8] sm:$0xff]
    %v3412 = vld [vmem:[#allocation10 + $0xb0] sm:$0xff]
    %v3413 = vld [vmem:[#allocation10 + $0xb8] sm:$0xff]
    %v3414 = vld [vmem:[#allocation10 + $0xc0] sm:$0xff]
    %v3415 = vld [vmem:[#allocation10 + $0xc8] sm:$0xff]
    %v3416 = vld [vmem:[#allocation10 + $0xd0] sm:$0xff]
    %v3417 = vld [vmem:[#allocation10 + $0xd8] sm:$0xff]
    %v3418 = vld [vmem:[#allocation10 + $0xe0] sm:$0xff]
    %v3419 = vld [vmem:[#allocation10 + $0xe8] sm:$0xff]
    %v3420 = vld [vmem:[#allocation10 + $0xf0] sm:$0xff]
    %v3421 = vld [vmem:[#allocation10 + $0xf8] sm:$0xff]
    %v3422 = vld [vmem:[%s9] sm:$0x3]
    %v3424 = vlaneseq
    %v3425 = vshrl.u32 %v3424, 7
    %v3426 = vsub.s32 0, %v3425
    %v3427 = vrot.slane %v3422, %v3426
    %v3428 = vlaneseq
    %v3429 = vshrl.u32 %v3428, 7
    %v3430 = vsub.s32 1, %v3429
    %v3431 = vrot.slane %v3422, %v3430
    %v3466 = vunpack.c.l.b16 %v3390
    %v3467 = vunpack.c.h.b16 %v3390
    %v3468 = vunpack.c.l.b16 %v3391
    %v3469 = vunpack.c.h.b16 %v3391
    %v3470 = vunpack.c.l.b16 %v3392
    %v3471 = vunpack.c.h.b16 %v3392
    %v3472 = vunpack.c.l.b16 %v3393
    %v3473 = vunpack.c.h.b16 %v3393
    %v3474 = vunpack.c.l.b16 %v3394
    %v3475 = vunpack.c.h.b16 %v3394
    %v3476 = vunpack.c.l.b16 %v3395
    %v3477 = vunpack.c.h.b16 %v3395
    %v3478 = vunpack.c.l.b16 %v3396
    %v3479 = vunpack.c.h.b16 %v3396
    %v3480 = vunpack.c.l.b16 %v3397
    %v3481 = vunpack.c.h.b16 %v3397
    %v3482 = vunpack.c.l.b16 %v3398
    %v3483 = vunpack.c.h.b16 %v3398
    %v3484 = vunpack.c.l.b16 %v3399
    %v3485 = vunpack.c.h.b16 %v3399
    %v3486 = vunpack.c.l.b16 %v3400
    %v3487 = vunpack.c.h.b16 %v3400
    %v3488 = vunpack.c.l.b16 %v3401
    %v3489 = vunpack.c.h.b16 %v3401
    %v3490 = vunpack.c.l.b16 %v3402
    %v3491 = vunpack.c.h.b16 %v3402
    %v3492 = vunpack.c.l.b16 %v3403
    %v3493 = vunpack.c.h.b16 %v3403
    %v3494 = vunpack.c.l.b16 %v3404
    %v3495 = vunpack.c.h.b16 %v3404
    %v3496 = vunpack.c.l.b16 %v3405
    %v3497 = vunpack.c.h.b16 %v3405
    %v3498 = vunpack.c.l.b16 %v3406
    %v3499 = vunpack.c.h.b16 %v3406
    %v3500 = vunpack.c.l.b16 %v3407
    %v3501 = vunpack.c.h.b16 %v3407
    %v3502 = vunpack.c.l.b16 %v3408
    %v3503 = vunpack.c.h.b16 %v3408
    %v3504 = vunpack.c.l.b16 %v3409
    %v3505 = vunpack.c.h.b16 %v3409
    %v3506 = vunpack.c.l.b16 %v3410
    %v3507 = vunpack.c.h.b16 %v3410
    %v3508 = vunpack.c.l.b16 %v3411
    %v3509 = vunpack.c.h.b16 %v3411
    %v3510 = vunpack.c.l.b16 %v3412
    %v3511 = vunpack.c.h.b16 %v3412
    %v3512 = vunpack.c.l.b16 %v3413
    %v3513 = vunpack.c.h.b16 %v3413
    %v3514 = vunpack.c.l.b16 %v3414
    %v3515 = vunpack.c.h.b16 %v3414
    %v3516 = vunpack.c.l.b16 %v3415
    %v3517 = vunpack.c.h.b16 %v3415
    %v3518 = vunpack.c.l.b16 %v3416
    %v3519 = vunpack.c.h.b16 %v3416
    %v3520 = vunpack.c.l.b16 %v3417
    %v3521 = vunpack.c.h.b16 %v3417
    %v3522 = vunpack.c.l.b16 %v3418
    %v3523 = vunpack.c.h.b16 %v3418
    %v3524 = vunpack.c.l.b16 %v3419
    %v3525 = vunpack.c.h.b16 %v3419
    %v3526 = vunpack.c.l.b16 %v3420
    %v3527 = vunpack.c.h.b16 %v3420
    %v3528 = vunpack.c.l.b16 %v3421
    %v3529 = vunpack.c.h.b16 %v3421
    %v3530 = vpack.c.b16 %v3468, %v3466
    %v3531 = vpack.c.b16 %v3469, %v3467
    %v3532 = vpack.c.b16 %v3472, %v3470
    %v3533 = vpack.c.b16 %v3473, %v3471
    %v3534 = vpack.c.b16 %v3476, %v3474
    %v3535 = vpack.c.b16 %v3477, %v3475
    %v3536 = vpack.c.b16 %v3480, %v3478
    %v3537 = vpack.c.b16 %v3481, %v3479
    %v3538 = vpack.c.b16 %v3484, %v3482
    %v3539 = vpack.c.b16 %v3485, %v3483
    %v3540 = vpack.c.b16 %v3488, %v3486
    %v3541 = vpack.c.b16 %v3489, %v3487
    %v3542 = vpack.c.b16 %v3492, %v3490
    %v3543 = vpack.c.b16 %v3493, %v3491
    %v3544 = vpack.c.b16 %v3496, %v3494
    %v3545 = vpack.c.b16 %v3497, %v3495
    %v3546 = vpack.c.b16 %v3500, %v3498
    %v3547 = vpack.c.b16 %v3501, %v3499
    %v3548 = vpack.c.b16 %v3504, %v3502
    %v3549 = vpack.c.b16 %v3505, %v3503
    %v3550 = vpack.c.b16 %v3508, %v3506
    %v3551 = vpack.c.b16 %v3509, %v3507
    %v3552 = vpack.c.b16 %v3512, %v3510
    %v3553 = vpack.c.b16 %v3513, %v3511
    %v3554 = vpack.c.b16 %v3516, %v3514
    %v3555 = vpack.c.b16 %v3517, %v3515
    %v3556 = vpack.c.b16 %v3520, %v3518
    %v3557 = vpack.c.b16 %v3521, %v3519
    %v3558 = vpack.c.b16 %v3524, %v3522
    %v3559 = vpack.c.b16 %v3525, %v3523
    %v3560 = vpack.c.b16 %v3528, %v3526
    %v3561 = vpack.c.b16 %v3529, %v3527
    %3594 = vmatprep.subr.bf16.mxu0 %v3531
    %3595 = vmatpush1.bf16.msra.mxu0 %v3530
    %3596 = vmatprep.subr.bf16.mxu0 %v3533
    %3597 = vmatpush1.bf16.msra.mxu0 %v3532
    %3598 = vmatprep.subr.bf16.mxu0 %v3535
    %3599 = vmatpush1.bf16.msra.mxu0 %v3534
    %3600 = vmatprep.subr.bf16.mxu0 %v3537
    %3601 = vmatpush1.bf16.msra.mxu0 %v3536
    %3602 = vmatprep.subr.bf16.mxu0 %v3539
    %3603 = vmatpush1.bf16.msra.mxu0 %v3538
    %3604 = vmatprep.subr.bf16.mxu0 %v3541
    %3605 = vmatpush1.bf16.msra.mxu0 %v3540
    %3606 = vmatprep.subr.bf16.mxu0 %v3543
    %3607 = vmatpush1.bf16.msra.mxu0 %v3542
    %3608 = vmatprep.subr.bf16.mxu0 %v3545
    %3609 = vmatpush1.bf16.msra.mxu0 %v3544
    %3610 = vmatprep.subr.bf16.mxu0 %v3547
    %3611 = vmatpush1.bf16.msra.mxu0 %v3546
    %3612 = vmatprep.subr.bf16.mxu0 %v3549
    %3613 = vmatpush1.bf16.msra.mxu0 %v3548
    %3614 = vmatprep.subr.bf16.mxu0 %v3551
    %3615 = vmatpush1.bf16.msra.mxu0 %v3550
    %3616 = vmatprep.subr.bf16.mxu0 %v3553
    %3617 = vmatpush1.bf16.msra.mxu0 %v3552
    %3618 = vmatprep.subr.bf16.mxu0 %v3555
    %3619 = vmatpush1.bf16.msra.mxu0 %v3554
    %3620 = vmatprep.subr.bf16.mxu0 %v3557
    %3621 = vmatpush1.bf16.msra.mxu0 %v3556
    %3622 = vmatprep.subr.bf16.mxu0 %v3559
    %3623 = vmatpush1.bf16.msra.mxu0 %v3558
    %3624 = vmatprep.subr.bf16.mxu0 %v3561
    %3625 = vmatpush1.bf16.msra.mxu0 %v3560
    %3626 = vmatprep.mubr.bf16.mxu0 %v3359
    %3627 = vmatmul.mubr.bf16.gmra.mrb[0].mxu0 %v3358
    %v3628 = vpop.f32.mrb[0].mxu0
    %v3629 = vadd.f32 %v3427, %v3628
    %v3630 = vpop.f32.mrb[0].mxu0
    %v3631 = vadd.f32 %v3431, %v3630
    %v3632 = vpop.f32.mrb[0].mxu0
    %v3633 = vadd.f32 %v3427, %v3632
    %v3634 = vpop.f32.mrb[0].mxu0
    %v3635 = vadd.f32 %v3431, %v3634
    %3636 = vmatprep.mubr.bf16.mxu0 %v3361
    %3637 = vmatmul.mubr.bf16.gmra.mrb[0].mxu0 %v3360
    %v3638 = vpop.f32.mrb[0].mxu0
    %v3639 = vadd.f32 %v3427, %v3638
    %v3640 = vpop.f32.mrb[0].mxu0
    %v3641 = vadd.f32 %v3431, %v3640
    %v3642 = vpop.f32.mrb[0].mxu0
    %v3643 = vadd.f32 %v3427, %v3642
    %v3644 = vpop.f32.mrb[0].mxu0
    %v3645 = vadd.f32 %v3431, %v3644
    %3646 = vmatprep.mubr.bf16.mxu0 %v3363
    %3647 = vmatmul.mubr.bf16.gmra.mrb[0].mxu0 %v3362
    %v3648 = vpop.f32.mrb[0].mxu0
    %v3649 = vadd.f32 %v3427, %v3648
    %v3650 = vpop.f32.mrb[0].mxu0
    %v3651 = vadd.f32 %v3431, %v3650
    %v3652 = vpop.f32.mrb[0].mxu0
    %v3653 = vadd.f32 %v3427, %v3652
    %v3654 = vpop.f32.mrb[0].mxu0
    %v3655 = vadd.f32 %v3431, %v3654
    %3656 = vmatprep.mubr.bf16.mxu0 %v3365
    %3657 = vmatmul.mubr.bf16.gmra.mrb[0].mxu0 %v3364
    %v3658 = vpop.f32.mrb[0].mxu0
    %v3659 = vadd.f32 %v3427, %v3658
    %v3660 = vpop.f32.mrb[0].mxu0
    %v3661 = vadd.f32 %v3431, %v3660
    %v3662 = vpop.f32.mrb[0].mxu0
    %v3663 = vadd.f32 %v3427, %v3662
    %v3664 = vpop.f32.mrb[0].mxu0
    %v3665 = vadd.f32 %v3431, %v3664
    %3666 = vmatprep.mubr.bf16.mxu0 %v3367
    %3667 = vmatmul.mubr.bf16.gmra.mrb[0].mxu0 %v3366
    %v3668 = vpop.f32.mrb[0].mxu0
    %v3669 = vadd.f32 %v3427, %v3668
    %v3670 = vpop.f32.mrb[0].mxu0
    %v3671 = vadd.f32 %v3431, %v3670
    %v3672 = vpop.f32.mrb[0].mxu0
    %v3673 = vadd.f32 %v3427, %v3672
    %v3674 = vpop.f32.mrb[0].mxu0
    %v3675 = vadd.f32 %v3431, %v3674
    %3676 = vmatprep.mubr.bf16.mxu0 %v3369
    %3677 = vmatmul.mubr.bf16.gmra.mrb[0].mxu0 %v3368
    %v3678 = vpop.f32.mrb[0].mxu0
    %v3679 = vadd.f32 %v3427, %v3678
    %v3680 = vpop.f32.mrb[0].mxu0
    %v3681 = vadd.f32 %v3431, %v3680
    %v3682 = vpop.f32.mrb[0].mxu0
    %v3683 = vadd.f32 %v3427, %v3682
    %v3684 = vpop.f32.mrb[0].mxu0
    %v3685 = vadd.f32 %v3431, %v3684
    %3686 = vmatprep.mubr.bf16.mxu0 %v3371
    %3687 = vmatmul.mubr.bf16.gmra.mrb[0].mxu0 %v3370
    %v3688 = vpop.f32.mrb[0].mxu0
    %v3689 = vadd.f32 %v3427, %v3688
    %v3690 = vpop.f32.mrb[0].mxu0
    %v3691 = vadd.f32 %v3431, %v3690
    %v3692 = vpop.f32.mrb[0].mxu0
    %v3693 = vadd.f32 %v3427, %v3692
    %v3694 = vpop.f32.mrb[0].mxu0
    %v3695 = vadd.f32 %v3431, %v3694
    %3696 = vmatprep.mubr.bf16.mxu0 %v3373
    %3697 = vmatmul.mubr.bf16.gmra.mrb[0].mxu0 %v3372
    %v3698 = vpop.f32.mrb[0].mxu0
    %v3699 = vadd.f32 %v3427, %v3698
    %v3700 = vpop.f32.mrb[0].mxu0
    %v3701 = vadd.f32 %v3431, %v3700
    %v3702 = vpop.f32.mrb[0].mxu0
    %v3703 = vadd.f32 %v3427, %v3702
    %v3704 = vpop.f32.mrb[0].mxu0
    %v3705 = vadd.f32 %v3431, %v3704
    %3706 = vmatprep.mubr.bf16.mxu0 %v3375
    %3707 = vmatmul.mubr.bf16.gmra.mrb[0].mxu0 %v3374
    %v3708 = vpop.f32.mrb[0].mxu0
    %v3709 = vadd.f32 %v3427, %v3708
    %v3710 = vpop.f32.mrb[0].mxu0
    %v3711 = vadd.f32 %v3431, %v3710
    %v3712 = vpop.f32.mrb[0].mxu0
    %v3713 = vadd.f32 %v3427, %v3712
    %v3714 = vpop.f32.mrb[0].mxu0
    %v3715 = vadd.f32 %v3431, %v3714
    %3716 = vmatprep.mubr.bf16.mxu0 %v3377
    %3717 = vmatmul.mubr.bf16.gmra.mrb[0].mxu0 %v3376
    %v3718 = vpop.f32.mrb[0].mxu0
    %v3719 = vadd.f32 %v3427, %v3718
    %v3720 = vpop.f32.mrb[0].mxu0
    %v3721 = vadd.f32 %v3431, %v3720
    %v3722 = vpop.f32.mrb[0].mxu0
    %v3723 = vadd.f32 %v3427, %v3722
    %v3724 = vpop.f32.mrb[0].mxu0
    %v3725 = vadd.f32 %v3431, %v3724
    %3726 = vmatprep.mubr.bf16.mxu0 %v3379
    %3727 = vmatmul.mubr.bf16.gmra.mrb[0].mxu0 %v3378
    %v3728 = vpop.f32.mrb[0].mxu0
    %v3729 = vadd.f32 %v3427, %v3728
    %v3730 = vpop.f32.mrb[0].mxu0
    %v3731 = vadd.f32 %v3431, %v3730
    %v3732 = vpop.f32.mrb[0].mxu0
    %v3733 = vadd.f32 %v3427, %v3732
    %v3734 = vpop.f32.mrb[0].mxu0
    %v3735 = vadd.f32 %v3431, %v3734
    %3736 = vmatprep.mubr.bf16.mxu0 %v3381
    %3737 = vmatmul.mubr.bf16.gmra.mrb[0].mxu0 %v3380
    %v3738 = vpop.f32.mrb[0].mxu0
    %v3739 = vadd.f32 %v3427, %v3738
    %v3740 = vpop.f32.mrb[0].mxu0
    %v3741 = vadd.f32 %v3431, %v3740
    %v3742 = vpop.f32.mrb[0].mxu0
    %v3743 = vadd.f32 %v3427, %v3742
    %v3744 = vpop.f32.mrb[0].mxu0
    %v3745 = vadd.f32 %v3431, %v3744
    %3746 = vmatprep.mubr.bf16.mxu0 %v3383
    %3747 = vmatmul.mubr.bf16.gmra.mrb[0].mxu0 %v3382
    %v3748 = vpop.f32.mrb[0].mxu0
    %v3749 = vadd.f32 %v3427, %v3748
    %v3750 = vpop.f32.mrb[0].mxu0
    %v3751 = vadd.f32 %v3431, %v3750
    %v3752 = vpop.f32.mrb[0].mxu0
    %v3753 = vadd.f32 %v3427, %v3752
    %v3754 = vpop.f32.mrb[0].mxu0
    %v3755 = vadd.f32 %v3431, %v3754
    %3756 = vmatprep.mubr.bf16.mxu0 %v3385
    %3757 = vmatmul.mubr.bf16.gmra.mrb[0].mxu0 %v3384
    %v3758 = vpop.f32.mrb[0].mxu0
    %v3759 = vadd.f32 %v3427, %v3758
    %v3760 = vpop.f32.mrb[0].mxu0
    %v3761 = vadd.f32 %v3431, %v3760
    %v3762 = vpop.f32.mrb[0].mxu0
    %v3763 = vadd.f32 %v3427, %v3762
    %v3764 = vpop.f32.mrb[0].mxu0
    %v3765 = vadd.f32 %v3431, %v3764
    %3766 = vmatprep.mubr.bf16.mxu0 %v3387
    %3767 = vmatmul.mubr.bf16.gmra.mrb[0].mxu0 %v3386
    %v3768 = vpop.f32.mrb[0].mxu0
    %v3769 = vadd.f32 %v3427, %v3768
    %v3770 = vpop.f32.mrb[0].mxu0
    %v3771 = vadd.f32 %v3431, %v3770
    %v3772 = vpop.f32.mrb[0].mxu0
    %v3773 = vadd.f32 %v3427, %v3772
    %v3774 = vpop.f32.mrb[0].mxu0
    %v3775 = vadd.f32 %v3431, %v3774
    %3776 = vmatprep.mubr.bf16.mxu0 %v3389
    %3777 = vmatmul.mubr.bf16.gmra.mrb[0].mxu0 %v3388
    %v3778 = vpop.f32.mrb[0].mxu0
    %v3779 = vadd.f32 %v3427, %v3778
    %v3780 = vpop.f32.mrb[0].mxu0
    %v3781 = vadd.f32 %v3431, %v3780
    %v3782 = vpop.f32.mrb[0].mxu0
    %v3783 = vadd.f32 %v3427, %v3782
    %v3784 = vpop.f32.mrb[0].mxu0
    %v3785 = vadd.f32 %v3431, %v3784
    %3786 = vdwg.mxu0
    %v3787 = vmul.f32 %v3631, 0.5
    %v3788 = vmul.f32 %v3635, 0.5
    %v3789 = vmul.f32 %v3641, 0.5
    %v3790 = vmul.f32 %v3645, 0.5
    %v3791 = vmul.f32 %v3651, 0.5
    %v3792 = vmul.f32 %v3655, 0.5
    %v3793 = vmul.f32 %v3661, 0.5
    %v3794 = vmul.f32 %v3665, 0.5
    %v3795 = vmul.f32 %v3671, 0.5
    %v3796 = vmul.f32 %v3675, 0.5
    %v3797 = vmul.f32 %v3681, 0.5
    %v3798 = vmul.f32 %v3685, 0.5
    %v3799 = vmul.f32 %v3691, 0.5
    %v3800 = vmul.f32 %v3695, 0.5
    %v3801 = vmul.f32 %v3701, 0.5
    %v3802 = vmul.f32 %v3705, 0.5
    %v3803 = vmul.f32 %v3711, 0.5
    %v3804 = vmul.f32 %v3715, 0.5
    %v3805 = vmul.f32 %v3721, 0.5
    %v3806 = vmul.f32 %v3725, 0.5
    %v3807 = vmul.f32 %v3731, 0.5
    %v3808 = vmul.f32 %v3735, 0.5
    %v3809 = vmul.f32 %v3741, 0.5
    %v3810 = vmul.f32 %v3745, 0.5
    %v3811 = vmul.f32 %v3751, 0.5
    %v3812 = vmul.f32 %v3755, 0.5
    %v3813 = vmul.f32 %v3761, 0.5
    %v3814 = vmul.f32 %v3765, 0.5
    %v3815 = vmul.f32 %v3771, 0.5
    %v3816 = vmul.f32 %v3775, 0.5
    %v3817 = vmul.f32 %v3781, 0.5
    %v3818 = vmul.f32 %v3785, 0.5
    %v3819 = vmul.f32 %v3787, 1.442695
    %v3820 = vpow.pop %v3819
    %v3821 = vmul.f32 %v3788, 1.442695
    %v3822 = vpow.pop %v3821
    %v3823 = vmul.f32 %v3789, 1.442695
    %v3824 = vpow.pop %v3823
    %v3825 = vmul.f32 %v3790, 1.442695
    %v3826 = vpow.pop %v3825
    %v3827 = vmul.f32 %v3791, 1.442695
    %v3828 = vpow.pop %v3827
    %v3829 = vmul.f32 %v3792, 1.442695
    %v3830 = vpow.pop %v3829
    %v3831 = vmul.f32 %v3793, 1.442695
    %v3832 = vpow.pop %v3831
    %v3833 = vmul.f32 %v3794, 1.442695
    %v3834 = vpow.pop %v3833
    %v3835 = vmul.f32 %v3795, 1.442695
    %v3836 = vpow.pop %v3835
    %v3837 = vmul.f32 %v3796, 1.442695
    %v3838 = vpow.pop %v3837
    %v3839 = vmul.f32 %v3797, 1.442695
    %v3840 = vpow.pop %v3839
    %v3841 = vmul.f32 %v3798, 1.442695
    %v3842 = vpow.pop %v3841
    %v3843 = vmul.f32 %v3799, 1.442695
    %v3844 = vpow.pop %v3843
    %v3845 = vmul.f32 %v3800, 1.442695
    %v3846 = vpow.pop %v3845
    %v3847 = vmul.f32 %v3801, 1.442695
    %v3848 = vpow.pop %v3847
    %v3849 = vmul.f32 %v3802, 1.442695
    %v3850 = vpow.pop %v3849
    %v3851 = vmul.f32 %v3803, 1.442695
    %v3852 = vpow.pop %v3851
    %v3853 = vmul.f32 %v3804, 1.442695
    %v3854 = vpow.pop %v3853
    %v3855 = vmul.f32 %v3805, 1.442695
    %v3856 = vpow.pop %v3855
    %v3857 = vmul.f32 %v3806, 1.442695
    %v3858 = vpow.pop %v3857
    %v3859 = vmul.f32 %v3807, 1.442695
    %v3860 = vpow.pop %v3859
    %v3861 = vmul.f32 %v3808, 1.442695
    %v3862 = vpow.pop %v3861
    %v3863 = vmul.f32 %v3809, 1.442695
    %v3864 = vpow.pop %v3863
    %v3865 = vmul.f32 %v3810, 1.442695
    %v3866 = vpow.pop %v3865
    %v3867 = vmul.f32 %v3811, 1.442695
    %v3868 = vpow.pop %v3867
    %v3869 = vmul.f32 %v3812, 1.442695
    %v3870 = vpow.pop %v3869
    %v3871 = vmul.f32 %v3813, 1.442695
    %v3872 = vpow.pop %v3871
    %v3873 = vmul.f32 %v3814, 1.442695
    %v3874 = vpow.pop %v3873
    %v3875 = vmul.f32 %v3815, 1.442695
    %v3876 = vpow.pop %v3875
    %v3877 = vmul.f32 %v3816, 1.442695
    %v3878 = vpow.pop %v3877
    %v3879 = vmul.f32 %v3817, 1.442695
    %v3880 = vpow.pop %v3879
    %v3881 = vmul.f32 %v3818, 1.442695
    %v3882 = vpow.pop %v3881
    %v3883 = vld [vmem:[#allocation5] sm:$0xf]
    %v3884 = vld [vmem:[#allocation5 + $0x4] sm:$0xf]
    %v3885 = vld [vmem:[#allocation5 + $0x8] sm:$0xf]
    %v3886 = vld [vmem:[#allocation5 + $0xc] sm:$0xf]
    %v3887 = vld [vmem:[#allocation5 + $0x10] sm:$0xf]
    %v3888 = vld [vmem:[#allocation5 + $0x14] sm:$0xf]
    %v3889 = vld [vmem:[#allocation5 + $0x18] sm:$0xf]
    %v3890 = vld [vmem:[#allocation5 + $0x1c] sm:$0xf]
    %v3891 = vld [vmem:[#allocation5 + $0x20] sm:$0xf]
    %v3892 = vld [vmem:[#allocation5 + $0x24] sm:$0xf]
    %v3893 = vld [vmem:[#allocation5 + $0x28] sm:$0xf]
    %v3894 = vld [vmem:[#allocation5 + $0x2c] sm:$0xf]
    %v3895 = vld [vmem:[#allocation5 + $0x30] sm:$0xf]
    %v3896 = vld [vmem:[#allocation5 + $0x34] sm:$0xf]
    %v3897 = vld [vmem:[#allocation5 + $0x38] sm:$0xf]
    %v3898 = vld [vmem:[#allocation5 + $0x3c] sm:$0xf]
    %v3899 = vld [vmem:[#allocation5 + $0x40] sm:$0xf]
    %v3900 = vld [vmem:[#allocation5 + $0x44] sm:$0xf]
    %v3901 = vld [vmem:[#allocation5 + $0x48] sm:$0xf]
    %v3902 = vld [vmem:[#allocation5 + $0x4c] sm:$0xf]
    %v3903 = vld [vmem:[#allocation5 + $0x50] sm:$0xf]
    %v3904 = vld [vmem:[#allocation5 + $0x54] sm:$0xf]
    %v3905 = vld [vmem:[#allocation5 + $0x58] sm:$0xf]
    %v3906 = vld [vmem:[#allocation5 + $0x5c] sm:$0xf]
    %v3907 = vld [vmem:[#allocation5 + $0x60] sm:$0xf]
    %v3908 = vld [vmem:[#allocation5 + $0x64] sm:$0xf]
    %v3909 = vld [vmem:[#allocation5 + $0x68] sm:$0xf]
    %v3910 = vld [vmem:[#allocation5 + $0x6c] sm:$0xf]
    %v3911 = vld [vmem:[#allocation5 + $0x70] sm:$0xf]
    %v3912 = vld [vmem:[#allocation5 + $0x74] sm:$0xf]
    %v3913 = vld [vmem:[#allocation5 + $0x78] sm:$0xf]
    %v3914 = vld [vmem:[#allocation5 + $0x7c] sm:$0xf]
    %v3915 = vunpack.c.l.bf16 %v3883
    %v3916 = vunpack.c.l.bf16 %v3884
    %v3917 = vunpack.c.l.bf16 %v3885
    %v3918 = vunpack.c.l.bf16 %v3886
    %v3919 = vunpack.c.l.bf16 %v3887
    %v3920 = vunpack.c.l.bf16 %v3888
    %v3921 = vunpack.c.l.bf16 %v3889
    %v3922 = vunpack.c.l.bf16 %v3890
    %v3923 = vunpack.c.l.bf16 %v3891
    %v3924 = vunpack.c.l.bf16 %v3892
    %v3925 = vunpack.c.l.bf16 %v3893
    %v3926 = vunpack.c.l.bf16 %v3894
    %v3927 = vunpack.c.l.bf16 %v3895
    %v3928 = vunpack.c.l.bf16 %v3896
    %v3929 = vunpack.c.l.bf16 %v3897
    %v3930 = vunpack.c.l.bf16 %v3898
    %v3931 = vunpack.c.l.bf16 %v3899
    %v3932 = vunpack.c.l.bf16 %v3900
    %v3933 = vunpack.c.l.bf16 %v3901
    %v3934 = vunpack.c.l.bf16 %v3902
    %v3935 = vunpack.c.l.bf16 %v3903
    %v3936 = vunpack.c.l.bf16 %v3904
    %v3937 = vunpack.c.l.bf16 %v3905
    %v3938 = vunpack.c.l.bf16 %v3906
    %v3939 = vunpack.c.l.bf16 %v3907
    %v3940 = vunpack.c.l.bf16 %v3908
    %v3941 = vunpack.c.l.bf16 %v3909
    %v3942 = vunpack.c.l.bf16 %v3910
    %v3943 = vunpack.c.l.bf16 %v3911
    %v3944 = vunpack.c.l.bf16 %v3912
    %v3945 = vunpack.c.l.bf16 %v3913
    %v3946 = vunpack.c.l.bf16 %v3914
    %v3947 = vmul.f32 %v3820, %v3915
    %v3948 = vmul.f32 %v3822, %v3916
    %v3949 = vmul.f32 %v3824, %v3917
    %v3950 = vmul.f32 %v3826, %v3918
    %v3951 = vmul.f32 %v3828, %v3919
    %v3952 = vmul.f32 %v3830, %v3920
    %v3953 = vmul.f32 %v3832, %v3921
    %v3954 = vmul.f32 %v3834, %v3922
    %v3955 = vmul.f32 %v3836, %v3923
    %v3956 = vmul.f32 %v3838, %v3924
    %v3957 = vmul.f32 %v3840, %v3925
    %v3958 = vmul.f32 %v3842, %v3926
    %v3959 = vmul.f32 %v3844, %v3927
    %v3960 = vmul.f32 %v3846, %v3928
    %v3961 = vmul.f32 %v3848, %v3929
    %v3962 = vmul.f32 %v3850, %v3930
    %v3963 = vmul.f32 %v3852, %v3931
    %v3964 = vmul.f32 %v3854, %v3932
    %v3965 = vmul.f32 %v3856, %v3933
    %v3966 = vmul.f32 %v3858, %v3934
    %v3967 = vmul.f32 %v3860, %v3935
    %v3968 = vmul.f32 %v3862, %v3936
    %v3969 = vmul.f32 %v3864, %v3937
    %v3970 = vmul.f32 %v3866, %v3938
    %v3971 = vmul.f32 %v3868, %v3939
    %v3972 = vmul.f32 %v3870, %v3940
    %v3973 = vmul.f32 %v3872, %v3941
    %v3974 = vmul.f32 %v3874, %v3942
    %v3975 = vmul.f32 %v3876, %v3943
    %v3976 = vmul.f32 %v3878, %v3944
    %v3977 = vmul.f32 %v3880, %v3945
    %v3978 = vmul.f32 %v3882, %v3946
    %v3979 = vadd.f32 %v3629, %v3947
    %v3980 = vadd.f32 %v3633, %v3948
    %v3981 = vadd.f32 %v3639, %v3949
    %v3982 = vadd.f32 %v3643, %v3950
    %v3983 = vadd.f32 %v3649, %v3951
    %v3984 = vadd.f32 %v3653, %v3952
    %v3985 = vadd.f32 %v3659, %v3953
    %v3986 = vadd.f32 %v3663, %v3954
    %v3987 = vadd.f32 %v3669, %v3955
    %v3988 = vadd.f32 %v3673, %v3956
    %v3989 = vadd.f32 %v3679, %v3957
    %v3990 = vadd.f32 %v3683, %v3958
    %v3991 = vadd.f32 %v3689, %v3959
    %v3992 = vadd.f32 %v3693, %v3960
    %v3993 = vadd.f32 %v3699, %v3961
    %v3994 = vadd.f32 %v3703, %v3962
    %v3995 = vadd.f32 %v3709, %v3963
    %v3996 = vadd.f32 %v3713, %v3964
    %v3997 = vadd.f32 %v3719, %v3965
    %v3998 = vadd.f32 %v3723, %v3966
    %v3999 = vadd.f32 %v3729, %v3967
    %v4000 = vadd.f32 %v3733, %v3968
    %v4001 = vadd.f32 %v3739, %v3969
    %v4002 = vadd.f32 %v3743, %v3970
    %v4003 = vadd.f32 %v3749, %v3971
    %v4004 = vadd.f32 %v3753, %v3972
    %v4005 = vadd.f32 %v3759, %v3973
    %v4006 = vadd.f32 %v3763, %v3974
    %v4007 = vadd.f32 %v3769, %v3975
    %v4008 = vadd.f32 %v3773, %v3976
    %v4009 = vadd.f32 %v3779, %v3977
    %v4010 = vadd.f32 %v3783, %v3978
    %v4011 = vpack.c.bf16 %v3980, %v3979
    %v4012 = vpack.c.bf16 %v3982, %v3981
    %v4013 = vpack.c.bf16 %v3984, %v3983
    %v4014 = vpack.c.bf16 %v3986, %v3985
    %v4015 = vpack.c.bf16 %v3988, %v3987
    %v4016 = vpack.c.bf16 %v3990, %v3989
    %v4017 = vpack.c.bf16 %v3992, %v3991
    %v4018 = vpack.c.bf16 %v3994, %v3993
    %v4019 = vpack.c.bf16 %v3996, %v3995
    %v4020 = vpack.c.bf16 %v3998, %v3997
    %v4021 = vpack.c.bf16 %v4000, %v3999
    %v4022 = vpack.c.bf16 %v4002, %v4001
    %v4023 = vpack.c.bf16 %v4004, %v4003
    %v4024 = vpack.c.bf16 %v4006, %v4005
    %v4025 = vpack.c.bf16 %v4008, %v4007
    %v4026 = vpack.c.bf16 %v4010, %v4009
    %v4027 = vld [vmem:[#allocation11] sm:$0xff]
    %v4028 = vld [vmem:[#allocation11 + $0x8] sm:$0xff]
    %v4029 = vld [vmem:[#allocation11 + $0x10] sm:$0xff]
    %v4030 = vld [vmem:[#allocation11 + $0x18] sm:$0xff]
    %v4031 = vld [vmem:[#allocation11 + $0x20] sm:$0xff]
    %v4032 = vld [vmem:[#allocation11 + $0x28] sm:$0xff]
    %v4033 = vld [vmem:[#allocation11 + $0x30] sm:$0xff]
    %v4034 = vld [vmem:[#allocation11 + $0x38] sm:$0xff]
    %v4035 = vld [vmem:[#allocation11 + $0x40] sm:$0xff]
    %v4036 = vld [vmem:[#allocation11 + $0x48] sm:$0xff]
    %v4037 = vld [vmem:[#allocation11 + $0x50] sm:$0xff]
    %v4038 = vld [vmem:[#allocation11 + $0x58] sm:$0xff]
    %v4039 = vld [vmem:[#allocation11 + $0x60] sm:$0xff]
    %v4040 = vld [vmem:[#allocation11 + $0x68] sm:$0xff]
    %v4041 = vld [vmem:[#allocation11 + $0x70] sm:$0xff]
    %v4042 = vld [vmem:[#allocation11 + $0x78] sm:$0xff]
    %v4059 = vunpack.c.l.b16 %v4027
    %v4060 = vunpack.c.h.b16 %v4027
    %v4061 = vunpack.c.l.b16 %v4028
    %v4062 = vunpack.c.h.b16 %v4028
    %v4063 = vunpack.c.l.b16 %v4029
    %v4064 = vunpack.c.h.b16 %v4029
    %v4065 = vunpack.c.l.b16 %v4030
    %v4066 = vunpack.c.h.b16 %v4030
    %v4067 = vunpack.c.l.b16 %v4031
    %v4068 = vunpack.c.h.b16 %v4031
    %v4069 = vunpack.c.l.b16 %v4032
    %v4070 = vunpack.c.h.b16 %v4032
    %v4071 = vunpack.c.l.b16 %v4033
    %v4072 = vunpack.c.h.b16 %v4033
    %v4073 = vunpack.c.l.b16 %v4034
    %v4074 = vunpack.c.h.b16 %v4034
    %v4075 = vunpack.c.l.b16 %v4035
    %v4076 = vunpack.c.h.b16 %v4035
    %v4077 = vunpack.c.l.b16 %v4036
    %v4078 = vunpack.c.h.b16 %v4036
    %v4079 = vunpack.c.l.b16 %v4037
    %v4080 = vunpack.c.h.b16 %v4037
    %v4081 = vunpack.c.l.b16 %v4038
    %v4082 = vunpack.c.h.b16 %v4038
    %v4083 = vunpack.c.l.b16 %v4039
    %v4084 = vunpack.c.h.b16 %v4039
    %v4085 = vunpack.c.l.b16 %v4040
    %v4086 = vunpack.c.h.b16 %v4040
    %v4087 = vunpack.c.l.b16 %v4041
    %v4088 = vunpack.c.h.b16 %v4041
    %v4089 = vunpack.c.l.b16 %v4042
    %v4090 = vunpack.c.h.b16 %v4042
    %v4091 = vpack.c.b16 %v4061, %v4059
    %v4092 = vpack.c.b16 %v4062, %v4060
    %v4093 = vpack.c.b16 %v4065, %v4063
    %v4094 = vpack.c.b16 %v4066, %v4064
    %v4095 = vpack.c.b16 %v4069, %v4067
    %v4096 = vpack.c.b16 %v4070, %v4068
    %v4097 = vpack.c.b16 %v4073, %v4071
    %v4098 = vpack.c.b16 %v4074, %v4072
    %v4099 = vpack.c.b16 %v4077, %v4075
    %v4100 = vpack.c.b16 %v4078, %v4076
    %v4101 = vpack.c.b16 %v4081, %v4079
    %v4102 = vpack.c.b16 %v4082, %v4080
    %v4103 = vpack.c.b16 %v4085, %v4083
    %v4104 = vpack.c.b16 %v4086, %v4084
    %v4105 = vpack.c.b16 %v4089, %v4087
    %v4106 = vpack.c.b16 %v4090, %v4088
    %4123 = vmatprep.subr.bf16.mxu0 %v4092
    %4124 = vmatpush1.bf16.msra.mxu0 %v4091
    %4125 = vmatprep.subr.bf16.mxu0 %v4094
    %4126 = vmatpush1.bf16.msra.mxu0 %v4093
    %4127 = vmatprep.subr.bf16.mxu0 %v4096
    %4128 = vmatpush1.bf16.msra.mxu0 %v4095
    %4129 = vmatprep.subr.bf16.mxu0 %v4098
    %4130 = vmatpush1.bf16.msra.mxu0 %v4097
    %4131 = vmatprep.subr.bf16.mxu0 %v4100
    %4132 = vmatpush1.bf16.msra.mxu0 %v4099
    %4133 = vmatprep.subr.bf16.mxu0 %v4102
    %4134 = vmatpush1.bf16.msra.mxu0 %v4101
    %4135 = vmatprep.subr.bf16.mxu0 %v4104
    %4136 = vmatpush1.bf16.msra.mxu0 %v4103
    %4137 = vmatprep.subr.bf16.mxu0 %v4106
    %4138 = vmatpush1.bf16.msra.mxu0 %v4105
    %4139 = vmatprep.subr.bf16.mxu0 0
    %4140 = vmatpush1.bf16.msra.mxu0 0
    %4141 = vmatprep.subr.bf16.mxu0 0
    %4142 = vmatpush1.bf16.msra.mxu0 0
    %4143 = vmatprep.subr.bf16.mxu0 0
    %4144 = vmatpush1.bf16.msra.mxu0 0
    %4145 = vmatprep.subr.bf16.mxu0 0
    %4146 = vmatpush1.bf16.msra.mxu0 0
    %4147 = vmatprep.subr.bf16.mxu0 0
    %4148 = vmatpush1.bf16.msra.mxu0 0
    %4149 = vmatprep.subr.bf16.mxu0 0
    %4150 = vmatpush1.bf16.msra.mxu0 0
    %4151 = vmatprep.subr.bf16.mxu0 0
    %4152 = vmatpush1.bf16.msra.mxu0 0
    %4153 = vmatprep.subr.bf16.mxu0 0
    %4154 = vmatpush1.bf16.msra.mxu0 0
    %4155 = vmatprep.mubr.bf16.mxu0 0
    %4156 = vmatmul.mubr.bf16.gmra.mrb[0].mxu0 %v4011
    %v4157 = vpop.f32.mrb[0].mxu0
    %v4158 = vadd.f32 0.0, %v4157
    %v4159 = vpop.f32.mrb[0].mxu0
    %v4160 = vadd.f32 0.0, %v4159
    %v4161 = vpop.f32.mrb[0].mxu0
    %v4162 = vadd.f32 0.0, %v4161
    %v4163 = vpop.f32.mrb[0].mxu0
    %v4164 = vadd.f32 0.0, %v4163
    %4165 = vmatprep.mubr.bf16.mxu0 0
    %4166 = vmatmul.mubr.bf16.gmra.mrb[0].mxu0 %v4012
    %v4167 = vpop.f32.mrb[0].mxu0
    %v4168 = vadd.f32 0.0, %v4167
    %v4169 = vpop.f32.mrb[0].mxu0
    %v4170 = vadd.f32 0.0, %v4169
    %v4171 = vpop.f32.mrb[0].mxu0
    %v4172 = vadd.f32 0.0, %v4171
    %v4173 = vpop.f32.mrb[0].mxu0
    %v4174 = vadd.f32 0.0, %v4173
    %4175 = vmatprep.mubr.bf16.mxu0 0
    %4176 = vmatmul.mubr.bf16.gmra.mrb[0].mxu0 %v4013
    %v4177 = vpop.f32.mrb[0].mxu0
    %v4178 = vadd.f32 0.0, %v4177
    %v4179 = vpop.f32.mrb[0].mxu0
    %v4180 = vadd.f32 0.0, %v4179
    %v4181 = vpop.f32.mrb[0].mxu0
    %v4182 = vadd.f32 0.0, %v4181
    %v4183 = vpop.f32.mrb[0].mxu0
    %v4184 = vadd.f32 0.0, %v4183
    %4185 = vmatprep.mubr.bf16.mxu0 0
    %4186 = vmatmul.mubr.bf16.gmra.mrb[0].mxu0 %v4014
    %v4187 = vpop.f32.mrb[0].mxu0
    %v4188 = vadd.f32 0.0, %v4187
    %v4189 = vpop.f32.mrb[0].mxu0
    %v4190 = vadd.f32 0.0, %v4189
    %v4191 = vpop.f32.mrb[0].mxu0
    %v4192 = vadd.f32 0.0, %v4191
    %v4193 = vpop.f32.mrb[0].mxu0
    %v4194 = vadd.f32 0.0, %v4193
    %4195 = vmatprep.mubr.bf16.mxu0 0
    %4196 = vmatmul.mubr.bf16.gmra.mrb[0].mxu0 %v4015
    %v4197 = vpop.f32.mrb[0].mxu0
    %v4198 = vadd.f32 0.0, %v4197
    %v4199 = vpop.f32.mrb[0].mxu0
    %v4200 = vadd.f32 0.0, %v4199
    %v4201 = vpop.f32.mrb[0].mxu0
    %v4202 = vadd.f32 0.0, %v4201
    %v4203 = vpop.f32.mrb[0].mxu0
    %v4204 = vadd.f32 0.0, %v4203
    %4205 = vmatprep.mubr.bf16.mxu0 0
    %4206 = vmatmul.mubr.bf16.gmra.mrb[0].mxu0 %v4016
    %v4207 = vpop.f32.mrb[0].mxu0
    %v4208 = vadd.f32 0.0, %v4207
    %v4209 = vpop.f32.mrb[0].mxu0
    %v4210 = vadd.f32 0.0, %v4209
    %v4211 = vpop.f32.mrb[0].mxu0
    %v4212 = vadd.f32 0.0, %v4211
    %v4213 = vpop.f32.mrb[0].mxu0
    %v4214 = vadd.f32 0.0, %v4213
    %4215 = vmatprep.mubr.bf16.mxu0 0
    %4216 = vmatmul.mubr.bf16.gmra.mrb[0].mxu0 %v4017
    %v4217 = vpop.f32.mrb[0].mxu0
    %v4218 = vadd.f32 0.0, %v4217
    %v4219 = vpop.f32.mrb[0].mxu0
    %v4220 = vadd.f32 0.0, %v4219
    %v4221 = vpop.f32.mrb[0].mxu0
    %v4222 = vadd.f32 0.0, %v4221
    %v4223 = vpop.f32.mrb[0].mxu0
    %v4224 = vadd.f32 0.0, %v4223
    %4225 = vmatprep.mubr.bf16.mxu0 0
    %4226 = vmatmul.mubr.bf16.gmra.mrb[0].mxu0 %v4018
    %v4227 = vpop.f32.mrb[0].mxu0
    %v4228 = vadd.f32 0.0, %v4227
    %v4229 = vpop.f32.mrb[0].mxu0
    %v4230 = vadd.f32 0.0, %v4229
    %v4231 = vpop.f32.mrb[0].mxu0
    %v4232 = vadd.f32 0.0, %v4231
    %v4233 = vpop.f32.mrb[0].mxu0
    %v4234 = vadd.f32 0.0, %v4233
    %4235 = vmatprep.mubr.bf16.mxu0 0
    %4236 = vmatmul.mubr.bf16.gmra.mrb[0].mxu0 %v4019
    %v4237 = vpop.f32.mrb[0].mxu0
    %v4238 = vadd.f32 0.0, %v4237
    %v4239 = vpop.f32.mrb[0].mxu0
    %v4240 = vadd.f32 0.0, %v4239
    %v4241 = vpop.f32.mrb[0].mxu0
    %v4242 = vadd.f32 0.0, %v4241
    %v4243 = vpop.f32.mrb[0].mxu0
    %v4244 = vadd.f32 0.0, %v4243
    %4245 = vmatprep.mubr.bf16.mxu0 0
    %4246 = vmatmul.mubr.bf16.gmra.mrb[0].mxu0 %v4020
    %v4247 = vpop.f32.mrb[0].mxu0
    %v4248 = vadd.f32 0.0, %v4247
    %v4249 = vpop.f32.mrb[0].mxu0
    %v4250 = vadd.f32 0.0, %v4249
    %v4251 = vpop.f32.mrb[0].mxu0
    %v4252 = vadd.f32 0.0, %v4251
    %v4253 = vpop.f32.mrb[0].mxu0
    %v4254 = vadd.f32 0.0, %v4253
    %4255 = vmatprep.mubr.bf16.mxu0 0
    %4256 = vmatmul.mubr.bf16.gmra.mrb[0].mxu0 %v4021
    %v4257 = vpop.f32.mrb[0].mxu0
    %v4258 = vadd.f32 0.0, %v4257
    %v4259 = vpop.f32.mrb[0].mxu0
    %v4260 = vadd.f32 0.0, %v4259
    %v4261 = vpop.f32.mrb[0].mxu0
    %v4262 = vadd.f32 0.0, %v4261
    %v4263 = vpop.f32.mrb[0].mxu0
    %v4264 = vadd.f32 0.0, %v4263
    %4265 = vmatprep.mubr.bf16.mxu0 0
    %4266 = vmatmul.mubr.bf16.gmra.mrb[0].mxu0 %v4022
    %v4267 = vpop.f32.mrb[0].mxu0
    %v4268 = vadd.f32 0.0, %v4267
    %v4269 = vpop.f32.mrb[0].mxu0
    %v4270 = vadd.f32 0.0, %v4269
    %v4271 = vpop.f32.mrb[0].mxu0
    %v4272 = vadd.f32 0.0, %v4271
    %v4273 = vpop.f32.mrb[0].mxu0
    %v4274 = vadd.f32 0.0, %v4273
    %4275 = vmatprep.mubr.bf16.mxu0 0
    %4276 = vmatmul.mubr.bf16.gmra.mrb[0].mxu0 %v4023
    %v4277 = vpop.f32.mrb[0].mxu0
    %v4278 = vadd.f32 0.0, %v4277
    %v4279 = vpop.f32.mrb[0].mxu0
    %v4280 = vadd.f32 0.0, %v4279
    %v4281 = vpop.f32.mrb[0].mxu0
    %v4282 = vadd.f32 0.0, %v4281
    %v4283 = vpop.f32.mrb[0].mxu0
    %v4284 = vadd.f32 0.0, %v4283
    %4285 = vmatprep.mubr.bf16.mxu0 0
    %4286 = vmatmul.mubr.bf16.gmra.mrb[0].mxu0 %v4024
    %v4287 = vpop.f32.mrb[0].mxu0
    %v4288 = vadd.f32 0.0, %v4287
    %v4289 = vpop.f32.mrb[0].mxu0
    %v4290 = vadd.f32 0.0, %v4289
    %v4291 = vpop.f32.mrb[0].mxu0
    %v4292 = vadd.f32 0.0, %v4291
    %v4293 = vpop.f32.mrb[0].mxu0
    %v4294 = vadd.f32 0.0, %v4293
    %4295 = vmatprep.mubr.bf16.mxu0 0
    %4296 = vmatmul.mubr.bf16.gmra.mrb[0].mxu0 %v4025
    %v4297 = vpop.f32.mrb[0].mxu0
    %v4298 = vadd.f32 0.0, %v4297
    %v4299 = vpop.f32.mrb[0].mxu0
    %v4300 = vadd.f32 0.0, %v4299
    %v4301 = vpop.f32.mrb[0].mxu0
    %v4302 = vadd.f32 0.0, %v4301
    %v4303 = vpop.f32.mrb[0].mxu0
    %v4304 = vadd.f32 0.0, %v4303
    %4305 = vmatprep.mubr.bf16.mxu0 0
    %4306 = vmatmul.mubr.bf16.gmra.mrb[0].mxu0 %v4026
    %v4307 = vpop.f32.mrb[0].mxu0
    %v4308 = vadd.f32 0.0, %v4307
    %v4309 = vpop.f32.mrb[0].mxu0
    %v4310 = vadd.f32 0.0, %v4309
    %v4311 = vpop.f32.mrb[0].mxu0
    %v4312 = vadd.f32 0.0, %v4311
    %v4313 = vpop.f32.mrb[0].mxu0
    %v4314 = vadd.f32 0.0, %v4313
    %4315 = vdwg.mxu0
    %v4316 = vadd.f32 %v4158, %v4162
    %v4317 = vadd.f32 %v4316, %v4168
    %v4318 = vadd.f32 %v4317, %v4172
    %v4319 = vadd.f32 %v4318, %v4178
    %v4320 = vadd.f32 %v4319, %v4182
    %v4321 = vadd.f32 %v4320, %v4188
    %v4322 = vadd.f32 %v4321, %v4192
    %v4323 = vadd.f32 %v4322, %v4198
    %v4324 = vadd.f32 %v4323, %v4202
    %v4325 = vadd.f32 %v4324, %v4208
    %v4326 = vadd.f32 %v4325, %v4212
    %v4327 = vadd.f32 %v4326, %v4218
    %v4328 = vadd.f32 %v4327, %v4222
    %v4329 = vadd.f32 %v4328, %v4228
    %v4330 = vadd.f32 %v4329, %v4232
    %v4331 = vadd.f32 %v4330, %v4238
    %v4332 = vadd.f32 %v4331, %v4242
    %v4333 = vadd.f32 %v4332, %v4248
    %v4334 = vadd.f32 %v4333, %v4252
    %v4335 = vadd.f32 %v4334, %v4258
    %v4336 = vadd.f32 %v4335, %v4262
    %v4337 = vadd.f32 %v4336, %v4268
    %v4338 = vadd.f32 %v4337, %v4272
    %v4339 = vadd.f32 %v4338, %v4278
    %v4340 = vadd.f32 %v4339, %v4282
    %v4341 = vadd.f32 %v4340, %v4288
    %v4342 = vadd.f32 %v4341, %v4292
    %v4343 = vadd.f32 %v4342, %v4298
    %v4344 = vadd.f32 %v4343, %v4302
    %v4345 = vadd.f32 %v4344, %v4308
    %v4346 = vadd.f32 %v4345, %v4312
    %v4347 = vrot.slane %v4346, 4
    %v4348 = vadd.f32 %v4346, %v4347
    %v4349 = vrot.slane %v4348, 2
    %v4350 = vadd.f32 %v4348, %v4349
    %v4351 = vrot.slane %v4350, 1
    %v4352 = vadd.f32 %v4350, %v4351
    %v4353 = vadd.f32 %v4160, %v4164
    %v4354 = vadd.f32 %v4353, %v4170
    %v4355 = vadd.f32 %v4354, %v4174
    %v4356 = vadd.f32 %v4355, %v4180
    %v4357 = vadd.f32 %v4356, %v4184
    %v4358 = vadd.f32 %v4357, %v4190
    %v4359 = vadd.f32 %v4358, %v4194
    %v4360 = vadd.f32 %v4359, %v4200
    %v4361 = vadd.f32 %v4360, %v4204
    %v4362 = vadd.f32 %v4361, %v4210
    %v4363 = vadd.f32 %v4362, %v4214
    %v4364 = vadd.f32 %v4363, %v4220
    %v4365 = vadd.f32 %v4364, %v4224
    %v4366 = vadd.f32 %v4365, %v4230
    %v4367 = vadd.f32 %v4366, %v4234
    %v4368 = vadd.f32 %v4367, %v4240
    %v4369 = vadd.f32 %v4368, %v4244
    %v4370 = vadd.f32 %v4369, %v4250
    %v4371 = vadd.f32 %v4370, %v4254
    %v4372 = vadd.f32 %v4371, %v4260
    %v4373 = vadd.f32 %v4372, %v4264
    %v4374 = vadd.f32 %v4373, %v4270
    %v4375 = vadd.f32 %v4374, %v4274
    %v4376 = vadd.f32 %v4375, %v4280
    %v4377 = vadd.f32 %v4376, %v4284
    %v4378 = vadd.f32 %v4377, %v4290
    %v4379 = vadd.f32 %v4378, %v4294
    %v4380 = vadd.f32 %v4379, %v4300
    %v4381 = vadd.f32 %v4380, %v4304
    %v4382 = vadd.f32 %v4381, %v4310
    %v4383 = vadd.f32 %v4382, %v4314
    %v4384 = vrot.slane %v4383, 4
    %v4385 = vadd.f32 %v4383, %v4384
    %v4386 = vrot.slane %v4385, 2
    %v4387 = vadd.f32 %v4385, %v4386
    %v4388 = vrot.slane %v4387, 1
    %v4389 = vadd.f32 %v4387, %v4388
    %v4390 = vmul.f32 %v4352, 0.00390625
    %v4391 = vmul.f32 %v4389, 0.00390625
    %v4392 = vmul.f32 %v4158, %v4158
    %v4393 = vmul.f32 %v4160, %v4160
    %v4394 = vmul.f32 %v4162, %v4162
    %v4395 = vmul.f32 %v4164, %v4164
    %v4396 = vmul.f32 %v4168, %v4168
    %v4397 = vmul.f32 %v4170, %v4170
    %v4398 = vmul.f32 %v4172, %v4172
    %v4399 = vmul.f32 %v4174, %v4174
    %v4400 = vmul.f32 %v4178, %v4178
    %v4401 = vmul.f32 %v4180, %v4180
    %v4402 = vmul.f32 %v4182, %v4182
    %v4403 = vmul.f32 %v4184, %v4184
    %v4404 = vmul.f32 %v4188, %v4188
    %v4405 = vmul.f32 %v4190, %v4190
    %v4406 = vmul.f32 %v4192, %v4192
    %v4407 = vmul.f32 %v4194, %v4194
    %v4408 = vmul.f32 %v4198, %v4198
    %v4409 = vmul.f32 %v4200, %v4200
    %v4410 = vmul.f32 %v4202, %v4202
    %v4411 = vmul.f32 %v4204, %v4204
    %v4412 = vmul.f32 %v4208, %v4208
    %v4413 = vmul.f32 %v4210, %v4210
    %v4414 = vmul.f32 %v4212, %v4212
    %v4415 = vmul.f32 %v4214, %v4214
    %v4416 = vmul.f32 %v4218, %v4218
    %v4417 = vmul.f32 %v4220, %v4220
    %v4418 = vmul.f32 %v4222, %v4222
    %v4419 = vmul.f32 %v4224, %v4224
    %v4420 = vmul.f32 %v4228, %v4228
    %v4421 = vmul.f32 %v4230, %v4230
    %v4422 = vmul.f32 %v4232, %v4232
    %v4423 = vmul.f32 %v4234, %v4234
    %v4424 = vmul.f32 %v4238, %v4238
    %v4425 = vmul.f32 %v4240, %v4240
    %v4426 = vmul.f32 %v4242, %v4242
    %v4427 = vmul.f32 %v4244, %v4244
    %v4428 = vmul.f32 %v4248, %v4248
    %v4429 = vmul.f32 %v4250, %v4250
    %v4430 = vmul.f32 %v4252, %v4252
    %v4431 = vmul.f32 %v4254, %v4254
    %v4432 = vmul.f32 %v4258, %v4258
    %v4433 = vmul.f32 %v4260, %v4260
    %v4434 = vmul.f32 %v4262, %v4262
    %v4435 = vmul.f32 %v4264, %v4264
    %v4436 = vmul.f32 %v4268, %v4268
    %v4437 = vmul.f32 %v4270, %v4270
    %v4438 = vmul.f32 %v4272, %v4272
    %v4439 = vmul.f32 %v4274, %v4274
    %v4440 = vmul.f32 %v4278, %v4278
    %v4441 = vmul.f32 %v4280, %v4280
    %v4442 = vmul.f32 %v4282, %v4282
    %v4443 = vmul.f32 %v4284, %v4284
    %v4444 = vmul.f32 %v4288, %v4288
    %v4445 = vmul.f32 %v4290, %v4290
    %v4446 = vmul.f32 %v4292, %v4292
    %v4447 = vmul.f32 %v4294, %v4294
    %v4448 = vmul.f32 %v4298, %v4298
    %v4449 = vmul.f32 %v4300, %v4300
    %v4450 = vmul.f32 %v4302, %v4302
    %v4451 = vmul.f32 %v4304, %v4304
    %v4452 = vmul.f32 %v4308, %v4308
    %v4453 = vmul.f32 %v4310, %v4310
    %v4454 = vmul.f32 %v4312, %v4312
    %v4455 = vmul.f32 %v4314, %v4314
    %v4456 = vadd.f32 %v4392, %v4394
    %v4457 = vadd.f32 %v4456, %v4396
    %v4458 = vadd.f32 %v4457, %v4398
    %v4459 = vadd.f32 %v4458, %v4400
    %v4460 = vadd.f32 %v4459, %v4402
    %v4461 = vadd.f32 %v4460, %v4404
    %v4462 = vadd.f32 %v4461, %v4406
    %v4463 = vadd.f32 %v4462, %v4408
    %v4464 = vadd.f32 %v4463, %v4410
    %v4465 = vadd.f32 %v4464, %v4412
    %v4466 = vadd.f32 %v4465, %v4414
    %v4467 = vadd.f32 %v4466, %v4416
    %v4468 = vadd.f32 %v4467, %v4418
    %v4469 = vadd.f32 %v4468, %v4420
    %v4470 = vadd.f32 %v4469, %v4422
    %v4471 = vadd.f32 %v4470, %v4424
    %v4472 = vadd.f32 %v4471, %v4426
    %v4473 = vadd.f32 %v4472, %v4428
    %v4474 = vadd.f32 %v4473, %v4430
    %v4475 = vadd.f32 %v4474, %v4432
    %v4476 = vadd.f32 %v4475, %v4434
    %v4477 = vadd.f32 %v4476, %v4436
    %v4478 = vadd.f32 %v4477, %v4438
    %v4479 = vadd.f32 %v4478, %v4440
    %v4480 = vadd.f32 %v4479, %v4442
    %v4481 = vadd.f32 %v4480, %v4444
    %v4482 = vadd.f32 %v4481, %v4446
    %v4483 = vadd.f32 %v4482, %v4448
    %v4484 = vadd.f32 %v4483, %v4450
    %v4485 = vadd.f32 %v4484, %v4452
    %v4486 = vadd.f32 %v4485, %v4454
    %v4487 = vrot.slane %v4486, 4
    %v4488 = vadd.f32 %v4486, %v4487
    %v4489 = vrot.slane %v4488, 2
    %v4490 = vadd.f32 %v4488, %v4489
    %v4491 = vrot.slane %v4490, 1
    %v4492 = vadd.f32 %v4490, %v4491
    %v4493 = vadd.f32 %v4393, %v4395
    %v4494 = vadd.f32 %v4493, %v4397
    %v4495 = vadd.f32 %v4494, %v4399
    %v4496 = vadd.f32 %v4495, %v4401
    %v4497 = vadd.f32 %v4496, %v4403
    %v4498 = vadd.f32 %v4497, %v4405
    %v4499 = vadd.f32 %v4498, %v4407
    %v4500 = vadd.f32 %v4499, %v4409
    %v4501 = vadd.f32 %v4500, %v4411
    %v4502 = vadd.f32 %v4501, %v4413
    %v4503 = vadd.f32 %v4502, %v4415
    %v4504 = vadd.f32 %v4503, %v4417
    %v4505 = vadd.f32 %v4504, %v4419
    %v4506 = vadd.f32 %v4505, %v4421
    %v4507 = vadd.f32 %v4506, %v4423
    %v4508 = vadd.f32 %v4507, %v4425
    %v4509 = vadd.f32 %v4508, %v4427
    %v4510 = vadd.f32 %v4509, %v4429
    %v4511 = vadd.f32 %v4510, %v4431
    %v4512 = vadd.f32 %v4511, %v4433
    %v4513 = vadd.f32 %v4512, %v4435
    %v4514 = vadd.f32 %v4513, %v4437
    %v4515 = vadd.f32 %v4514, %v4439
    %v4516 = vadd.f32 %v4515, %v4441
    %v4517 = vadd.f32 %v4516, %v4443
    %v4518 = vadd.f32 %v4517, %v4445
    %v4519 = vadd.f32 %v4518, %v4447
    %v4520 = vadd.f32 %v4519, %v4449
    %v4521 = vadd.f32 %v4520, %v4451
    %v4522 = vadd.f32 %v4521, %v4453
    %v4523 = vadd.f32 %v4522, %v4455
    %v4524 = vrot.slane %v4523, 4
    %v4525 = vadd.f32 %v4523, %v4524
    %v4526 = vrot.slane %v4525, 2
    %v4527 = vadd.f32 %v4525, %v4526
    %v4528 = vrot.slane %v4527, 1
    %v4529 = vadd.f32 %v4527, %v4528
    %v4530 = vmul.f32 %v4492, 0.00390625
    %v4531 = vmul.f32 %v4529, 0.00390625
    %v4532 = vmul.f32 %v4390, %v4390
    %v4533 = vmul.f32 %v4391, %v4391
    %v4534 = vsub.f32 %v4530, %v4532
    %v4535 = vsub.f32 %v4531, %v4533
    %v4536 = vadd.f32 %v4534, 1e-05
    %v4537 = vadd.f32 %v4535, 1e-05
    %v4538 = vrsqrt.pop %v4536
    %v4539 = vrsqrt.pop %v4537
    %v4540 = vld [vmem:[%s11] sm:$0x3]
    %v4542 = vlaneseq
    %v4543 = vshrl.u32 %v4542, 7
    %v4544 = vsub.s32 0, %v4543
    %v4545 = vrot.slane %v4540, %v4544
    %v4546 = vlaneseq
    %v4547 = vshrl.u32 %v4546, 7
    %v4548 = vsub.s32 1, %v4547
    %v4549 = vrot.slane %v4540, %v4548
    %v4552 = vmul.f32 %v4538, %v4545
    %v4553 = vmul.f32 %v4539, %v4549
    %v4554 = vld [vmem:[%s12] sm:$0x3]
    %v4555 = vmul.f32 %v4390, %v4552
    %v4556 = vmul.f32 %v4391, %v4553
    %v4559 = vcombine.low %v4555, %v4556
    %v4561 = vunpack.c.l.s4 1966171168
    %v4562 = vunpack.c.0.s8 %v4561
    %v4563 = vlaneseq
    %v4564 = vshrl.u32 %v4563, 7
    %v4565 = vsub.s32 %v4562, %v4564
    %v4566 = vrot.slane %v4559, %v4565
    %v4568 = vunpack.c.l.s4 1966171168
    %v4569 = vunpack.c.0.s8 %v4568
    %v4570 = vlaneseq
    %v4571 = vshrl.u32 %v4570, 7
    %v4572 = vsub.s32 %v4569, %v4571
    %v4573 = vrot.slane %v4566, %v4572
    %v4575 = vsub.f32 %v4554, %v4573
    %v4576 = vlaneseq
    %v4577 = vshrl.u32 %v4576, 7
    %v4578 = vsub.s32 0, %v4577
    %v4579 = vrot.slane %v4552, %v4578
    %v4580 = vlaneseq
    %v4581 = vshrl.u32 %v4580, 7
    %v4582 = vsub.s32 0, %v4581
    %v4583 = vrot.slane %v4553, %v4582
    %v4584 = vmul.f32 %v4158, %v4579
    %v4585 = vmul.f32 %v4160, %v4583
    %v4586 = vmul.f32 %v4162, %v4579
    %v4587 = vmul.f32 %v4164, %v4583
    %v4588 = vmul.f32 %v4168, %v4579
    %v4589 = vmul.f32 %v4170, %v4583
    %v4590 = vmul.f32 %v4172, %v4579
    %v4591 = vmul.f32 %v4174, %v4583
    %v4592 = vmul.f32 %v4178, %v4579
    %v4593 = vmul.f32 %v4180, %v4583
    %v4594 = vmul.f32 %v4182, %v4579
    %v4595 = vmul.f32 %v4184, %v4583
    %v4596 = vmul.f32 %v4188, %v4579
    %v4597 = vmul.f32 %v4190, %v4583
    %v4598 = vmul.f32 %v4192, %v4579
    %v4599 = vmul.f32 %v4194, %v4583
    %v4600 = vmul.f32 %v4198, %v4579
    %v4601 = vmul.f32 %v4200, %v4583
    %v4602 = vmul.f32 %v4202, %v4579
    %v4603 = vmul.f32 %v4204, %v4583
    %v4604 = vmul.f32 %v4208, %v4579
    %v4605 = vmul.f32 %v4210, %v4583
    %v4606 = vmul.f32 %v4212, %v4579
    %v4607 = vmul.f32 %v4214, %v4583
    %v4608 = vmul.f32 %v4218, %v4579
    %v4609 = vmul.f32 %v4220, %v4583
    %v4610 = vmul.f32 %v4222, %v4579
    %v4611 = vmul.f32 %v4224, %v4583
    %v4612 = vmul.f32 %v4228, %v4579
    %v4613 = vmul.f32 %v4230, %v4583
    %v4614 = vmul.f32 %v4232, %v4579
    %v4615 = vmul.f32 %v4234, %v4583
    %v4616 = vmul.f32 %v4238, %v4579
    %v4617 = vmul.f32 %v4240, %v4583
    %v4618 = vmul.f32 %v4242, %v4579
    %v4619 = vmul.f32 %v4244, %v4583
    %v4620 = vmul.f32 %v4248, %v4579
    %v4621 = vmul.f32 %v4250, %v4583
    %v4622 = vmul.f32 %v4252, %v4579
    %v4623 = vmul.f32 %v4254, %v4583
    %v4624 = vmul.f32 %v4258, %v4579
    %v4625 = vmul.f32 %v4260, %v4583
    %v4626 = vmul.f32 %v4262, %v4579
    %v4627 = vmul.f32 %v4264, %v4583
    %v4628 = vmul.f32 %v4268, %v4579
    %v4629 = vmul.f32 %v4270, %v4583
    %v4630 = vmul.f32 %v4272, %v4579
    %v4631 = vmul.f32 %v4274, %v4583
    %v4632 = vmul.f32 %v4278, %v4579
    %v4633 = vmul.f32 %v4280, %v4583
    %v4634 = vmul.f32 %v4282, %v4579
    %v4635 = vmul.f32 %v4284, %v4583
    %v4636 = vmul.f32 %v4288, %v4579
    %v4637 = vmul.f32 %v4290, %v4583
    %v4638 = vmul.f32 %v4292, %v4579
    %v4639 = vmul.f32 %v4294, %v4583
    %v4640 = vmul.f32 %v4298, %v4579
    %v4641 = vmul.f32 %v4300, %v4583
    %v4642 = vmul.f32 %v4302, %v4579
    %v4643 = vmul.f32 %v4304, %v4583
    %v4644 = vmul.f32 %v4308, %v4579
    %v4645 = vmul.f32 %v4310, %v4583
    %v4646 = vmul.f32 %v4312, %v4579
    %v4647 = vmul.f32 %v4314, %v4583
    %v4649 = vlaneseq
    %v4650 = vshrl.u32 %v4649, 7
    %v4651 = vsub.s32 0, %v4650
    %v4652 = vrot.slane %v4575, %v4651
    %v4653 = vlaneseq
    %v4654 = vshrl.u32 %v4653, 7
    %v4655 = vsub.s32 1, %v4654
    %v4656 = vrot.slane %v4575, %v4655
    %v4659 = vadd.f32 %v4584, %v4652
    %v4660 = vadd.f32 %v4585, %v4656
    %v4661 = vadd.f32 %v4586, %v4652
    %v4662 = vadd.f32 %v4587, %v4656
    %v4663 = vadd.f32 %v4588, %v4652
    %v4664 = vadd.f32 %v4589, %v4656
    %v4665 = vadd.f32 %v4590, %v4652
    %v4666 = vadd.f32 %v4591, %v4656
    %v4667 = vadd.f32 %v4592, %v4652
    %v4668 = vadd.f32 %v4593, %v4656
    %v4669 = vadd.f32 %v4594, %v4652
    %v4670 = vadd.f32 %v4595, %v4656
    %v4671 = vadd.f32 %v4596, %v4652
    %v4672 = vadd.f32 %v4597, %v4656
    %v4673 = vadd.f32 %v4598, %v4652
    %v4674 = vadd.f32 %v4599, %v4656
    %v4675 = vadd.f32 %v4600, %v4652
    %v4676 = vadd.f32 %v4601, %v4656
    %v4677 = vadd.f32 %v4602, %v4652
    %v4678 = vadd.f32 %v4603, %v4656
    %v4679 = vadd.f32 %v4604, %v4652
    %v4680 = vadd.f32 %v4605, %v4656
    %v4681 = vadd.f32 %v4606, %v4652
    %v4682 = vadd.f32 %v4607, %v4656
    %v4683 = vadd.f32 %v4608, %v4652
    %v4684 = vadd.f32 %v4609, %v4656
    %v4685 = vadd.f32 %v4610, %v4652
    %v4686 = vadd.f32 %v4611, %v4656
    %v4687 = vadd.f32 %v4612, %v4652
    %v4688 = vadd.f32 %v4613, %v4656
    %v4689 = vadd.f32 %v4614, %v4652
    %v4690 = vadd.f32 %v4615, %v4656
    %v4691 = vadd.f32 %v4616, %v4652
    %v4692 = vadd.f32 %v4617, %v4656
    %v4693 = vadd.f32 %v4618, %v4652
    %v4694 = vadd.f32 %v4619, %v4656
    %v4695 = vadd.f32 %v4620, %v4652
    %v4696 = vadd.f32 %v4621, %v4656
    %v4697 = vadd.f32 %v4622, %v4652
    %v4698 = vadd.f32 %v4623, %v4656
    %v4699 = vadd.f32 %v4624, %v4652
    %v4700 = vadd.f32 %v4625, %v4656
    %v4701 = vadd.f32 %v4626, %v4652
    %v4702 = vadd.f32 %v4627, %v4656
    %v4703 = vadd.f32 %v4628, %v4652
    %v4704 = vadd.f32 %v4629, %v4656
    %v4705 = vadd.f32 %v4630, %v4652
    %v4706 = vadd.f32 %v4631, %v4656
    %v4707 = vadd.f32 %v4632, %v4652
    %v4708 = vadd.f32 %v4633, %v4656
    %v4709 = vadd.f32 %v4634, %v4652
    %v4710 = vadd.f32 %v4635, %v4656
    %v4711 = vadd.f32 %v4636, %v4652
    %v4712 = vadd.f32 %v4637, %v4656
    %v4713 = vadd.f32 %v4638, %v4652
    %v4714 = vadd.f32 %v4639, %v4656
    %v4715 = vadd.f32 %v4640, %v4652
    %v4716 = vadd.f32 %v4641, %v4656
    %v4717 = vadd.f32 %v4642, %v4652
    %v4718 = vadd.f32 %v4643, %v4656
    %v4719 = vadd.f32 %v4644, %v4652
    %v4720 = vadd.f32 %v4645, %v4656
    %v4721 = vadd.f32 %v4646, %v4652
    %v4722 = vadd.f32 %v4647, %v4656
    %v4723 = vmin.f32 %v4659, 20.0
    %v4724 = vmin.f32 %v4660, 20.0
    %v4725 = vmin.f32 %v4661, 20.0
    %v4726 = vmin.f32 %v4662, 20.0
    %v4727 = vmin.f32 %v4663, 20.0
    %v4728 = vmin.f32 %v4664, 20.0
    %v4729 = vmin.f32 %v4665, 20.0
    %v4730 = vmin.f32 %v4666, 20.0
    %v4731 = vmin.f32 %v4667, 20.0
    %v4732 = vmin.f32 %v4668, 20.0
    %v4733 = vmin.f32 %v4669, 20.0
    %v4734 = vmin.f32 %v4670, 20.0
    %v4735 = vmin.f32 %v4671, 20.0
    %v4736 = vmin.f32 %v4672, 20.0
    %v4737 = vmin.f32 %v4673, 20.0
    %v4738 = vmin.f32 %v4674, 20.0
    %v4739 = vmin.f32 %v4675, 20.0
    %v4740 = vmin.f32 %v4676, 20.0
    %v4741 = vmin.f32 %v4677, 20.0
    %v4742 = vmin.f32 %v4678, 20.0
    %v4743 = vmin.f32 %v4679, 20.0
    %v4744 = vmin.f32 %v4680, 20.0
    %v4745 = vmin.f32 %v4681, 20.0
    %v4746 = vmin.f32 %v4682, 20.0
    %v4747 = vmin.f32 %v4683, 20.0
    %v4748 = vmin.f32 %v4684, 20.0
    %v4749 = vmin.f32 %v4685, 20.0
    %v4750 = vmin.f32 %v4686, 20.0
    %v4751 = vmin.f32 %v4687, 20.0
    %v4752 = vmin.f32 %v4688, 20.0
    %v4753 = vmin.f32 %v4689, 20.0
    %v4754 = vmin.f32 %v4690, 20.0
    %v4755 = vmin.f32 %v4691, 20.0
    %v4756 = vmin.f32 %v4692, 20.0
    %v4757 = vmin.f32 %v4693, 20.0
    %v4758 = vmin.f32 %v4694, 20.0
    %v4759 = vmin.f32 %v4695, 20.0
    %v4760 = vmin.f32 %v4696, 20.0
    %v4761 = vmin.f32 %v4697, 20.0
    %v4762 = vmin.f32 %v4698, 20.0
    %v4763 = vmin.f32 %v4699, 20.0
    %v4764 = vmin.f32 %v4700, 20.0
    %v4765 = vmin.f32 %v4701, 20.0
    %v4766 = vmin.f32 %v4702, 20.0
    %v4767 = vmin.f32 %v4703, 20.0
    %v4768 = vmin.f32 %v4704, 20.0
    %v4769 = vmin.f32 %v4705, 20.0
    %v4770 = vmin.f32 %v4706, 20.0
    %v4771 = vmin.f32 %v4707, 20.0
    %v4772 = vmin.f32 %v4708, 20.0
    %v4773 = vmin.f32 %v4709, 20.0
    %v4774 = vmin.f32 %v4710, 20.0
    %v4775 = vmin.f32 %v4711, 20.0
    %v4776 = vmin.f32 %v4712, 20.0
    %v4777 = vmin.f32 %v4713, 20.0
    %v4778 = vmin.f32 %v4714, 20.0
    %v4779 = vmin.f32 %v4715, 20.0
    %v4780 = vmin.f32 %v4716, 20.0
    %v4781 = vmin.f32 %v4717, 20.0
    %v4782 = vmin.f32 %v4718, 20.0
    %v4783 = vmin.f32 %v4719, 20.0
    %v4784 = vmin.f32 %v4720, 20.0
    %v4785 = vmin.f32 %v4721, 20.0
    %v4786 = vmin.f32 %v4722, 20.0
    %v4787 = vmul.f32 %v4723, 1.442695
    %v4788 = vpow.pop %v4787
    %v4789 = vmul.f32 %v4724, 1.442695
    %v4790 = vpow.pop %v4789
    %v4791 = vmul.f32 %v4725, 1.442695
    %v4792 = vpow.pop %v4791
    %v4793 = vmul.f32 %v4726, 1.442695
    %v4794 = vpow.pop %v4793
    %v4795 = vmul.f32 %v4727, 1.442695
    %v4796 = vpow.pop %v4795
    %v4797 = vmul.f32 %v4728, 1.442695
    %v4798 = vpow.pop %v4797
    %v4799 = vmul.f32 %v4729, 1.442695
    %v4800 = vpow.pop %v4799
    %v4801 = vmul.f32 %v4730, 1.442695
    %v4802 = vpow.pop %v4801
    %v4803 = vmul.f32 %v4731, 1.442695
    %v4804 = vpow.pop %v4803
    %v4805 = vmul.f32 %v4732, 1.442695
    %v4806 = vpow.pop %v4805
    %v4807 = vmul.f32 %v4733, 1.442695
    %v4808 = vpow.pop %v4807
    %v4809 = vmul.f32 %v4734, 1.442695
    %v4810 = vpow.pop %v4809
    %v4811 = vmul.f32 %v4735, 1.442695
    %v4812 = vpow.pop %v4811
    %v4813 = vmul.f32 %v4736, 1.442695
    %v4814 = vpow.pop %v4813
    %v4815 = vmul.f32 %v4737, 1.442695
    %v4816 = vpow.pop %v4815
    %v4817 = vmul.f32 %v4738, 1.442695
    %v4818 = vpow.pop %v4817
    %v4819 = vmul.f32 %v4739, 1.442695
    %v4820 = vpow.pop %v4819
    %v4821 = vmul.f32 %v4740, 1.442695
    %v4822 = vpow.pop %v4821
    %v4823 = vmul.f32 %v4741, 1.442695
    %v4824 = vpow.pop %v4823
    %v4825 = vmul.f32 %v4742, 1.442695
    %v4826 = vpow.pop %v4825
    %v4827 = vmul.f32 %v4743, 1.442695
    %v4828 = vpow.pop %v4827
    %v4829 = vmul.f32 %v4744, 1.442695
    %v4830 = vpow.pop %v4829
    %v4831 = vmul.f32 %v4745, 1.442695
    %v4832 = vpow.pop %v4831
    %v4833 = vmul.f32 %v4746, 1.442695
    %v4834 = vpow.pop %v4833
    %v4835 = vmul.f32 %v4747, 1.442695
    %v4836 = vpow.pop %v4835
    %v4837 = vmul.f32 %v4748, 1.442695
    %v4838 = vpow.pop %v4837
    %v4839 = vmul.f32 %v4749, 1.442695
    %v4840 = vpow.pop %v4839
    %v4841 = vmul.f32 %v4750, 1.442695
    %v4842 = vpow.pop %v4841
    %v4843 = vmul.f32 %v4751, 1.442695
    %v4844 = vpow.pop %v4843
    %v4845 = vmul.f32 %v4752, 1.442695
    %v4846 = vpow.pop %v4845
    %v4847 = vmul.f32 %v4753, 1.442695
    %v4848 = vpow.pop %v4847
    %v4849 = vmul.f32 %v4754, 1.442695
    %v4850 = vpow.pop %v4849
    %v4851 = vmul.f32 %v4755, 1.442695
    %v4852 = vpow.pop %v4851
    %v4853 = vmul.f32 %v4756, 1.442695
    %v4854 = vpow.pop %v4853
    %v4855 = vmul.f32 %v4757, 1.442695
    %v4856 = vpow.pop %v4855
    %v4857 = vmul.f32 %v4758, 1.442695
    %v4858 = vpow.pop %v4857
    %v4859 = vmul.f32 %v4759, 1.442695
    %v4860 = vpow.pop %v4859
    %v4861 = vmul.f32 %v4760, 1.442695
    %v4862 = vpow.pop %v4861
    %v4863 = vmul.f32 %v4761, 1.442695
    %v4864 = vpow.pop %v4863
    %v4865 = vmul.f32 %v4762, 1.442695
    %v4866 = vpow.pop %v4865
    %v4867 = vmul.f32 %v4763, 1.442695
    %v4868 = vpow.pop %v4867
    %v4869 = vmul.f32 %v4764, 1.442695
    %v4870 = vpow.pop %v4869
    %v4871 = vmul.f32 %v4765, 1.442695
    %v4872 = vpow.pop %v4871
    %v4873 = vmul.f32 %v4766, 1.442695
    %v4874 = vpow.pop %v4873
    %v4875 = vmul.f32 %v4767, 1.442695
    %v4876 = vpow.pop %v4875
    %v4877 = vmul.f32 %v4768, 1.442695
    %v4878 = vpow.pop %v4877
    %v4879 = vmul.f32 %v4769, 1.442695
    %v4880 = vpow.pop %v4879
    %v4881 = vmul.f32 %v4770, 1.442695
    %v4882 = vpow.pop %v4881
    %v4883 = vmul.f32 %v4771, 1.442695
    %v4884 = vpow.pop %v4883
    %v4885 = vmul.f32 %v4772, 1.442695
    %v4886 = vpow.pop %v4885
    %v4887 = vmul.f32 %v4773, 1.442695
    %v4888 = vpow.pop %v4887
    %v4889 = vmul.f32 %v4774, 1.442695
    %v4890 = vpow.pop %v4889
    %v4891 = vmul.f32 %v4775, 1.442695
    %v4892 = vpow.pop %v4891
    %v4893 = vmul.f32 %v4776, 1.442695
    %v4894 = vpow.pop %v4893
    %v4895 = vmul.f32 %v4777, 1.442695
    %v4896 = vpow.pop %v4895
    %v4897 = vmul.f32 %v4778, 1.442695
    %v4898 = vpow.pop %v4897
    %v4899 = vmul.f32 %v4779, 1.442695
    %v4900 = vpow.pop %v4899
    %v4901 = vmul.f32 %v4780, 1.442695
    %v4902 = vpow.pop %v4901
    %v4903 = vmul.f32 %v4781, 1.442695
    %v4904 = vpow.pop %v4903
    %v4905 = vmul.f32 %v4782, 1.442695
    %v4906 = vpow.pop %v4905
    %v4907 = vmul.f32 %v4783, 1.442695
    %v4908 = vpow.pop %v4907
    %v4909 = vmul.f32 %v4784, 1.442695
    %v4910 = vpow.pop %v4909
    %v4911 = vmul.f32 %v4785, 1.442695
    %v4912 = vpow.pop %v4911
    %v4913 = vmul.f32 %v4786, 1.442695
    %v4914 = vpow.pop %v4913
    %v4915 = vadd.f32 %v4788, 1.0
    %v4916 = vadd.f32 %v4790, 1.0
    %v4917 = vadd.f32 %v4792, 1.0
    %v4918 = vadd.f32 %v4794, 1.0
    %v4919 = vadd.f32 %v4796, 1.0
    %v4920 = vadd.f32 %v4798, 1.0
    %v4921 = vadd.f32 %v4800, 1.0
    %v4922 = vadd.f32 %v4802, 1.0
    %v4923 = vadd.f32 %v4804, 1.0
    %v4924 = vadd.f32 %v4806, 1.0
    %v4925 = vadd.f32 %v4808, 1.0
    %v4926 = vadd.f32 %v4810, 1.0
    %v4927 = vadd.f32 %v4812, 1.0
    %v4928 = vadd.f32 %v4814, 1.0
    %v4929 = vadd.f32 %v4816, 1.0
    %v4930 = vadd.f32 %v4818, 1.0
    %v4931 = vadd.f32 %v4820, 1.0
    %v4932 = vadd.f32 %v4822, 1.0
    %v4933 = vadd.f32 %v4824, 1.0
    %v4934 = vadd.f32 %v4826, 1.0
    %v4935 = vadd.f32 %v4828, 1.0
    %v4936 = vadd.f32 %v4830, 1.0
    %v4937 = vadd.f32 %v4832, 1.0
    %v4938 = vadd.f32 %v4834, 1.0
    %v4939 = vadd.f32 %v4836, 1.0
    %v4940 = vadd.f32 %v4838, 1.0
    %v4941 = vadd.f32 %v4840, 1.0
    %v4942 = vadd.f32 %v4842, 1.0
    %v4943 = vadd.f32 %v4844, 1.0
    %v4944 = vadd.f32 %v4846, 1.0
    %v4945 = vadd.f32 %v4848, 1.0
    %v4946 = vadd.f32 %v4850, 1.0
    %v4947 = vadd.f32 %v4852, 1.0
    %v4948 = vadd.f32 %v4854, 1.0
    %v4949 = vadd.f32 %v4856, 1.0
    %v4950 = vadd.f32 %v4858, 1.0
    %v4951 = vadd.f32 %v4860, 1.0
    %v4952 = vadd.f32 %v4862, 1.0
    %v4953 = vadd.f32 %v4864, 1.0
    %v4954 = vadd.f32 %v4866, 1.0
    %v4955 = vadd.f32 %v4868, 1.0
    %v4956 = vadd.f32 %v4870, 1.0
    %v4957 = vadd.f32 %v4872, 1.0
    %v4958 = vadd.f32 %v4874, 1.0
    %v4959 = vadd.f32 %v4876, 1.0
    %v4960 = vadd.f32 %v4878, 1.0
    %v4961 = vadd.f32 %v4880, 1.0
    %v4962 = vadd.f32 %v4882, 1.0
    %v4963 = vadd.f32 %v4884, 1.0
    %v4964 = vadd.f32 %v4886, 1.0
    %v4965 = vadd.f32 %v4888, 1.0
    %v4966 = vadd.f32 %v4890, 1.0
    %v4967 = vadd.f32 %v4892, 1.0
    %v4968 = vadd.f32 %v4894, 1.0
    %v4969 = vadd.f32 %v4896, 1.0
    %v4970 = vadd.f32 %v4898, 1.0
    %v4971 = vadd.f32 %v4900, 1.0
    %v4972 = vadd.f32 %v4902, 1.0
    %v4973 = vadd.f32 %v4904, 1.0
    %v4974 = vadd.f32 %v4906, 1.0
    %v4975 = vadd.f32 %v4908, 1.0
    %v4976 = vadd.f32 %v4910, 1.0
    %v4977 = vadd.f32 %v4912, 1.0
    %v4978 = vadd.f32 %v4914, 1.0
    %v4979 = vmul.f32 %v4915, %v4915
    %v4980 = vmul.f32 %v4916, %v4916
    %v4981 = vmul.f32 %v4917, %v4917
    %v4982 = vmul.f32 %v4918, %v4918
    %v4983 = vmul.f32 %v4919, %v4919
    %v4984 = vmul.f32 %v4920, %v4920
    %v4985 = vmul.f32 %v4921, %v4921
    %v4986 = vmul.f32 %v4922, %v4922
    %v4987 = vmul.f32 %v4923, %v4923
    %v4988 = vmul.f32 %v4924, %v4924
    %v4989 = vmul.f32 %v4925, %v4925
    %v4990 = vmul.f32 %v4926, %v4926
    %v4991 = vmul.f32 %v4927, %v4927
    %v4992 = vmul.f32 %v4928, %v4928
    %v4993 = vmul.f32 %v4929, %v4929
    %v4994 = vmul.f32 %v4930, %v4930
    %v4995 = vmul.f32 %v4931, %v4931
    %v4996 = vmul.f32 %v4932, %v4932
    %v4997 = vmul.f32 %v4933, %v4933
    %v4998 = vmul.f32 %v4934, %v4934
    %v4999 = vmul.f32 %v4935, %v4935
    %v5000 = vmul.f32 %v4936, %v4936
    %v5001 = vmul.f32 %v4937, %v4937
    %v5002 = vmul.f32 %v4938, %v4938
    %v5003 = vmul.f32 %v4939, %v4939
    %v5004 = vmul.f32 %v4940, %v4940
    %v5005 = vmul.f32 %v4941, %v4941
    %v5006 = vmul.f32 %v4942, %v4942
    %v5007 = vmul.f32 %v4943, %v4943
    %v5008 = vmul.f32 %v4944, %v4944
    %v5009 = vmul.f32 %v4945, %v4945
    %v5010 = vmul.f32 %v4946, %v4946
    %v5011 = vmul.f32 %v4947, %v4947
    %v5012 = vmul.f32 %v4948, %v4948
    %v5013 = vmul.f32 %v4949, %v4949
    %v5014 = vmul.f32 %v4950, %v4950
    %v5015 = vmul.f32 %v4951, %v4951
    %v5016 = vmul.f32 %v4952, %v4952
    %v5017 = vmul.f32 %v4953, %v4953
    %v5018 = vmul.f32 %v4954, %v4954
    %v5019 = vmul.f32 %v4955, %v4955
    %v5020 = vmul.f32 %v4956, %v4956
    %v5021 = vmul.f32 %v4957, %v4957
    %v5022 = vmul.f32 %v4958, %v4958
    %v5023 = vmul.f32 %v4959, %v4959
    %v5024 = vmul.f32 %v4960, %v4960
    %v5025 = vmul.f32 %v4961, %v4961
    %v5026 = vmul.f32 %v4962, %v4962
    %v5027 = vmul.f32 %v4963, %v4963
    %v5028 = vmul.f32 %v4964, %v4964
    %v5029 = vmul.f32 %v4965, %v4965
    %v5030 = vmul.f32 %v4966, %v4966
    %v5031 = vmul.f32 %v4967, %v4967
    %v5032 = vmul.f32 %v4968, %v4968
    %v5033 = vmul.f32 %v4969, %v4969
    %v5034 = vmul.f32 %v4970, %v4970
    %v5035 = vmul.f32 %v4971, %v4971
    %v5036 = vmul.f32 %v4972, %v4972
    %v5037 = vmul.f32 %v4973, %v4973
    %v5038 = vmul.f32 %v4974, %v4974
    %v5039 = vmul.f32 %v4975, %v4975
    %v5040 = vmul.f32 %v4976, %v4976
    %v5041 = vmul.f32 %v4977, %v4977
    %v5042 = vmul.f32 %v4978, %v4978
    %v5043 = vsub.f32 %v4979, 1.0
    %v5044 = vsub.f32 %v4980, 1.0
    %v5045 = vsub.f32 %v4981, 1.0
    %v5046 = vsub.f32 %v4982, 1.0
    %v5047 = vsub.f32 %v4983, 1.0
    %v5048 = vsub.f32 %v4984, 1.0
    %v5049 = vsub.f32 %v4985, 1.0
    %v5050 = vsub.f32 %v4986, 1.0
    %v5051 = vsub.f32 %v4987, 1.0
    %v5052 = vsub.f32 %v4988, 1.0
    %v5053 = vsub.f32 %v4989, 1.0
    %v5054 = vsub.f32 %v4990, 1.0
    %v5055 = vsub.f32 %v4991, 1.0
    %v5056 = vsub.f32 %v4992, 1.0
    %v5057 = vsub.f32 %v4993, 1.0
    %v5058 = vsub.f32 %v4994, 1.0
    %v5059 = vsub.f32 %v4995, 1.0
    %v5060 = vsub.f32 %v4996, 1.0
    %v5061 = vsub.f32 %v4997, 1.0
    %v5062 = vsub.f32 %v4998, 1.0
    %v5063 = vsub.f32 %v4999, 1.0
    %v5064 = vsub.f32 %v5000, 1.0
    %v5065 = vsub.f32 %v5001, 1.0
    %v5066 = vsub.f32 %v5002, 1.0
    %v5067 = vsub.f32 %v5003, 1.0
    %v5068 = vsub.f32 %v5004, 1.0
    %v5069 = vsub.f32 %v5005, 1.0
    %v5070 = vsub.f32 %v5006, 1.0
    %v5071 = vsub.f32 %v5007, 1.0
    %v5072 = vsub.f32 %v5008, 1.0
    %v5073 = vsub.f32 %v5009, 1.0
    %v5074 = vsub.f32 %v5010, 1.0
    %v5075 = vsub.f32 %v5011, 1.0
    %v5076 = vsub.f32 %v5012, 1.0
    %v5077 = vsub.f32 %v5013, 1.0
    %v5078 = vsub.f32 %v5014, 1.0
    %v5079 = vsub.f32 %v5015, 1.0
    %v5080 = vsub.f32 %v5016, 1.0
    %v5081 = vsub.f32 %v5017, 1.0
    %v5082 = vsub.f32 %v5018, 1.0
    %v5083 = vsub.f32 %v5019, 1.0
    %v5084 = vsub.f32 %v5020, 1.0
    %v5085 = vsub.f32 %v5021, 1.0
    %v5086 = vsub.f32 %v5022, 1.0
    %v5087 = vsub.f32 %v5023, 1.0
    %v5088 = vsub.f32 %v5024, 1.0
    %v5089 = vsub.f32 %v5025, 1.0
    %v5090 = vsub.f32 %v5026, 1.0
    %v5091 = vsub.f32 %v5027, 1.0
    %v5092 = vsub.f32 %v5028, 1.0
    %v5093 = vsub.f32 %v5029, 1.0
    %v5094 = vsub.f32 %v5030, 1.0
    %v5095 = vsub.f32 %v5031, 1.0
    %v5096 = vsub.f32 %v5032, 1.0
    %v5097 = vsub.f32 %v5033, 1.0
    %v5098 = vsub.f32 %v5034, 1.0
    %v5099 = vsub.f32 %v5035, 1.0
    %v5100 = vsub.f32 %v5036, 1.0
    %v5101 = vsub.f32 %v5037, 1.0
    %v5102 = vsub.f32 %v5038, 1.0
    %v5103 = vsub.f32 %v5039, 1.0
    %v5104 = vsub.f32 %v5040, 1.0
    %v5105 = vsub.f32 %v5041, 1.0
    %v5106 = vsub.f32 %v5042, 1.0
    %v5107 = vadd.f32 %v4979, 1.0
    %v5108 = vadd.f32 %v4980, 1.0
    %v5109 = vadd.f32 %v4981, 1.0
    %v5110 = vadd.f32 %v4982, 1.0
    %v5111 = vadd.f32 %v4983, 1.0
    %v5112 = vadd.f32 %v4984, 1.0
    %v5113 = vadd.f32 %v4985, 1.0
    %v5114 = vadd.f32 %v4986, 1.0
    %v5115 = vadd.f32 %v4987, 1.0
    %v5116 = vadd.f32 %v4988, 1.0
    %v5117 = vadd.f32 %v4989, 1.0
    %v5118 = vadd.f32 %v4990, 1.0
    %v5119 = vadd.f32 %v4991, 1.0
    %v5120 = vadd.f32 %v4992, 1.0
    %v5121 = vadd.f32 %v4993, 1.0
    %v5122 = vadd.f32 %v4994, 1.0
    %v5123 = vadd.f32 %v4995, 1.0
    %v5124 = vadd.f32 %v4996, 1.0
    %v5125 = vadd.f32 %v4997, 1.0
    %v5126 = vadd.f32 %v4998, 1.0
    %v5127 = vadd.f32 %v4999, 1.0
    %v5128 = vadd.f32 %v5000, 1.0
    %v5129 = vadd.f32 %v5001, 1.0
    %v5130 = vadd.f32 %v5002, 1.0
    %v5131 = vadd.f32 %v5003, 1.0
    %v5132 = vadd.f32 %v5004, 1.0
    %v5133 = vadd.f32 %v5005, 1.0
    %v5134 = vadd.f32 %v5006, 1.0
    %v5135 = vadd.f32 %v5007, 1.0
    %v5136 = vadd.f32 %v5008, 1.0
    %v5137 = vadd.f32 %v5009, 1.0
    %v5138 = vadd.f32 %v5010, 1.0
    %v5139 = vadd.f32 %v5011, 1.0
    %v5140 = vadd.f32 %v5012, 1.0
    %v5141 = vadd.f32 %v5013, 1.0
    %v5142 = vadd.f32 %v5014, 1.0
    %v5143 = vadd.f32 %v5015, 1.0
    %v5144 = vadd.f32 %v5016, 1.0
    %v5145 = vadd.f32 %v5017, 1.0
    %v5146 = vadd.f32 %v5018, 1.0
    %v5147 = vadd.f32 %v5019, 1.0
    %v5148 = vadd.f32 %v5020, 1.0
    %v5149 = vadd.f32 %v5021, 1.0
    %v5150 = vadd.f32 %v5022, 1.0
    %v5151 = vadd.f32 %v5023, 1.0
    %v5152 = vadd.f32 %v5024, 1.0
    %v5153 = vadd.f32 %v5025, 1.0
    %v5154 = vadd.f32 %v5026, 1.0
    %v5155 = vadd.f32 %v5027, 1.0
    %v5156 = vadd.f32 %v5028, 1.0
    %v5157 = vadd.f32 %v5029, 1.0
    %v5158 = vadd.f32 %v5030, 1.0
    %v5159 = vadd.f32 %v5031, 1.0
    %v5160 = vadd.f32 %v5032, 1.0
    %v5161 = vadd.f32 %v5033, 1.0
    %v5162 = vadd.f32 %v5034, 1.0
    %v5163 = vadd.f32 %v5035, 1.0
    %v5164 = vadd.f32 %v5036, 1.0
    %v5165 = vadd.f32 %v5037, 1.0
    %v5166 = vadd.f32 %v5038, 1.0
    %v5167 = vadd.f32 %v5039, 1.0
    %v5168 = vadd.f32 %v5040, 1.0
    %v5169 = vadd.f32 %v5041, 1.0
    %v5170 = vadd.f32 %v5042, 1.0
    %v5171 = vrcp.pop %v5107
    %v5172 = vrcp.pop %v5108
    %v5173 = vrcp.pop %v5109
    %v5174 = vrcp.pop %v5110
    %v5175 = vrcp.pop %v5111
    %v5176 = vrcp.pop %v5112
    %v5177 = vrcp.pop %v5113
    %v5178 = vrcp.pop %v5114
    %v5179 = vrcp.pop %v5115
    %v5180 = vrcp.pop %v5116
    %v5181 = vrcp.pop %v5117
    %v5182 = vrcp.pop %v5118
    %v5183 = vrcp.pop %v5119
    %v5184 = vrcp.pop %v5120
    %v5185 = vrcp.pop %v5121
    %v5186 = vrcp.pop %v5122
    %v5187 = vrcp.pop %v5123
    %v5188 = vrcp.pop %v5124
    %v5189 = vrcp.pop %v5125
    %v5190 = vrcp.pop %v5126
    %v5191 = vrcp.pop %v5127
    %v5192 = vrcp.pop %v5128
    %v5193 = vrcp.pop %v5129
    %v5194 = vrcp.pop %v5130
    %v5195 = vrcp.pop %v5131
    %v5196 = vrcp.pop %v5132
    %v5197 = vrcp.pop %v5133
    %v5198 = vrcp.pop %v5134
    %v5199 = vrcp.pop %v5135
    %v5200 = vrcp.pop %v5136
    %v5201 = vrcp.pop %v5137
    %v5202 = vrcp.pop %v5138
    %v5203 = vrcp.pop %v5139
    %v5204 = vrcp.pop %v5140
    %v5205 = vrcp.pop %v5141
    %v5206 = vrcp.pop %v5142
    %v5207 = vrcp.pop %v5143
    %v5208 = vrcp.pop %v5144
    %v5209 = vrcp.pop %v5145
    %v5210 = vrcp.pop %v5146
    %v5211 = vrcp.pop %v5147
    %v5212 = vrcp.pop %v5148
    %v5213 = vrcp.pop %v5149
    %v5214 = vrcp.pop %v5150
    %v5215 = vrcp.pop %v5151
    %v5216 = vrcp.pop %v5152
    %v5217 = vrcp.pop %v5153
    %v5218 = vrcp.pop %v5154
    %v5219 = vrcp.pop %v5155
    %v5220 = vrcp.pop %v5156
    %v5221 = vrcp.pop %v5157
    %v5222 = vrcp.pop %v5158
    %v5223 = vrcp.pop %v5159
    %v5224 = vrcp.pop %v5160
    %v5225 = vrcp.pop %v5161
    %v5226 = vrcp.pop %v5162
    %v5227 = vrcp.pop %v5163
    %v5228 = vrcp.pop %v5164
    %v5229 = vrcp.pop %v5165
    %v5230 = vrcp.pop %v5166
    %v5231 = vrcp.pop %v5167
    %v5232 = vrcp.pop %v5168
    %v5233 = vrcp.pop %v5169
    %v5234 = vrcp.pop %v5170
    %v5235 = vmul.f32 %v5043, %v5171
    %v5236 = vmul.f32 %v5044, %v5172
    %v5237 = vmul.f32 %v5045, %v5173
    %v5238 = vmul.f32 %v5046, %v5174
    %v5239 = vmul.f32 %v5047, %v5175
    %v5240 = vmul.f32 %v5048, %v5176
    %v5241 = vmul.f32 %v5049, %v5177
    %v5242 = vmul.f32 %v5050, %v5178
    %v5243 = vmul.f32 %v5051, %v5179
    %v5244 = vmul.f32 %v5052, %v5180
    %v5245 = vmul.f32 %v5053, %v5181
    %v5246 = vmul.f32 %v5054, %v5182
    %v5247 = vmul.f32 %v5055, %v5183
    %v5248 = vmul.f32 %v5056, %v5184
    %v5249 = vmul.f32 %v5057, %v5185
    %v5250 = vmul.f32 %v5058, %v5186
    %v5251 = vmul.f32 %v5059, %v5187
    %v5252 = vmul.f32 %v5060, %v5188
    %v5253 = vmul.f32 %v5061, %v5189
    %v5254 = vmul.f32 %v5062, %v5190
    %v5255 = vmul.f32 %v5063, %v5191
    %v5256 = vmul.f32 %v5064, %v5192
    %v5257 = vmul.f32 %v5065, %v5193
    %v5258 = vmul.f32 %v5066, %v5194
    %v5259 = vmul.f32 %v5067, %v5195
    %v5260 = vmul.f32 %v5068, %v5196
    %v5261 = vmul.f32 %v5069, %v5197
    %v5262 = vmul.f32 %v5070, %v5198
    %v5263 = vmul.f32 %v5071, %v5199
    %v5264 = vmul.f32 %v5072, %v5200
    %v5265 = vmul.f32 %v5073, %v5201
    %v5266 = vmul.f32 %v5074, %v5202
    %v5267 = vmul.f32 %v5075, %v5203
    %v5268 = vmul.f32 %v5076, %v5204
    %v5269 = vmul.f32 %v5077, %v5205
    %v5270 = vmul.f32 %v5078, %v5206
    %v5271 = vmul.f32 %v5079, %v5207
    %v5272 = vmul.f32 %v5080, %v5208
    %v5273 = vmul.f32 %v5081, %v5209
    %v5274 = vmul.f32 %v5082, %v5210
    %v5275 = vmul.f32 %v5083, %v5211
    %v5276 = vmul.f32 %v5084, %v5212
    %v5277 = vmul.f32 %v5085, %v5213
    %v5278 = vmul.f32 %v5086, %v5214
    %v5279 = vmul.f32 %v5087, %v5215
    %v5280 = vmul.f32 %v5088, %v5216
    %v5281 = vmul.f32 %v5089, %v5217
    %v5282 = vmul.f32 %v5090, %v5218
    %v5283 = vmul.f32 %v5091, %v5219
    %v5284 = vmul.f32 %v5092, %v5220
    %v5285 = vmul.f32 %v5093, %v5221
    %v5286 = vmul.f32 %v5094, %v5222
    %v5287 = vmul.f32 %v5095, %v5223
    %v5288 = vmul.f32 %v5096, %v5224
    %v5289 = vmul.f32 %v5097, %v5225
    %v5290 = vmul.f32 %v5098, %v5226
    %v5291 = vmul.f32 %v5099, %v5227
    %v5292 = vmul.f32 %v5100, %v5228
    %v5293 = vmul.f32 %v5101, %v5229
    %v5294 = vmul.f32 %v5102, %v5230
    %v5295 = vmul.f32 %v5103, %v5231
    %v5296 = vmul.f32 %v5104, %v5232
    %v5297 = vmul.f32 %v5105, %v5233
    %v5298 = vmul.f32 %v5106, %v5234
    %vm5299 = vcmp.gt.f32.partialorder %v4659, 20.0
    %vm5300 = vcmp.gt.f32.partialorder %v4660, 20.0
    %vm5301 = vcmp.gt.f32.partialorder %v4661, 20.0
    %vm5302 = vcmp.gt.f32.partialorder %v4662, 20.0
    %vm5303 = vcmp.gt.f32.partialorder %v4663, 20.0
    %vm5304 = vcmp.gt.f32.partialorder %v4664, 20.0
    %vm5305 = vcmp.gt.f32.partialorder %v4665, 20.0
    %vm5306 = vcmp.gt.f32.partialorder %v4666, 20.0
    %vm5307 = vcmp.gt.f32.partialorder %v4667, 20.0
    %vm5308 = vcmp.gt.f32.partialorder %v4668, 20.0
    %vm5309 = vcmp.gt.f32.partialorder %v4669, 20.0
    %vm5310 = vcmp.gt.f32.partialorder %v4670, 20.0
    %vm5311 = vcmp.gt.f32.partialorder %v4671, 20.0
    %vm5312 = vcmp.gt.f32.partialorder %v4672, 20.0
    %vm5313 = vcmp.gt.f32.partialorder %v4673, 20.0
    %vm5314 = vcmp.gt.f32.partialorder %v4674, 20.0
    %vm5315 = vcmp.gt.f32.partialorder %v4675, 20.0
    %vm5316 = vcmp.gt.f32.partialorder %v4676, 20.0
    %vm5317 = vcmp.gt.f32.partialorder %v4677, 20.0
    %vm5318 = vcmp.gt.f32.partialorder %v4678, 20.0
    %vm5319 = vcmp.gt.f32.partialorder %v4679, 20.0
    %vm5320 = vcmp.gt.f32.partialorder %v4680, 20.0
    %vm5321 = vcmp.gt.f32.partialorder %v4681, 20.0
    %vm5322 = vcmp.gt.f32.partialorder %v4682, 20.0
    %vm5323 = vcmp.gt.f32.partialorder %v4683, 20.0
    %vm5324 = vcmp.gt.f32.partialorder %v4684, 20.0
    %vm5325 = vcmp.gt.f32.partialorder %v4685, 20.0
    %vm5326 = vcmp.gt.f32.partialorder %v4686, 20.0
    %vm5327 = vcmp.gt.f32.partialorder %v4687, 20.0
    %vm5328 = vcmp.gt.f32.partialorder %v4688, 20.0
    %vm5329 = vcmp.gt.f32.partialorder %v4689, 20.0
    %vm5330 = vcmp.gt.f32.partialorder %v4690, 20.0
    %vm5331 = vcmp.gt.f32.partialorder %v4691, 20.0
    %vm5332 = vcmp.gt.f32.partialorder %v4692, 20.0
    %vm5333 = vcmp.gt.f32.partialorder %v4693, 20.0
    %vm5334 = vcmp.gt.f32.partialorder %v4694, 20.0
    %vm5335 = vcmp.gt.f32.partialorder %v4695, 20.0
    %vm5336 = vcmp.gt.f32.partialorder %v4696, 20.0
    %vm5337 = vcmp.gt.f32.partialorder %v4697, 20.0
    %vm5338 = vcmp.gt.f32.partialorder %v4698, 20.0
    %vm5339 = vcmp.gt.f32.partialorder %v4699, 20.0
    %vm5340 = vcmp.gt.f32.partialorder %v4700, 20.0
    %vm5341 = vcmp.gt.f32.partialorder %v4701, 20.0
    %vm5342 = vcmp.gt.f32.partialorder %v4702, 20.0
    %vm5343 = vcmp.gt.f32.partialorder %v4703, 20.0
    %vm5344 = vcmp.gt.f32.partialorder %v4704, 20.0
    %vm5345 = vcmp.gt.f32.partialorder %v4705, 20.0
    %vm5346 = vcmp.gt.f32.partialorder %v4706, 20.0
    %vm5347 = vcmp.gt.f32.partialorder %v4707, 20.0
    %vm5348 = vcmp.gt.f32.partialorder %v4708, 20.0
    %vm5349 = vcmp.gt.f32.partialorder %v4709, 20.0
    %vm5350 = vcmp.gt.f32.partialorder %v4710, 20.0
    %vm5351 = vcmp.gt.f32.partialorder %v4711, 20.0
    %vm5352 = vcmp.gt.f32.partialorder %v4712, 20.0
    %vm5353 = vcmp.gt.f32.partialorder %v4713, 20.0
    %vm5354 = vcmp.gt.f32.partialorder %v4714, 20.0
    %vm5355 = vcmp.gt.f32.partialorder %v4715, 20.0
    %vm5356 = vcmp.gt.f32.partialorder %v4716, 20.0
    %vm5357 = vcmp.gt.f32.partialorder %v4717, 20.0
    %vm5358 = vcmp.gt.f32.partialorder %v4718, 20.0
    %vm5359 = vcmp.gt.f32.partialorder %v4719, 20.0
    %vm5360 = vcmp.gt.f32.partialorder %v4720, 20.0
    %vm5361 = vcmp.gt.f32.partialorder %v4721, 20.0
    %vm5362 = vcmp.gt.f32.partialorder %v4722, 20.0
    %v5363 = vmul.f32 %v4659, %v5235
    %v5364 = vmul.f32 %v4660, %v5236
    %v5365 = vmul.f32 %v4661, %v5237
    %v5366 = vmul.f32 %v4662, %v5238
    %v5367 = vmul.f32 %v4663, %v5239
    %v5368 = vmul.f32 %v4664, %v5240
    %v5369 = vmul.f32 %v4665, %v5241
    %v5370 = vmul.f32 %v4666, %v5242
    %v5371 = vmul.f32 %v4667, %v5243
    %v5372 = vmul.f32 %v4668, %v5244
    %v5373 = vmul.f32 %v4669, %v5245
    %v5374 = vmul.f32 %v4670, %v5246
    %v5375 = vmul.f32 %v4671, %v5247
    %v5376 = vmul.f32 %v4672, %v5248
    %v5377 = vmul.f32 %v4673, %v5249
    %v5378 = vmul.f32 %v4674, %v5250
    %v5379 = vmul.f32 %v4675, %v5251
    %v5380 = vmul.f32 %v4676, %v5252
    %v5381 = vmul.f32 %v4677, %v5253
    %v5382 = vmul.f32 %v4678, %v5254
    %v5383 = vmul.f32 %v4679, %v5255
    %v5384 = vmul.f32 %v4680, %v5256
    %v5385 = vmul.f32 %v4681, %v5257
    %v5386 = vmul.f32 %v4682, %v5258
    %v5387 = vmul.f32 %v4683, %v5259
    %v5388 = vmul.f32 %v4684, %v5260
    %v5389 = vmul.f32 %v4685, %v5261
    %v5390 = vmul.f32 %v4686, %v5262
    %v5391 = vmul.f32 %v4687, %v5263
    %v5392 = vmul.f32 %v4688, %v5264
    %v5393 = vmul.f32 %v4689, %v5265
    %v5394 = vmul.f32 %v4690, %v5266
    %v5395 = vmul.f32 %v4691, %v5267
    %v5396 = vmul.f32 %v4692, %v5268
    %v5397 = vmul.f32 %v4693, %v5269
    %v5398 = vmul.f32 %v4694, %v5270
    %v5399 = vmul.f32 %v4695, %v5271
    %v5400 = vmul.f32 %v4696, %v5272
    %v5401 = vmul.f32 %v4697, %v5273
    %v5402 = vmul.f32 %v4698, %v5274
    %v5403 = vmul.f32 %v4699, %v5275
    %v5404 = vmul.f32 %v4700, %v5276
    %v5405 = vmul.f32 %v4701, %v5277
    %v5406 = vmul.f32 %v4702, %v5278
    %v5407 = vmul.f32 %v4703, %v5279
    %v5408 = vmul.f32 %v4704, %v5280
    %v5409 = vmul.f32 %v4705, %v5281
    %v5410 = vmul.f32 %v4706, %v5282
    %v5411 = vmul.f32 %v4707, %v5283
    %v5412 = vmul.f32 %v4708, %v5284
    %v5413 = vmul.f32 %v4709, %v5285
    %v5414 = vmul.f32 %v4710, %v5286
    %v5415 = vmul.f32 %v4711, %v5287
    %v5416 = vmul.f32 %v4712, %v5288
    %v5417 = vmul.f32 %v4713, %v5289
    %v5418 = vmul.f32 %v4714, %v5290
    %v5419 = vmul.f32 %v4715, %v5291
    %v5420 = vmul.f32 %v4716, %v5292
    %v5421 = vmul.f32 %v4717, %v5293
    %v5422 = vmul.f32 %v4718, %v5294
    %v5423 = vmul.f32 %v4719, %v5295
    %v5424 = vmul.f32 %v4720, %v5296
    %v5425 = vmul.f32 %v4721, %v5297
    %v5426 = vmul.f32 %v4722, %v5298
    %v5427 = vsel %vm5299, %v4659, %v5363
    %v5428 = vsel %vm5300, %v4660, %v5364
    %v5429 = vsel %vm5301, %v4661, %v5365
    %v5430 = vsel %vm5302, %v4662, %v5366
    %v5431 = vsel %vm5303, %v4663, %v5367
    %v5432 = vsel %vm5304, %v4664, %v5368
    %v5433 = vsel %vm5305, %v4665, %v5369
    %v5434 = vsel %vm5306, %v4666, %v5370
    %v5435 = vsel %vm5307, %v4667, %v5371
    %v5436 = vsel %vm5308, %v4668, %v5372
    %v5437 = vsel %vm5309, %v4669, %v5373
    %v5438 = vsel %vm5310, %v4670, %v5374
    %v5439 = vsel %vm5311, %v4671, %v5375
    %v5440 = vsel %vm5312, %v4672, %v5376
    %v5441 = vsel %vm5313, %v4673, %v5377
    %v5442 = vsel %vm5314, %v4674, %v5378
    %v5443 = vsel %vm5315, %v4675, %v5379
    %v5444 = vsel %vm5316, %v4676, %v5380
    %v5445 = vsel %vm5317, %v4677, %v5381
    %v5446 = vsel %vm5318, %v4678, %v5382
    %v5447 = vsel %vm5319, %v4679, %v5383
    %v5448 = vsel %vm5320, %v4680, %v5384
    %v5449 = vsel %vm5321, %v4681, %v5385
    %v5450 = vsel %vm5322, %v4682, %v5386
    %v5451 = vsel %vm5323, %v4683, %v5387
    %v5452 = vsel %vm5324, %v4684, %v5388
    %v5453 = vsel %vm5325, %v4685, %v5389
    %v5454 = vsel %vm5326, %v4686, %v5390
    %v5455 = vsel %vm5327, %v4687, %v5391
    %v5456 = vsel %vm5328, %v4688, %v5392
    %v5457 = vsel %vm5329, %v4689, %v5393
    %v5458 = vsel %vm5330, %v4690, %v5394
    %v5459 = vsel %vm5331, %v4691, %v5395
    %v5460 = vsel %vm5332, %v4692, %v5396
    %v5461 = vsel %vm5333, %v4693, %v5397
    %v5462 = vsel %vm5334, %v4694, %v5398
    %v5463 = vsel %vm5335, %v4695, %v5399
    %v5464 = vsel %vm5336, %v4696, %v5400
    %v5465 = vsel %vm5337, %v4697, %v5401
    %v5466 = vsel %vm5338, %v4698, %v5402
    %v5467 = vsel %vm5339, %v4699, %v5403
    %v5468 = vsel %vm5340, %v4700, %v5404
    %v5469 = vsel %vm5341, %v4701, %v5405
    %v5470 = vsel %vm5342, %v4702, %v5406
    %v5471 = vsel %vm5343, %v4703, %v5407
    %v5472 = vsel %vm5344, %v4704, %v5408
    %v5473 = vsel %vm5345, %v4705, %v5409
    %v5474 = vsel %vm5346, %v4706, %v5410
    %v5475 = vsel %vm5347, %v4707, %v5411
    %v5476 = vsel %vm5348, %v4708, %v5412
    %v5477 = vsel %vm5349, %v4709, %v5413
    %v5478 = vsel %vm5350, %v4710, %v5414
    %v5479 = vsel %vm5351, %v4711, %v5415
    %v5480 = vsel %vm5352, %v4712, %v5416
    %v5481 = vsel %vm5353, %v4713, %v5417
    %v5482 = vsel %vm5354, %v4714, %v5418
    %v5483 = vsel %vm5355, %v4715, %v5419
    %v5484 = vsel %vm5356, %v4716, %v5420
    %v5485 = vsel %vm5357, %v4717, %v5421
    %v5486 = vsel %vm5358, %v4718, %v5422
    %v5487 = vsel %vm5359, %v4719, %v5423
    %v5488 = vsel %vm5360, %v4720, %v5424
    %v5489 = vsel %vm5361, %v4721, %v5425
    %v5490 = vsel %vm5362, %v4722, %v5426
    %v5491 = vpack.c.bf16 %v5429, %v5427
    %v5492 = vpack.c.bf16 %v5430, %v5428
    %v5493 = vpack.c.bf16 %v5433, %v5431
    %v5494 = vpack.c.bf16 %v5434, %v5432
    %v5495 = vpack.c.bf16 %v5437, %v5435
    %v5496 = vpack.c.bf16 %v5438, %v5436
    %v5497 = vpack.c.bf16 %v5441, %v5439
    %v5498 = vpack.c.bf16 %v5442, %v5440
    %v5499 = vpack.c.bf16 %v5445, %v5443
    %v5500 = vpack.c.bf16 %v5446, %v5444
    %v5501 = vpack.c.bf16 %v5449, %v5447
    %v5502 = vpack.c.bf16 %v5450, %v5448
    %v5503 = vpack.c.bf16 %v5453, %v5451
    %v5504 = vpack.c.bf16 %v5454, %v5452
    %v5505 = vpack.c.bf16 %v5457, %v5455
    %v5506 = vpack.c.bf16 %v5458, %v5456
    %v5507 = vpack.c.bf16 %v5461, %v5459
    %v5508 = vpack.c.bf16 %v5462, %v5460
    %v5509 = vpack.c.bf16 %v5465, %v5463
    %v5510 = vpack.c.bf16 %v5466, %v5464
    %v5511 = vpack.c.bf16 %v5469, %v5467
    %v5512 = vpack.c.bf16 %v5470, %v5468
    %v5513 = vpack.c.bf16 %v5473, %v5471
    %v5514 = vpack.c.bf16 %v5474, %v5472
    %v5515 = vpack.c.bf16 %v5477, %v5475
    %v5516 = vpack.c.bf16 %v5478, %v5476
    %v5517 = vpack.c.bf16 %v5481, %v5479
    %v5518 = vpack.c.bf16 %v5482, %v5480
    %v5519 = vpack.c.bf16 %v5485, %v5483
    %v5520 = vpack.c.bf16 %v5486, %v5484
    %v5521 = vpack.c.bf16 %v5489, %v5487
    %v5522 = vpack.c.bf16 %v5490, %v5488
    %v5523 = vld [vmem:[#allocation13] sm:$0xff]
    %v5524 = vld [vmem:[#allocation13 + $0x8] sm:$0xff]
    %v5525 = vld [vmem:[#allocation13 + $0x10] sm:$0xff]
    %v5526 = vld [vmem:[#allocation13 + $0x18] sm:$0xff]
    %v5527 = vld [vmem:[#allocation13 + $0x20] sm:$0xff]
    %v5528 = vld [vmem:[#allocation13 + $0x28] sm:$0xff]
    %v5529 = vld [vmem:[#allocation13 + $0x30] sm:$0xff]
    %v5530 = vld [vmem:[#allocation13 + $0x38] sm:$0xff]
    %v5531 = vld [vmem:[#allocation13 + $0x40] sm:$0xff]
    %v5532 = vld [vmem:[#allocation13 + $0x48] sm:$0xff]
    %v5533 = vld [vmem:[#allocation13 + $0x50] sm:$0xff]
    %v5534 = vld [vmem:[#allocation13 + $0x58] sm:$0xff]
    %v5535 = vld [vmem:[#allocation13 + $0x60] sm:$0xff]
    %v5536 = vld [vmem:[#allocation13 + $0x68] sm:$0xff]
    %v5537 = vld [vmem:[#allocation13 + $0x70] sm:$0xff]
    %v5538 = vld [vmem:[#allocation13 + $0x78] sm:$0xff]
    %v5539 = vld [vmem:[#allocation13 + $0x80] sm:$0xff]
    %v5540 = vld [vmem:[#allocation13 + $0x88] sm:$0xff]
    %v5541 = vld [vmem:[#allocation13 + $0x90] sm:$0xff]
    %v5542 = vld [vmem:[#allocation13 + $0x98] sm:$0xff]
    %v5543 = vld [vmem:[#allocation13 + $0xa0] sm:$0xff]
    %v5544 = vld [vmem:[#allocation13 + $0xa8] sm:$0xff]
    %v5545 = vld [vmem:[#allocation13 + $0xb0] sm:$0xff]
    %v5546 = vld [vmem:[#allocation13 + $0xb8] sm:$0xff]
    %v5547 = vld [vmem:[#allocation13 + $0xc0] sm:$0xff]
    %v5548 = vld [vmem:[#allocation13 + $0xc8] sm:$0xff]
    %v5549 = vld [vmem:[#allocation13 + $0xd0] sm:$0xff]
    %v5550 = vld [vmem:[#allocation13 + $0xd8] sm:$0xff]
    %v5551 = vld [vmem:[#allocation13 + $0xe0] sm:$0xff]
    %v5552 = vld [vmem:[#allocation13 + $0xe8] sm:$0xff]
    %v5553 = vld [vmem:[#allocation13 + $0xf0] sm:$0xff]
    %v5554 = vld [vmem:[#allocation13 + $0xf8] sm:$0xff]
    %v5587 = vunpack.c.l.b16 %v5523
    %v5588 = vunpack.c.h.b16 %v5523
    %v5589 = vunpack.c.l.b16 %v5524
    %v5590 = vunpack.c.h.b16 %v5524
    %v5591 = vunpack.c.l.b16 %v5525
    %v5592 = vunpack.c.h.b16 %v5525
    %v5593 = vunpack.c.l.b16 %v5526
    %v5594 = vunpack.c.h.b16 %v5526
    %v5595 = vunpack.c.l.b16 %v5527
    %v5596 = vunpack.c.h.b16 %v5527
    %v5597 = vunpack.c.l.b16 %v5528
    %v5598 = vunpack.c.h.b16 %v5528
    %v5599 = vunpack.c.l.b16 %v5529
    %v5600 = vunpack.c.h.b16 %v5529
    %v5601 = vunpack.c.l.b16 %v5530
    %v5602 = vunpack.c.h.b16 %v5530
    %v5603 = vunpack.c.l.b16 %v5531
    %v5604 = vunpack.c.h.b16 %v5531
    %v5605 = vunpack.c.l.b16 %v5532
    %v5606 = vunpack.c.h.b16 %v5532
    %v5607 = vunpack.c.l.b16 %v5533
    %v5608 = vunpack.c.h.b16 %v5533
    %v5609 = vunpack.c.l.b16 %v5534
    %v5610 = vunpack.c.h.b16 %v5534
    %v5611 = vunpack.c.l.b16 %v5535
    %v5612 = vunpack.c.h.b16 %v5535
    %v5613 = vunpack.c.l.b16 %v5536
    %v5614 = vunpack.c.h.b16 %v5536
    %v5615 = vunpack.c.l.b16 %v5537
    %v5616 = vunpack.c.h.b16 %v5537
    %v5617 = vunpack.c.l.b16 %v5538
    %v5618 = vunpack.c.h.b16 %v5538
    %v5619 = vunpack.c.l.b16 %v5539
    %v5620 = vunpack.c.h.b16 %v5539
    %v5621 = vunpack.c.l.b16 %v5540
    %v5622 = vunpack.c.h.b16 %v5540
    %v5623 = vunpack.c.l.b16 %v5541
    %v5624 = vunpack.c.h.b16 %v5541
    %v5625 = vunpack.c.l.b16 %v5542
    %v5626 = vunpack.c.h.b16 %v5542
    %v5627 = vunpack.c.l.b16 %v5543
    %v5628 = vunpack.c.h.b16 %v5543
    %v5629 = vunpack.c.l.b16 %v5544
    %v5630 = vunpack.c.h.b16 %v5544
    %v5631 = vunpack.c.l.b16 %v5545
    %v5632 = vunpack.c.h.b16 %v5545
    %v5633 = vunpack.c.l.b16 %v5546
    %v5634 = vunpack.c.h.b16 %v5546
    %v5635 = vunpack.c.l.b16 %v5547
    %v5636 = vunpack.c.h.b16 %v5547
    %v5637 = vunpack.c.l.b16 %v5548
    %v5638 = vunpack.c.h.b16 %v5548
    %v5639 = vunpack.c.l.b16 %v5549
    %v5640 = vunpack.c.h.b16 %v5549
    %v5641 = vunpack.c.l.b16 %v5550
    %v5642 = vunpack.c.h.b16 %v5550
    %v5643 = vunpack.c.l.b16 %v5551
    %v5644 = vunpack.c.h.b16 %v5551
    %v5645 = vunpack.c.l.b16 %v5552
    %v5646 = vunpack.c.h.b16 %v5552
    %v5647 = vunpack.c.l.b16 %v5553
    %v5648 = vunpack.c.h.b16 %v5553
    %v5649 = vunpack.c.l.b16 %v5554
    %v5650 = vunpack.c.h.b16 %v5554
    %v5651 = vpack.c.b16 %v5589, %v5587
    %v5652 = vpack.c.b16 %v5590, %v5588
    %v5653 = vpack.c.b16 %v5593, %v5591
    %v5654 = vpack.c.b16 %v5594, %v5592
    %v5655 = vpack.c.b16 %v5597, %v5595
    %v5656 = vpack.c.b16 %v5598, %v5596
    %v5657 = vpack.c.b16 %v5601, %v5599
    %v5658 = vpack.c.b16 %v5602, %v5600
    %v5659 = vpack.c.b16 %v5605, %v5603
    %v5660 = vpack.c.b16 %v5606, %v5604
    %v5661 = vpack.c.b16 %v5609, %v5607
    %v5662 = vpack.c.b16 %v5610, %v5608
    %v5663 = vpack.c.b16 %v5613, %v5611
    %v5664 = vpack.c.b16 %v5614, %v5612
    %v5665 = vpack.c.b16 %v5617, %v5615
    %v5666 = vpack.c.b16 %v5618, %v5616
    %v5667 = vpack.c.b16 %v5621, %v5619
    %v5668 = vpack.c.b16 %v5622, %v5620
    %v5669 = vpack.c.b16 %v5625, %v5623
    %v5670 = vpack.c.b16 %v5626, %v5624
    %v5671 = vpack.c.b16 %v5629, %v5627
    %v5672 = vpack.c.b16 %v5630, %v5628
    %v5673 = vpack.c.b16 %v5633, %v5631
    %v5674 = vpack.c.b16 %v5634, %v5632
    %v5675 = vpack.c.b16 %v5637, %v5635
    %v5676 = vpack.c.b16 %v5638, %v5636
    %v5677 = vpack.c.b16 %v5641, %v5639
    %v5678 = vpack.c.b16 %v5642, %v5640
    %v5679 = vpack.c.b16 %v5645, %v5643
    %v5680 = vpack.c.b16 %v5646, %v5644
    %v5681 = vpack.c.b16 %v5649, %v5647
    %v5682 = vpack.c.b16 %v5650, %v5648
    %5715 = vmatprep.subr.bf16.mxu0 %v5652
    %5716 = vmatpush1.bf16.msra.mxu0 %v5651
    %5717 = vmatprep.subr.bf16.mxu0 %v5654
    %5718 = vmatpush1.bf16.msra.mxu0 %v5653
    %5719 = vmatprep.subr.bf16.mxu0 %v5656
    %5720 = vmatpush1.bf16.msra.mxu0 %v5655
    %5721 = vmatprep.subr.bf16.mxu0 %v5658
    %5722 = vmatpush1.bf16.msra.mxu0 %v5657
    %5723 = vmatprep.subr.bf16.mxu0 %v5660
    %5724 = vmatpush1.bf16.msra.mxu0 %v5659
    %5725 = vmatprep.subr.bf16.mxu0 %v5662
    %5726 = vmatpush1.bf16.msra.mxu0 %v5661
    %5727 = vmatprep.subr.bf16.mxu0 %v5664
    %5728 = vmatpush1.bf16.msra.mxu0 %v5663
    %5729 = vmatprep.subr.bf16.mxu0 %v5666
    %5730 = vmatpush1.bf16.msra.mxu0 %v5665
    %5731 = vmatprep.subr.bf16.mxu0 %v5668
    %5732 = vmatpush1.bf16.msra.mxu0 %v5667
    %5733 = vmatprep.subr.bf16.mxu0 %v5670
    %5734 = vmatpush1.bf16.msra.mxu0 %v5669
    %5735 = vmatprep.subr.bf16.mxu0 %v5672
    %5736 = vmatpush1.bf16.msra.mxu0 %v5671
    %5737 = vmatprep.subr.bf16.mxu0 %v5674
    %5738 = vmatpush1.bf16.msra.mxu0 %v5673
    %5739 = vmatprep.subr.bf16.mxu0 %v5676
    %5740 = vmatpush1.bf16.msra.mxu0 %v5675
    %5741 = vmatprep.subr.bf16.mxu0 %v5678
    %5742 = vmatpush1.bf16.msra.mxu0 %v5677
    %5743 = vmatprep.subr.bf16.mxu0 %v5680
    %5744 = vmatpush1.bf16.msra.mxu0 %v5679
    %5745 = vmatprep.subr.bf16.mxu0 %v5682
    %5746 = vmatpush1.bf16.msra.mxu0 %v5681
    %5747 = vmatprep.mubr.bf16.mxu0 %v5492
    %5748 = vmatmul.mubr.bf16.gmra.mrb[0].mxu0 %v5491
    %v5749 = vpop.f32.mrb[0].mxu0
    %v5750 = vadd.f32 0.0, %v5749
    %v5751 = vpop.f32.mrb[0].mxu0
    %v5752 = vadd.f32 0.0, %v5751
    %v5753 = vpop.f32.mrb[0].mxu0
    %v5754 = vadd.f32 0.0, %v5753
    %v5755 = vpop.f32.mrb[0].mxu0
    %v5756 = vadd.f32 0.0, %v5755
    %5757 = vmatprep.mubr.bf16.mxu0 %v5494
    %5758 = vmatmul.mubr.bf16.gmra.mrb[0].mxu0 %v5493
    %v5759 = vpop.f32.mrb[0].mxu0
    %v5760 = vadd.f32 0.0, %v5759
    %v5761 = vpop.f32.mrb[0].mxu0
    %v5762 = vadd.f32 0.0, %v5761
    %v5763 = vpop.f32.mrb[0].mxu0
    %v5764 = vadd.f32 0.0, %v5763
    %v5765 = vpop.f32.mrb[0].mxu0
    %v5766 = vadd.f32 0.0, %v5765
    %5767 = vmatprep.mubr.bf16.mxu0 %v5496
    %5768 = vmatmul.mubr.bf16.gmra.mrb[0].mxu0 %v5495
    %v5769 = vpop.f32.mrb[0].mxu0
    %v5770 = vadd.f32 0.0, %v5769
    %v5771 = vpop.f32.mrb[0].mxu0
    %v5772 = vadd.f32 0.0, %v5771
    %v5773 = vpop.f32.mrb[0].mxu0
    %v5774 = vadd.f32 0.0, %v5773
    %v5775 = vpop.f32.mrb[0].mxu0
    %v5776 = vadd.f32 0.0, %v5775
    %5777 = vmatprep.mubr.bf16.mxu0 %v5498
    %5778 = vmatmul.mubr.bf16.gmra.mrb[0].mxu0 %v5497
    %v5779 = vpop.f32.mrb[0].mxu0
    %v5780 = vadd.f32 0.0, %v5779
    %v5781 = vpop.f32.mrb[0].mxu0
    %v5782 = vadd.f32 0.0, %v5781
    %v5783 = vpop.f32.mrb[0].mxu0
    %v5784 = vadd.f32 0.0, %v5783
    %v5785 = vpop.f32.mrb[0].mxu0
    %v5786 = vadd.f32 0.0, %v5785
    %5787 = vmatprep.mubr.bf16.mxu0 %v5500
    %5788 = vmatmul.mubr.bf16.gmra.mrb[0].mxu0 %v5499
    %v5789 = vpop.f32.mrb[0].mxu0
    %v5790 = vadd.f32 0.0, %v5789
    %v5791 = vpop.f32.mrb[0].mxu0
    %v5792 = vadd.f32 0.0, %v5791
    %v5793 = vpop.f32.mrb[0].mxu0
    %v5794 = vadd.f32 0.0, %v5793
    %v5795 = vpop.f32.mrb[0].mxu0
    %v5796 = vadd.f32 0.0, %v5795
    %5797 = vmatprep.mubr.bf16.mxu0 %v5502
    %5798 = vmatmul.mubr.bf16.gmra.mrb[0].mxu0 %v5501
    %v5799 = vpop.f32.mrb[0].mxu0
    %v5800 = vadd.f32 0.0, %v5799
    %v5801 = vpop.f32.mrb[0].mxu0
    %v5802 = vadd.f32 0.0, %v5801
    %v5803 = vpop.f32.mrb[0].mxu0
    %v5804 = vadd.f32 0.0, %v5803
    %v5805 = vpop.f32.mrb[0].mxu0
    %v5806 = vadd.f32 0.0, %v5805
    %5807 = vmatprep.mubr.bf16.mxu0 %v5504
    %5808 = vmatmul.mubr.bf16.gmra.mrb[0].mxu0 %v5503
    %v5809 = vpop.f32.mrb[0].mxu0
    %v5810 = vadd.f32 0.0, %v5809
    %v5811 = vpop.f32.mrb[0].mxu0
    %v5812 = vadd.f32 0.0, %v5811
    %v5813 = vpop.f32.mrb[0].mxu0
    %v5814 = vadd.f32 0.0, %v5813
    %v5815 = vpop.f32.mrb[0].mxu0
    %v5816 = vadd.f32 0.0, %v5815
    %5817 = vmatprep.mubr.bf16.mxu0 %v5506
    %5818 = vmatmul.mubr.bf16.gmra.mrb[0].mxu0 %v5505
    %v5819 = vpop.f32.mrb[0].mxu0
    %v5820 = vadd.f32 0.0, %v5819
    %v5821 = vpop.f32.mrb[0].mxu0
    %v5822 = vadd.f32 0.0, %v5821
    %v5823 = vpop.f32.mrb[0].mxu0
    %v5824 = vadd.f32 0.0, %v5823
    %v5825 = vpop.f32.mrb[0].mxu0
    %v5826 = vadd.f32 0.0, %v5825
    %5827 = vmatprep.mubr.bf16.mxu0 %v5508
    %5828 = vmatmul.mubr.bf16.gmra.mrb[0].mxu0 %v5507
    %v5829 = vpop.f32.mrb[0].mxu0
    %v5830 = vadd.f32 0.0, %v5829
    %v5831 = vpop.f32.mrb[0].mxu0
    %v5832 = vadd.f32 0.0, %v5831
    %v5833 = vpop.f32.mrb[0].mxu0
    %v5834 = vadd.f32 0.0, %v5833
    %v5835 = vpop.f32.mrb[0].mxu0
    %v5836 = vadd.f32 0.0, %v5835
    %5837 = vmatprep.mubr.bf16.mxu0 %v5510
    %5838 = vmatmul.mubr.bf16.gmra.mrb[0].mxu0 %v5509
    %v5839 = vpop.f32.mrb[0].mxu0
    %v5840 = vadd.f32 0.0, %v5839
    %v5841 = vpop.f32.mrb[0].mxu0
    %v5842 = vadd.f32 0.0, %v5841
    %v5843 = vpop.f32.mrb[0].mxu0
    %v5844 = vadd.f32 0.0, %v5843
    %v5845 = vpop.f32.mrb[0].mxu0
    %v5846 = vadd.f32 0.0, %v5845
    %5847 = vmatprep.mubr.bf16.mxu0 %v5512
    %5848 = vmatmul.mubr.bf16.gmra.mrb[0].mxu0 %v5511
    %v5849 = vpop.f32.mrb[0].mxu0
    %v5850 = vadd.f32 0.0, %v5849
    %v5851 = vpop.f32.mrb[0].mxu0
    %v5852 = vadd.f32 0.0, %v5851
    %v5853 = vpop.f32.mrb[0].mxu0
    %v5854 = vadd.f32 0.0, %v5853
    %v5855 = vpop.f32.mrb[0].mxu0
    %v5856 = vadd.f32 0.0, %v5855
    %5857 = vmatprep.mubr.bf16.mxu0 %v5514
    %5858 = vmatmul.mubr.bf16.gmra.mrb[0].mxu0 %v5513
    %v5859 = vpop.f32.mrb[0].mxu0
    %v5860 = vadd.f32 0.0, %v5859
    %v5861 = vpop.f32.mrb[0].mxu0
    %v5862 = vadd.f32 0.0, %v5861
    %v5863 = vpop.f32.mrb[0].mxu0
    %v5864 = vadd.f32 0.0, %v5863
    %v5865 = vpop.f32.mrb[0].mxu0
    %v5866 = vadd.f32 0.0, %v5865
    %5867 = vmatprep.mubr.bf16.mxu0 %v5516
    %5868 = vmatmul.mubr.bf16.gmra.mrb[0].mxu0 %v5515
    %v5869 = vpop.f32.mrb[0].mxu0
    %v5870 = vadd.f32 0.0, %v5869
    %v5871 = vpop.f32.mrb[0].mxu0
    %v5872 = vadd.f32 0.0, %v5871
    %v5873 = vpop.f32.mrb[0].mxu0
    %v5874 = vadd.f32 0.0, %v5873
    %v5875 = vpop.f32.mrb[0].mxu0
    %v5876 = vadd.f32 0.0, %v5875
    %5877 = vmatprep.mubr.bf16.mxu0 %v5518
    %5878 = vmatmul.mubr.bf16.gmra.mrb[0].mxu0 %v5517
    %v5879 = vpop.f32.mrb[0].mxu0
    %v5880 = vadd.f32 0.0, %v5879
    %v5881 = vpop.f32.mrb[0].mxu0
    %v5882 = vadd.f32 0.0, %v5881
    %v5883 = vpop.f32.mrb[0].mxu0
    %v5884 = vadd.f32 0.0, %v5883
    %v5885 = vpop.f32.mrb[0].mxu0
    %v5886 = vadd.f32 0.0, %v5885
    %5887 = vmatprep.mubr.bf16.mxu0 %v5520
    %5888 = vmatmul.mubr.bf16.gmra.mrb[0].mxu0 %v5519
    %v5889 = vpop.f32.mrb[0].mxu0
    %v5890 = vadd.f32 0.0, %v5889
    %v5891 = vpop.f32.mrb[0].mxu0
    %v5892 = vadd.f32 0.0, %v5891
    %v5893 = vpop.f32.mrb[0].mxu0
    %v5894 = vadd.f32 0.0, %v5893
    %v5895 = vpop.f32.mrb[0].mxu0
    %v5896 = vadd.f32 0.0, %v5895
    %5897 = vmatprep.mubr.bf16.mxu0 %v5522
    %5898 = vmatmul.mubr.bf16.gmra.mrb[0].mxu0 %v5521
    %v5899 = vpop.f32.mrb[0].mxu0
    %v5900 = vadd.f32 0.0, %v5899
    %v5901 = vpop.f32.mrb[0].mxu0
    %v5902 = vadd.f32 0.0, %v5901
    %v5903 = vpop.f32.mrb[0].mxu0
    %v5904 = vadd.f32 0.0, %v5903
    %v5905 = vpop.f32.mrb[0].mxu0
    %v5906 = vadd.f32 0.0, %v5905
    %5907 = vdwg.mxu0
    %v5908 = vadd.f32 %v5750, %v5754
    %v5909 = vadd.f32 %v5908, %v5760
    %v5910 = vadd.f32 %v5909, %v5764
    %v5911 = vadd.f32 %v5910, %v5770
    %v5912 = vadd.f32 %v5911, %v5774
    %v5913 = vadd.f32 %v5912, %v5780
    %v5914 = vadd.f32 %v5913, %v5784
    %v5915 = vadd.f32 %v5914, %v5790
    %v5916 = vadd.f32 %v5915, %v5794
    %v5917 = vadd.f32 %v5916, %v5800
    %v5918 = vadd.f32 %v5917, %v5804
    %v5919 = vadd.f32 %v5918, %v5810
    %v5920 = vadd.f32 %v5919, %v5814
    %v5921 = vadd.f32 %v5920, %v5820
    %v5922 = vadd.f32 %v5921, %v5824
    %v5923 = vadd.f32 %v5922, %v5830
    %v5924 = vadd.f32 %v5923, %v5834
    %v5925 = vadd.f32 %v5924, %v5840
    %v5926 = vadd.f32 %v5925, %v5844
    %v5927 = vadd.f32 %v5926, %v5850
    %v5928 = vadd.f32 %v5927, %v5854
    %v5929 = vadd.f32 %v5928, %v5860
    %v5930 = vadd.f32 %v5929, %v5864
    %v5931 = vadd.f32 %v5930, %v5870
    %v5932 = vadd.f32 %v5931, %v5874
    %v5933 = vadd.f32 %v5932, %v5880
    %v5934 = vadd.f32 %v5933, %v5884
    %v5935 = vadd.f32 %v5934, %v5890
    %v5936 = vadd.f32 %v5935, %v5894
    %v5937 = vadd.f32 %v5936, %v5900
    %v5938 = vadd.f32 %v5937, %v5904
    %v5939 = vrot.slane %v5938, 4
    %v5940 = vadd.f32 %v5938, %v5939
    %v5941 = vrot.slane %v5940, 2
    %v5942 = vadd.f32 %v5940, %v5941
    %v5943 = vrot.slane %v5942, 1
    %v5944 = vadd.f32 %v5942, %v5943
    %v5945 = vadd.f32 %v5752, %v5756
    %v5946 = vadd.f32 %v5945, %v5762
    %v5947 = vadd.f32 %v5946, %v5766
    %v5948 = vadd.f32 %v5947, %v5772
    %v5949 = vadd.f32 %v5948, %v5776
    %v5950 = vadd.f32 %v5949, %v5782
    %v5951 = vadd.f32 %v5950, %v5786
    %v5952 = vadd.f32 %v5951, %v5792
    %v5953 = vadd.f32 %v5952, %v5796
    %v5954 = vadd.f32 %v5953, %v5802
    %v5955 = vadd.f32 %v5954, %v5806
    %v5956 = vadd.f32 %v5955, %v5812
    %v5957 = vadd.f32 %v5956, %v5816
    %v5958 = vadd.f32 %v5957, %v5822
    %v5959 = vadd.f32 %v5958, %v5826
    %v5960 = vadd.f32 %v5959, %v5832
    %v5961 = vadd.f32 %v5960, %v5836
    %v5962 = vadd.f32 %v5961, %v5842
    %v5963 = vadd.f32 %v5962, %v5846
    %v5964 = vadd.f32 %v5963, %v5852
    %v5965 = vadd.f32 %v5964, %v5856
    %v5966 = vadd.f32 %v5965, %v5862
    %v5967 = vadd.f32 %v5966, %v5866
    %v5968 = vadd.f32 %v5967, %v5872
    %v5969 = vadd.f32 %v5968, %v5876
    %v5970 = vadd.f32 %v5969, %v5882
    %v5971 = vadd.f32 %v5970, %v5886
    %v5972 = vadd.f32 %v5971, %v5892
    %v5973 = vadd.f32 %v5972, %v5896
    %v5974 = vadd.f32 %v5973, %v5902
    %v5975 = vadd.f32 %v5974, %v5906
    %v5976 = vrot.slane %v5975, 4
    %v5977 = vadd.f32 %v5975, %v5976
    %v5978 = vrot.slane %v5977, 2
    %v5979 = vadd.f32 %v5977, %v5978
    %v5980 = vrot.slane %v5979, 1
    %v5981 = vadd.f32 %v5979, %v5980
    %v5982 = vmul.f32 %v5944, 0.00390625
    %v5983 = vmul.f32 %v5981, 0.00390625
    %v5984 = vmul.f32 %v5750, %v5750
    %v5985 = vmul.f32 %v5752, %v5752
    %v5986 = vmul.f32 %v5754, %v5754
    %v5987 = vmul.f32 %v5756, %v5756
    %v5988 = vmul.f32 %v5760, %v5760
    %v5989 = vmul.f32 %v5762, %v5762
    %v5990 = vmul.f32 %v5764, %v5764
    %v5991 = vmul.f32 %v5766, %v5766
    %v5992 = vmul.f32 %v5770, %v5770
    %v5993 = vmul.f32 %v5772, %v5772
    %v5994 = vmul.f32 %v5774, %v5774
    %v5995 = vmul.f32 %v5776, %v5776
    %v5996 = vmul.f32 %v5780, %v5780
    %v5997 = vmul.f32 %v5782, %v5782
    %v5998 = vmul.f32 %v5784, %v5784
    %v5999 = vmul.f32 %v5786, %v5786
    %v6000 = vmul.f32 %v5790, %v5790
    %v6001 = vmul.f32 %v5792, %v5792
    %v6002 = vmul.f32 %v5794, %v5794
    %v6003 = vmul.f32 %v5796, %v5796
    %v6004 = vmul.f32 %v5800, %v5800
    %v6005 = vmul.f32 %v5802, %v5802
    %v6006 = vmul.f32 %v5804, %v5804
    %v6007 = vmul.f32 %v5806, %v5806
    %v6008 = vmul.f32 %v5810, %v5810
    %v6009 = vmul.f32 %v5812, %v5812
    %v6010 = vmul.f32 %v5814, %v5814
    %v6011 = vmul.f32 %v5816, %v5816
    %v6012 = vmul.f32 %v5820, %v5820
    %v6013 = vmul.f32 %v5822, %v5822
    %v6014 = vmul.f32 %v5824, %v5824
    %v6015 = vmul.f32 %v5826, %v5826
    %v6016 = vmul.f32 %v5830, %v5830
    %v6017 = vmul.f32 %v5832, %v5832
    %v6018 = vmul.f32 %v5834, %v5834
    %v6019 = vmul.f32 %v5836, %v5836
    %v6020 = vmul.f32 %v5840, %v5840
    %v6021 = vmul.f32 %v5842, %v5842
    %v6022 = vmul.f32 %v5844, %v5844
    %v6023 = vmul.f32 %v5846, %v5846
    %v6024 = vmul.f32 %v5850, %v5850
    %v6025 = vmul.f32 %v5852, %v5852
    %v6026 = vmul.f32 %v5854, %v5854
    %v6027 = vmul.f32 %v5856, %v5856
    %v6028 = vmul.f32 %v5860, %v5860
    %v6029 = vmul.f32 %v5862, %v5862
    %v6030 = vmul.f32 %v5864, %v5864
    %v6031 = vmul.f32 %v5866, %v5866
    %v6032 = vmul.f32 %v5870, %v5870
    %v6033 = vmul.f32 %v5872, %v5872
    %v6034 = vmul.f32 %v5874, %v5874
    %v6035 = vmul.f32 %v5876, %v5876
    %v6036 = vmul.f32 %v5880, %v5880
    %v6037 = vmul.f32 %v5882, %v5882
    %v6038 = vmul.f32 %v5884, %v5884
    %v6039 = vmul.f32 %v5886, %v5886
    %v6040 = vmul.f32 %v5890, %v5890
    %v6041 = vmul.f32 %v5892, %v5892
    %v6042 = vmul.f32 %v5894, %v5894
    %v6043 = vmul.f32 %v5896, %v5896
    %v6044 = vmul.f32 %v5900, %v5900
    %v6045 = vmul.f32 %v5902, %v5902
    %v6046 = vmul.f32 %v5904, %v5904
    %v6047 = vmul.f32 %v5906, %v5906
    %v6048 = vadd.f32 %v5984, %v5986
    %v6049 = vadd.f32 %v6048, %v5988
    %v6050 = vadd.f32 %v6049, %v5990
    %v6051 = vadd.f32 %v6050, %v5992
    %v6052 = vadd.f32 %v6051, %v5994
    %v6053 = vadd.f32 %v6052, %v5996
    %v6054 = vadd.f32 %v6053, %v5998
    %v6055 = vadd.f32 %v6054, %v6000
    %v6056 = vadd.f32 %v6055, %v6002
    %v6057 = vadd.f32 %v6056, %v6004
    %v6058 = vadd.f32 %v6057, %v6006
    %v6059 = vadd.f32 %v6058, %v6008
    %v6060 = vadd.f32 %v6059, %v6010
    %v6061 = vadd.f32 %v6060, %v6012
    %v6062 = vadd.f32 %v6061, %v6014
    %v6063 = vadd.f32 %v6062, %v6016
    %v6064 = vadd.f32 %v6063, %v6018
    %v6065 = vadd.f32 %v6064, %v6020
    %v6066 = vadd.f32 %v6065, %v6022
    %v6067 = vadd.f32 %v6066, %v6024
    %v6068 = vadd.f32 %v6067, %v6026
    %v6069 = vadd.f32 %v6068, %v6028
    %v6070 = vadd.f32 %v6069, %v6030
    %v6071 = vadd.f32 %v6070, %v6032
    %v6072 = vadd.f32 %v6071, %v6034
    %v6073 = vadd.f32 %v6072, %v6036
    %v6074 = vadd.f32 %v6073, %v6038
    %v6075 = vadd.f32 %v6074, %v6040
    %v6076 = vadd.f32 %v6075, %v6042
    %v6077 = vadd.f32 %v6076, %v6044
    %v6078 = vadd.f32 %v6077, %v6046
    %v6079 = vrot.slane %v6078, 4
    %v6080 = vadd.f32 %v6078, %v6079
    %v6081 = vrot.slane %v6080, 2
    %v6082 = vadd.f32 %v6080, %v6081
    %v6083 = vrot.slane %v6082, 1
    %v6084 = vadd.f32 %v6082, %v6083
    %v6085 = vadd.f32 %v5985, %v5987
    %v6086 = vadd.f32 %v6085, %v5989
    %v6087 = vadd.f32 %v6086, %v5991
    %v6088 = vadd.f32 %v6087, %v5993
    %v6089 = vadd.f32 %v6088, %v5995
    %v6090 = vadd.f32 %v6089, %v5997
    %v6091 = vadd.f32 %v6090, %v5999
    %v6092 = vadd.f32 %v6091, %v6001
    %v6093 = vadd.f32 %v6092, %v6003
    %v6094 = vadd.f32 %v6093, %v6005
    %v6095 = vadd.f32 %v6094, %v6007
    %v6096 = vadd.f32 %v6095, %v6009
    %v6097 = vadd.f32 %v6096, %v6011
    %v6098 = vadd.f32 %v6097, %v6013
    %v6099 = vadd.f32 %v6098, %v6015
    %v6100 = vadd.f32 %v6099, %v6017
    %v6101 = vadd.f32 %v6100, %v6019
    %v6102 = vadd.f32 %v6101, %v6021
    %v6103 = vadd.f32 %v6102, %v6023
    %v6104 = vadd.f32 %v6103, %v6025
    %v6105 = vadd.f32 %v6104, %v6027
    %v6106 = vadd.f32 %v6105, %v6029
    %v6107 = vadd.f32 %v6106, %v6031
    %v6108 = vadd.f32 %v6107, %v6033
    %v6109 = vadd.f32 %v6108, %v6035
    %v6110 = vadd.f32 %v6109, %v6037
    %v6111 = vadd.f32 %v6110, %v6039
    %v6112 = vadd.f32 %v6111, %v6041
    %v6113 = vadd.f32 %v6112, %v6043
    %v6114 = vadd.f32 %v6113, %v6045
    %v6115 = vadd.f32 %v6114, %v6047
    %v6116 = vrot.slane %v6115, 4
    %v6117 = vadd.f32 %v6115, %v6116
    %v6118 = vrot.slane %v6117, 2
    %v6119 = vadd.f32 %v6117, %v6118
    %v6120 = vrot.slane %v6119, 1
    %v6121 = vadd.f32 %v6119, %v6120
    %v6122 = vmul.f32 %v6084, 0.00390625
    %v6123 = vmul.f32 %v6121, 0.00390625
    %v6124 = vmul.f32 %v5982, %v5982
    %v6125 = vmul.f32 %v5983, %v5983
    %v6126 = vsub.f32 %v6122, %v6124
    %v6127 = vsub.f32 %v6123, %v6125
    %v6128 = vadd.f32 %v6126, 1e-05
    %v6129 = vadd.f32 %v6127, 1e-05
    %v6130 = vrsqrt.pop %v6128
    %v6131 = vrsqrt.pop %v6129
    %v6132 = vld [vmem:[%s14] sm:$0x3]
    %v6134 = vlaneseq
    %v6135 = vshrl.u32 %v6134, 7
    %v6136 = vsub.s32 0, %v6135
    %v6137 = vrot.slane %v6132, %v6136
    %v6138 = vlaneseq
    %v6139 = vshrl.u32 %v6138, 7
    %v6140 = vsub.s32 1, %v6139
    %v6141 = vrot.slane %v6132, %v6140
    %v6144 = vmul.f32 %v6130, %v6137
    %v6145 = vmul.f32 %v6131, %v6141
    %v6146 = vld [vmem:[%s15] sm:$0x3]
    %v6147 = vmul.f32 %v5982, %v6144
    %v6148 = vmul.f32 %v5983, %v6145
    %v6151 = vcombine.low %v6147, %v6148
    %v6153 = vunpack.c.l.s4 1966171168
    %v6154 = vunpack.c.0.s8 %v6153
    %v6155 = vlaneseq
    %v6156 = vshrl.u32 %v6155, 7
    %v6157 = vsub.s32 %v6154, %v6156
    %v6158 = vrot.slane %v6151, %v6157
    %v6160 = vunpack.c.l.s4 1966171168
    %v6161 = vunpack.c.0.s8 %v6160
    %v6162 = vlaneseq
    %v6163 = vshrl.u32 %v6162, 7
    %v6164 = vsub.s32 %v6161, %v6163
    %v6165 = vrot.slane %v6158, %v6164
    %v6167 = vsub.f32 %v6146, %v6165
    %v6168 = vlaneseq
    %v6169 = vshrl.u32 %v6168, 7
    %v6170 = vsub.s32 0, %v6169
    %v6171 = vrot.slane %v6144, %v6170
    %v6172 = vlaneseq
    %v6173 = vshrl.u32 %v6172, 7
    %v6174 = vsub.s32 0, %v6173
    %v6175 = vrot.slane %v6145, %v6174
    %v6176 = vmul.f32 %v5750, %v6171
    %v6177 = vmul.f32 %v5752, %v6175
    %v6178 = vmul.f32 %v5754, %v6171
    %v6179 = vmul.f32 %v5756, %v6175
    %v6180 = vmul.f32 %v5760, %v6171
    %v6181 = vmul.f32 %v5762, %v6175
    %v6182 = vmul.f32 %v5764, %v6171
    %v6183 = vmul.f32 %v5766, %v6175
    %v6184 = vmul.f32 %v5770, %v6171
    %v6185 = vmul.f32 %v5772, %v6175
    %v6186 = vmul.f32 %v5774, %v6171
    %v6187 = vmul.f32 %v5776, %v6175
    %v6188 = vmul.f32 %v5780, %v6171
    %v6189 = vmul.f32 %v5782, %v6175
    %v6190 = vmul.f32 %v5784, %v6171
    %v6191 = vmul.f32 %v5786, %v6175
    %v6192 = vmul.f32 %v5790, %v6171
    %v6193 = vmul.f32 %v5792, %v6175
    %v6194 = vmul.f32 %v5794, %v6171
    %v6195 = vmul.f32 %v5796, %v6175
    %v6196 = vmul.f32 %v5800, %v6171
    %v6197 = vmul.f32 %v5802, %v6175
    %v6198 = vmul.f32 %v5804, %v6171
    %v6199 = vmul.f32 %v5806, %v6175
    %v6200 = vmul.f32 %v5810, %v6171
    %v6201 = vmul.f32 %v5812, %v6175
    %v6202 = vmul.f32 %v5814, %v6171
    %v6203 = vmul.f32 %v5816, %v6175
    %v6204 = vmul.f32 %v5820, %v6171
    %v6205 = vmul.f32 %v5822, %v6175
    %v6206 = vmul.f32 %v5824, %v6171
    %v6207 = vmul.f32 %v5826, %v6175
    %v6208 = vmul.f32 %v5830, %v6171
    %v6209 = vmul.f32 %v5832, %v6175
    %v6210 = vmul.f32 %v5834, %v6171
    %v6211 = vmul.f32 %v5836, %v6175
    %v6212 = vmul.f32 %v5840, %v6171
    %v6213 = vmul.f32 %v5842, %v6175
    %v6214 = vmul.f32 %v5844, %v6171
    %v6215 = vmul.f32 %v5846, %v6175
    %v6216 = vmul.f32 %v5850, %v6171
    %v6217 = vmul.f32 %v5852, %v6175
    %v6218 = vmul.f32 %v5854, %v6171
    %v6219 = vmul.f32 %v5856, %v6175
    %v6220 = vmul.f32 %v5860, %v6171
    %v6221 = vmul.f32 %v5862, %v6175
    %v6222 = vmul.f32 %v5864, %v6171
    %v6223 = vmul.f32 %v5866, %v6175
    %v6224 = vmul.f32 %v5870, %v6171
    %v6225 = vmul.f32 %v5872, %v6175
    %v6226 = vmul.f32 %v5874, %v6171
    %v6227 = vmul.f32 %v5876, %v6175
    %v6228 = vmul.f32 %v5880, %v6171
    %v6229 = vmul.f32 %v5882, %v6175
    %v6230 = vmul.f32 %v5884, %v6171
    %v6231 = vmul.f32 %v5886, %v6175
    %v6232 = vmul.f32 %v5890, %v6171
    %v6233 = vmul.f32 %v5892, %v6175
    %v6234 = vmul.f32 %v5894, %v6171
    %v6235 = vmul.f32 %v5896, %v6175
    %v6236 = vmul.f32 %v5900, %v6171
    %v6237 = vmul.f32 %v5902, %v6175
    %v6238 = vmul.f32 %v5904, %v6171
    %v6239 = vmul.f32 %v5906, %v6175
    %v6241 = vlaneseq
    %v6242 = vshrl.u32 %v6241, 7
    %v6243 = vsub.s32 0, %v6242
    %v6244 = vrot.slane %v6167, %v6243
    %v6245 = vlaneseq
    %v6246 = vshrl.u32 %v6245, 7
    %v6247 = vsub.s32 1, %v6246
    %v6248 = vrot.slane %v6167, %v6247
    %v6251 = vadd.f32 %v6176, %v6244
    %v6252 = vadd.f32 %v6177, %v6248
    %v6253 = vadd.f32 %v6178, %v6244
    %v6254 = vadd.f32 %v6179, %v6248
    %v6255 = vadd.f32 %v6180, %v6244
    %v6256 = vadd.f32 %v6181, %v6248
    %v6257 = vadd.f32 %v6182, %v6244
    %v6258 = vadd.f32 %v6183, %v6248
    %v6259 = vadd.f32 %v6184, %v6244
    %v6260 = vadd.f32 %v6185, %v6248
    %v6261 = vadd.f32 %v6186, %v6244
    %v6262 = vadd.f32 %v6187, %v6248
    %v6263 = vadd.f32 %v6188, %v6244
    %v6264 = vadd.f32 %v6189, %v6248
    %v6265 = vadd.f32 %v6190, %v6244
    %v6266 = vadd.f32 %v6191, %v6248
    %v6267 = vadd.f32 %v6192, %v6244
    %v6268 = vadd.f32 %v6193, %v6248
    %v6269 = vadd.f32 %v6194, %v6244
    %v6270 = vadd.f32 %v6195, %v6248
    %v6271 = vadd.f32 %v6196, %v6244
    %v6272 = vadd.f32 %v6197, %v6248
    %v6273 = vadd.f32 %v6198, %v6244
    %v6274 = vadd.f32 %v6199, %v6248
    %v6275 = vadd.f32 %v6200, %v6244
    %v6276 = vadd.f32 %v6201, %v6248
    %v6277 = vadd.f32 %v6202, %v6244
    %v6278 = vadd.f32 %v6203, %v6248
    %v6279 = vadd.f32 %v6204, %v6244
    %v6280 = vadd.f32 %v6205, %v6248
    %v6281 = vadd.f32 %v6206, %v6244
    %v6282 = vadd.f32 %v6207, %v6248
    %v6283 = vadd.f32 %v6208, %v6244
    %v6284 = vadd.f32 %v6209, %v6248
    %v6285 = vadd.f32 %v6210, %v6244
    %v6286 = vadd.f32 %v6211, %v6248
    %v6287 = vadd.f32 %v6212, %v6244
    %v6288 = vadd.f32 %v6213, %v6248
    %v6289 = vadd.f32 %v6214, %v6244
    %v6290 = vadd.f32 %v6215, %v6248
    %v6291 = vadd.f32 %v6216, %v6244
    %v6292 = vadd.f32 %v6217, %v6248
    %v6293 = vadd.f32 %v6218, %v6244
    %v6294 = vadd.f32 %v6219, %v6248
    %v6295 = vadd.f32 %v6220, %v6244
    %v6296 = vadd.f32 %v6221, %v6248
    %v6297 = vadd.f32 %v6222, %v6244
    %v6298 = vadd.f32 %v6223, %v6248
    %v6299 = vadd.f32 %v6224, %v6244
    %v6300 = vadd.f32 %v6225, %v6248
    %v6301 = vadd.f32 %v6226, %v6244
    %v6302 = vadd.f32 %v6227, %v6248
    %v6303 = vadd.f32 %v6228, %v6244
    %v6304 = vadd.f32 %v6229, %v6248
    %v6305 = vadd.f32 %v6230, %v6244
    %v6306 = vadd.f32 %v6231, %v6248
    %v6307 = vadd.f32 %v6232, %v6244
    %v6308 = vadd.f32 %v6233, %v6248
    %v6309 = vadd.f32 %v6234, %v6244
    %v6310 = vadd.f32 %v6235, %v6248
    %v6311 = vadd.f32 %v6236, %v6244
    %v6312 = vadd.f32 %v6237, %v6248
    %v6313 = vadd.f32 %v6238, %v6244
    %v6314 = vadd.f32 %v6239, %v6248
    %v6315 = vmin.f32 %v6251, 20.0
    %v6316 = vmin.f32 %v6252, 20.0
    %v6317 = vmin.f32 %v6253, 20.0
    %v6318 = vmin.f32 %v6254, 20.0
    %v6319 = vmin.f32 %v6255, 20.0
    %v6320 = vmin.f32 %v6256, 20.0
    %v6321 = vmin.f32 %v6257, 20.0
    %v6322 = vmin.f32 %v6258, 20.0
    %v6323 = vmin.f32 %v6259, 20.0
    %v6324 = vmin.f32 %v6260, 20.0
    %v6325 = vmin.f32 %v6261, 20.0
    %v6326 = vmin.f32 %v6262, 20.0
    %v6327 = vmin.f32 %v6263, 20.0
    %v6328 = vmin.f32 %v6264, 20.0
    %v6329 = vmin.f32 %v6265, 20.0
    %v6330 = vmin.f32 %v6266, 20.0
    %v6331 = vmin.f32 %v6267, 20.0
    %v6332 = vmin.f32 %v6268, 20.0
    %v6333 = vmin.f32 %v6269, 20.0
    %v6334 = vmin.f32 %v6270, 20.0
    %v6335 = vmin.f32 %v6271, 20.0
    %v6336 = vmin.f32 %v6272, 20.0
    %v6337 = vmin.f32 %v6273, 20.0
    %v6338 = vmin.f32 %v6274, 20.0
    %v6339 = vmin.f32 %v6275, 20.0
    %v6340 = vmin.f32 %v6276, 20.0
    %v6341 = vmin.f32 %v6277, 20.0
    %v6342 = vmin.f32 %v6278, 20.0
    %v6343 = vmin.f32 %v6279, 20.0
    %v6344 = vmin.f32 %v6280, 20.0
    %v6345 = vmin.f32 %v6281, 20.0
    %v6346 = vmin.f32 %v6282, 20.0
    %v6347 = vmin.f32 %v6283, 20.0
    %v6348 = vmin.f32 %v6284, 20.0
    %v6349 = vmin.f32 %v6285, 20.0
    %v6350 = vmin.f32 %v6286, 20.0
    %v6351 = vmin.f32 %v6287, 20.0
    %v6352 = vmin.f32 %v6288, 20.0
    %v6353 = vmin.f32 %v6289, 20.0
    %v6354 = vmin.f32 %v6290, 20.0
    %v6355 = vmin.f32 %v6291, 20.0
    %v6356 = vmin.f32 %v6292, 20.0
    %v6357 = vmin.f32 %v6293, 20.0
    %v6358 = vmin.f32 %v6294, 20.0
    %v6359 = vmin.f32 %v6295, 20.0
    %v6360 = vmin.f32 %v6296, 20.0
    %v6361 = vmin.f32 %v6297, 20.0
    %v6362 = vmin.f32 %v6298, 20.0
    %v6363 = vmin.f32 %v6299, 20.0
    %v6364 = vmin.f32 %v6300, 20.0
    %v6365 = vmin.f32 %v6301, 20.0
    %v6366 = vmin.f32 %v6302, 20.0
    %v6367 = vmin.f32 %v6303, 20.0
    %v6368 = vmin.f32 %v6304, 20.0
    %v6369 = vmin.f32 %v6305, 20.0
    %v6370 = vmin.f32 %v6306, 20.0
    %v6371 = vmin.f32 %v6307, 20.0
    %v6372 = vmin.f32 %v6308, 20.0
    %v6373 = vmin.f32 %v6309, 20.0
    %v6374 = vmin.f32 %v6310, 20.0
    %v6375 = vmin.f32 %v6311, 20.0
    %v6376 = vmin.f32 %v6312, 20.0
    %v6377 = vmin.f32 %v6313, 20.0
    %v6378 = vmin.f32 %v6314, 20.0
    %v6379 = vmul.f32 %v6315, 1.442695
    %v6380 = vpow.pop %v6379
    %v6381 = vmul.f32 %v6316, 1.442695
    %v6382 = vpow.pop %v6381
    %v6383 = vmul.f32 %v6317, 1.442695
    %v6384 = vpow.pop %v6383
    %v6385 = vmul.f32 %v6318, 1.442695
    %v6386 = vpow.pop %v6385
    %v6387 = vmul.f32 %v6319, 1.442695
    %v6388 = vpow.pop %v6387
    %v6389 = vmul.f32 %v6320, 1.442695
    %v6390 = vpow.pop %v6389
    %v6391 = vmul.f32 %v6321, 1.442695
    %v6392 = vpow.pop %v6391
    %v6393 = vmul.f32 %v6322, 1.442695
    %v6394 = vpow.pop %v6393
    %v6395 = vmul.f32 %v6323, 1.442695
    %v6396 = vpow.pop %v6395
    %v6397 = vmul.f32 %v6324, 1.442695
    %v6398 = vpow.pop %v6397
    %v6399 = vmul.f32 %v6325, 1.442695
    %v6400 = vpow.pop %v6399
    %v6401 = vmul.f32 %v6326, 1.442695
    %v6402 = vpow.pop %v6401
    %v6403 = vmul.f32 %v6327, 1.442695
    %v6404 = vpow.pop %v6403
    %v6405 = vmul.f32 %v6328, 1.442695
    %v6406 = vpow.pop %v6405
    %v6407 = vmul.f32 %v6329, 1.442695
    %v6408 = vpow.pop %v6407
    %v6409 = vmul.f32 %v6330, 1.442695
    %v6410 = vpow.pop %v6409
    %v6411 = vmul.f32 %v6331, 1.442695
    %v6412 = vpow.pop %v6411
    %v6413 = vmul.f32 %v6332, 1.442695
    %v6414 = vpow.pop %v6413
    %v6415 = vmul.f32 %v6333, 1.442695
    %v6416 = vpow.pop %v6415
    %v6417 = vmul.f32 %v6334, 1.442695
    %v6418 = vpow.pop %v6417
    %v6419 = vmul.f32 %v6335, 1.442695
    %v6420 = vpow.pop %v6419
    %v6421 = vmul.f32 %v6336, 1.442695
    %v6422 = vpow.pop %v6421
    %v6423 = vmul.f32 %v6337, 1.442695
    %v6424 = vpow.pop %v6423
    %v6425 = vmul.f32 %v6338, 1.442695
    %v6426 = vpow.pop %v6425
    %v6427 = vmul.f32 %v6339, 1.442695
    %v6428 = vpow.pop %v6427
    %v6429 = vmul.f32 %v6340, 1.442695
    %v6430 = vpow.pop %v6429
    %v6431 = vmul.f32 %v6341, 1.442695
    %v6432 = vpow.pop %v6431
    %v6433 = vmul.f32 %v6342, 1.442695
    %v6434 = vpow.pop %v6433
    %v6435 = vmul.f32 %v6343, 1.442695
    %v6436 = vpow.pop %v6435
    %v6437 = vmul.f32 %v6344, 1.442695
    %v6438 = vpow.pop %v6437
    %v6439 = vmul.f32 %v6345, 1.442695
    %v6440 = vpow.pop %v6439
    %v6441 = vmul.f32 %v6346, 1.442695
    %v6442 = vpow.pop %v6441
    %v6443 = vmul.f32 %v6347, 1.442695
    %v6444 = vpow.pop %v6443
    %v6445 = vmul.f32 %v6348, 1.442695
    %v6446 = vpow.pop %v6445
    %v6447 = vmul.f32 %v6349, 1.442695
    %v6448 = vpow.pop %v6447
    %v6449 = vmul.f32 %v6350, 1.442695
    %v6450 = vpow.pop %v6449
    %v6451 = vmul.f32 %v6351, 1.442695
    %v6452 = vpow.pop %v6451
    %v6453 = vmul.f32 %v6352, 1.442695
    %v6454 = vpow.pop %v6453
    %v6455 = vmul.f32 %v6353, 1.442695
    %v6456 = vpow.pop %v6455
    %v6457 = vmul.f32 %v6354, 1.442695
    %v6458 = vpow.pop %v6457
    %v6459 = vmul.f32 %v6355, 1.442695
    %v6460 = vpow.pop %v6459
    %v6461 = vmul.f32 %v6356, 1.442695
    %v6462 = vpow.pop %v6461
    %v6463 = vmul.f32 %v6357, 1.442695
    %v6464 = vpow.pop %v6463
    %v6465 = vmul.f32 %v6358, 1.442695
    %v6466 = vpow.pop %v6465
    %v6467 = vmul.f32 %v6359, 1.442695
    %v6468 = vpow.pop %v6467
    %v6469 = vmul.f32 %v6360, 1.442695
    %v6470 = vpow.pop %v6469
    %v6471 = vmul.f32 %v6361, 1.442695
    %v6472 = vpow.pop %v6471
    %v6473 = vmul.f32 %v6362, 1.442695
    %v6474 = vpow.pop %v6473
    %v6475 = vmul.f32 %v6363, 1.442695
    %v6476 = vpow.pop %v6475
    %v6477 = vmul.f32 %v6364, 1.442695
    %v6478 = vpow.pop %v6477
    %v6479 = vmul.f32 %v6365, 1.442695
    %v6480 = vpow.pop %v6479
    %v6481 = vmul.f32 %v6366, 1.442695
    %v6482 = vpow.pop %v6481
    %v6483 = vmul.f32 %v6367, 1.442695
    %v6484 = vpow.pop %v6483
    %v6485 = vmul.f32 %v6368, 1.442695
    %v6486 = vpow.pop %v6485
    %v6487 = vmul.f32 %v6369, 1.442695
    %v6488 = vpow.pop %v6487
    %v6489 = vmul.f32 %v6370, 1.442695
    %v6490 = vpow.pop %v6489
    %v6491 = vmul.f32 %v6371, 1.442695
    %v6492 = vpow.pop %v6491
    %v6493 = vmul.f32 %v6372, 1.442695
    %v6494 = vpow.pop %v6493
    %v6495 = vmul.f32 %v6373, 1.442695
    %v6496 = vpow.pop %v6495
    %v6497 = vmul.f32 %v6374, 1.442695
    %v6498 = vpow.pop %v6497
    %v6499 = vmul.f32 %v6375, 1.442695
    %v6500 = vpow.pop %v6499
    %v6501 = vmul.f32 %v6376, 1.442695
    %v6502 = vpow.pop %v6501
    %v6503 = vmul.f32 %v6377, 1.442695
    %v6504 = vpow.pop %v6503
    %v6505 = vmul.f32 %v6378, 1.442695
    %v6506 = vpow.pop %v6505
    %v6507 = vadd.f32 %v6380, 1.0
    %v6508 = vadd.f32 %v6382, 1.0
    %v6509 = vadd.f32 %v6384, 1.0
    %v6510 = vadd.f32 %v6386, 1.0
    %v6511 = vadd.f32 %v6388, 1.0
    %v6512 = vadd.f32 %v6390, 1.0
    %v6513 = vadd.f32 %v6392, 1.0
    %v6514 = vadd.f32 %v6394, 1.0
    %v6515 = vadd.f32 %v6396, 1.0
    %v6516 = vadd.f32 %v6398, 1.0
    %v6517 = vadd.f32 %v6400, 1.0
    %v6518 = vadd.f32 %v6402, 1.0
    %v6519 = vadd.f32 %v6404, 1.0
    %v6520 = vadd.f32 %v6406, 1.0
    %v6521 = vadd.f32 %v6408, 1.0
    %v6522 = vadd.f32 %v6410, 1.0
    %v6523 = vadd.f32 %v6412, 1.0
    %v6524 = vadd.f32 %v6414, 1.0
    %v6525 = vadd.f32 %v6416, 1.0
    %v6526 = vadd.f32 %v6418, 1.0
    %v6527 = vadd.f32 %v6420, 1.0
    %v6528 = vadd.f32 %v6422, 1.0
    %v6529 = vadd.f32 %v6424, 1.0
    %v6530 = vadd.f32 %v6426, 1.0
    %v6531 = vadd.f32 %v6428, 1.0
    %v6532 = vadd.f32 %v6430, 1.0
    %v6533 = vadd.f32 %v6432, 1.0
    %v6534 = vadd.f32 %v6434, 1.0
    %v6535 = vadd.f32 %v6436, 1.0
    %v6536 = vadd.f32 %v6438, 1.0
    %v6537 = vadd.f32 %v6440, 1.0
    %v6538 = vadd.f32 %v6442, 1.0
    %v6539 = vadd.f32 %v6444, 1.0
    %v6540 = vadd.f32 %v6446, 1.0
    %v6541 = vadd.f32 %v6448, 1.0
    %v6542 = vadd.f32 %v6450, 1.0
    %v6543 = vadd.f32 %v6452, 1.0
    %v6544 = vadd.f32 %v6454, 1.0
    %v6545 = vadd.f32 %v6456, 1.0
    %v6546 = vadd.f32 %v6458, 1.0
    %v6547 = vadd.f32 %v6460, 1.0
    %v6548 = vadd.f32 %v6462, 1.0
    %v6549 = vadd.f32 %v6464, 1.0
    %v6550 = vadd.f32 %v6466, 1.0
    %v6551 = vadd.f32 %v6468, 1.0
    %v6552 = vadd.f32 %v6470, 1.0
    %v6553 = vadd.f32 %v6472, 1.0
    %v6554 = vadd.f32 %v6474, 1.0
    %v6555 = vadd.f32 %v6476, 1.0
    %v6556 = vadd.f32 %v6478, 1.0
    %v6557 = vadd.f32 %v6480, 1.0
    %v6558 = vadd.f32 %v6482, 1.0
    %v6559 = vadd.f32 %v6484, 1.0
    %v6560 = vadd.f32 %v6486, 1.0
    %v6561 = vadd.f32 %v6488, 1.0
    %v6562 = vadd.f32 %v6490, 1.0
    %v6563 = vadd.f32 %v6492, 1.0
    %v6564 = vadd.f32 %v6494, 1.0
    %v6565 = vadd.f32 %v6496, 1.0
    %v6566 = vadd.f32 %v6498, 1.0
    %v6567 = vadd.f32 %v6500, 1.0
    %v6568 = vadd.f32 %v6502, 1.0
    %v6569 = vadd.f32 %v6504, 1.0
    %v6570 = vadd.f32 %v6506, 1.0
    %v6571 = vmul.f32 %v6507, %v6507
    %v6572 = vmul.f32 %v6508, %v6508
    %v6573 = vmul.f32 %v6509, %v6509
    %v6574 = vmul.f32 %v6510, %v6510
    %v6575 = vmul.f32 %v6511, %v6511
    %v6576 = vmul.f32 %v6512, %v6512
    %v6577 = vmul.f32 %v6513, %v6513
    %v6578 = vmul.f32 %v6514, %v6514
    %v6579 = vmul.f32 %v6515, %v6515
    %v6580 = vmul.f32 %v6516, %v6516
    %v6581 = vmul.f32 %v6517, %v6517
    %v6582 = vmul.f32 %v6518, %v6518
    %v6583 = vmul.f32 %v6519, %v6519
    %v6584 = vmul.f32 %v6520, %v6520
    %v6585 = vmul.f32 %v6521, %v6521
    %v6586 = vmul.f32 %v6522, %v6522
    %v6587 = vmul.f32 %v6523, %v6523
    %v6588 = vmul.f32 %v6524, %v6524
    %v6589 = vmul.f32 %v6525, %v6525
    %v6590 = vmul.f32 %v6526, %v6526
    %v6591 = vmul.f32 %v6527, %v6527
    %v6592 = vmul.f32 %v6528, %v6528
    %v6593 = vmul.f32 %v6529, %v6529
    %v6594 = vmul.f32 %v6530, %v6530
    %v6595 = vmul.f32 %v6531, %v6531
    %v6596 = vmul.f32 %v6532, %v6532
    %v6597 = vmul.f32 %v6533, %v6533
    %v6598 = vmul.f32 %v6534, %v6534
    %v6599 = vmul.f32 %v6535, %v6535
    %v6600 = vmul.f32 %v6536, %v6536
    %v6601 = vmul.f32 %v6537, %v6537
    %v6602 = vmul.f32 %v6538, %v6538
    %v6603 = vmul.f32 %v6539, %v6539
    %v6604 = vmul.f32 %v6540, %v6540
    %v6605 = vmul.f32 %v6541, %v6541
    %v6606 = vmul.f32 %v6542, %v6542
    %v6607 = vmul.f32 %v6543, %v6543
    %v6608 = vmul.f32 %v6544, %v6544
    %v6609 = vmul.f32 %v6545, %v6545
    %v6610 = vmul.f32 %v6546, %v6546
    %v6611 = vmul.f32 %v6547, %v6547
    %v6612 = vmul.f32 %v6548, %v6548
    %v6613 = vmul.f32 %v6549, %v6549
    %v6614 = vmul.f32 %v6550, %v6550
    %v6615 = vmul.f32 %v6551, %v6551
    %v6616 = vmul.f32 %v6552, %v6552
    %v6617 = vmul.f32 %v6553, %v6553
    %v6618 = vmul.f32 %v6554, %v6554
    %v6619 = vmul.f32 %v6555, %v6555
    %v6620 = vmul.f32 %v6556, %v6556
    %v6621 = vmul.f32 %v6557, %v6557
    %v6622 = vmul.f32 %v6558, %v6558
    %v6623 = vmul.f32 %v6559, %v6559
    %v6624 = vmul.f32 %v6560, %v6560
    %v6625 = vmul.f32 %v6561, %v6561
    %v6626 = vmul.f32 %v6562, %v6562
    %v6627 = vmul.f32 %v6563, %v6563
    %v6628 = vmul.f32 %v6564, %v6564
    %v6629 = vmul.f32 %v6565, %v6565
    %v6630 = vmul.f32 %v6566, %v6566
    %v6631 = vmul.f32 %v6567, %v6567
    %v6632 = vmul.f32 %v6568, %v6568
    %v6633 = vmul.f32 %v6569, %v6569
    %v6634 = vmul.f32 %v6570, %v6570
    %v6635 = vsub.f32 %v6571, 1.0
    %v6636 = vsub.f32 %v6572, 1.0
    %v6637 = vsub.f32 %v6573, 1.0
    %v6638 = vsub.f32 %v6574, 1.0
    %v6639 = vsub.f32 %v6575, 1.0
    %v6640 = vsub.f32 %v6576, 1.0
    %v6641 = vsub.f32 %v6577, 1.0
    %v6642 = vsub.f32 %v6578, 1.0
    %v6643 = vsub.f32 %v6579, 1.0
    %v6644 = vsub.f32 %v6580, 1.0
    %v6645 = vsub.f32 %v6581, 1.0
    %v6646 = vsub.f32 %v6582, 1.0
    %v6647 = vsub.f32 %v6583, 1.0
    %v6648 = vsub.f32 %v6584, 1.0
    %v6649 = vsub.f32 %v6585, 1.0
    %v6650 = vsub.f32 %v6586, 1.0
    %v6651 = vsub.f32 %v6587, 1.0
    %v6652 = vsub.f32 %v6588, 1.0
    %v6653 = vsub.f32 %v6589, 1.0
    %v6654 = vsub.f32 %v6590, 1.0
    %v6655 = vsub.f32 %v6591, 1.0
    %v6656 = vsub.f32 %v6592, 1.0
    %v6657 = vsub.f32 %v6593, 1.0
    %v6658 = vsub.f32 %v6594, 1.0
    %v6659 = vsub.f32 %v6595, 1.0
    %v6660 = vsub.f32 %v6596, 1.0
    %v6661 = vsub.f32 %v6597, 1.0
    %v6662 = vsub.f32 %v6598, 1.0
    %v6663 = vsub.f32 %v6599, 1.0
    %v6664 = vsub.f32 %v6600, 1.0
    %v6665 = vsub.f32 %v6601, 1.0
    %v6666 = vsub.f32 %v6602, 1.0
    %v6667 = vsub.f32 %v6603, 1.0
    %v6668 = vsub.f32 %v6604, 1.0
    %v6669 = vsub.f32 %v6605, 1.0
    %v6670 = vsub.f32 %v6606, 1.0
    %v6671 = vsub.f32 %v6607, 1.0
    %v6672 = vsub.f32 %v6608, 1.0
    %v6673 = vsub.f32 %v6609, 1.0
    %v6674 = vsub.f32 %v6610, 1.0
    %v6675 = vsub.f32 %v6611, 1.0
    %v6676 = vsub.f32 %v6612, 1.0
    %v6677 = vsub.f32 %v6613, 1.0
    %v6678 = vsub.f32 %v6614, 1.0
    %v6679 = vsub.f32 %v6615, 1.0
    %v6680 = vsub.f32 %v6616, 1.0
    %v6681 = vsub.f32 %v6617, 1.0
    %v6682 = vsub.f32 %v6618, 1.0
    %v6683 = vsub.f32 %v6619, 1.0
    %v6684 = vsub.f32 %v6620, 1.0
    %v6685 = vsub.f32 %v6621, 1.0
    %v6686 = vsub.f32 %v6622, 1.0
    %v6687 = vsub.f32 %v6623, 1.0
    %v6688 = vsub.f32 %v6624, 1.0
    %v6689 = vsub.f32 %v6625, 1.0
    %v6690 = vsub.f32 %v6626, 1.0
    %v6691 = vsub.f32 %v6627, 1.0
    %v6692 = vsub.f32 %v6628, 1.0
    %v6693 = vsub.f32 %v6629, 1.0
    %v6694 = vsub.f32 %v6630, 1.0
    %v6695 = vsub.f32 %v6631, 1.0
    %v6696 = vsub.f32 %v6632, 1.0
    %v6697 = vsub.f32 %v6633, 1.0
    %v6698 = vsub.f32 %v6634, 1.0
    %v6699 = vadd.f32 %v6571, 1.0
    %v6700 = vadd.f32 %v6572, 1.0
    %v6701 = vadd.f32 %v6573, 1.0
    %v6702 = vadd.f32 %v6574, 1.0
    %v6703 = vadd.f32 %v6575, 1.0
    %v6704 = vadd.f32 %v6576, 1.0
    %v6705 = vadd.f32 %v6577, 1.0
    %v6706 = vadd.f32 %v6578, 1.0
    %v6707 = vadd.f32 %v6579, 1.0
    %v6708 = vadd.f32 %v6580, 1.0
    %v6709 = vadd.f32 %v6581, 1.0
    %v6710 = vadd.f32 %v6582, 1.0
    %v6711 = vadd.f32 %v6583, 1.0
    %v6712 = vadd.f32 %v6584, 1.0
    %v6713 = vadd.f32 %v6585, 1.0
    %v6714 = vadd.f32 %v6586, 1.0
    %v6715 = vadd.f32 %v6587, 1.0
    %v6716 = vadd.f32 %v6588, 1.0
    %v6717 = vadd.f32 %v6589, 1.0
    %v6718 = vadd.f32 %v6590, 1.0
    %v6719 = vadd.f32 %v6591, 1.0
    %v6720 = vadd.f32 %v6592, 1.0
    %v6721 = vadd.f32 %v6593, 1.0
    %v6722 = vadd.f32 %v6594, 1.0
    %v6723 = vadd.f32 %v6595, 1.0
    %v6724 = vadd.f32 %v6596, 1.0
    %v6725 = vadd.f32 %v6597, 1.0
    %v6726 = vadd.f32 %v6598, 1.0
    %v6727 = vadd.f32 %v6599, 1.0
    %v6728 = vadd.f32 %v6600, 1.0
    %v6729 = vadd.f32 %v6601, 1.0
    %v6730 = vadd.f32 %v6602, 1.0
    %v6731 = vadd.f32 %v6603, 1.0
    %v6732 = vadd.f32 %v6604, 1.0
    %v6733 = vadd.f32 %v6605, 1.0
    %v6734 = vadd.f32 %v6606, 1.0
    %v6735 = vadd.f32 %v6607, 1.0
    %v6736 = vadd.f32 %v6608, 1.0
    %v6737 = vadd.f32 %v6609, 1.0
    %v6738 = vadd.f32 %v6610, 1.0
    %v6739 = vadd.f32 %v6611, 1.0
    %v6740 = vadd.f32 %v6612, 1.0
    %v6741 = vadd.f32 %v6613, 1.0
    %v6742 = vadd.f32 %v6614, 1.0
    %v6743 = vadd.f32 %v6615, 1.0
    %v6744 = vadd.f32 %v6616, 1.0
    %v6745 = vadd.f32 %v6617, 1.0
    %v6746 = vadd.f32 %v6618, 1.0
    %v6747 = vadd.f32 %v6619, 1.0
    %v6748 = vadd.f32 %v6620, 1.0
    %v6749 = vadd.f32 %v6621, 1.0
    %v6750 = vadd.f32 %v6622, 1.0
    %v6751 = vadd.f32 %v6623, 1.0
    %v6752 = vadd.f32 %v6624, 1.0
    %v6753 = vadd.f32 %v6625, 1.0
    %v6754 = vadd.f32 %v6626, 1.0
    %v6755 = vadd.f32 %v6627, 1.0
    %v6756 = vadd.f32 %v6628, 1.0
    %v6757 = vadd.f32 %v6629, 1.0
    %v6758 = vadd.f32 %v6630, 1.0
    %v6759 = vadd.f32 %v6631, 1.0
    %v6760 = vadd.f32 %v6632, 1.0
    %v6761 = vadd.f32 %v6633, 1.0
    %v6762 = vadd.f32 %v6634, 1.0
    %v6763 = vrcp.pop %v6699
    %v6764 = vrcp.pop %v6700
    %v6765 = vrcp.pop %v6701
    %v6766 = vrcp.pop %v6702
    %v6767 = vrcp.pop %v6703
    %v6768 = vrcp.pop %v6704
    %v6769 = vrcp.pop %v6705
    %v6770 = vrcp.pop %v6706
    %v6771 = vrcp.pop %v6707
    %v6772 = vrcp.pop %v6708
    %v6773 = vrcp.pop %v6709
    %v6774 = vrcp.pop %v6710
    %v6775 = vrcp.pop %v6711
    %v6776 = vrcp.pop %v6712
    %v6777 = vrcp.pop %v6713
    %v6778 = vrcp.pop %v6714
    %v6779 = vrcp.pop %v6715
    %v6780 = vrcp.pop %v6716
    %v6781 = vrcp.pop %v6717
    %v6782 = vrcp.pop %v6718
    %v6783 = vrcp.pop %v6719
    %v6784 = vrcp.pop %v6720
    %v6785 = vrcp.pop %v6721
    %v6786 = vrcp.pop %v6722
    %v6787 = vrcp.pop %v6723
    %v6788 = vrcp.pop %v6724
    %v6789 = vrcp.pop %v6725
    %v6790 = vrcp.pop %v6726
    %v6791 = vrcp.pop %v6727
    %v6792 = vrcp.pop %v6728
    %v6793 = vrcp.pop %v6729
    %v6794 = vrcp.pop %v6730
    %v6795 = vrcp.pop %v6731
    %v6796 = vrcp.pop %v6732
    %v6797 = vrcp.pop %v6733
    %v6798 = vrcp.pop %v6734
    %v6799 = vrcp.pop %v6735
    %v6800 = vrcp.pop %v6736
    %v6801 = vrcp.pop %v6737
    %v6802 = vrcp.pop %v6738
    %v6803 = vrcp.pop %v6739
    %v6804 = vrcp.pop %v6740
    %v6805 = vrcp.pop %v6741
    %v6806 = vrcp.pop %v6742
    %v6807 = vrcp.pop %v6743
    %v6808 = vrcp.pop %v6744
    %v6809 = vrcp.pop %v6745
    %v6810 = vrcp.pop %v6746
    %v6811 = vrcp.pop %v6747
    %v6812 = vrcp.pop %v6748
    %v6813 = vrcp.pop %v6749
    %v6814 = vrcp.pop %v6750
    %v6815 = vrcp.pop %v6751
    %v6816 = vrcp.pop %v6752
    %v6817 = vrcp.pop %v6753
    %v6818 = vrcp.pop %v6754
    %v6819 = vrcp.pop %v6755
    %v6820 = vrcp.pop %v6756
    %v6821 = vrcp.pop %v6757
    %v6822 = vrcp.pop %v6758
    %v6823 = vrcp.pop %v6759
    %v6824 = vrcp.pop %v6760
    %v6825 = vrcp.pop %v6761
    %v6826 = vrcp.pop %v6762
    %v6827 = vmul.f32 %v6635, %v6763
    %v6828 = vmul.f32 %v6636, %v6764
    %v6829 = vmul.f32 %v6637, %v6765
    %v6830 = vmul.f32 %v6638, %v6766
    %v6831 = vmul.f32 %v6639, %v6767
    %v6832 = vmul.f32 %v6640, %v6768
    %v6833 = vmul.f32 %v6641, %v6769
    %v6834 = vmul.f32 %v6642, %v6770
    %v6835 = vmul.f32 %v6643, %v6771
    %v6836 = vmul.f32 %v6644, %v6772
    %v6837 = vmul.f32 %v6645, %v6773
    %v6838 = vmul.f32 %v6646, %v6774
    %v6839 = vmul.f32 %v6647, %v6775
    %v6840 = vmul.f32 %v6648, %v6776
    %v6841 = vmul.f32 %v6649, %v6777
    %v6842 = vmul.f32 %v6650, %v6778
    %v6843 = vmul.f32 %v6651, %v6779
    %v6844 = vmul.f32 %v6652, %v6780
    %v6845 = vmul.f32 %v6653, %v6781
    %v6846 = vmul.f32 %v6654, %v6782
    %v6847 = vmul.f32 %v6655, %v6783
    %v6848 = vmul.f32 %v6656, %v6784
    %v6849 = vmul.f32 %v6657, %v6785
    %v6850 = vmul.f32 %v6658, %v6786
    %v6851 = vmul.f32 %v6659, %v6787
    %v6852 = vmul.f32 %v6660, %v6788
    %v6853 = vmul.f32 %v6661, %v6789
    %v6854 = vmul.f32 %v6662, %v6790
    %v6855 = vmul.f32 %v6663, %v6791
    %v6856 = vmul.f32 %v6664, %v6792
    %v6857 = vmul.f32 %v6665, %v6793
    %v6858 = vmul.f32 %v6666, %v6794
    %v6859 = vmul.f32 %v6667, %v6795
    %v6860 = vmul.f32 %v6668, %v6796
    %v6861 = vmul.f32 %v6669, %v6797
    %v6862 = vmul.f32 %v6670, %v6798
    %v6863 = vmul.f32 %v6671, %v6799
    %v6864 = vmul.f32 %v6672, %v6800
    %v6865 = vmul.f32 %v6673, %v6801
    %v6866 = vmul.f32 %v6674, %v6802
    %v6867 = vmul.f32 %v6675, %v6803
    %v6868 = vmul.f32 %v6676, %v6804
    %v6869 = vmul.f32 %v6677, %v6805
    %v6870 = vmul.f32 %v6678, %v6806
    %v6871 = vmul.f32 %v6679, %v6807
    %v6872 = vmul.f32 %v6680, %v6808
    %v6873 = vmul.f32 %v6681, %v6809
    %v6874 = vmul.f32 %v6682, %v6810
    %v6875 = vmul.f32 %v6683, %v6811
    %v6876 = vmul.f32 %v6684, %v6812
    %v6877 = vmul.f32 %v6685, %v6813
    %v6878 = vmul.f32 %v6686, %v6814
    %v6879 = vmul.f32 %v6687, %v6815
    %v6880 = vmul.f32 %v6688, %v6816
    %v6881 = vmul.f32 %v6689, %v6817
    %v6882 = vmul.f32 %v6690, %v6818
    %v6883 = vmul.f32 %v6691, %v6819
    %v6884 = vmul.f32 %v6692, %v6820
    %v6885 = vmul.f32 %v6693, %v6821
    %v6886 = vmul.f32 %v6694, %v6822
    %v6887 = vmul.f32 %v6695, %v6823
    %v6888 = vmul.f32 %v6696, %v6824
    %v6889 = vmul.f32 %v6697, %v6825
    %v6890 = vmul.f32 %v6698, %v6826
    %vm6891 = vcmp.gt.f32.partialorder %v6251, 20.0
    %vm6892 = vcmp.gt.f32.partialorder %v6252, 20.0
    %vm6893 = vcmp.gt.f32.partialorder %v6253, 20.0
    %vm6894 = vcmp.gt.f32.partialorder %v6254, 20.0
    %vm6895 = vcmp.gt.f32.partialorder %v6255, 20.0
    %vm6896 = vcmp.gt.f32.partialorder %v6256, 20.0
    %vm6897 = vcmp.gt.f32.partialorder %v6257, 20.0
    %vm6898 = vcmp.gt.f32.partialorder %v6258, 20.0
    %vm6899 = vcmp.gt.f32.partialorder %v6259, 20.0
    %vm6900 = vcmp.gt.f32.partialorder %v6260, 20.0
    %vm6901 = vcmp.gt.f32.partialorder %v6261, 20.0
    %vm6902 = vcmp.gt.f32.partialorder %v6262, 20.0
    %vm6903 = vcmp.gt.f32.partialorder %v6263, 20.0
    %vm6904 = vcmp.gt.f32.partialorder %v6264, 20.0
    %vm6905 = vcmp.gt.f32.partialorder %v6265, 20.0
    %vm6906 = vcmp.gt.f32.partialorder %v6266, 20.0
    %vm6907 = vcmp.gt.f32.partialorder %v6267, 20.0
    %vm6908 = vcmp.gt.f32.partialorder %v6268, 20.0
    %vm6909 = vcmp.gt.f32.partialorder %v6269, 20.0
    %vm6910 = vcmp.gt.f32.partialorder %v6270, 20.0
    %vm6911 = vcmp.gt.f32.partialorder %v6271, 20.0
    %vm6912 = vcmp.gt.f32.partialorder %v6272, 20.0
    %vm6913 = vcmp.gt.f32.partialorder %v6273, 20.0
    %vm6914 = vcmp.gt.f32.partialorder %v6274, 20.0
    %vm6915 = vcmp.gt.f32.partialorder %v6275, 20.0
    %vm6916 = vcmp.gt.f32.partialorder %v6276, 20.0
    %vm6917 = vcmp.gt.f32.partialorder %v6277, 20.0
    %vm6918 = vcmp.gt.f32.partialorder %v6278, 20.0
    %vm6919 = vcmp.gt.f32.partialorder %v6279, 20.0
    %vm6920 = vcmp.gt.f32.partialorder %v6280, 20.0
    %vm6921 = vcmp.gt.f32.partialorder %v6281, 20.0
    %vm6922 = vcmp.gt.f32.partialorder %v6282, 20.0
    %vm6923 = vcmp.gt.f32.partialorder %v6283, 20.0
    %vm6924 = vcmp.gt.f32.partialorder %v6284, 20.0
    %vm6925 = vcmp.gt.f32.partialorder %v6285, 20.0
    %vm6926 = vcmp.gt.f32.partialorder %v6286, 20.0
    %vm6927 = vcmp.gt.f32.partialorder %v6287, 20.0
    %vm6928 = vcmp.gt.f32.partialorder %v6288, 20.0
    %vm6929 = vcmp.gt.f32.partialorder %v6289, 20.0
    %vm6930 = vcmp.gt.f32.partialorder %v6290, 20.0
    %vm6931 = vcmp.gt.f32.partialorder %v6291, 20.0
    %vm6932 = vcmp.gt.f32.partialorder %v6292, 20.0
    %vm6933 = vcmp.gt.f32.partialorder %v6293, 20.0
    %vm6934 = vcmp.gt.f32.partialorder %v6294, 20.0
    %vm6935 = vcmp.gt.f32.partialorder %v6295, 20.0
    %vm6936 = vcmp.gt.f32.partialorder %v6296, 20.0
    %vm6937 = vcmp.gt.f32.partialorder %v6297, 20.0
    %vm6938 = vcmp.gt.f32.partialorder %v6298, 20.0
    %vm6939 = vcmp.gt.f32.partialorder %v6299, 20.0
    %vm6940 = vcmp.gt.f32.partialorder %v6300, 20.0
    %vm6941 = vcmp.gt.f32.partialorder %v6301, 20.0
    %vm6942 = vcmp.gt.f32.partialorder %v6302, 20.0
    %vm6943 = vcmp.gt.f32.partialorder %v6303, 20.0
    %vm6944 = vcmp.gt.f32.partialorder %v6304, 20.0
    %vm6945 = vcmp.gt.f32.partialorder %v6305, 20.0
    %vm6946 = vcmp.gt.f32.partialorder %v6306, 20.0
    %vm6947 = vcmp.gt.f32.partialorder %v6307, 20.0
    %vm6948 = vcmp.gt.f32.partialorder %v6308, 20.0
    %vm6949 = vcmp.gt.f32.partialorder %v6309, 20.0
    %vm6950 = vcmp.gt.f32.partialorder %v6310, 20.0
    %vm6951 = vcmp.gt.f32.partialorder %v6311, 20.0
    %vm6952 = vcmp.gt.f32.partialorder %v6312, 20.0
    %vm6953 = vcmp.gt.f32.partialorder %v6313, 20.0
    %vm6954 = vcmp.gt.f32.partialorder %v6314, 20.0
    %v6955 = vmul.f32 %v6251, %v6827
    %v6956 = vmul.f32 %v6252, %v6828
    %v6957 = vmul.f32 %v6253, %v6829
    %v6958 = vmul.f32 %v6254, %v6830
    %v6959 = vmul.f32 %v6255, %v6831
    %v6960 = vmul.f32 %v6256, %v6832
    %v6961 = vmul.f32 %v6257, %v6833
    %v6962 = vmul.f32 %v6258, %v6834
    %v6963 = vmul.f32 %v6259, %v6835
    %v6964 = vmul.f32 %v6260, %v6836
    %v6965 = vmul.f32 %v6261, %v6837
    %v6966 = vmul.f32 %v6262, %v6838
    %v6967 = vmul.f32 %v6263, %v6839
    %v6968 = vmul.f32 %v6264, %v6840
    %v6969 = vmul.f32 %v6265, %v6841
    %v6970 = vmul.f32 %v6266, %v6842
    %v6971 = vmul.f32 %v6267, %v6843
    %v6972 = vmul.f32 %v6268, %v6844
    %v6973 = vmul.f32 %v6269, %v6845
    %v6974 = vmul.f32 %v6270, %v6846
    %v6975 = vmul.f32 %v6271, %v6847
    %v6976 = vmul.f32 %v6272, %v6848
    %v6977 = vmul.f32 %v6273, %v6849
    %v6978 = vmul.f32 %v6274, %v6850
    %v6979 = vmul.f32 %v6275, %v6851
    %v6980 = vmul.f32 %v6276, %v6852
    %v6981 = vmul.f32 %v6277, %v6853
    %v6982 = vmul.f32 %v6278, %v6854
    %v6983 = vmul.f32 %v6279, %v6855
    %v6984 = vmul.f32 %v6280, %v6856
    %v6985 = vmul.f32 %v6281, %v6857
    %v6986 = vmul.f32 %v6282, %v6858
    %v6987 = vmul.f32 %v6283, %v6859
    %v6988 = vmul.f32 %v6284, %v6860
    %v6989 = vmul.f32 %v6285, %v6861
    %v6990 = vmul.f32 %v6286, %v6862
    %v6991 = vmul.f32 %v6287, %v6863
    %v6992 = vmul.f32 %v6288, %v6864
    %v6993 = vmul.f32 %v6289, %v6865
    %v6994 = vmul.f32 %v6290, %v6866
    %v6995 = vmul.f32 %v6291, %v6867
    %v6996 = vmul.f32 %v6292, %v6868
    %v6997 = vmul.f32 %v6293, %v6869
    %v6998 = vmul.f32 %v6294, %v6870
    %v6999 = vmul.f32 %v6295, %v6871
    %v7000 = vmul.f32 %v6296, %v6872
    %v7001 = vmul.f32 %v6297, %v6873
    %v7002 = vmul.f32 %v6298, %v6874
    %v7003 = vmul.f32 %v6299, %v6875
    %v7004 = vmul.f32 %v6300, %v6876
    %v7005 = vmul.f32 %v6301, %v6877
    %v7006 = vmul.f32 %v6302, %v6878
    %v7007 = vmul.f32 %v6303, %v6879
    %v7008 = vmul.f32 %v6304, %v6880
    %v7009 = vmul.f32 %v6305, %v6881
    %v7010 = vmul.f32 %v6306, %v6882
    %v7011 = vmul.f32 %v6307, %v6883
    %v7012 = vmul.f32 %v6308, %v6884
    %v7013 = vmul.f32 %v6309, %v6885
    %v7014 = vmul.f32 %v6310, %v6886
    %v7015 = vmul.f32 %v6311, %v6887
    %v7016 = vmul.f32 %v6312, %v6888
    %v7017 = vmul.f32 %v6313, %v6889
    %v7018 = vmul.f32 %v6314, %v6890
    %v7019 = vsel %vm6891, %v6251, %v6955
    %v7020 = vsel %vm6892, %v6252, %v6956
    %v7021 = vsel %vm6893, %v6253, %v6957
    %v7022 = vsel %vm6894, %v6254, %v6958
    %v7023 = vsel %vm6895, %v6255, %v6959
    %v7024 = vsel %vm6896, %v6256, %v6960
    %v7025 = vsel %vm6897, %v6257, %v6961
    %v7026 = vsel %vm6898, %v6258, %v6962
    %v7027 = vsel %vm6899, %v6259, %v6963
    %v7028 = vsel %vm6900, %v6260, %v6964
    %v7029 = vsel %vm6901, %v6261, %v6965
    %v7030 = vsel %vm6902, %v6262, %v6966
    %v7031 = vsel %vm6903, %v6263, %v6967
    %v7032 = vsel %vm6904, %v6264, %v6968
    %v7033 = vsel %vm6905, %v6265, %v6969
    %v7034 = vsel %vm6906, %v6266, %v6970
    %v7035 = vsel %vm6907, %v6267, %v6971
    %v7036 = vsel %vm6908, %v6268, %v6972
    %v7037 = vsel %vm6909, %v6269, %v6973
    %v7038 = vsel %vm6910, %v6270, %v6974
    %v7039 = vsel %vm6911, %v6271, %v6975
    %v7040 = vsel %vm6912, %v6272, %v6976
    %v7041 = vsel %vm6913, %v6273, %v6977
    %v7042 = vsel %vm6914, %v6274, %v6978
    %v7043 = vsel %vm6915, %v6275, %v6979
    %v7044 = vsel %vm6916, %v6276, %v6980
    %v7045 = vsel %vm6917, %v6277, %v6981
    %v7046 = vsel %vm6918, %v6278, %v6982
    %v7047 = vsel %vm6919, %v6279, %v6983
    %v7048 = vsel %vm6920, %v6280, %v6984
    %v7049 = vsel %vm6921, %v6281, %v6985
    %v7050 = vsel %vm6922, %v6282, %v6986
    %v7051 = vsel %vm6923, %v6283, %v6987
    %v7052 = vsel %vm6924, %v6284, %v6988
    %v7053 = vsel %vm6925, %v6285, %v6989
    %v7054 = vsel %vm6926, %v6286, %v6990
    %v7055 = vsel %vm6927, %v6287, %v6991
    %v7056 = vsel %vm6928, %v6288, %v6992
    %v7057 = vsel %vm6929, %v6289, %v6993
    %v7058 = vsel %vm6930, %v6290, %v6994
    %v7059 = vsel %vm6931, %v6291, %v6995
    %v7060 = vsel %vm6932, %v6292, %v6996
    %v7061 = vsel %vm6933, %v6293, %v6997
    %v7062 = vsel %vm6934, %v6294, %v6998
    %v7063 = vsel %vm6935, %v6295, %v6999
    %v7064 = vsel %vm6936, %v6296, %v7000
    %v7065 = vsel %vm6937, %v6297, %v7001
    %v7066 = vsel %vm6938, %v6298, %v7002
    %v7067 = vsel %vm6939, %v6299, %v7003
    %v7068 = vsel %vm6940, %v6300, %v7004
    %v7069 = vsel %vm6941, %v6301, %v7005
    %v7070 = vsel %vm6942, %v6302, %v7006
    %v7071 = vsel %vm6943, %v6303, %v7007
    %v7072 = vsel %vm6944, %v6304, %v7008
    %v7073 = vsel %vm6945, %v6305, %v7009
    %v7074 = vsel %vm6946, %v6306, %v7010
    %v7075 = vsel %vm6947, %v6307, %v7011
    %v7076 = vsel %vm6948, %v6308, %v7012
    %v7077 = vsel %vm6949, %v6309, %v7013
    %v7078 = vsel %vm6950, %v6310, %v7014
    %v7079 = vsel %vm6951, %v6311, %v7015
    %v7080 = vsel %vm6952, %v6312, %v7016
    %v7081 = vsel %vm6953, %v6313, %v7017
    %v7082 = vsel %vm6954, %v6314, %v7018
    %v7083 = vpack.c.bf16 %v7021, %v7019
    %v7084 = vpack.c.bf16 %v7022, %v7020
    %v7085 = vpack.c.bf16 %v7025, %v7023
    %v7086 = vpack.c.bf16 %v7026, %v7024
    %v7087 = vpack.c.bf16 %v7029, %v7027
    %v7088 = vpack.c.bf16 %v7030, %v7028
    %v7089 = vpack.c.bf16 %v7033, %v7031
    %v7090 = vpack.c.bf16 %v7034, %v7032
    %v7091 = vpack.c.bf16 %v7037, %v7035
    %v7092 = vpack.c.bf16 %v7038, %v7036
    %v7093 = vpack.c.bf16 %v7041, %v7039
    %v7094 = vpack.c.bf16 %v7042, %v7040
    %v7095 = vpack.c.bf16 %v7045, %v7043
    %v7096 = vpack.c.bf16 %v7046, %v7044
    %v7097 = vpack.c.bf16 %v7049, %v7047
    %v7098 = vpack.c.bf16 %v7050, %v7048
    %v7099 = vpack.c.bf16 %v7053, %v7051
    %v7100 = vpack.c.bf16 %v7054, %v7052
    %v7101 = vpack.c.bf16 %v7057, %v7055
    %v7102 = vpack.c.bf16 %v7058, %v7056
    %v7103 = vpack.c.bf16 %v7061, %v7059
    %v7104 = vpack.c.bf16 %v7062, %v7060
    %v7105 = vpack.c.bf16 %v7065, %v7063
    %v7106 = vpack.c.bf16 %v7066, %v7064
    %v7107 = vpack.c.bf16 %v7069, %v7067
    %v7108 = vpack.c.bf16 %v7070, %v7068
    %v7109 = vpack.c.bf16 %v7073, %v7071
    %v7110 = vpack.c.bf16 %v7074, %v7072
    %v7111 = vpack.c.bf16 %v7077, %v7075
    %v7112 = vpack.c.bf16 %v7078, %v7076
    %v7113 = vpack.c.bf16 %v7081, %v7079
    %v7114 = vpack.c.bf16 %v7082, %v7080
    %v7115 = vld [vmem:[#allocation14] sm:$0xf]
    %v7116 = vld [vmem:[#allocation14 + $0x4] sm:$0xf]
    %v7117 = vld [vmem:[#allocation14 + $0x8] sm:$0xf]
    %v7118 = vld [vmem:[#allocation14 + $0xc] sm:$0xf]
    %v7119 = vld [vmem:[#allocation14 + $0x10] sm:$0xf]
    %v7120 = vld [vmem:[#allocation14 + $0x14] sm:$0xf]
    %v7121 = vld [vmem:[#allocation14 + $0x18] sm:$0xf]
    %v7122 = vld [vmem:[#allocation14 + $0x1c] sm:$0xf]
    %v7123 = vld [vmem:[#allocation14 + $0x20] sm:$0xf]
    %v7124 = vld [vmem:[#allocation14 + $0x24] sm:$0xf]
    %v7125 = vld [vmem:[#allocation14 + $0x28] sm:$0xf]
    %v7126 = vld [vmem:[#allocation14 + $0x2c] sm:$0xf]
    %v7127 = vld [vmem:[#allocation14 + $0x30] sm:$0xf]
    %v7128 = vld [vmem:[#allocation14 + $0x34] sm:$0xf]
    %v7129 = vld [vmem:[#allocation14 + $0x38] sm:$0xf]
    %v7130 = vld [vmem:[#allocation14 + $0x3c] sm:$0xf]
    %v7131 = vld [vmem:[#allocation14 + $0x40] sm:$0xf]
    %v7132 = vld [vmem:[#allocation14 + $0x44] sm:$0xf]
    %v7133 = vld [vmem:[#allocation14 + $0x48] sm:$0xf]
    %v7134 = vld [vmem:[#allocation14 + $0x4c] sm:$0xf]
    %v7135 = vld [vmem:[#allocation14 + $0x50] sm:$0xf]
    %v7136 = vld [vmem:[#allocation14 + $0x54] sm:$0xf]
    %v7137 = vld [vmem:[#allocation14 + $0x58] sm:$0xf]
    %v7138 = vld [vmem:[#allocation14 + $0x5c] sm:$0xf]
    %v7139 = vld [vmem:[#allocation14 + $0x60] sm:$0xf]
    %v7140 = vld [vmem:[#allocation14 + $0x64] sm:$0xf]
    %v7141 = vld [vmem:[#allocation14 + $0x68] sm:$0xf]
    %v7142 = vld [vmem:[#allocation14 + $0x6c] sm:$0xf]
    %v7143 = vld [vmem:[#allocation14 + $0x70] sm:$0xf]
    %v7144 = vld [vmem:[#allocation14 + $0x74] sm:$0xf]
    %v7145 = vld [vmem:[#allocation14 + $0x78] sm:$0xf]
    %v7146 = vld [vmem:[#allocation14 + $0x7c] sm:$0xf]
    %v7147 = vld [vmem:[%s17] sm:$0x1]
    %v7149 = vlaneseq
    %v7150 = vshrl.u32 %v7149, 7
    %v7151 = vsub.s32 0, %v7150
    %v7152 = vrot.slane %v7147, %v7151
    %v7186 = vunpack.c.l.b16 %v7115
    %v7187 = vunpack.c.l.b16 %v7116
    %v7188 = vunpack.c.l.b16 %v7117
    %v7189 = vunpack.c.l.b16 %v7118
    %v7190 = vunpack.c.l.b16 %v7119
    %v7191 = vunpack.c.l.b16 %v7120
    %v7192 = vunpack.c.l.b16 %v7121
    %v7193 = vunpack.c.l.b16 %v7122
    %v7194 = vunpack.c.l.b16 %v7123
    %v7195 = vunpack.c.l.b16 %v7124
    %v7196 = vunpack.c.l.b16 %v7125
    %v7197 = vunpack.c.l.b16 %v7126
    %v7198 = vunpack.c.l.b16 %v7127
    %v7199 = vunpack.c.l.b16 %v7128
    %v7200 = vunpack.c.l.b16 %v7129
    %v7201 = vunpack.c.l.b16 %v7130
    %v7202 = vunpack.c.l.b16 %v7131
    %v7203 = vunpack.c.l.b16 %v7132
    %v7204 = vunpack.c.l.b16 %v7133
    %v7205 = vunpack.c.l.b16 %v7134
    %v7206 = vunpack.c.l.b16 %v7135
    %v7207 = vunpack.c.l.b16 %v7136
    %v7208 = vunpack.c.l.b16 %v7137
    %v7209 = vunpack.c.l.b16 %v7138
    %v7210 = vunpack.c.l.b16 %v7139
    %v7211 = vunpack.c.l.b16 %v7140
    %v7212 = vunpack.c.l.b16 %v7141
    %v7213 = vunpack.c.l.b16 %v7142
    %v7214 = vunpack.c.l.b16 %v7143
    %v7215 = vunpack.c.l.b16 %v7144
    %v7216 = vunpack.c.l.b16 %v7145
    %v7217 = vunpack.c.l.b16 %v7146
    %v7218 = vpack.c.b16 %v7187, %v7186
    %v7219 = vpack.c.b16 %v7189, %v7188
    %v7220 = vpack.c.b16 %v7191, %v7190
    %v7221 = vpack.c.b16 %v7193, %v7192
    %v7222 = vpack.c.b16 %v7195, %v7194
    %v7223 = vpack.c.b16 %v7197, %v7196
    %v7224 = vpack.c.b16 %v7199, %v7198
    %v7225 = vpack.c.b16 %v7201, %v7200
    %v7226 = vpack.c.b16 %v7203, %v7202
    %v7227 = vpack.c.b16 %v7205, %v7204
    %v7228 = vpack.c.b16 %v7207, %v7206
    %v7229 = vpack.c.b16 %v7209, %v7208
    %v7230 = vpack.c.b16 %v7211, %v7210
    %v7231 = vpack.c.b16 %v7213, %v7212
    %v7232 = vpack.c.b16 %v7215, %v7214
    %v7233 = vpack.c.b16 %v7217, %v7216
    %7250 = vmatprep.subr.bf16.mxu0 0
    %7251 = vmatpush1.bf16.msra.mxu0 %v7218
    %7252 = vmatprep.subr.bf16.mxu0 0
    %7253 = vmatpush1.bf16.msra.mxu0 %v7219
    %7254 = vmatprep.subr.bf16.mxu0 0
    %7255 = vmatpush1.bf16.msra.mxu0 %v7220
    %7256 = vmatprep.subr.bf16.mxu0 0
    %7257 = vmatpush1.bf16.msra.mxu0 %v7221
    %7258 = vmatprep.subr.bf16.mxu0 0
    %7259 = vmatpush1.bf16.msra.mxu0 %v7222
    %7260 = vmatprep.subr.bf16.mxu0 0
    %7261 = vmatpush1.bf16.msra.mxu0 %v7223
    %7262 = vmatprep.subr.bf16.mxu0 0
    %7263 = vmatpush1.bf16.msra.mxu0 %v7224
    %7264 = vmatprep.subr.bf16.mxu0 0
    %7265 = vmatpush1.bf16.msra.mxu0 %v7225
    %7266 = vmatprep.subr.bf16.mxu0 0
    %7267 = vmatpush1.bf16.msra.mxu0 %v7226
    %7268 = vmatprep.subr.bf16.mxu0 0
    %7269 = vmatpush1.bf16.msra.mxu0 %v7227
    %7270 = vmatprep.subr.bf16.mxu0 0
    %7271 = vmatpush1.bf16.msra.mxu0 %v7228
    %7272 = vmatprep.subr.bf16.mxu0 0
    %7273 = vmatpush1.bf16.msra.mxu0 %v7229
    %7274 = vmatprep.subr.bf16.mxu0 0
    %7275 = vmatpush1.bf16.msra.mxu0 %v7230
    %7276 = vmatprep.subr.bf16.mxu0 0
    %7277 = vmatpush1.bf16.msra.mxu0 %v7231
    %7278 = vmatprep.subr.bf16.mxu0 0
    %7279 = vmatpush1.bf16.msra.mxu0 %v7232
    %7280 = vmatprep.subr.bf16.mxu0 0
    %7281 = vmatpush1.bf16.msra.mxu0 %v7233
    %7282 = vmatprep.mubr.bf16.mxu0 %v7084
    %7283 = vmatmul.mubr.bf16.gmra.mrb[0].mxu0 %v7083
    %v7284 = vpop.f32.mrb[0].mxu0
    %v7285 = vadd.f32 %v7152, %v7284
    %v7286 = vpop.f32.mrb[0].mxu0
    %v7287 = vpop.f32.mrb[0].mxu0
    %v7288 = vadd.f32 %v7152, %v7287
    %v7289 = vpop.f32.mrb[0].mxu0
    %7290 = vmatprep.mubr.bf16.mxu0 %v7086
    %7291 = vmatmul.mubr.bf16.gmra.mrb[0].mxu0 %v7085
    %v7292 = vpop.f32.mrb[0].mxu0
    %v7293 = vadd.f32 %v7152, %v7292
    %v7294 = vpop.f32.mrb[0].mxu0
    %v7295 = vpop.f32.mrb[0].mxu0
    %v7296 = vadd.f32 %v7152, %v7295
    %v7297 = vpop.f32.mrb[0].mxu0
    %7298 = vmatprep.mubr.bf16.mxu0 %v7088
    %7299 = vmatmul.mubr.bf16.gmra.mrb[0].mxu0 %v7087
    %v7300 = vpop.f32.mrb[0].mxu0
    %v7301 = vadd.f32 %v7152, %v7300
    %v7302 = vpop.f32.mrb[0].mxu0
    %v7303 = vpop.f32.mrb[0].mxu0
    %v7304 = vadd.f32 %v7152, %v7303
    %v7305 = vpop.f32.mrb[0].mxu0
    %7306 = vmatprep.mubr.bf16.mxu0 %v7090
    %7307 = vmatmul.mubr.bf16.gmra.mrb[0].mxu0 %v7089
    %v7308 = vpop.f32.mrb[0].mxu0
    %v7309 = vadd.f32 %v7152, %v7308
    %v7310 = vpop.f32.mrb[0].mxu0
    %v7311 = vpop.f32.mrb[0].mxu0
    %v7312 = vadd.f32 %v7152, %v7311
    %v7313 = vpop.f32.mrb[0].mxu0
    %7314 = vmatprep.mubr.bf16.mxu0 %v7092
    %7315 = vmatmul.mubr.bf16.gmra.mrb[0].mxu0 %v7091
    %v7316 = vpop.f32.mrb[0].mxu0
    %v7317 = vadd.f32 %v7152, %v7316
    %v7318 = vpop.f32.mrb[0].mxu0
    %v7319 = vpop.f32.mrb[0].mxu0
    %v7320 = vadd.f32 %v7152, %v7319
    %v7321 = vpop.f32.mrb[0].mxu0
    %7322 = vmatprep.mubr.bf16.mxu0 %v7094
    %7323 = vmatmul.mubr.bf16.gmra.mrb[0].mxu0 %v7093
    %v7324 = vpop.f32.mrb[0].mxu0
    %v7325 = vadd.f32 %v7152, %v7324
    %v7326 = vpop.f32.mrb[0].mxu0
    %v7327 = vpop.f32.mrb[0].mxu0
    %v7328 = vadd.f32 %v7152, %v7327
    %v7329 = vpop.f32.mrb[0].mxu0
    %7330 = vmatprep.mubr.bf16.mxu0 %v7096
    %7331 = vmatmul.mubr.bf16.gmra.mrb[0].mxu0 %v7095
    %v7332 = vpop.f32.mrb[0].mxu0
    %v7333 = vadd.f32 %v7152, %v7332
    %v7334 = vpop.f32.mrb[0].mxu0
    %v7335 = vpop.f32.mrb[0].mxu0
    %v7336 = vadd.f32 %v7152, %v7335
    %v7337 = vpop.f32.mrb[0].mxu0
    %7338 = vmatprep.mubr.bf16.mxu0 %v7098
    %7339 = vmatmul.mubr.bf16.gmra.mrb[0].mxu0 %v7097
    %v7340 = vpop.f32.mrb[0].mxu0
    %v7341 = vadd.f32 %v7152, %v7340
    %v7342 = vpop.f32.mrb[0].mxu0
    %v7343 = vpop.f32.mrb[0].mxu0
    %v7344 = vadd.f32 %v7152, %v7343
    %v7345 = vpop.f32.mrb[0].mxu0
    %7346 = vmatprep.mubr.bf16.mxu0 %v7100
    %7347 = vmatmul.mubr.bf16.gmra.mrb[0].mxu0 %v7099
    %v7348 = vpop.f32.mrb[0].mxu0
    %v7349 = vadd.f32 %v7152, %v7348
    %v7350 = vpop.f32.mrb[0].mxu0
    %v7351 = vpop.f32.mrb[0].mxu0
    %v7352 = vadd.f32 %v7152, %v7351
    %v7353 = vpop.f32.mrb[0].mxu0
    %7354 = vmatprep.mubr.bf16.mxu0 %v7102
    %7355 = vmatmul.mubr.bf16.gmra.mrb[0].mxu0 %v7101
    %v7356 = vpop.f32.mrb[0].mxu0
    %v7357 = vadd.f32 %v7152, %v7356
    %v7358 = vpop.f32.mrb[0].mxu0
    %v7359 = vpop.f32.mrb[0].mxu0
    %v7360 = vadd.f32 %v7152, %v7359
    %v7361 = vpop.f32.mrb[0].mxu0
    %7362 = vmatprep.mubr.bf16.mxu0 %v7104
    %7363 = vmatmul.mubr.bf16.gmra.mrb[0].mxu0 %v7103
    %v7364 = vpop.f32.mrb[0].mxu0
    %v7365 = vadd.f32 %v7152, %v7364
    %v7366 = vpop.f32.mrb[0].mxu0
    %v7367 = vpop.f32.mrb[0].mxu0
    %v7368 = vadd.f32 %v7152, %v7367
    %v7369 = vpop.f32.mrb[0].mxu0
    %7370 = vmatprep.mubr.bf16.mxu0 %v7106
    %7371 = vmatmul.mubr.bf16.gmra.mrb[0].mxu0 %v7105
    %v7372 = vpop.f32.mrb[0].mxu0
    %v7373 = vadd.f32 %v7152, %v7372
    %v7374 = vpop.f32.mrb[0].mxu0
    %v7375 = vpop.f32.mrb[0].mxu0
    %v7376 = vadd.f32 %v7152, %v7375
    %v7377 = vpop.f32.mrb[0].mxu0
    %7378 = vmatprep.mubr.bf16.mxu0 %v7108
    %7379 = vmatmul.mubr.bf16.gmra.mrb[0].mxu0 %v7107
    %v7380 = vpop.f32.mrb[0].mxu0
    %v7381 = vadd.f32 %v7152, %v7380
    %v7382 = vpop.f32.mrb[0].mxu0
    %v7383 = vpop.f32.mrb[0].mxu0
    %v7384 = vadd.f32 %v7152, %v7383
    %v7385 = vpop.f32.mrb[0].mxu0
    %7386 = vmatprep.mubr.bf16.mxu0 %v7110
    %7387 = vmatmul.mubr.bf16.gmra.mrb[0].mxu0 %v7109
    %v7388 = vpop.f32.mrb[0].mxu0
    %v7389 = vadd.f32 %v7152, %v7388
    %v7390 = vpop.f32.mrb[0].mxu0
    %v7391 = vpop.f32.mrb[0].mxu0
    %v7392 = vadd.f32 %v7152, %v7391
    %v7393 = vpop.f32.mrb[0].mxu0
    %7394 = vmatprep.mubr.bf16.mxu0 %v7112
    %7395 = vmatmul.mubr.bf16.gmra.mrb[0].mxu0 %v7111
    %v7396 = vpop.f32.mrb[0].mxu0
    %v7397 = vadd.f32 %v7152, %v7396
    %v7398 = vpop.f32.mrb[0].mxu0
    %v7399 = vpop.f32.mrb[0].mxu0
    %v7400 = vadd.f32 %v7152, %v7399
    %v7401 = vpop.f32.mrb[0].mxu0
    %7402 = vmatprep.mubr.bf16.mxu0 %v7114
    %7403 = vmatmul.mubr.bf16.gmra.mrb[0].mxu0 %v7113
    %v7404 = vpop.f32.mrb[0].mxu0
    %v7405 = vadd.f32 %v7152, %v7404
    %v7406 = vpop.f32.mrb[0].mxu0
    %v7407 = vpop.f32.mrb[0].mxu0
    %v7408 = vadd.f32 %v7152, %v7407
    %v7409 = vpop.f32.mrb[0].mxu0
    %7410 = vdwg.mxu0
    %7411 = vst [vmem:[#allocation16] sm:$0xff] %v7285
    %7412 = vst [vmem:[#allocation16 + $0x8] sm:$0xff] %v7288
    %7413 = vst [vmem:[#allocation16 + $0x10] sm:$0xff] %v7293
    %7414 = vst [vmem:[#allocation16 + $0x18] sm:$0xff] %v7296
    %7415 = vst [vmem:[#allocation16 + $0x20] sm:$0xff] %v7301
    %7416 = vst [vmem:[#allocation16 + $0x28] sm:$0xff] %v7304
    %7417 = vst [vmem:[#allocation16 + $0x30] sm:$0xff] %v7309
    %7418 = vst [vmem:[#allocation16 + $0x38] sm:$0xff] %v7312
    %7419 = vst [vmem:[#allocation16 + $0x40] sm:$0xff] %v7317
    %7420 = vst [vmem:[#allocation16 + $0x48] sm:$0xff] %v7320
    %7421 = vst [vmem:[#allocation16 + $0x50] sm:$0xff] %v7325
    %7422 = vst [vmem:[#allocation16 + $0x58] sm:$0xff] %v7328
    %7423 = vst [vmem:[#allocation16 + $0x60] sm:$0xff] %v7333
    %7424 = vst [vmem:[#allocation16 + $0x68] sm:$0xff] %v7336
    %7425 = vst [vmem:[#allocation16 + $0x70] sm:$0xff] %v7341
    %7426 = vst [vmem:[#allocation16 + $0x78] sm:$0xff] %v7344
    %7427 = vst [vmem:[#allocation16 + $0x80] sm:$0xff] %v7349
    %7428 = vst [vmem:[#allocation16 + $0x88] sm:$0xff] %v7352
    %7429 = vst [vmem:[#allocation16 + $0x90] sm:$0xff] %v7357
    %7430 = vst [vmem:[#allocation16 + $0x98] sm:$0xff] %v7360
    %7431 = vst [vmem:[#allocation16 + $0xa0] sm:$0xff] %v7365
    %7432 = vst [vmem:[#allocation16 + $0xa8] sm:$0xff] %v7368
    %7433 = vst [vmem:[#allocation16 + $0xb0] sm:$0xff] %v7373
    %7434 = vst [vmem:[#allocation16 + $0xb8] sm:$0xff] %v7376
    %7435 = vst [vmem:[#allocation16 + $0xc0] sm:$0xff] %v7381
    %7436 = vst [vmem:[#allocation16 + $0xc8] sm:$0xff] %v7384
    %7437 = vst [vmem:[#allocation16 + $0xd0] sm:$0xff] %v7389
    %7438 = vst [vmem:[#allocation16 + $0xd8] sm:$0xff] %v7392
    %7439 = vst [vmem:[#allocation16 + $0xe0] sm:$0xff] %v7397
    %7440 = vst [vmem:[#allocation16 + $0xe8] sm:$0xff] %v7400
    %7441 = vst [vmem:[#allocation16 + $0xf0] sm:$0xff] %v7405
    %7442 = vst [vmem:[#allocation16 + $0xf8] sm:$0xff] %v7408
    %v7443 = vpack.c.bf16 %v3633, %v3629
    %v7444 = vpack.c.bf16 %v3643, %v3639
    %v7445 = vpack.c.bf16 %v3653, %v3649
    %v7446 = vpack.c.bf16 %v3663, %v3659
    %v7447 = vpack.c.bf16 %v3673, %v3669
    %v7448 = vpack.c.bf16 %v3683, %v3679
    %v7449 = vpack.c.bf16 %v3693, %v3689
    %v7450 = vpack.c.bf16 %v3703, %v3699
    %v7451 = vpack.c.bf16 %v3713, %v3709
    %v7452 = vpack.c.bf16 %v3723, %v3719
    %v7453 = vpack.c.bf16 %v3733, %v3729
    %v7454 = vpack.c.bf16 %v3743, %v3739
    %v7455 = vpack.c.bf16 %v3753, %v3749
    %v7456 = vpack.c.bf16 %v3763, %v3759
    %v7457 = vpack.c.bf16 %v3773, %v3769
    %v7458 = vpack.c.bf16 %v3783, %v3779
    %v7475 = vunpack.c.l.b16 %v7443
    %v7476 = vunpack.c.h.b16 %v7443
    %v7477 = vunpack.c.l.b16 %v7444
    %v7478 = vunpack.c.h.b16 %v7444
    %v7479 = vunpack.c.l.b16 %v7445
    %v7480 = vunpack.c.h.b16 %v7445
    %v7481 = vunpack.c.l.b16 %v7446
    %v7482 = vunpack.c.h.b16 %v7446
    %v7483 = vunpack.c.l.b16 %v7447
    %v7484 = vunpack.c.h.b16 %v7447
    %v7485 = vunpack.c.l.b16 %v7448
    %v7486 = vunpack.c.h.b16 %v7448
    %v7487 = vunpack.c.l.b16 %v7449
    %v7488 = vunpack.c.h.b16 %v7449
    %v7489 = vunpack.c.l.b16 %v7450
    %v7490 = vunpack.c.h.b16 %v7450
    %v7491 = vunpack.c.l.b16 %v7451
    %v7492 = vunpack.c.h.b16 %v7451
    %v7493 = vunpack.c.l.b16 %v7452
    %v7494 = vunpack.c.h.b16 %v7452
    %v7495 = vunpack.c.l.b16 %v7453
    %v7496 = vunpack.c.h.b16 %v7453
    %v7497 = vunpack.c.l.b16 %v7454
    %v7498 = vunpack.c.h.b16 %v7454
    %v7499 = vunpack.c.l.b16 %v7455
    %v7500 = vunpack.c.h.b16 %v7455
    %v7501 = vunpack.c.l.b16 %v7456
    %v7502 = vunpack.c.h.b16 %v7456
    %v7503 = vunpack.c.l.b16 %v7457
    %v7504 = vunpack.c.h.b16 %v7457
    %v7505 = vunpack.c.l.b16 %v7458
    %v7506 = vunpack.c.h.b16 %v7458
    %v7507 = vpack.c.b16 %v7475, %v7475
    %v7508 = vpack.c.b16 %v7476, %v7476
    %v7509 = vpack.c.b16 %v7477, %v7477
    %v7510 = vpack.c.b16 %v7478, %v7478
    %v7511 = vpack.c.b16 %v7479, %v7479
    %v7512 = vpack.c.b16 %v7480, %v7480
    %v7513 = vpack.c.b16 %v7481, %v7481
    %v7514 = vpack.c.b16 %v7482, %v7482
    %v7515 = vpack.c.b16 %v7483, %v7483
    %v7516 = vpack.c.b16 %v7484, %v7484
    %v7517 = vpack.c.b16 %v7485, %v7485
    %v7518 = vpack.c.b16 %v7486, %v7486
    %v7519 = vpack.c.b16 %v7487, %v7487
    %v7520 = vpack.c.b16 %v7488, %v7488
    %v7521 = vpack.c.b16 %v7489, %v7489
    %v7522 = vpack.c.b16 %v7490, %v7490
    %v7523 = vpack.c.b16 %v7491, %v7491
    %v7524 = vpack.c.b16 %v7492, %v7492
    %v7525 = vpack.c.b16 %v7493, %v7493
    %v7526 = vpack.c.b16 %v7494, %v7494
    %v7527 = vpack.c.b16 %v7495, %v7495
    %v7528 = vpack.c.b16 %v7496, %v7496
    %v7529 = vpack.c.b16 %v7497, %v7497
    %v7530 = vpack.c.b16 %v7498, %v7498
    %v7531 = vpack.c.b16 %v7499, %v7499
    %v7532 = vpack.c.b16 %v7500, %v7500
    %v7533 = vpack.c.b16 %v7501, %v7501
    %v7534 = vpack.c.b16 %v7502, %v7502
    %v7535 = vpack.c.b16 %v7503, %v7503
    %v7536 = vpack.c.b16 %v7504, %v7504
    %v7537 = vpack.c.b16 %v7505, %v7505
    %v7538 = vpack.c.b16 %v7506, %v7506
    %7571 = vst [vmem:[#allocation17] sm:$0xf] %v7507
    %7572 = vst [vmem:[#allocation17 + $0x4] sm:$0xf] %v7508
    %7573 = vst [vmem:[#allocation17 + $0x8] sm:$0xf] %v7509
    %7574 = vst [vmem:[#allocation17 + $0xc] sm:$0xf] %v7510
    %7575 = vst [vmem:[#allocation17 + $0x10] sm:$0xf] %v7511
    %7576 = vst [vmem:[#allocation17 + $0x14] sm:$0xf] %v7512
    %7577 = vst [vmem:[#allocation17 + $0x18] sm:$0xf] %v7513
    %7578 = vst [vmem:[#allocation17 + $0x1c] sm:$0xf] %v7514
    %7579 = vst [vmem:[#allocation17 + $0x20] sm:$0xf] %v7515
    %7580 = vst [vmem:[#allocation17 + $0x24] sm:$0xf] %v7516
    %7581 = vst [vmem:[#allocation17 + $0x28] sm:$0xf] %v7517
    %7582 = vst [vmem:[#allocation17 + $0x2c] sm:$0xf] %v7518
    %7583 = vst [vmem:[#allocation17 + $0x30] sm:$0xf] %v7519
    %7584 = vst [vmem:[#allocation17 + $0x34] sm:$0xf] %v7520
    %7585 = vst [vmem:[#allocation17 + $0x38] sm:$0xf] %v7521
    %7586 = vst [vmem:[#allocation17 + $0x3c] sm:$0xf] %v7522
    %7587 = vst [vmem:[#allocation17 + $0x40] sm:$0xf] %v7523
    %7588 = vst [vmem:[#allocation17 + $0x44] sm:$0xf] %v7524
    %7589 = vst [vmem:[#allocation17 + $0x48] sm:$0xf] %v7525
    %7590 = vst [vmem:[#allocation17 + $0x4c] sm:$0xf] %v7526
    %7591 = vst [vmem:[#allocation17 + $0x50] sm:$0xf] %v7527
    %7592 = vst [vmem:[#allocation17 + $0x54] sm:$0xf] %v7528
    %7593 = vst [vmem:[#allocation17 + $0x58] sm:$0xf] %v7529
    %7594 = vst [vmem:[#allocation17 + $0x5c] sm:$0xf] %v7530
    %7595 = vst [vmem:[#allocation17 + $0x60] sm:$0xf] %v7531
    %7596 = vst [vmem:[#allocation17 + $0x64] sm:$0xf] %v7532
    %7597 = vst [vmem:[#allocation17 + $0x68] sm:$0xf] %v7533
    %7598 = vst [vmem:[#allocation17 + $0x6c] sm:$0xf] %v7534
    %7599 = vst [vmem:[#allocation17 + $0x70] sm:$0xf] %v7535
    %7600 = vst [vmem:[#allocation17 + $0x74] sm:$0xf] %v7536
    %7601 = vst [vmem:[#allocation17 + $0x78] sm:$0xf] %v7537
    %7602 = vst [vmem:[#allocation17 + $0x7c] sm:$0xf] %v7538
    %v7603 = vpack.c.bf16 %v3635, %v3631
    %v7604 = vpack.c.bf16 %v3645, %v3641
    %v7605 = vpack.c.bf16 %v3655, %v3651
    %v7606 = vpack.c.bf16 %v3665, %v3661
    %v7607 = vpack.c.bf16 %v3675, %v3671
    %v7608 = vpack.c.bf16 %v3685, %v3681
    %v7609 = vpack.c.bf16 %v3695, %v3691
    %v7610 = vpack.c.bf16 %v3705, %v3701
    %v7611 = vpack.c.bf16 %v3715, %v3711
    %v7612 = vpack.c.bf16 %v3725, %v3721
    %v7613 = vpack.c.bf16 %v3735, %v3731
    %v7614 = vpack.c.bf16 %v3745, %v3741
    %v7615 = vpack.c.bf16 %v3755, %v3751
    %v7616 = vpack.c.bf16 %v3765, %v3761
    %v7617 = vpack.c.bf16 %v3775, %v3771
    %v7618 = vpack.c.bf16 %v3785, %v3781
    %v7635 = vunpack.c.l.b16 %v7603
    %v7636 = vunpack.c.h.b16 %v7603
    %v7637 = vunpack.c.l.b16 %v7604
    %v7638 = vunpack.c.h.b16 %v7604
    %v7639 = vunpack.c.l.b16 %v7605
    %v7640 = vunpack.c.h.b16 %v7605
    %v7641 = vunpack.c.l.b16 %v7606
    %v7642 = vunpack.c.h.b16 %v7606
    %v7643 = vunpack.c.l.b16 %v7607
    %v7644 = vunpack.c.h.b16 %v7607
    %v7645 = vunpack.c.l.b16 %v7608
    %v7646 = vunpack.c.h.b16 %v7608
    %v7647 = vunpack.c.l.b16 %v7609
    %v7648 = vunpack.c.h.b16 %v7609
    %v7649 = vunpack.c.l.b16 %v7610
    %v7650 = vunpack.c.h.b16 %v7610
    %v7651 = vunpack.c.l.b16 %v7611
    %v7652 = vunpack.c.h.b16 %v7611
    %v7653 = vunpack.c.l.b16 %v7612
    %v7654 = vunpack.c.h.b16 %v7612
    %v7655 = vunpack.c.l.b16 %v7613
    %v7656 = vunpack.c.h.b16 %v7613
    %v7657 = vunpack.c.l.b16 %v7614
    %v7658 = vunpack.c.h.b16 %v7614
    %v7659 = vunpack.c.l.b16 %v7615
    %v7660 = vunpack.c.h.b16 %v7615
    %v7661 = vunpack.c.l.b16 %v7616
    %v7662 = vunpack.c.h.b16 %v7616
    %v7663 = vunpack.c.l.b16 %v7617
    %v7664 = vunpack.c.h.b16 %v7617
    %v7665 = vunpack.c.l.b16 %v7618
    %v7666 = vunpack.c.h.b16 %v7618
    %v7667 = vpack.c.b16 %v7635, %v7635
    %v7668 = vpack.c.b16 %v7636, %v7636
    %v7669 = vpack.c.b16 %v7637, %v7637
    %v7670 = vpack.c.b16 %v7638, %v7638
    %v7671 = vpack.c.b16 %v7639, %v7639
    %v7672 = vpack.c.b16 %v7640, %v7640
    %v7673 = vpack.c.b16 %v7641, %v7641
    %v7674 = vpack.c.b16 %v7642, %v7642
    %v7675 = vpack.c.b16 %v7643, %v7643
    %v7676 = vpack.c.b16 %v7644, %v7644
    %v7677 = vpack.c.b16 %v7645, %v7645
    %v7678 = vpack.c.b16 %v7646, %v7646
    %v7679 = vpack.c.b16 %v7647, %v7647
    %v7680 = vpack.c.b16 %v7648, %v7648
    %v7681 = vpack.c.b16 %v7649, %v7649
    %v7682 = vpack.c.b16 %v7650, %v7650
    %v7683 = vpack.c.b16 %v7651, %v7651
    %v7684 = vpack.c.b16 %v7652, %v7652
    %v7685 = vpack.c.b16 %v7653, %v7653
    %v7686 = vpack.c.b16 %v7654, %v7654
    %v7687 = vpack.c.b16 %v7655, %v7655
    %v7688 = vpack.c.b16 %v7656, %v7656
    %v7689 = vpack.c.b16 %v7657, %v7657
    %v7690 = vpack.c.b16 %v7658, %v7658
    %v7691 = vpack.c.b16 %v7659, %v7659
    %v7692 = vpack.c.b16 %v7660, %v7660
    %v7693 = vpack.c.b16 %v7661, %v7661
    %v7694 = vpack.c.b16 %v7662, %v7662
    %v7695 = vpack.c.b16 %v7663, %v7663
    %v7696 = vpack.c.b16 %v7664, %v7664
    %v7697 = vpack.c.b16 %v7665, %v7665
    %v7698 = vpack.c.b16 %v7666, %v7666
    %7731 = vst [vmem:[#allocation19] sm:$0xf] %v7667
    %7732 = vst [vmem:[#allocation19 + $0x4] sm:$0xf] %v7668
    %7733 = vst [vmem:[#allocation19 + $0x8] sm:$0xf] %v7669
    %7734 = vst [vmem:[#allocation19 + $0xc] sm:$0xf] %v7670
    %7735 = vst [vmem:[#allocation19 + $0x10] sm:$0xf] %v7671
    %7736 = vst [vmem:[#allocation19 + $0x14] sm:$0xf] %v7672
    %7737 = vst [vmem:[#allocation19 + $0x18] sm:$0xf] %v7673
    %7738 = vst [vmem:[#allocation19 + $0x1c] sm:$0xf] %v7674
    %7739 = vst [vmem:[#allocation19 + $0x20] sm:$0xf] %v7675
    %7740 = vst [vmem:[#allocation19 + $0x24] sm:$0xf] %v7676
    %7741 = vst [vmem:[#allocation19 + $0x28] sm:$0xf] %v7677
    %7742 = vst [vmem:[#allocation19 + $0x2c] sm:$0xf] %v7678
    %7743 = vst [vmem:[#allocation19 + $0x30] sm:$0xf] %v7679
    %7744 = vst [vmem:[#allocation19 + $0x34] sm:$0xf] %v7680
    %7745 = vst [vmem:[#allocation19 + $0x38] sm:$0xf] %v7681
    %7746 = vst [vmem:[#allocation19 + $0x3c] sm:$0xf] %v7682
    %7747 = vst [vmem:[#allocation19 + $0x40] sm:$0xf] %v7683
    %7748 = vst [vmem:[#allocation19 + $0x44] sm:$0xf] %v7684
    %7749 = vst [vmem:[#allocation19 + $0x48] sm:$0xf] %v7685
    %7750 = vst [vmem:[#allocation19 + $0x4c] sm:$0xf] %v7686
    %7751 = vst [vmem:[#allocation19 + $0x50] sm:$0xf] %v7687
    %7752 = vst [vmem:[#allocation19 + $0x54] sm:$0xf] %v7688
    %7753 = vst [vmem:[#allocation19 + $0x58] sm:$0xf] %v7689
    %7754 = vst [vmem:[#allocation19 + $0x5c] sm:$0xf] %v7690
    %7755 = vst [vmem:[#allocation19 + $0x60] sm:$0xf] %v7691
    %7756 = vst [vmem:[#allocation19 + $0x64] sm:$0xf] %v7692
    %7757 = vst [vmem:[#allocation19 + $0x68] sm:$0xf] %v7693
    %7758 = vst [vmem:[#allocation19 + $0x6c] sm:$0xf] %v7694
    %7759 = vst [vmem:[#allocation19 + $0x70] sm:$0xf] %v7695
    %7760 = vst [vmem:[#allocation19 + $0x74] sm:$0xf] %v7696
    %7761 = vst [vmem:[#allocation19 + $0x78] sm:$0xf] %v7697
    %7762 = vst [vmem:[#allocation19 + $0x7c] sm:$0xf] %v7698
    // Predicated region
    $region106: #{tpu_custom_call.1} parent=1 // pred_check
      _
    $region107: #{tpu_custom_call.1} parent=1 // pred_check_branch
      %7764 = sbr.rel (0) target = $region109
    $region108: #{tpu_custom_call.1} parent=1 // pred_region
      %s7766 = ssub.s32 4096, 4096
      %7767 = vsyncadd [#allocation4], %s7766
      %s7768 = sshll.u32 [#allocation16], 4
      %s7769 = int_to_ptr.vmem [resolvable:$true] %s7768
      %7774 = dma.vmem_to_hbm [thread:$0]  %s7769, 4096, %s18, [#allocation4], 128, 128, 8
    $region109: #{tpu_custom_call.1} parent=1 // pred_fallthru
      _
    // Predicated region
    $region110: #{tpu_custom_call.1} parent=1 // pred_check
      _
    $region111: #{tpu_custom_call.1} parent=1 // pred_check_branch
      %7776 = sbr.rel (0) target = $region113
    $region112: #{tpu_custom_call.1} parent=1 // pred_region
      %s7778 = ssub.s32 2048, 2048
      %7779 = vsyncadd [#allocation18], %s7778
      %s7780 = sshll.u32 [#allocation17], 4
      %s7781 = int_to_ptr.vmem [resolvable:$true] %s7780
      %7786 = dma.vmem_to_hbm [thread:$0]  %s7781, 2048, %s19, [#allocation18], 64, 64, 4
    $region113: #{tpu_custom_call.1} parent=1 // pred_fallthru
      _
    // Predicated region
    $region114: #{tpu_custom_call.1} parent=1 // pred_check
      _
    $region115: #{tpu_custom_call.1} parent=1 // pred_check_branch
      %7788 = sbr.rel (0) target = $region117
    $region116: #{tpu_custom_call.1} parent=1 // pred_region
      %s7790 = ssub.s32 2048, 2048
      %7791 = vsyncadd [#allocation18], %s7790
      %s7792 = sshll.u32 [#allocation19], 4
      %s7793 = int_to_ptr.vmem [resolvable:$true] %s7792
      %7798 = dma.vmem_to_hbm [thread:$0]  %s7793, 2048, %s20, [#allocation18], 64, 64, 4
    $region117: #{tpu_custom_call.1} parent=1 // pred_fallthru
      _
    // Predicated region
    $region118: #{tpu_custom_call.1} parent=1 // pred_check
      _
    $region119: #{tpu_custom_call.1} parent=1 // pred_check_branch
      %7800 = sbr.rel (0) target = $region121
    $region120: #{tpu_custom_call.1} parent=1 // pred_region
      %7801 = dma.done [#allocation4], 4096
    $region121: #{tpu_custom_call.1} parent=1 // pred_fallthru
      _
    // Predicated region
    $region122: #{tpu_custom_call.1} parent=1 // pred_check
      _
    $region123: #{tpu_custom_call.1} parent=1 // pred_check_branch
      %7803 = sbr.rel (0) target = $region125
    $region124: #{tpu_custom_call.1} parent=1 // pred_region
      %7804 = dma.done [#allocation18], 2048
    $region125: #{tpu_custom_call.1} parent=1 // pred_fallthru
      _
    // Predicated region
    $region126: #{tpu_custom_call.1} parent=1 // pred_check
      _
    $region127: #{tpu_custom_call.1} parent=1 // pred_check_branch
      %7806 = sbr.rel (0) target = $region129
    $region128: #{tpu_custom_call.1} parent=1 // pred_region
      %7807 = dma.done [#allocation18], 2048
    $region129: #{tpu_custom_call.1} parent=1 // pred_fallthru
      _
    %7808 = vsyncpa [#allocation3], 1
    %7809 = vsyncpa [#allocation6], 1
    %7810 = vsyncpa [#allocation9], 1
    %7811 = vsyncpa [#allocation12], 1
    %7812 = vsyncpa [#allocation15], 1
    %7813 = vsyncpa [#allocation4], 1
    %7814 = vsyncpa [#allocation18], 1

</llo_original>
